<compile_context>
chip_gen: v7x
topology: tpu7x:2x2x1
jax: 0.10.0
libtpu: 0.0.40
codegen_flags: <defaults>
</compile_context>

<pallas_src>
import numpy as np
import jax
import jax.numpy as jnp
from jax import lax
from jax.experimental import pallas as pl
from jax.experimental.pallas import tpu as pltpu

BN_EPS = 1e-5


# ---------------------------------------------------------------------------
# Static helpers (numpy, parameter / operator setup)
# ---------------------------------------------------------------------------
def _bilinear_matrix(out_size, in_size):
    """F.interpolate(mode='bilinear', align_corners=False) along one axis as a
    dense (out_size, in_size) linear map."""
    m = np.zeros((out_size, in_size), dtype=np.float32)
    scale = in_size / out_size
    for i in range(out_size):
        src = max((i + 0.5) * scale - 0.5, 0.0)
        i0 = min(int(np.floor(src)), in_size - 1)
        i1 = min(i0 + 1, in_size - 1)
        lam = src - i0
        m[i, i0] += 1.0 - lam
        m[i, i1] += lam
    return m


def _row_upsample_weights(H, Hh, TR):
    """Per-tile bilinear row-upsample weights.

    Local low-res row j of tile t corresponds to global low-res row
    (t*TR//2 - 1 + j); rows outside [0, Hh) never receive weight (they only exist
    so every tile sees a fixed-size JL = TR//2 + 2 window at a fixed slab offset).
    Returns rw of shape (HT, JL, TR): rw[t, j, ii] = weight of local low-res row j
    for high-res row t*TR + ii.
    """
    HT = H // TR
    JL = TR // 2 + 2
    scale = Hh / H
    rw = np.zeros((HT, JL, TR), np.float32)
    for t in range(HT):
        base = t * TR // 2 - 1
        for ii in range(TR):
            src = max((t * TR + ii + 0.5) * scale - 0.5, 0.0)
            i0 = min(int(np.floor(src)), Hh - 1)
            i1 = min(i0 + 1, Hh - 1)
            lam = src - i0
            rw[t, i0 - base, ii] += 1.0 - lam
            rw[t, i1 - base, ii] += lam
    return rw


def _vmem_estimate(cin, ch, cout, TR, W, itemsize):
    """Rough per-grid-step VMEM working set (double-buffered inputs + scratch)."""
    Wh, JL = W // 2, TR // 2 + 2
    Wp, JLp, Whp = W + 2, JL + 1, Wh + 1
    P = TR * W
    slabs = 2 * (cin * (TR + 2) * Wp + 4 * cin * JLp * Whp) * itemsize
    small = 2 * (JL * P * 4 + cout * P * 4)
    weights = 2 * (18 * cin * ch + 2 * cout * ch + Wh * P) * itemsize \
        + 2 * (2 * ch + cout) * 4
    scratch = 9 * cin * (P + JL * Wh) * itemsize + (3 * ch + cout) * P * 4
    return slabs + small + weights + scratch


def _pick_row_tile(H, W, cin, ch, cout, itemsize, budget=20 << 20):
    """Largest row tile (multiple of 8, or H itself) that fits the VMEM budget."""
    cands = sorted({c for c in range(8, H + 1, 8) if H % c == 0} | {H})
    best = cands[0]
    for c in cands:
        if _vmem_estimate(cin, ch, cout, c, W, itemsize) <= budget:
            best = max(best, c)
    return best


# ---------------------------------------------------------------------------
# Pallas kernel: one (batch, row-tile) block per grid step
# ---------------------------------------------------------------------------
def _make_cfpn_kernel(tr, jl, wh, w_out, precision):
    def cfpn_kernel(rwb_ref,           # (1, JL, TR*W)      f32 row-upsample weights for tile t
                    his_ref,           # (1, 1, cin, TR+2, W+2)    stride-1 input slab (halo rows)
                    los_ref,           # (1, 1, 4*cin, JL+1, Wh+1) stride-2 phase-split input slab
                    whi_ref, wlo_ref,  # (ch, 9*cin) BN-scale-folded conv weights (compute dtype)
                    wfh_ref, wfl_ref,  # (cout, ch)  BN-scale-folded 1x1 fusion weights
                    shh_ref, shl_ref, shf_ref,   # (ch,1)/(ch,1)/(cout,1) f32 BN shifts
                    uct_ref,           # (Wh, TR*W) column-upsample matrix, tiled TR times
                    out_ref):          # (1, cout, TR, W) f32
        f32 = jnp.float32
        cin = his_ref.shape[2]
        p_hi = tr * w_out
        p_lo = jl * wh
        cd = wfh_ref.dtype

        # ---- 3x3 stride-1 conv (hi branch): VMEM im2col + one fused-K MXU dot ----
        hi_patches = jnp.concatenate(
            [his_ref[0, 0, :, kh:kh + tr, kw:kw + w_out].reshape(cin, p_hi)
             for kh in range(3) for kw in range(3)], axis=0)               # (9*cin, TR*W)
        hi = jnp.dot(whi_ref[...], hi_patches, precision=precision,
                     preferred_element_type=f32)                           # (ch, TR*W)
        hi = jnp.maximum(hi + shh_ref[...], 0.0)

        # ---- 3x3 stride-2 conv (lo branch) on the phase-split slab ----
        lo_patches = jnp.concatenate(
            [los_ref[0, 0,
                     ((kh % 2) * 2 + kw % 2) * cin:((kh % 2) * 2 + kw % 2 + 1) * cin,
                     kh // 2:kh // 2 + jl,
                     kw // 2:kw // 2 + wh].reshape(cin, p_lo)
             for kh in range(3) for kw in range(3)], axis=0)               # (9*cin, JL*Wh)
        lo = jnp.dot(wlo_ref[...], lo_patches, precision=precision,
                     preferred_element_type=f32)                           # (ch, JL*Wh)
        lo = jnp.maximum(lo + shl_ref[...], 0.0).astype(cd)

        # ---- separable bilinear x2 upsample (lane-dense, no concat) ----
        uct = uct_ref[...]                       # (Wh, TR*W), compute dtype
        rwb = rwb_ref[0]                         # (JL, TR*W), f32
        lo_up = None
        for j in range(jl):
            cols = jnp.dot(lo[:, j * wh:(j + 1) * wh], uct,
                           precision=precision, preferred_element_type=f32)  # (ch, TR*W)
            contrib = rwb[j] * cols
            lo_up = contrib if lo_up is None else lo_up + contrib

        # ---- 1x1 fusion conv over channel concat [hi, lo_up] + folded BN + ReLU ----
        fused = (jnp.dot(wfh_ref[...], hi.astype(cd), precision=precision,
                         preferred_element_type=f32)
                 + jnp.dot(wfl_ref[...], lo_up.astype(cd), precision=precision,
                           preferred_element_type=f32)
                 + shf_ref[...])                                           # (cout, TR*W)
        out_ref[0] = jnp.maximum(fused, 0.0).reshape(wfh_ref.shape[0], tr, w_out)

    return cfpn_kernel


# ---------------------------------------------------------------------------
# Wrapper: padding, per-tile slabs, BN folding, upsample operators + pallas_call
# ---------------------------------------------------------------------------
def cfpn_level_forward(x_nchw, params, *, compute_dtype=jnp.bfloat16, row_tile=None):
    N, cin, H, W = x_nchw.shape
    assert H % 2 == 0 and W % 2 == 0, "CFPN Pallas kernel expects even H and W"
    ch = params["w_hi"].shape[0]          # out_channels // 2
    cout = params["w_fu"].shape[0]
    Hh, Wh = H // 2, W // 2
    cd = np.dtype(compute_dtype)
    itemsize = cd.itemsize

    TR = _pick_row_tile(H, W, cin, ch, cout, itemsize) if row_tile is None else int(row_tile)
    assert H % TR == 0 and TR % 2 == 0 and (TR % 8 == 0 or TR == H)
    HT = H // TR
    JL = TR // 2 + 2
    JLp, Whp, Wp = JL + 1, Wh + 1, W + 2
    P = TR * W

    # ---- fold inference BatchNorm into conv weights / per-channel shifts ----
    def fold(w2d, b, bn):
        gamma, beta, mean, var = bn
        scale = gamma / jnp.sqrt(var + BN_EPS)
        return w2d * scale[:, None], ((b - mean) * scale + beta)[:, None]

    def taps(w):    # (Co, Ci, 3, 3) -> (Co, 9*Ci), (kh, kw)-major / channel-minor K
        return jnp.transpose(w, (0, 2, 3, 1)).reshape(w.shape[0], -1)

    whi, shh = fold(taps(params["w_hi"]), params["b_hi"], params["bn_hi"])
    wlo, shl = fold(taps(params["w_lo"]), params["b_lo"], params["bn_lo"])
    wfu, shf = fold(params["w_fu"][:, :, 0, 0], params["b_fu"], params["bn_fu"])
    whi, wlo = whi.astype(cd), wlo.astype(cd)
    wfh, wfl = wfu[:, :ch].astype(cd), wfu[:, ch:].astype(cd)

    # ---- static upsample operators (lane-dense forms) ----
    uct = jnp.asarray(np.tile(_bilinear_matrix(W, Wh).T, (1, TR))).astype(cd)    # (Wh, TR*W)
    rw = _row_upsample_weights(H, Hh, TR)                                        # (HT, JL, TR)
    rwb = jnp.asarray(np.repeat(rw[:, :, :, None], W, axis=3).reshape(HT, JL, P))

    # ---- streamed input slabs (small per-tile row halos instead of 9x im2col) ----
    xp = jnp.pad(x_nchw.astype(cd), ((0, 0), (0, 0), (3, 3), (1, 1)))   # (N, cin, H+6, W+2)

    # stride-1 branch: padded rows [t*TR-1, t*TR+TR] per tile (1-row halo each side)
    hi_rows = (np.arange(HT, dtype=np.int32)[:, None] * TR + 2
               + np.arange(TR + 2, dtype=np.int32)[None, :])             # (HT, TR+2)
    hi_slab = jnp.transpose(xp[:, :, hi_rows, :], (0, 2, 1, 3, 4))       # (N, HT, cin, TR+2, Wp)

    # stride-2 branch: de-interleave row/col phases so every 3x3 tap is a unit-stride slice
    xph = jnp.stack([xp[..., 0::2], xp[..., 1::2]], axis=2)              # (N, cin, 2cp, H+6, Whp)
    lo_rows = (np.arange(HT, dtype=np.int32)[:, None, None] * TR
               + np.arange(2, dtype=np.int32)[None, :, None]
               + 2 * np.arange(JLp, dtype=np.int32)[None, None, :])      # (HT, 2rp, JLp)
    lo_slab = jnp.transpose(xph[:, :, :, lo_rows, :], (0, 3, 4, 2, 1, 5, 6))
    lo_slab = lo_slab.reshape(N, HT, 4 * cin, JLp, Whp)                  # (N, HT, 4*cin, JLp, Whp)

    precision = lax.Precision.HIGHEST if cd == jnp.float32 else None
    est = _vmem_estimate(cin, ch, cout, TR, W, itemsize)
    vmem_limit = int(min(64 << 20, max(32 << 20, 2 * est)))

    def full_spec(shape):
        return pl.BlockSpec(shape, lambda n, t, _s=shape: (0,) * len(_s))

    out = pl.pallas_call(
        _make_cfpn_kernel(TR, JL, Wh, W, precision),
        out_shape=jax.ShapeDtypeStruct((N, cout, H, W), jnp.float32),
        grid=(N, HT),
        in_specs=[
            pl.BlockSpec((1, JL, P), lambda n, t: (t, 0, 0)),                       # row weights
            pl.BlockSpec((1, 1, cin, TR + 2, Wp), lambda n, t: (n, t, 0, 0, 0)),    # hi slab
            pl.BlockSpec((1, 1, 4 * cin, JLp, Whp), lambda n, t: (n, t, 0, 0, 0)),  # lo slab
            full_spec(whi.shape), full_spec(wlo.shape),
            full_spec(wfh.shape), full_spec(wfl.shape),
            full_spec(shh.shape), full_spec(shl.shape), full_spec(shf.shape),
            full_spec(uct.shape),
        ],
        out_specs=pl.BlockSpec((1, cout, TR, W), lambda n, t: (n, 0, t, 0)),
        compiler_params=pltpu.CompilerParams(
            dimension_semantics=("parallel", "parallel"),
            vmem_limit_bytes=vmem_limit),
    )(rwb, hi_slab, lo_slab, whi, wlo, wfh, wfl, shh, shl, shf, uct)
    return out                                                           # NCHW, f32


# ---------------------------------------------------------------------------
# Deterministic parameter init (PyTorch-style uniform fan-in bounds)
# ---------------------------------------------------------------------------
def init_params(key, in_channels, out_channels):
    ch = out_channels // 2
    keys = iter(jax.random.split(key, 24))

    def conv_init(cin, cout, k):
        bound = 1.0 / np.sqrt(cin * k * k)
        w = jax.random.uniform(next(keys), (cout, cin, k, k), jnp.float32, -bound, bound)
        b = jax.random.uniform(next(keys), (cout,), jnp.float32, -bound, bound)
        return w, b

    def bn_init(c):
        gamma = jax.random.uniform(next(keys), (c,), jnp.float32, 0.5, 1.5)
        beta = jax.random.uniform(next(keys), (c,), jnp.float32, -0.5, 0.5)
        mean = jax.random.uniform(next(keys), (c,), jnp.float32, -0.5, 0.5)
        var = jax.random.uniform(next(keys), (c,), jnp.float32, 0.5, 1.5)
        return (gamma, beta, mean, var)

    w_hi, b_hi = conv_init(in_channels, ch, 3)
    w_lo, b_lo = conv_init(in_channels, ch, 3)
    w_fu, b_fu = conv_init(out_channels, out_channels, 1)
    return dict(w_hi=w_hi, b_hi=b_hi, bn_hi=bn_init(ch),
                w_lo=w_lo, b_lo=b_lo, bn_lo=bn_init(ch),
                w_fu=w_fu, b_fu=b_fu, bn_fu=bn_init(out_channels))


# ---------------------------------------------------------------------------
# Pure-JAX reference (independent conv path) for verification
# ---------------------------------------------------------------------------
def reference_forward(x, p):
    def conv(x_, w, b, stride, pad):
        y = jax.lax.conv_general_dilated(
            x_, w, (stride, stride), ((pad, pad), (pad, pad)),
            dimension_numbers=("NCHW", "OIHW", "NCHW"),
            precision=jax.lax.Precision.HIGHEST)
        return y + b[None, :, None, None]

    def bn_relu(y, bn):
        gamma, beta, mean, var = bn
        s = (gamma / jnp.sqrt(var + BN_EPS))[None, :, None, None]
        return jnp.maximum((y - mean[None, :, None, None]) * s
                           + beta[None, :, None, None], 0.0)

    _, _, H, W = x.shape
    hi = bn_relu(conv(x, p["w_hi"], p["b_hi"], 1, 1), p["bn_hi"])
    lo = bn_relu(conv(x, p["w_lo"], p["b_lo"], 2, 1), p["bn_lo"])
    R = jnp.asarray(_bilinear_matrix(H, lo.shape[2]))
    C = jnp.asarray(_bilinear_matrix(W, lo.shape[3]))
    up = jnp.einsum("hH,ncHW,wW->nchw", R, lo, C,
                    precision=jax.lax.Precision.HIGHEST)
    cat = jnp.concatenate([hi, up], axis=1)
    return bn_relu(conv(cat, p["w_fu"], p["b_fu"], 1, 0), p["bn_fu"])


if __name__ == "__main__":
    key = jax.random.PRNGKey(0)
    kx, kp = jax.random.split(key)
    N, Cin, Cout, H, W = 2, 4, 8, 16, 16
    x = jax.random.normal(kx, (N, Cin, H, W), jnp.float32)
    params = init_params(kp, Cin, Cout)

    ref = reference_forward(x, params)

    # f32 path with 2 row tiles: tight check of the slab/halo indexing, phase-split
    # stride-2 conv, BN folding and the separable-upsample wiring.
    out_f32 = jax.block_until_ready(
        cfpn_level_forward(x, params, compute_dtype=jnp.float32, row_tile=8))
    assert out_f32.shape == (N, Cout, H, W)
    np.testing.assert_allclose(np.asarray(out_f32), np.asarray(ref),
                               atol=2e-3, rtol=2e-3)

    # default bf16 MXU path (VMEM-aware auto row tile); looser tolerance from bf16
    out_bf16 = jax.block_until_ready(cfpn_level_forward(x, params))
    assert out_bf16.shape == (N, Cout, H, W)
    np.testing.assert_allclose(np.asarray(out_bf16), np.asarray(ref),
                               atol=5e-2, rtol=5e-2)

    print("KERNEL_OK")
</pallas_src>

<mosaic_0001>
module attributes {stable_mosaic.version = 11 : i64} {
  func.func @cfpn_kernel(%arg0: i32, %arg1: i32, %arg2: memref<1x6x128xf32, #tpu.memory_space<vmem>>, %arg3: memref<1x1x4x10x18xf32, #tpu.memory_space<vmem>>, %arg4: memref<1x1x16x7x9xf32, #tpu.memory_space<vmem>>, %arg5: memref<4x36xf32, #tpu.memory_space<vmem>>, %arg6: memref<4x36xf32, #tpu.memory_space<vmem>>, %arg7: memref<8x4xf32, #tpu.memory_space<vmem>>, %arg8: memref<8x4xf32, #tpu.memory_space<vmem>>, %arg9: memref<4x1xf32, #tpu.memory_space<vmem>>, %arg10: memref<4x1xf32, #tpu.memory_space<vmem>>, %arg11: memref<8x1xf32, #tpu.memory_space<vmem>>, %arg12: memref<8x128xf32, #tpu.memory_space<vmem>>, %arg13: memref<1x8x8x16xf32, #tpu.memory_space<vmem>>) attributes {dimension_semantics = [#tpu.dimension_semantics<parallel>, #tpu.dimension_semantics<parallel>], iteration_bounds = array<i64: 2, 2>, scalar_prefetch = 0 : i64, scratch_operands = 0 : i64, tpu.core_type = #tpu.core_type<tc>, window_params = [{transform_indices = @transform_0, window_bounds = array<i64: 1, 6, 128>}, {transform_indices = @transform_1, window_bounds = array<i64: 1, 1, 4, 10, 18>}, {transform_indices = @transform_2, window_bounds = array<i64: 1, 1, 16, 7, 9>}, {pipeline_mode = #tpu.pipeline_mode<synchronous>, transform_indices = @transform_3, window_bounds = array<i64: 4, 36>}, {pipeline_mode = #tpu.pipeline_mode<synchronous>, transform_indices = @transform_4, window_bounds = array<i64: 4, 36>}, {pipeline_mode = #tpu.pipeline_mode<synchronous>, transform_indices = @transform_5, window_bounds = array<i64: 8, 4>}, {pipeline_mode = #tpu.pipeline_mode<synchronous>, transform_indices = @transform_6, window_bounds = array<i64: 8, 4>}, {pipeline_mode = #tpu.pipeline_mode<synchronous>, transform_indices = @transform_7, window_bounds = array<i64: 4, 1>}, {pipeline_mode = #tpu.pipeline_mode<synchronous>, transform_indices = @transform_8, window_bounds = array<i64: 4, 1>}, {pipeline_mode = #tpu.pipeline_mode<synchronous>, transform_indices = @transform_9, window_bounds = array<i64: 8, 1>}, {pipeline_mode = #tpu.pipeline_mode<synchronous>, transform_indices = @transform_10, window_bounds = array<i64: 8, 128>}, {transform_indices = @transform_11, window_bounds = array<i64: 1, 8, 8, 16>}]} {
    %c0 = arith.constant 0 : index
    %c0_0 = arith.constant 0 : index
    %c0_1 = arith.constant 0 : index
    %c0_2 = arith.constant 0 : index
    %c0_3 = arith.constant 0 : index
    %0 = vector.load %arg3[%c0, %c0_0, %c0_1, %c0_2, %c0_3] : memref<1x1x4x10x18xf32, #tpu.memory_space<vmem>>, vector<1x1x4x8x16xf32>
    %1 = vector.shape_cast %0 : vector<1x1x4x8x16xf32> to vector<4x8x16xf32>
    %2 = vector.shape_cast %1 : vector<4x8x16xf32> to vector<4x128xf32>
    %c0_4 = arith.constant 0 : index
    %c0_5 = arith.constant 0 : index
    %c0_6 = arith.constant 0 : index
    %c0_7 = arith.constant 0 : index
    %c1 = arith.constant 1 : index
    %3 = vector.load %arg3[%c0_4, %c0_5, %c0_6, %c0_7, %c1] : memref<1x1x4x10x18xf32, #tpu.memory_space<vmem>>, vector<1x1x4x8x16xf32>
    %4 = vector.shape_cast %3 : vector<1x1x4x8x16xf32> to vector<4x8x16xf32>
    %5 = vector.shape_cast %4 : vector<4x8x16xf32> to vector<4x128xf32>
    %c0_8 = arith.constant 0 : index
    %c0_9 = arith.constant 0 : index
    %c0_10 = arith.constant 0 : index
    %c0_11 = arith.constant 0 : index
    %c2 = arith.constant 2 : index
    %6 = vector.load %arg3[%c0_8, %c0_9, %c0_10, %c0_11, %c2] : memref<1x1x4x10x18xf32, #tpu.memory_space<vmem>>, vector<1x1x4x8x16xf32>
    %7 = vector.shape_cast %6 : vector<1x1x4x8x16xf32> to vector<4x8x16xf32>
    %8 = vector.shape_cast %7 : vector<4x8x16xf32> to vector<4x128xf32>
    %c0_12 = arith.constant 0 : index
    %c0_13 = arith.constant 0 : index
    %c0_14 = arith.constant 0 : index
    %c1_15 = arith.constant 1 : index
    %c0_16 = arith.constant 0 : index
    %9 = vector.load %arg3[%c0_12, %c0_13, %c0_14, %c1_15, %c0_16] : memref<1x1x4x10x18xf32, #tpu.memory_space<vmem>>, vector<1x1x4x8x16xf32>
    %10 = vector.shape_cast %9 : vector<1x1x4x8x16xf32> to vector<4x8x16xf32>
    %11 = vector.shape_cast %10 : vector<4x8x16xf32> to vector<4x128xf32>
    %c0_17 = arith.constant 0 : index
    %c0_18 = arith.constant 0 : index
    %c0_19 = arith.constant 0 : index
    %c1_20 = arith.constant 1 : index
    %c1_21 = arith.constant 1 : index
    %12 = vector.load %arg3[%c0_17, %c0_18, %c0_19, %c1_20, %c1_21] : memref<1x1x4x10x18xf32, #tpu.memory_space<vmem>>, vector<1x1x4x8x16xf32>
    %13 = vector.shape_cast %12 : vector<1x1x4x8x16xf32> to vector<4x8x16xf32>
    %14 = vector.shape_cast %13 : vector<4x8x16xf32> to vector<4x128xf32>
    %c0_22 = arith.constant 0 : index
    %c0_23 = arith.constant 0 : index
    %c0_24 = arith.constant 0 : index
    %c1_25 = arith.constant 1 : index
    %c2_26 = arith.constant 2 : index
    %15 = vector.load %arg3[%c0_22, %c0_23, %c0_24, %c1_25, %c2_26] : memref<1x1x4x10x18xf32, #tpu.memory_space<vmem>>, vector<1x1x4x8x16xf32>
    %16 = vector.shape_cast %15 : vector<1x1x4x8x16xf32> to vector<4x8x16xf32>
    %17 = vector.shape_cast %16 : vector<4x8x16xf32> to vector<4x128xf32>
    %c0_27 = arith.constant 0 : index
    %c0_28 = arith.constant 0 : index
    %c0_29 = arith.constant 0 : index
    %c2_30 = arith.constant 2 : index
    %c0_31 = arith.constant 0 : index
    %18 = vector.load %arg3[%c0_27, %c0_28, %c0_29, %c2_30, %c0_31] : memref<1x1x4x10x18xf32, #tpu.memory_space<vmem>>, vector<1x1x4x8x16xf32>
    %19 = vector.shape_cast %18 : vector<1x1x4x8x16xf32> to vector<4x8x16xf32>
    %20 = vector.shape_cast %19 : vector<4x8x16xf32> to vector<4x128xf32>
    %c0_32 = arith.constant 0 : index
    %c0_33 = arith.constant 0 : index
    %c0_34 = arith.constant 0 : index
    %c2_35 = arith.constant 2 : index
    %c1_36 = arith.constant 1 : index
    %21 = vector.load %arg3[%c0_32, %c0_33, %c0_34, %c2_35, %c1_36] : memref<1x1x4x10x18xf32, #tpu.memory_space<vmem>>, vector<1x1x4x8x16xf32>
    %22 = vector.shape_cast %21 : vector<1x1x4x8x16xf32> to vector<4x8x16xf32>
    %23 = vector.shape_cast %22 : vector<4x8x16xf32> to vector<4x128xf32>
    %c0_37 = arith.constant 0 : index
    %c0_38 = arith.constant 0 : index
    %c0_39 = arith.constant 0 : index
    %c2_40 = arith.constant 2 : index
    %c2_41 = arith.constant 2 : index
    %24 = vector.load %arg3[%c0_37, %c0_38, %c0_39, %c2_40, %c2_41] : memref<1x1x4x10x18xf32, #tpu.memory_space<vmem>>, vector<1x1x4x8x16xf32>
    %25 = vector.shape_cast %24 : vector<1x1x4x8x16xf32> to vector<4x8x16xf32>
    %26 = vector.shape_cast %25 : vector<4x8x16xf32> to vector<4x128xf32>
    %27 = tpu.concatenate %2, %5, %8, %11, %14, %17, %20, %23, %26 in 0 : vector<4x128xf32>, vector<4x128xf32>, vector<4x128xf32>, vector<4x128xf32>, vector<4x128xf32>, vector<4x128xf32>, vector<4x128xf32>, vector<4x128xf32>, vector<4x128xf32> -> vector<36x128xf32>
    %c0_42 = arith.constant 0 : index
    %c0_43 = arith.constant 0 : index
    %28 = vector.load %arg5[%c0_42, %c0_43] : memref<4x36xf32, #tpu.memory_space<vmem>>, vector<4x36xf32>
    %cst = arith.constant dense<0.000000e+00> : vector<4x128xf32>
    %29 = tpu.matmul %28, %27, %cst {dimension_numbers = #tpu.dot_dimension_numbers<[1], [0], [0], [1], [0, 0, 1, 1], [], []>, precision = #tpu.contract_precision<fp32>} : vector<4x36xf32>, vector<36x128xf32>, vector<4x128xf32> -> vector<4x128xf32>
    %c0_44 = arith.constant 0 : index
    %c0_45 = arith.constant 0 : index
    %30 = vector.load %arg9[%c0_44, %c0_45] : memref<4x1xf32, #tpu.memory_space<vmem>>, vector<4x1xf32>
    %31 = vector.broadcast %30 : vector<4x1xf32> to vector<4x128xf32>
    %32 = arith.addf %29, %31 : vector<4x128xf32>
    %cst_46 = arith.constant 0.000000e+00 : f32
    %33 = vector.broadcast %cst_46 : f32 to vector<4x128xf32>
    %34 = arith.maximumf %32, %33 : vector<4x128xf32>
    %c0_47 = arith.constant 0 : index
    %c0_48 = arith.constant 0 : index
    %c0_49 = arith.constant 0 : index
    %c0_50 = arith.constant 0 : index
    %c0_51 = arith.constant 0 : index
    %35 = vector.load %arg4[%c0_47, %c0_48, %c0_49, %c0_50, %c0_51] : memref<1x1x16x7x9xf32, #tpu.memory_space<vmem>>, vector<1x1x4x6x8xf32>
    %36 = vector.shape_cast %35 : vector<1x1x4x6x8xf32> to vector<4x6x8xf32>
    %37 = vector.shape_cast %36 : vector<4x6x8xf32> to vector<4x48xf32>
    %c0_52 = arith.constant 0 : index
    %c0_53 = arith.constant 0 : index
    %c4 = arith.constant 4 : index
    %c0_54 = arith.constant 0 : index
    %c0_55 = arith.constant 0 : index
    %38 = vector.load %arg4[%c0_52, %c0_53, %c4, %c0_54, %c0_55] : memref<1x1x16x7x9xf32, #tpu.memory_space<vmem>>, vector<1x1x4x6x8xf32>
    %39 = vector.shape_cast %38 : vector<1x1x4x6x8xf32> to vector<4x6x8xf32>
    %40 = vector.shape_cast %39 : vector<4x6x8xf32> to vector<4x48xf32>
    %c0_56 = arith.constant 0 : index
    %c0_57 = arith.constant 0 : index
    %c0_58 = arith.constant 0 : index
    %c0_59 = arith.constant 0 : index
    %c1_60 = arith.constant 1 : index
    %41 = vector.load %arg4[%c0_56, %c0_57, %c0_58, %c0_59, %c1_60] : memref<1x1x16x7x9xf32, #tpu.memory_space<vmem>>, vector<1x1x4x6x8xf32>
    %42 = vector.shape_cast %41 : vector<1x1x4x6x8xf32> to vector<4x6x8xf32>
    %43 = vector.shape_cast %42 : vector<4x6x8xf32> to vector<4x48xf32>
    %c0_61 = arith.constant 0 : index
    %c0_62 = arith.constant 0 : index
    %c8 = arith.constant 8 : index
    %c0_63 = arith.constant 0 : index
    %c0_64 = arith.constant 0 : index
    %44 = vector.load %arg4[%c0_61, %c0_62, %c8, %c0_63, %c0_64] : memref<1x1x16x7x9xf32, #tpu.memory_space<vmem>>, vector<1x1x4x6x8xf32>
    %45 = vector.shape_cast %44 : vector<1x1x4x6x8xf32> to vector<4x6x8xf32>
    %46 = vector.shape_cast %45 : vector<4x6x8xf32> to vector<4x48xf32>
    %c0_65 = arith.constant 0 : index
    %c0_66 = arith.constant 0 : index
    %c12 = arith.constant 12 : index
    %c0_67 = arith.constant 0 : index
    %c0_68 = arith.constant 0 : index
    %47 = vector.load %arg4[%c0_65, %c0_66, %c12, %c0_67, %c0_68] : memref<1x1x16x7x9xf32, #tpu.memory_space<vmem>>, vector<1x1x4x6x8xf32>
    %48 = vector.shape_cast %47 : vector<1x1x4x6x8xf32> to vector<4x6x8xf32>
    %49 = vector.shape_cast %48 : vector<4x6x8xf32> to vector<4x48xf32>
    %c0_69 = arith.constant 0 : index
    %c0_70 = arith.constant 0 : index
    %c8_71 = arith.constant 8 : index
    %c0_72 = arith.constant 0 : index
    %c1_73 = arith.constant 1 : index
    %50 = vector.load %arg4[%c0_69, %c0_70, %c8_71, %c0_72, %c1_73] : memref<1x1x16x7x9xf32, #tpu.memory_space<vmem>>, vector<1x1x4x6x8xf32>
    %51 = vector.shape_cast %50 : vector<1x1x4x6x8xf32> to vector<4x6x8xf32>
    %52 = vector.shape_cast %51 : vector<4x6x8xf32> to vector<4x48xf32>
    %c0_74 = arith.constant 0 : index
    %c0_75 = arith.constant 0 : index
    %c0_76 = arith.constant 0 : index
    %c1_77 = arith.constant 1 : index
    %c0_78 = arith.constant 0 : index
    %53 = vector.load %arg4[%c0_74, %c0_75, %c0_76, %c1_77, %c0_78] : memref<1x1x16x7x9xf32, #tpu.memory_space<vmem>>, vector<1x1x4x6x8xf32>
    %54 = vector.shape_cast %53 : vector<1x1x4x6x8xf32> to vector<4x6x8xf32>
    %55 = vector.shape_cast %54 : vector<4x6x8xf32> to vector<4x48xf32>
    %c0_79 = arith.constant 0 : index
    %c0_80 = arith.constant 0 : index
    %c4_81 = arith.constant 4 : index
    %c1_82 = arith.constant 1 : index
    %c0_83 = arith.constant 0 : index
    %56 = vector.load %arg4[%c0_79, %c0_80, %c4_81, %c1_82, %c0_83] : memref<1x1x16x7x9xf32, #tpu.memory_space<vmem>>, vector<1x1x4x6x8xf32>
    %57 = vector.shape_cast %56 : vector<1x1x4x6x8xf32> to vector<4x6x8xf32>
    %58 = vector.shape_cast %57 : vector<4x6x8xf32> to vector<4x48xf32>
    %c0_84 = arith.constant 0 : index
    %c0_85 = arith.constant 0 : index
    %c0_86 = arith.constant 0 : index
    %c1_87 = arith.constant 1 : index
    %c1_88 = arith.constant 1 : index
    %59 = vector.load %arg4[%c0_84, %c0_85, %c0_86, %c1_87, %c1_88] : memref<1x1x16x7x9xf32, #tpu.memory_space<vmem>>, vector<1x1x4x6x8xf32>
    %60 = vector.shape_cast %59 : vector<1x1x4x6x8xf32> to vector<4x6x8xf32>
    %61 = vector.shape_cast %60 : vector<4x6x8xf32> to vector<4x48xf32>
    %62 = tpu.concatenate %37, %40, %43, %46, %49, %52, %55, %58, %61 in 0 : vector<4x48xf32>, vector<4x48xf32>, vector<4x48xf32>, vector<4x48xf32>, vector<4x48xf32>, vector<4x48xf32>, vector<4x48xf32>, vector<4x48xf32>, vector<4x48xf32> -> vector<36x48xf32>
    %c0_89 = arith.constant 0 : index
    %c0_90 = arith.constant 0 : index
    %63 = vector.load %arg6[%c0_89, %c0_90] : memref<4x36xf32, #tpu.memory_space<vmem>>, vector<4x36xf32>
    %cst_91 = arith.constant dense<0.000000e+00> : vector<4x48xf32>
    %64 = tpu.matmul %63, %62, %cst_91 {dimension_numbers = #tpu.dot_dimension_numbers<[1], [0], [0], [1], [0, 0, 1, 1], [], []>, precision = #tpu.contract_precision<fp32>} : vector<4x36xf32>, vector<36x48xf32>, vector<4x48xf32> -> vector<4x48xf32>
    %c0_92 = arith.constant 0 : index
    %c0_93 = arith.constant 0 : index
    %65 = vector.load %arg10[%c0_92, %c0_93] : memref<4x1xf32, #tpu.memory_space<vmem>>, vector<4x1xf32>
    %66 = vector.broadcast %65 : vector<4x1xf32> to vector<4x48xf32>
    %67 = arith.addf %64, %66 : vector<4x48xf32>
    %cst_94 = arith.constant 0.000000e+00 : f32
    %68 = vector.broadcast %cst_94 : f32 to vector<4x48xf32>
    %69 = arith.maximumf %67, %68 : vector<4x48xf32>
    %c0_95 = arith.constant 0 : index
    %c0_96 = arith.constant 0 : index
    %70 = vector.load %arg12[%c0_95, %c0_96] : memref<8x128xf32, #tpu.memory_space<vmem>>, vector<8x128xf32>
    %c0_97 = arith.constant 0 : index
    %c0_98 = arith.constant 0 : index
    %c0_99 = arith.constant 0 : index
    %71 = vector.load %arg2[%c0_97, %c0_98, %c0_99] : memref<1x6x128xf32, #tpu.memory_space<vmem>>, vector<1x6x128xf32>
    %72 = vector.shape_cast %71 : vector<1x6x128xf32> to vector<6x128xf32>
    %73 = vector.extract_strided_slice %69 {offsets = [0, 0], sizes = [4, 8], strides = [1, 1]} : vector<4x48xf32> to vector<4x8xf32>
    %cst_100 = arith.constant dense<0.000000e+00> : vector<4x128xf32>
    %74 = tpu.matmul %73, %70, %cst_100 {dimension_numbers = #tpu.dot_dimension_numbers<[1], [0], [0], [1], [0, 0, 1, 1], [], []>, precision = #tpu.contract_precision<fp32>} : vector<4x8xf32>, vector<8x128xf32>, vector<4x128xf32> -> vector<4x128xf32>
    %75 = vector.extract_strided_slice %72 {offsets = [0, 0], sizes = [1, 128], strides = [1, 1]} : vector<6x128xf32> to vector<1x128xf32>
    %76 = vector.shape_cast %75 : vector<1x128xf32> to vector<128xf32>
    %77 = vector.shape_cast %76 : vector<128xf32> to vector<1x128xf32>
    %78 = vector.broadcast %77 : vector<1x128xf32> to vector<4x128xf32>
    %79 = arith.mulf %78, %74 : vector<4x128xf32>
    %80 = vector.extract_strided_slice %69 {offsets = [0, 8], sizes = [4, 8], strides = [1, 1]} : vector<4x48xf32> to vector<4x8xf32>
    %cst_101 = arith.constant dense<0.000000e+00> : vector<4x128xf32>
    %81 = tpu.matmul %80, %70, %cst_101 {dimension_numbers = #tpu.dot_dimension_numbers<[1], [0], [0], [1], [0, 0, 1, 1], [], []>, precision = #tpu.contract_precision<fp32>} : vector<4x8xf32>, vector<8x128xf32>, vector<4x128xf32> -> vector<4x128xf32>
    %82 = vector.extract_strided_slice %72 {offsets = [1, 0], sizes = [1, 128], strides = [1, 1]} : vector<6x128xf32> to vector<1x128xf32>
    %83 = vector.shape_cast %82 : vector<1x128xf32> to vector<128xf32>
    %84 = vector.shape_cast %83 : vector<128xf32> to vector<1x128xf32>
    %85 = vector.broadcast %84 : vector<1x128xf32> to vector<4x128xf32>
    %86 = arith.mulf %85, %81 : vector<4x128xf32>
    %87 = arith.addf %79, %86 : vector<4x128xf32>
    %88 = vector.extract_strided_slice %69 {offsets = [0, 16], sizes = [4, 8], strides = [1, 1]} : vector<4x48xf32> to vector<4x8xf32>
    %cst_102 = arith.constant dense<0.000000e+00> : vector<4x128xf32>
    %89 = tpu.matmul %88, %70, %cst_102 {dimension_numbers = #tpu.dot_dimension_numbers<[1], [0], [0], [1], [0, 0, 1, 1], [], []>, precision = #tpu.contract_precision<fp32>} : vector<4x8xf32>, vector<8x128xf32>, vector<4x128xf32> -> vector<4x128xf32>
    %90 = vector.extract_strided_slice %72 {offsets = [2, 0], sizes = [1, 128], strides = [1, 1]} : vector<6x128xf32> to vector<1x128xf32>
    %91 = vector.shape_cast %90 : vector<1x128xf32> to vector<128xf32>
    %92 = vector.shape_cast %91 : vector<128xf32> to vector<1x128xf32>
    %93 = vector.broadcast %92 : vector<1x128xf32> to vector<4x128xf32>
    %94 = arith.mulf %93, %89 : vector<4x128xf32>
    %95 = arith.addf %87, %94 : vector<4x128xf32>
    %96 = vector.extract_strided_slice %69 {offsets = [0, 24], sizes = [4, 8], strides = [1, 1]} : vector<4x48xf32> to vector<4x8xf32>
    %cst_103 = arith.constant dense<0.000000e+00> : vector<4x128xf32>
    %97 = tpu.matmul %96, %70, %cst_103 {dimension_numbers = #tpu.dot_dimension_numbers<[1], [0], [0], [1], [0, 0, 1, 1], [], []>, precision = #tpu.contract_precision<fp32>} : vector<4x8xf32>, vector<8x128xf32>, vector<4x128xf32> -> vector<4x128xf32>
    %98 = vector.extract_strided_slice %72 {offsets = [3, 0], sizes = [1, 128], strides = [1, 1]} : vector<6x128xf32> to vector<1x128xf32>
    %99 = vector.shape_cast %98 : vector<1x128xf32> to vector<128xf32>
    %100 = vector.shape_cast %99 : vector<128xf32> to vector<1x128xf32>
    %101 = vector.broadcast %100 : vector<1x128xf32> to vector<4x128xf32>
    %102 = arith.mulf %101, %97 : vector<4x128xf32>
    %103 = arith.addf %95, %102 : vector<4x128xf32>
    %104 = vector.extract_strided_slice %69 {offsets = [0, 32], sizes = [4, 8], strides = [1, 1]} : vector<4x48xf32> to vector<4x8xf32>
    %cst_104 = arith.constant dense<0.000000e+00> : vector<4x128xf32>
    %105 = tpu.matmul %104, %70, %cst_104 {dimension_numbers = #tpu.dot_dimension_numbers<[1], [0], [0], [1], [0, 0, 1, 1], [], []>, precision = #tpu.contract_precision<fp32>} : vector<4x8xf32>, vector<8x128xf32>, vector<4x128xf32> -> vector<4x128xf32>
    %106 = vector.extract_strided_slice %72 {offsets = [4, 0], sizes = [1, 128], strides = [1, 1]} : vector<6x128xf32> to vector<1x128xf32>
    %107 = vector.shape_cast %106 : vector<1x128xf32> to vector<128xf32>
    %108 = vector.shape_cast %107 : vector<128xf32> to vector<1x128xf32>
    %109 = vector.broadcast %108 : vector<1x128xf32> to vector<4x128xf32>
    %110 = arith.mulf %109, %105 : vector<4x128xf32>
    %111 = arith.addf %103, %110 : vector<4x128xf32>
    %112 = vector.extract_strided_slice %69 {offsets = [0, 40], sizes = [4, 8], strides = [1, 1]} : vector<4x48xf32> to vector<4x8xf32>
    %cst_105 = arith.constant dense<0.000000e+00> : vector<4x128xf32>
    %113 = tpu.matmul %112, %70, %cst_105 {dimension_numbers = #tpu.dot_dimension_numbers<[1], [0], [0], [1], [0, 0, 1, 1], [], []>, precision = #tpu.contract_precision<fp32>} : vector<4x8xf32>, vector<8x128xf32>, vector<4x128xf32> -> vector<4x128xf32>
    %114 = vector.extract_strided_slice %72 {offsets = [5, 0], sizes = [1, 128], strides = [1, 1]} : vector<6x128xf32> to vector<1x128xf32>
    %115 = vector.shape_cast %114 : vector<1x128xf32> to vector<128xf32>
    %116 = vector.shape_cast %115 : vector<128xf32> to vector<1x128xf32>
    %117 = vector.broadcast %116 : vector<1x128xf32> to vector<4x128xf32>
    %118 = arith.mulf %117, %113 : vector<4x128xf32>
    %119 = arith.addf %111, %118 : vector<4x128xf32>
    %c0_106 = arith.constant 0 : index
    %c0_107 = arith.constant 0 : index
    %120 = vector.load %arg7[%c0_106, %c0_107] : memref<8x4xf32, #tpu.memory_space<vmem>>, vector<8x4xf32>
    %cst_108 = arith.constant dense<0.000000e+00> : vector<8x128xf32>
    %121 = tpu.matmul %120, %34, %cst_108 {dimension_numbers = #tpu.dot_dimension_numbers<[1], [0], [0], [1], [0, 0, 1, 1], [], []>, precision = #tpu.contract_precision<fp32>} : vector<8x4xf32>, vector<4x128xf32>, vector<8x128xf32> -> vector<8x128xf32>
    %c0_109 = arith.constant 0 : index
    %c0_110 = arith.constant 0 : index
    %122 = vector.load %arg8[%c0_109, %c0_110] : memref<8x4xf32, #tpu.memory_space<vmem>>, vector<8x4xf32>
    %cst_111 = arith.constant dense<0.000000e+00> : vector<8x128xf32>
    %123 = tpu.matmul %122, %119, %cst_111 {dimension_numbers = #tpu.dot_dimension_numbers<[1], [0], [0], [1], [0, 0, 1, 1], [], []>, precision = #tpu.contract_precision<fp32>} : vector<8x4xf32>, vector<4x128xf32>, vector<8x128xf32> -> vector<8x128xf32>
    %124 = arith.addf %121, %123 : vector<8x128xf32>
    %c0_112 = arith.constant 0 : index
    %c0_113 = arith.constant 0 : index
    %125 = vector.load %arg11[%c0_112, %c0_113] : memref<8x1xf32, #tpu.memory_space<vmem>>, vector<8x1xf32>
    %126 = vector.broadcast %125 : vector<8x1xf32> to vector<8x128xf32>
    %127 = arith.addf %124, %126 : vector<8x128xf32>
    %cst_114 = arith.constant 0.000000e+00 : f32
    %128 = vector.broadcast %cst_114 : f32 to vector<8x128xf32>
    %129 = arith.maximumf %127, %128 : vector<8x128xf32>
    %130 = vector.shape_cast %129 : vector<8x128xf32> to vector<8x8x16xf32>
    %c0_115 = arith.constant 0 : index
    %c0_116 = arith.constant 0 : index
    %c0_117 = arith.constant 0 : index
    %c0_118 = arith.constant 0 : index
    %131 = vector.load %arg13[%c0_115, %c0_116, %c0_117, %c0_118] : memref<1x8x8x16xf32, #tpu.memory_space<vmem>>, vector<1x8x8x16xf32>
    %132 = vector.shape_cast %131 : vector<1x8x8x16xf32> to vector<8x8x16xf32>
    %133 = vector.shape_cast %130 : vector<8x8x16xf32> to vector<1x8x8x16xf32>
    tpu.vector_store %arg13[%c0_115, %c0_116, %c0_117, %c0_118], %133 {strides = array<i32>} : memref<1x8x8x16xf32, #tpu.memory_space<vmem>>, vector<1x8x8x16xf32>,
    return
  }
  func.func @transform_0(%arg0: i32, %arg1: i32) -> (i32, i32, i32) {
    %c0_i32 = arith.constant 0 : i32
    %c0_i32_0 = arith.constant 0 : i32
    %c0_i32_1 = arith.constant 0 : i32
    return %arg1, %c0_i32, %c0_i32_0 : i32, i32, i32
  }
  func.func @transform_1(%arg0: i32, %arg1: i32) -> (i32, i32, i32, i32, i32) {
    %c0_i32 = arith.constant 0 : i32
    %c0_i32_0 = arith.constant 0 : i32
    %c0_i32_1 = arith.constant 0 : i32
    %c0_i32_2 = arith.constant 0 : i32
    return %arg0, %arg1, %c0_i32, %c0_i32_0, %c0_i32_1 : i32, i32, i32, i32, i32
  }
  func.func @transform_2(%arg0: i32, %arg1: i32) -> (i32, i32, i32, i32, i32) {
    %c0_i32 = arith.constant 0 : i32
    %c0_i32_0 = arith.constant 0 : i32
    %c0_i32_1 = arith.constant 0 : i32
    %c0_i32_2 = arith.constant 0 : i32
    return %arg0, %arg1, %c0_i32, %c0_i32_0, %c0_i32_1 : i32, i32, i32, i32, i32
  }
  func.func @transform_3(%arg0: i32, %arg1: i32) -> (i32, i32) {
    %c0_i32 = arith.constant 0 : i32
    %c0_i32_0 = arith.constant 0 : i32
    %c0_i32_1 = arith.constant 0 : i32
    return %c0_i32, %c0_i32_0 : i32, i32
  }
  func.func @transform_4(%arg0: i32, %arg1: i32) -> (i32, i32) {
    %c0_i32 = arith.constant 0 : i32
    %c0_i32_0 = arith.constant 0 : i32
    %c0_i32_1 = arith.constant 0 : i32
    return %c0_i32, %c0_i32_0 : i32, i32
  }
  func.func @transform_5(%arg0: i32, %arg1: i32) -> (i32, i32) {
    %c0_i32 = arith.constant 0 : i32
    %c0_i32_0 = arith.constant 0 : i32
    %c0_i32_1 = arith.constant 0 : i32
    return %c0_i32, %c0_i32_0 : i32, i32
  }
  func.func @transform_6(%arg0: i32, %arg1: i32) -> (i32, i32) {
    %c0_i32 = arith.constant 0 : i32
    %c0_i32_0 = arith.constant 0 : i32
    %c0_i32_1 = arith.constant 0 : i32
    return %c0_i32, %c0_i32_0 : i32, i32
  }
  func.func @transform_7(%arg0: i32, %arg1: i32) -> (i32, i32) {
    %c0_i32 = arith.constant 0 : i32
    %c0_i32_0 = arith.constant 0 : i32
    %c0_i32_1 = arith.constant 0 : i32
    return %c0_i32, %c0_i32_0 : i32, i32
  }
  func.func @transform_8(%arg0: i32, %arg1: i32) -> (i32, i32) {
    %c0_i32 = arith.constant 0 : i32
    %c0_i32_0 = arith.constant 0 : i32
    %c0_i32_1 = arith.constant 0 : i32
    return %c0_i32, %c0_i32_0 : i32, i32
  }
  func.func @transform_9(%arg0: i32, %arg1: i32) -> (i32, i32) {
    %c0_i32 = arith.constant 0 : i32
    %c0_i32_0 = arith.constant 0 : i32
    %c0_i32_1 = arith.constant 0 : i32
    return %c0_i32, %c0_i32_0 : i32, i32
  }
  func.func @transform_10(%arg0: i32, %arg1: i32) -> (i32, i32) {
    %c0_i32 = arith.constant 0 : i32
    %c0_i32_0 = arith.constant 0 : i32
    %c0_i32_1 = arith.constant 0 : i32
    return %c0_i32, %c0_i32_0 : i32, i32
  }
  func.func @transform_11(%arg0: i32, %arg1: i32) -> (i32, i32, i32, i32) {
    %c0_i32 = arith.constant 0 : i32
    %c0_i32_0 = arith.constant 0 : i32
    %c0_i32_1 = arith.constant 0 : i32
    return %arg0, %c0_i32, %arg1, %c0_i32_0 : i32, i32, i32, i32
  }
}

</mosaic_0001>

<llo_original>
// kernel: tpu_custom_call.1
$region0: #{tpu_custom_call.1}
  #allocation0 [shape = 'u32[]', space=smem, size = 0x4, offset = 0x4, fixed_abs, tag = 'smem constant byte address 0x4 - core index']
  #allocation1 [shape = 'u32[144,128]{1,0:T(1,128)}', space=vmem, size = 0x12000, scoped, tag = 'internal scratch']
  %s0 = inlined_call_operand.vmem [shape: f32[2,6,128], index: 0, kind: input, shape index: {}]
  %s1 = inlined_call_operand.vmem [shape: f32[2,2,4,10,18], index: 1, kind: input, shape index: {}]
  %s2 = inlined_call_operand.vmem [shape: f32[2,2,16,7,9], index: 2, kind: input, shape index: {}]
  %s3 = inlined_call_operand.vmem [shape: f32[4,36], index: 3, kind: input, shape index: {}]
  %s4 = inlined_call_operand.vmem [shape: f32[4,36], index: 4, kind: input, shape index: {}]
  %s5 = inlined_call_operand.vmem [shape: f32[8,4], index: 5, kind: input, shape index: {}]
  %s6 = inlined_call_operand.vmem [shape: f32[8,4], index: 6, kind: input, shape index: {}]
  %s7 = inlined_call_operand.vmem [shape: f32[4,1], index: 7, kind: input, shape index: {}]
  %s8 = inlined_call_operand.vmem [shape: f32[4,1], index: 8, kind: input, shape index: {}]
  %s9 = inlined_call_operand.vmem [shape: f32[8,1], index: 9, kind: input, shape index: {}]
  %s10 = inlined_call_operand.vmem [shape: f32[8,128], index: 10, kind: input, shape index: {}]
  %s11 = inlined_call_operand.hbm [shape: f32[2,8,16,16], index: 11, kind: output, shape index: {}]
  %s12 = sld [smem:[#allocation0]]
  $region77: #{tpu_custom_call.1} parent=0
    _
  %s14 = ssub.s32 1, %s12
  %s15 = scalar_select 0, %s14, %s12
  $region1: #{tpu_custom_call.1} parent=0
    #allocation2 [shape = 'u8[65536]{0}', space=vmem, size = 0x10000, scoped, tag = 'output window, operand 0']
    #allocation3 [shape = 's32[2]{0}', space=sflag, size = 0x8, scoped, tag = 'scoped memory for tpu_custom_call.1']
    %16 = vsyncpa [#allocation3], 0
    %s17 = scalar_lea.sflag [#allocation3], 1
    %18 = vsyncpa %s17, 0
    loop: start=0, step=1, limit=6
    $region2: #{tpu_custom_call.1} parent=1 // loop_pre_header
      _
    $region3: #{tpu_custom_call.1} parent=1 // loop_header
      %s20 = sphi 0, %s24
      %p21 = scmp.ge.s32.totalorder %s20, 6
      %s27 = sphi 0, %s39
      %s28 = sphi 0, %s35
      %s29 = sphi 0, %s27
      %s30 = sphi 0, %s28
      %s31 = sphi 0, %s29
      %s32 = sphi 0, %s30
      %s42 = sphi 0, %s44
      %s45 = sphi 0, %s42
      %s46 = sphi 0, %s45
      %s62 = sphi 0, %s46
      %s70 = sphi 0, %s72
      %s73 = sphi 0, %s70
      %s74 = sphi 0, %s73
      %s90 = sphi 0, %s74
      %s98 = sphi 0, %s100
      %s101 = sphi 0, %s98
      %s102 = sphi 0, %s101
      %s118 = sphi 0, %s102
      %s122 = sphi 0, %s122
      %s124 = sphi 0, %s122
      %s125 = sphi 0, %s124
      %s139 = sphi 0, %s125
      %s143 = sphi 0, %s143
      %s145 = sphi 0, %s143
      %s146 = sphi 0, %s145
      %s160 = sphi 0, %s146
      %s164 = sphi 0, %s164
      %s166 = sphi 0, %s164
      %s167 = sphi 0, %s166
      %s181 = sphi 0, %s167
      %s185 = sphi 0, %s185
      %s187 = sphi 0, %s185
      %s188 = sphi 0, %s187
      %s202 = sphi 0, %s188
      %s206 = sphi 0, %s206
      %s208 = sphi 0, %s206
      %s209 = sphi 0, %s208
      %s223 = sphi 0, %s209
      %s227 = sphi 0, %s227
      %s229 = sphi 0, %s227
      %s230 = sphi 0, %s229
      %s244 = sphi 0, %s230
      %s248 = sphi 0, %s248
      %s250 = sphi 0, %s248
      %s251 = sphi 0, %s250
      %s265 = sphi 0, %s251
      %s269 = sphi 0, %s269
      %s271 = sphi 0, %s269
      %s272 = sphi 0, %s271
      %s286 = sphi 0, %s272
      %s294 = sphi 0, %s296
      %s297 = sphi 0, %s294
      %s298 = sphi 0, %s297
      %s314 = sphi 0, %s298
    $region4: #{tpu_custom_call.1} parent=1 // loop_header_branch
      %23 = sbr.rel (%p21) target = $region8
    $region5: #{tpu_custom_call.1} parent=1 // loop_body
      %s25 = ssub.s32 %s20, 1
      %s26 = ssub.s32 %s20, 2
      %s33 = sadd.s32 1, %s28
      %p34 = scmp.ge.s32.totalorder %s33, 2
      %s35 = scalar_select %p34, 0, %s33
      %s36 = sadd.s32 1, %s27
      %s37 = scalar_select %p34, %s36, %s27
      %p38 = scmp.ge.s32.totalorder %s37, 2
      %s39 = scalar_select %p38, 0, %s37
      %s40 = ssub.s32 %s28, %s35
      %p41 = scmp.eq.s32.totalorder %s40, 0
      %s43 = sadd.s32 %s42, 1
      %s44 = scalar_select %p41, %s42, %s43
      %p47 = pneg %p41
      %p48 = scmp.eq.s32.totalorder %s20, 3
      %p49 = por %p47, %p48
      %p50 = scmp.ne.s32.totalorder %s42, %s45
      %p51 = scmp.eq.s32.totalorder %s20, 0
      %p52 = por %p50, %p51
      %p53 = scmp.ne.s32.totalorder %s42, %s45
      %p54 = scmp.eq.s32.totalorder %s25, 3
      %p55 = por %p53, %p54
      %p56 = scmp.ne.s32.totalorder %s45, %s46
      %p57 = scmp.eq.s32.totalorder %s25, 0
      %p58 = por %p56, %p57
      %p59 = scmp.ne.s32.totalorder %s45, %s46
      %p60 = scmp.eq.s32.totalorder %s26, 3
      %p61 = por %p59, %p60
      %p63 = scmp.ne.s32.totalorder %s46, %s62
      %p64 = scmp.eq.s32.totalorder %s26, 0
      %p65 = por %p63, %p64
      %s66 = ssub.s32 %s27, %s39
      %s67 = ssub.s32 %s28, %s35
      %s68 = sor.u32 %s66, %s67
      %p69 = scmp.eq.s32.totalorder %s68, 0
      %s71 = sadd.s32 %s70, 1
      %s72 = scalar_select %p69, %s70, %s71
      %p75 = pneg %p69
      %p76 = scmp.eq.s32.totalorder %s20, 3
      %p77 = por %p75, %p76
      %p78 = scmp.ne.s32.totalorder %s70, %s73
      %p79 = scmp.eq.s32.totalorder %s20, 0
      %p80 = por %p78, %p79
      %p81 = scmp.ne.s32.totalorder %s70, %s73
      %p82 = scmp.eq.s32.totalorder %s25, 3
      %p83 = por %p81, %p82
      %p84 = scmp.ne.s32.totalorder %s73, %s74
      %p85 = scmp.eq.s32.totalorder %s25, 0
      %p86 = por %p84, %p85
      %p87 = scmp.ne.s32.totalorder %s73, %s74
      %p88 = scmp.eq.s32.totalorder %s26, 3
      %p89 = por %p87, %p88
      %p91 = scmp.ne.s32.totalorder %s74, %s90
      %p92 = scmp.eq.s32.totalorder %s26, 0
      %p93 = por %p91, %p92
      %s94 = ssub.s32 %s27, %s39
      %s95 = ssub.s32 %s28, %s35
      %s96 = sor.u32 %s94, %s95
      %p97 = scmp.eq.s32.totalorder %s96, 0
      %s99 = sadd.s32 %s98, 1
      %s100 = scalar_select %p97, %s98, %s99
      %p103 = pneg %p97
      %p104 = scmp.eq.s32.totalorder %s20, 3
      %p105 = por %p103, %p104
      %p106 = scmp.ne.s32.totalorder %s98, %s101
      %p107 = scmp.eq.s32.totalorder %s20, 0
      %p108 = por %p106, %p107
      %p109 = scmp.ne.s32.totalorder %s98, %s101
      %p110 = scmp.eq.s32.totalorder %s25, 3
      %p111 = por %p109, %p110
      %p112 = scmp.ne.s32.totalorder %s101, %s102
      %p113 = scmp.eq.s32.totalorder %s25, 0
      %p114 = por %p112, %p113
      %p115 = scmp.ne.s32.totalorder %s101, %s102
      %p116 = scmp.eq.s32.totalorder %s26, 3
      %p117 = por %p115, %p116
      %p119 = scmp.ne.s32.totalorder %s102, %s118
      %p120 = scmp.eq.s32.totalorder %s26, 0
      %p121 = por %p119, %p120
      %s123 = sadd.s32 %s122, 1
      %p126 = scmp.eq.s32.totalorder %s20, 3
      %p127 = scmp.ne.s32.totalorder %s122, %s124
      %p128 = scmp.eq.s32.totalorder %s20, 0
      %p129 = por %p127, %p128
      %p130 = scmp.ne.s32.totalorder %s122, %s124
      %p131 = scmp.eq.s32.totalorder %s25, 3
      %p132 = por %p130, %p131
      %p133 = scmp.ne.s32.totalorder %s124, %s125
      %p134 = scmp.eq.s32.totalorder %s25, 0
      %p135 = por %p133, %p134
      %p136 = scmp.ne.s32.totalorder %s124, %s125
      %p137 = scmp.eq.s32.totalorder %s26, 3
      %p138 = por %p136, %p137
      %p140 = scmp.ne.s32.totalorder %s125, %s139
      %p141 = scmp.eq.s32.totalorder %s26, 0
      %p142 = por %p140, %p141
      %s144 = sadd.s32 %s143, 1
      %p147 = scmp.eq.s32.totalorder %s20, 3
      %p148 = scmp.ne.s32.totalorder %s143, %s145
      %p149 = scmp.eq.s32.totalorder %s20, 0
      %p150 = por %p148, %p149
      %p151 = scmp.ne.s32.totalorder %s143, %s145
      %p152 = scmp.eq.s32.totalorder %s25, 3
      %p153 = por %p151, %p152
      %p154 = scmp.ne.s32.totalorder %s145, %s146
      %p155 = scmp.eq.s32.totalorder %s25, 0
      %p156 = por %p154, %p155
      %p157 = scmp.ne.s32.totalorder %s145, %s146
      %p158 = scmp.eq.s32.totalorder %s26, 3
      %p159 = por %p157, %p158
      %p161 = scmp.ne.s32.totalorder %s146, %s160
      %p162 = scmp.eq.s32.totalorder %s26, 0
      %p163 = por %p161, %p162
      %s165 = sadd.s32 %s164, 1
      %p168 = scmp.eq.s32.totalorder %s20, 3
      %p169 = scmp.ne.s32.totalorder %s164, %s166
      %p170 = scmp.eq.s32.totalorder %s20, 0
      %p171 = por %p169, %p170
      %p172 = scmp.ne.s32.totalorder %s164, %s166
      %p173 = scmp.eq.s32.totalorder %s25, 3
      %p174 = por %p172, %p173
      %p175 = scmp.ne.s32.totalorder %s166, %s167
      %p176 = scmp.eq.s32.totalorder %s25, 0
      %p177 = por %p175, %p176
      %p178 = scmp.ne.s32.totalorder %s166, %s167
      %p179 = scmp.eq.s32.totalorder %s26, 3
      %p180 = por %p178, %p179
      %p182 = scmp.ne.s32.totalorder %s167, %s181
      %p183 = scmp.eq.s32.totalorder %s26, 0
      %p184 = por %p182, %p183
      %s186 = sadd.s32 %s185, 1
      %p189 = scmp.eq.s32.totalorder %s20, 3
      %p190 = scmp.ne.s32.totalorder %s185, %s187
      %p191 = scmp.eq.s32.totalorder %s20, 0
      %p192 = por %p190, %p191
      %p193 = scmp.ne.s32.totalorder %s185, %s187
      %p194 = scmp.eq.s32.totalorder %s25, 3
      %p195 = por %p193, %p194
      %p196 = scmp.ne.s32.totalorder %s187, %s188
      %p197 = scmp.eq.s32.totalorder %s25, 0
      %p198 = por %p196, %p197
      %p199 = scmp.ne.s32.totalorder %s187, %s188
      %p200 = scmp.eq.s32.totalorder %s26, 3
      %p201 = por %p199, %p200
      %p203 = scmp.ne.s32.totalorder %s188, %s202
      %p204 = scmp.eq.s32.totalorder %s26, 0
      %p205 = por %p203, %p204
      %s207 = sadd.s32 %s206, 1
      %p210 = scmp.eq.s32.totalorder %s20, 3
      %p211 = scmp.ne.s32.totalorder %s206, %s208
      %p212 = scmp.eq.s32.totalorder %s20, 0
      %p213 = por %p211, %p212
      %p214 = scmp.ne.s32.totalorder %s206, %s208
      %p215 = scmp.eq.s32.totalorder %s25, 3
      %p216 = por %p214, %p215
      %p217 = scmp.ne.s32.totalorder %s208, %s209
      %p218 = scmp.eq.s32.totalorder %s25, 0
      %p219 = por %p217, %p218
      %p220 = scmp.ne.s32.totalorder %s208, %s209
      %p221 = scmp.eq.s32.totalorder %s26, 3
      %p222 = por %p220, %p221
      %p224 = scmp.ne.s32.totalorder %s209, %s223
      %p225 = scmp.eq.s32.totalorder %s26, 0
      %p226 = por %p224, %p225
      %s228 = sadd.s32 %s227, 1
      %p231 = scmp.eq.s32.totalorder %s20, 3
      %p232 = scmp.ne.s32.totalorder %s227, %s229
      %p233 = scmp.eq.s32.totalorder %s20, 0
      %p234 = por %p232, %p233
      %p235 = scmp.ne.s32.totalorder %s227, %s229
      %p236 = scmp.eq.s32.totalorder %s25, 3
      %p237 = por %p235, %p236
      %p238 = scmp.ne.s32.totalorder %s229, %s230
      %p239 = scmp.eq.s32.totalorder %s25, 0
      %p240 = por %p238, %p239
      %p241 = scmp.ne.s32.totalorder %s229, %s230
      %p242 = scmp.eq.s32.totalorder %s26, 3
      %p243 = por %p241, %p242
      %p245 = scmp.ne.s32.totalorder %s230, %s244
      %p246 = scmp.eq.s32.totalorder %s26, 0
      %p247 = por %p245, %p246
      %s249 = sadd.s32 %s248, 1
      %p252 = scmp.eq.s32.totalorder %s20, 3
      %p253 = scmp.ne.s32.totalorder %s248, %s250
      %p254 = scmp.eq.s32.totalorder %s20, 0
      %p255 = por %p253, %p254
      %p256 = scmp.ne.s32.totalorder %s248, %s250
      %p257 = scmp.eq.s32.totalorder %s25, 3
      %p258 = por %p256, %p257
      %p259 = scmp.ne.s32.totalorder %s250, %s251
      %p260 = scmp.eq.s32.totalorder %s25, 0
      %p261 = por %p259, %p260
      %p262 = scmp.ne.s32.totalorder %s250, %s251
      %p263 = scmp.eq.s32.totalorder %s26, 3
      %p264 = por %p262, %p263
      %p266 = scmp.ne.s32.totalorder %s251, %s265
      %p267 = scmp.eq.s32.totalorder %s26, 0
      %p268 = por %p266, %p267
      %s270 = sadd.s32 %s269, 1
      %p273 = scmp.eq.s32.totalorder %s20, 3
      %p274 = scmp.ne.s32.totalorder %s269, %s271
      %p275 = scmp.eq.s32.totalorder %s20, 0
      %p276 = por %p274, %p275
      %p277 = scmp.ne.s32.totalorder %s269, %s271
      %p278 = scmp.eq.s32.totalorder %s25, 3
      %p279 = por %p277, %p278
      %p280 = scmp.ne.s32.totalorder %s271, %s272
      %p281 = scmp.eq.s32.totalorder %s25, 0
      %p282 = por %p280, %p281
      %p283 = scmp.ne.s32.totalorder %s271, %s272
      %p284 = scmp.eq.s32.totalorder %s26, 3
      %p285 = por %p283, %p284
      %p287 = scmp.ne.s32.totalorder %s272, %s286
      %p288 = scmp.eq.s32.totalorder %s26, 0
      %p289 = por %p287, %p288
      %s290 = ssub.s32 %s27, %s39
      %s291 = ssub.s32 %s28, %s35
      %s292 = sor.u32 %s290, %s291
      %p293 = scmp.eq.s32.totalorder %s292, 0
      %s295 = sadd.s32 %s294, 1
      %s296 = scalar_select %p293, %s294, %s295
      %p299 = pneg %p293
      %p300 = scmp.eq.s32.totalorder %s20, 3
      %p301 = por %p299, %p300
      %p302 = scmp.ne.s32.totalorder %s294, %s297
      %p303 = scmp.eq.s32.totalorder %s20, 0
      %p304 = por %p302, %p303
      %p305 = scmp.ne.s32.totalorder %s294, %s297
      %p306 = scmp.eq.s32.totalorder %s25, 3
      %p307 = por %p305, %p306
      %p308 = scmp.ne.s32.totalorder %s297, %s298
      %p309 = scmp.eq.s32.totalorder %s25, 0
      %p310 = por %p308, %p309
      %p311 = scmp.ne.s32.totalorder %s297, %s298
      %p312 = scmp.eq.s32.totalorder %s26, 3
      %p313 = por %p311, %p312
      %p315 = scmp.ne.s32.totalorder %s298, %s314
      %p316 = scmp.eq.s32.totalorder %s26, 0
      %p317 = por %p315, %p316
      %p318 = scmp.le.s32.totalorder 1, %s20
      %p319 = scmp.lt.s32.totalorder %s20, 5
      %p320 = pnand %p318, %p319
      %p321 = pneg %p320
      // Predicated region
      $region9: #{tpu_custom_call.1} parent=5 // pred_check
        _
      $region10: #{tpu_custom_call.1} parent=5 // pred_check_branch
        %323 = sbr.rel (%p320) target = $region12
      $region11: #{tpu_custom_call.1} parent=5 // pred_region
        %s324 = ssub.s32 %s20, 1
        // Predicated region
        $region13: #{tpu_custom_call.1} parent=11 // pred_check
          %p325 = pneg %p135
        $region14: #{tpu_custom_call.1} parent=11 // pred_check_branch
          %327 = sbr.rel (%p325) target = $region16
        $region15: #{tpu_custom_call.1} parent=11 // pred_region
          _
        $region16: #{tpu_custom_call.1} parent=11 // pred_fallthru
          _
        // Predicated region
        $region17: #{tpu_custom_call.1} parent=11 // pred_check
          %p328 = pneg %p156
        $region18: #{tpu_custom_call.1} parent=11 // pred_check_branch
          %330 = sbr.rel (%p328) target = $region20
        $region19: #{tpu_custom_call.1} parent=11 // pred_region
          _
        $region20: #{tpu_custom_call.1} parent=11 // pred_fallthru
          _
        // Predicated region
        $region21: #{tpu_custom_call.1} parent=11 // pred_check
          %p331 = pneg %p177
        $region22: #{tpu_custom_call.1} parent=11 // pred_check_branch
          %333 = sbr.rel (%p331) target = $region24
        $region23: #{tpu_custom_call.1} parent=11 // pred_region
          _
        $region24: #{tpu_custom_call.1} parent=11 // pred_fallthru
          _
        // Predicated region
        $region25: #{tpu_custom_call.1} parent=11 // pred_check
          %p334 = pneg %p198
        $region26: #{tpu_custom_call.1} parent=11 // pred_check_branch
          %336 = sbr.rel (%p334) target = $region28
        $region27: #{tpu_custom_call.1} parent=11 // pred_region
          _
        $region28: #{tpu_custom_call.1} parent=11 // pred_fallthru
          _
        // Predicated region
        $region29: #{tpu_custom_call.1} parent=11 // pred_check
          %p337 = pneg %p219
        $region30: #{tpu_custom_call.1} parent=11 // pred_check_branch
          %339 = sbr.rel (%p337) target = $region32
        $region31: #{tpu_custom_call.1} parent=11 // pred_region
          _
        $region32: #{tpu_custom_call.1} parent=11 // pred_fallthru
          _
        // Predicated region
        $region33: #{tpu_custom_call.1} parent=11 // pred_check
          %p340 = pneg %p240
        $region34: #{tpu_custom_call.1} parent=11 // pred_check_branch
          %342 = sbr.rel (%p340) target = $region36
        $region35: #{tpu_custom_call.1} parent=11 // pred_region
          _
        $region36: #{tpu_custom_call.1} parent=11 // pred_fallthru
          _
        // Predicated region
        $region37: #{tpu_custom_call.1} parent=11 // pred_check
          %p343 = pneg %p261
        $region38: #{tpu_custom_call.1} parent=11 // pred_check_branch
          %345 = sbr.rel (%p343) target = $region40
        $region39: #{tpu_custom_call.1} parent=11 // pred_region
          _
        $region40: #{tpu_custom_call.1} parent=11 // pred_fallthru
          _
        // Predicated region
        $region41: #{tpu_custom_call.1} parent=11 // pred_check
          %p346 = pneg %p282
        $region42: #{tpu_custom_call.1} parent=11 // pred_check_branch
          %348 = sbr.rel (%p346) target = $region44
        $region43: #{tpu_custom_call.1} parent=11 // pred_region
          _
        $region44: #{tpu_custom_call.1} parent=11 // pred_fallthru
          _
      $region12: #{tpu_custom_call.1} parent=5 // pred_fallthru
        _
      %p349 = scmp.lt.s32.totalorder %s20, 4
      // Predicated region
      $region45: #{tpu_custom_call.1} parent=5 // pred_check
        %p350 = pneg %p349
      $region46: #{tpu_custom_call.1} parent=5 // pred_check_branch
        %352 = sbr.rel (%p350) target = $region48
      $region47: #{tpu_custom_call.1} parent=5 // pred_region
        // Predicated region
        $region49: #{tpu_custom_call.1} parent=47 // pred_check
          %p353 = pneg %p52
        $region50: #{tpu_custom_call.1} parent=47 // pred_check_branch
          %355 = sbr.rel (%p353) target = $region52
        $region51: #{tpu_custom_call.1} parent=47 // pred_region
          %p356 = scmp.lt.s32.totalorder %s28, 1
          %s357 = scalar_select %p356, %s28, 1
          %s358 = smul.addr %s357, 8
          %s359 = scalar_lea.vmem %s0, %s358
        $region52: #{tpu_custom_call.1} parent=47 // pred_fallthru
          _
        // Predicated region
        $region53: #{tpu_custom_call.1} parent=47 // pred_check
          %p360 = pneg %p80
        $region54: #{tpu_custom_call.1} parent=47 // pred_check_branch
          %362 = sbr.rel (%p360) target = $region56
        $region55: #{tpu_custom_call.1} parent=47 // pred_region
          %p363 = scmp.lt.s32.totalorder %s27, 1
          %s364 = scalar_select %p363, %s27, 1
          %p365 = scmp.lt.s32.totalorder %s28, 1
          %s366 = scalar_select %p365, %s28, 1
          %s367 = smul.addr %s366, 8
          %s368 = smul.addr %s364, 16
          %s369 = sadd.s32 %s367, %s368
          %s370 = smul.addr %s369, 8
          %s371 = scalar_lea.vmem %s1, %s370
        $region56: #{tpu_custom_call.1} parent=47 // pred_fallthru
          _
        // Predicated region
        $region57: #{tpu_custom_call.1} parent=47 // pred_check
          %p372 = pneg %p108
        $region58: #{tpu_custom_call.1} parent=47 // pred_check_branch
          %374 = sbr.rel (%p372) target = $region60
        $region59: #{tpu_custom_call.1} parent=47 // pred_region
          %p375 = scmp.lt.s32.totalorder %s27, 1
          %s376 = scalar_select %p375, %s27, 1
          %p377 = scmp.lt.s32.totalorder %s28, 1
          %s378 = scalar_select %p377, %s28, 1
          %s379 = smul.addr %s378, 16
          %s380 = smul.addr %s376, 32
          %s381 = sadd.s32 %s379, %s380
          %s382 = smul.addr %s381, 8
          %s383 = scalar_lea.vmem %s2, %s382
        $region60: #{tpu_custom_call.1} parent=47 // pred_fallthru
          _
      $region48: #{tpu_custom_call.1} parent=5 // pred_fallthru
        _
      %p384 = scmp.le.s32.totalorder 1, %s20
      %p385 = scmp.lt.s32.totalorder %s20, 5
      %p386 = pnand %p384, %p385
      %p387 = pneg %p386
      // Predicated region
      $region61: #{tpu_custom_call.1} parent=5 // pred_check
        _
      $region62: #{tpu_custom_call.1} parent=5 // pred_check_branch
        %389 = sbr.rel (%p386) target = $region64
      $region63: #{tpu_custom_call.1} parent=5 // pred_region
        %s390 = ssub.s32 %s20, 1
        %p391 = scmp.lt.s32.totalorder %s30, 1
        %s392 = scalar_select %p391, %s30, 1
        %s393 = smul.addr %s392, 8
        %s394 = scalar_lea.vmem %s0, %s393
        %p395 = pneg %p58
        %p396 = pneg %p55
        %p397 = scmp.lt.s32.totalorder %s29, 1
        %s398 = scalar_select %p397, %s29, 1
        %p399 = scmp.lt.s32.totalorder %s30, 1
        %s400 = scalar_select %p399, %s30, 1
        %s401 = smul.addr %s400, 8
        %s402 = smul.addr %s398, 16
        %s403 = sadd.s32 %s401, %s402
        %s404 = smul.addr %s403, 8
        %s405 = scalar_lea.vmem %s1, %s404
        %p406 = pneg %p86
        %p407 = pneg %p83
        %p408 = scmp.lt.s32.totalorder %s29, 1
        %s409 = scalar_select %p408, %s29, 1
        %p410 = scmp.lt.s32.totalorder %s30, 1
        %s411 = scalar_select %p410, %s30, 1
        %s412 = smul.addr %s411, 16
        %s413 = smul.addr %s409, 32
        %s414 = sadd.s32 %s412, %s413
        %s415 = smul.addr %s414, 8
        %s416 = scalar_lea.vmem %s2, %s415
        %p417 = pneg %p114
        %p418 = pneg %p111
        %p419 = pneg %p135
        %p420 = pneg %p132
        %p421 = pneg %p156
        %p422 = pneg %p153
        %p423 = pneg %p177
        %p424 = pneg %p174
        %p425 = pneg %p198
        %p426 = pneg %p195
        %p427 = pneg %p219
        %p428 = pneg %p216
        %p429 = pneg %p240
        %p430 = pneg %p237
        %p431 = pneg %p261
        %p432 = pneg %p258
        %p433 = pneg %p282
        %p434 = pneg %p279
        %p435 = pneg %p310
        %p436 = pneg %p307
        %s437 = sand.u32 %s297, 1
        %s438 = scalar_lea.sflag [#allocation3], %s437
        %s439 = sand.u32 %s297, 1
        %s440 = smul.addr %s439, 64
        %s441 = scalar_lea.vmem [#allocation2], %s440
        %p442 = scmp.lt.s32.totalorder %s30, 1
        %s443 = scalar_select %p442, %s30, 1
        %s444 = smul.addr %s443, 8
        %s445 = scalar_lea.vmem %s0, %s444
        %p446 = scmp.lt.s32.totalorder %s29, 1
        %s447 = scalar_select %p446, %s29, 1
        %p448 = scmp.lt.s32.totalorder %s30, 1
        %s449 = scalar_select %p448, %s30, 1
        %s450 = smul.addr %s449, 8
        %s451 = smul.addr %s447, 16
        %s452 = sadd.s32 %s450, %s451
        %s453 = smul.addr %s452, 8
        %s454 = scalar_lea.vmem %s1, %s453
        %p455 = scmp.lt.s32.totalorder %s29, 1
        %s456 = scalar_select %p455, %s29, 1
        %p457 = scmp.lt.s32.totalorder %s30, 1
        %s458 = scalar_select %p457, %s30, 1
        %s459 = smul.addr %s458, 16
        %s460 = smul.addr %s456, 32
        %s461 = sadd.s32 %s459, %s460
        %s462 = smul.addr %s461, 8
        %s463 = scalar_lea.vmem %s2, %s462
        %v464 = vld [vmem:[%s454] sm:$0xff]
        %v465 = vld [vmem:[%s454 + $0x10] sm:$0xff]
        %v466 = vld [vmem:[%s454 + $0x20] sm:$0xff]
        %v467 = vld [vmem:[%s454 + $0x30] sm:$0xff]
        %v468 = vcombine.low %v464, %v466
        %v469 = vcombine.high %v464, %v466
        %v471 = vunpack.c.l.s4 1983009808
        %v472 = vunpack.c.0.s8 %v471
        %v473 = vlaneseq
        %v474 = vshrl.u32 %v473, 7
        %v475 = vsub.s32 %v472, %v474
        %v476 = vrot.slane %v468, %v475
        %v478 = vunpack.c.l.s4 1983009808
        %v479 = vunpack.c.0.s8 %v478
        %v480 = vlaneseq
        %v481 = vshrl.u32 %v480, 7
        %v482 = vsub.s32 %v479, %v481
        %v483 = vrot.slane %v469, %v482
        %v484 = vcombine.low %v465, %v467
        %v485 = vcombine.high %v465, %v467
        %v487 = vunpack.c.l.s4 1983009808
        %v488 = vunpack.c.0.s8 %v487
        %v489 = vlaneseq
        %v490 = vshrl.u32 %v489, 7
        %v491 = vsub.s32 %v488, %v490
        %v492 = vrot.slane %v484, %v491
        %v494 = vunpack.c.l.s4 1983009808
        %v495 = vunpack.c.0.s8 %v494
        %v496 = vlaneseq
        %v497 = vshrl.u32 %v496, 7
        %v498 = vsub.s32 %v495, %v497
        %v499 = vrot.slane %v485, %v498
        %v500 = vcombine.low %v476, %v492
        %v501 = vcombine.high %v476, %v492
        %v503 = vunpack.c.l.s4 1934713408
        %v504 = vunpack.c.0.s8 %v503
        %v505 = vlaneseq
        %v506 = vshrl.u32 %v505, 7
        %v507 = vsub.s32 %v504, %v506
        %v508 = vrot.slane %v500, %v507
        %v510 = vunpack.c.l.s4 1934713408
        %v511 = vunpack.c.0.s8 %v510
        %v512 = vlaneseq
        %v513 = vshrl.u32 %v512, 7
        %v514 = vsub.s32 %v511, %v513
        %v515 = vrot.slane %v501, %v514
        %v516 = vcombine.low %v483, %v499
        %v517 = vcombine.high %v483, %v499
        %v519 = vunpack.c.l.s4 1934713408
        %v520 = vunpack.c.0.s8 %v519
        %v521 = vlaneseq
        %v522 = vshrl.u32 %v521, 7
        %v523 = vsub.s32 %v520, %v522
        %v524 = vrot.slane %v516, %v523
        %v526 = vunpack.c.l.s4 1934713408
        %v527 = vunpack.c.0.s8 %v526
        %v528 = vlaneseq
        %v529 = vshrl.u32 %v528, 7
        %v530 = vsub.s32 %v527, %v529
        %v531 = vrot.slane %v517, %v530
        %v532 = vcombine.high %v508, 0.0
        %v533 = vcombine.high %v515, 0.0
        %v534 = vcombine.high %v524, 0.0
        %v535 = vcombine.high %v531, 0.0
        %537 = vrot.lane.b32.xlu0 %v532, 16
        %v538 = vpop.permute.xlu0 %537
        %541 = vrot.lane.b32.xlu0 %v515, 32
        %v542 = vpop.permute.xlu0 %541
        %545 = vrot.lane.b32.xlu0 %v533, 48
        %v546 = vpop.permute.xlu0 %545
        %549 = vrot.lane.b32.xlu0 %v524, 64
        %v550 = vpop.permute.xlu0 %549
        %553 = vrot.lane.b32.xlu0 %v534, 80
        %v554 = vpop.permute.xlu0 %553
        %557 = vrot.lane.b32.xlu0 %v531, 96
        %v558 = vpop.permute.xlu0 %557
        %561 = vrot.lane.b32.xlu0 %v535, 112
        %v562 = vpop.permute.xlu0 %561
        %vm564 = vcmask 130048
        %v565 = vsel %vm564, %v508, %v538
        %vm566 = vcmask 261120
        %v567 = vsel %vm566, %v565, %v542
        %vm568 = vcmask 392192
        %v569 = vsel %vm568, %v567, %v546
        %vm570 = vcmask 523264
        %v571 = vsel %vm570, %v569, %v550
        %vm572 = vcmask 654336
        %v573 = vsel %vm572, %v571, %v554
        %vm574 = vcmask 785408
        %v575 = vsel %vm574, %v573, %v558
        %vm576 = vcmask 916480
        %v577 = vsel %vm576, %v575, %v562
        %582 = vrot.lane.b32.xlu0 %v464, 127
        %v583 = vpop.permute.xlu0 %582
        %584 = vrot.lane.b32.xlu0 %v465, 127
        %v585 = vpop.permute.xlu0 %584
        %586 = vrot.lane.b32.xlu0 %v466, 127
        %v587 = vpop.permute.xlu0 %586
        %588 = vrot.lane.b32.xlu0 %v467, 127
        %v589 = vpop.permute.xlu0 %588
        %v594 = vcombine.low %v583, %v587
        %v595 = vcombine.high %v583, %v587
        %v597 = vunpack.c.l.s4 1983009808
        %v598 = vunpack.c.0.s8 %v597
        %v599 = vlaneseq
        %v600 = vshrl.u32 %v599, 7
        %v601 = vsub.s32 %v598, %v600
        %v602 = vrot.slane %v594, %v601
        %v604 = vunpack.c.l.s4 1983009808
        %v605 = vunpack.c.0.s8 %v604
        %v606 = vlaneseq
        %v607 = vshrl.u32 %v606, 7
        %v608 = vsub.s32 %v605, %v607
        %v609 = vrot.slane %v595, %v608
        %v610 = vcombine.low %v585, %v589
        %v611 = vcombine.high %v585, %v589
        %v613 = vunpack.c.l.s4 1983009808
        %v614 = vunpack.c.0.s8 %v613
        %v615 = vlaneseq
        %v616 = vshrl.u32 %v615, 7
        %v617 = vsub.s32 %v614, %v616
        %v618 = vrot.slane %v610, %v617
        %v620 = vunpack.c.l.s4 1983009808
        %v621 = vunpack.c.0.s8 %v620
        %v622 = vlaneseq
        %v623 = vshrl.u32 %v622, 7
        %v624 = vsub.s32 %v621, %v623
        %v625 = vrot.slane %v611, %v624
        %v626 = vcombine.low %v602, %v618
        %v627 = vcombine.high %v602, %v618
        %v629 = vunpack.c.l.s4 1934713408
        %v630 = vunpack.c.0.s8 %v629
        %v631 = vlaneseq
        %v632 = vshrl.u32 %v631, 7
        %v633 = vsub.s32 %v630, %v632
        %v634 = vrot.slane %v626, %v633
        %v636 = vunpack.c.l.s4 1934713408
        %v637 = vunpack.c.0.s8 %v636
        %v638 = vlaneseq
        %v639 = vshrl.u32 %v638, 7
        %v640 = vsub.s32 %v637, %v639
        %v641 = vrot.slane %v627, %v640
        %v642 = vcombine.low %v609, %v625
        %v643 = vcombine.high %v609, %v625
        %v645 = vunpack.c.l.s4 1934713408
        %v646 = vunpack.c.0.s8 %v645
        %v647 = vlaneseq
        %v648 = vshrl.u32 %v647, 7
        %v649 = vsub.s32 %v646, %v648
        %v650 = vrot.slane %v642, %v649
        %v652 = vunpack.c.l.s4 1934713408
        %v653 = vunpack.c.0.s8 %v652
        %v654 = vlaneseq
        %v655 = vshrl.u32 %v654, 7
        %v656 = vsub.s32 %v653, %v655
        %v657 = vrot.slane %v643, %v656
        %v658 = vcombine.high %v634, 0.0
        %v659 = vcombine.high %v641, 0.0
        %v660 = vcombine.high %v650, 0.0
        %v661 = vcombine.high %v657, 0.0
        %663 = vrot.lane.b32.xlu0 %v658, 16
        %v664 = vpop.permute.xlu0 %663
        %667 = vrot.lane.b32.xlu0 %v641, 32
        %v668 = vpop.permute.xlu0 %667
        %671 = vrot.lane.b32.xlu0 %v659, 48
        %v672 = vpop.permute.xlu0 %671
        %675 = vrot.lane.b32.xlu0 %v650, 64
        %v676 = vpop.permute.xlu0 %675
        %679 = vrot.lane.b32.xlu0 %v660, 80
        %v680 = vpop.permute.xlu0 %679
        %683 = vrot.lane.b32.xlu0 %v657, 96
        %v684 = vpop.permute.xlu0 %683
        %687 = vrot.lane.b32.xlu0 %v661, 112
        %v688 = vpop.permute.xlu0 %687
        %v690 = vsel %vm564, %v634, %v664
        %v691 = vsel %vm566, %v690, %v668
        %v692 = vsel %vm568, %v691, %v672
        %v693 = vsel %vm570, %v692, %v676
        %v694 = vsel %vm572, %v693, %v680
        %v695 = vsel %vm574, %v694, %v684
        %v696 = vsel %vm576, %v695, %v688
        %697 = vrot.lane.b32.xlu0 %v464, 126
        %v698 = vpop.permute.xlu0 %697
        %699 = vrot.lane.b32.xlu0 %v465, 126
        %v700 = vpop.permute.xlu0 %699
        %701 = vrot.lane.b32.xlu0 %v466, 126
        %v702 = vpop.permute.xlu0 %701
        %703 = vrot.lane.b32.xlu0 %v467, 126
        %v704 = vpop.permute.xlu0 %703
        %v709 = vcombine.low %v698, %v702
        %v710 = vcombine.high %v698, %v702
        %v712 = vunpack.c.l.s4 1983009808
        %v713 = vunpack.c.0.s8 %v712
        %v714 = vlaneseq
        %v715 = vshrl.u32 %v714, 7
        %v716 = vsub.s32 %v713, %v715
        %v717 = vrot.slane %v709, %v716
        %v719 = vunpack.c.l.s4 1983009808
        %v720 = vunpack.c.0.s8 %v719
        %v721 = vlaneseq
        %v722 = vshrl.u32 %v721, 7
        %v723 = vsub.s32 %v720, %v722
        %v724 = vrot.slane %v710, %v723
        %v725 = vcombine.low %v700, %v704
        %v726 = vcombine.high %v700, %v704
        %v728 = vunpack.c.l.s4 1983009808
        %v729 = vunpack.c.0.s8 %v728
        %v730 = vlaneseq
        %v731 = vshrl.u32 %v730, 7
        %v732 = vsub.s32 %v729, %v731
        %v733 = vrot.slane %v725, %v732
        %v735 = vunpack.c.l.s4 1983009808
        %v736 = vunpack.c.0.s8 %v735
        %v737 = vlaneseq
        %v738 = vshrl.u32 %v737, 7
        %v739 = vsub.s32 %v736, %v738
        %v740 = vrot.slane %v726, %v739
        %v741 = vcombine.low %v717, %v733
        %v742 = vcombine.high %v717, %v733
        %v744 = vunpack.c.l.s4 1934713408
        %v745 = vunpack.c.0.s8 %v744
        %v746 = vlaneseq
        %v747 = vshrl.u32 %v746, 7
        %v748 = vsub.s32 %v745, %v747
        %v749 = vrot.slane %v741, %v748
        %v751 = vunpack.c.l.s4 1934713408
        %v752 = vunpack.c.0.s8 %v751
        %v753 = vlaneseq
        %v754 = vshrl.u32 %v753, 7
        %v755 = vsub.s32 %v752, %v754
        %v756 = vrot.slane %v742, %v755
        %v757 = vcombine.low %v724, %v740
        %v758 = vcombine.high %v724, %v740
        %v760 = vunpack.c.l.s4 1934713408
        %v761 = vunpack.c.0.s8 %v760
        %v762 = vlaneseq
        %v763 = vshrl.u32 %v762, 7
        %v764 = vsub.s32 %v761, %v763
        %v765 = vrot.slane %v757, %v764
        %v767 = vunpack.c.l.s4 1934713408
        %v768 = vunpack.c.0.s8 %v767
        %v769 = vlaneseq
        %v770 = vshrl.u32 %v769, 7
        %v771 = vsub.s32 %v768, %v770
        %v772 = vrot.slane %v758, %v771
        %v773 = vcombine.high %v749, 0.0
        %v774 = vcombine.high %v756, 0.0
        %v775 = vcombine.high %v765, 0.0
        %v776 = vcombine.high %v772, 0.0
        %778 = vrot.lane.b32.xlu0 %v773, 16
        %v779 = vpop.permute.xlu0 %778
        %782 = vrot.lane.b32.xlu0 %v756, 32
        %v783 = vpop.permute.xlu0 %782
        %786 = vrot.lane.b32.xlu0 %v774, 48
        %v787 = vpop.permute.xlu0 %786
        %790 = vrot.lane.b32.xlu0 %v765, 64
        %v791 = vpop.permute.xlu0 %790
        %794 = vrot.lane.b32.xlu0 %v775, 80
        %v795 = vpop.permute.xlu0 %794
        %798 = vrot.lane.b32.xlu0 %v772, 96
        %v799 = vpop.permute.xlu0 %798
        %802 = vrot.lane.b32.xlu0 %v776, 112
        %v803 = vpop.permute.xlu0 %802
        %v805 = vsel %vm564, %v749, %v779
        %v806 = vsel %vm566, %v805, %v783
        %v807 = vsel %vm568, %v806, %v787
        %v808 = vsel %vm570, %v807, %v791
        %v809 = vsel %vm572, %v808, %v795
        %v810 = vsel %vm574, %v809, %v799
        %v811 = vsel %vm576, %v810, %v803
        %v812 = vld [vmem:[%s454 + $0x1] sm:$0xff]
        %v813 = vld [vmem:[%s454 + $0x11] sm:$0xff]
        %v814 = vld [vmem:[%s454 + $0x21] sm:$0xff]
        %v815 = vld [vmem:[%s454 + $0x31] sm:$0xff]
        %v816 = vcombine.low %v812, %v814
        %v817 = vcombine.high %v812, %v814
        %v819 = vunpack.c.l.s4 1983009808
        %v820 = vunpack.c.0.s8 %v819
        %v821 = vlaneseq
        %v822 = vshrl.u32 %v821, 7
        %v823 = vsub.s32 %v820, %v822
        %v824 = vrot.slane %v816, %v823
        %v826 = vunpack.c.l.s4 1983009808
        %v827 = vunpack.c.0.s8 %v826
        %v828 = vlaneseq
        %v829 = vshrl.u32 %v828, 7
        %v830 = vsub.s32 %v827, %v829
        %v831 = vrot.slane %v817, %v830
        %v832 = vcombine.low %v813, %v815
        %v833 = vcombine.high %v813, %v815
        %v835 = vunpack.c.l.s4 1983009808
        %v836 = vunpack.c.0.s8 %v835
        %v837 = vlaneseq
        %v838 = vshrl.u32 %v837, 7
        %v839 = vsub.s32 %v836, %v838
        %v840 = vrot.slane %v832, %v839
        %v842 = vunpack.c.l.s4 1983009808
        %v843 = vunpack.c.0.s8 %v842
        %v844 = vlaneseq
        %v845 = vshrl.u32 %v844, 7
        %v846 = vsub.s32 %v843, %v845
        %v847 = vrot.slane %v833, %v846
        %v848 = vcombine.low %v824, %v840
        %v849 = vcombine.high %v824, %v840
        %v851 = vunpack.c.l.s4 1934713408
        %v852 = vunpack.c.0.s8 %v851
        %v853 = vlaneseq
        %v854 = vshrl.u32 %v853, 7
        %v855 = vsub.s32 %v852, %v854
        %v856 = vrot.slane %v848, %v855
        %v858 = vunpack.c.l.s4 1934713408
        %v859 = vunpack.c.0.s8 %v858
        %v860 = vlaneseq
        %v861 = vshrl.u32 %v860, 7
        %v862 = vsub.s32 %v859, %v861
        %v863 = vrot.slane %v849, %v862
        %v864 = vcombine.low %v831, %v847
        %v865 = vcombine.high %v831, %v847
        %v867 = vunpack.c.l.s4 1934713408
        %v868 = vunpack.c.0.s8 %v867
        %v869 = vlaneseq
        %v870 = vshrl.u32 %v869, 7
        %v871 = vsub.s32 %v868, %v870
        %v872 = vrot.slane %v864, %v871
        %v874 = vunpack.c.l.s4 1934713408
        %v875 = vunpack.c.0.s8 %v874
        %v876 = vlaneseq
        %v877 = vshrl.u32 %v876, 7
        %v878 = vsub.s32 %v875, %v877
        %v879 = vrot.slane %v865, %v878
        %v880 = vcombine.high %v856, 0.0
        %v881 = vcombine.high %v863, 0.0
        %v882 = vcombine.high %v872, 0.0
        %v883 = vcombine.high %v879, 0.0
        %885 = vrot.lane.b32.xlu0 %v880, 16
        %v886 = vpop.permute.xlu0 %885
        %889 = vrot.lane.b32.xlu0 %v863, 32
        %v890 = vpop.permute.xlu0 %889
        %893 = vrot.lane.b32.xlu0 %v881, 48
        %v894 = vpop.permute.xlu0 %893
        %897 = vrot.lane.b32.xlu0 %v872, 64
        %v898 = vpop.permute.xlu0 %897
        %901 = vrot.lane.b32.xlu0 %v882, 80
        %v902 = vpop.permute.xlu0 %901
        %905 = vrot.lane.b32.xlu0 %v879, 96
        %v906 = vpop.permute.xlu0 %905
        %909 = vrot.lane.b32.xlu0 %v883, 112
        %v910 = vpop.permute.xlu0 %909
        %v912 = vsel %vm564, %v856, %v886
        %v913 = vsel %vm566, %v912, %v890
        %v914 = vsel %vm568, %v913, %v894
        %v915 = vsel %vm570, %v914, %v898
        %v916 = vsel %vm572, %v915, %v902
        %v917 = vsel %vm574, %v916, %v906
        %v918 = vsel %vm576, %v917, %v910
        %923 = vrot.lane.b32.xlu0 %v812, 127
        %v924 = vpop.permute.xlu0 %923
        %925 = vrot.lane.b32.xlu0 %v813, 127
        %v926 = vpop.permute.xlu0 %925
        %927 = vrot.lane.b32.xlu0 %v814, 127
        %v928 = vpop.permute.xlu0 %927
        %929 = vrot.lane.b32.xlu0 %v815, 127
        %v930 = vpop.permute.xlu0 %929
        %v935 = vcombine.low %v924, %v928
        %v936 = vcombine.high %v924, %v928
        %v938 = vunpack.c.l.s4 1983009808
        %v939 = vunpack.c.0.s8 %v938
        %v940 = vlaneseq
        %v941 = vshrl.u32 %v940, 7
        %v942 = vsub.s32 %v939, %v941
        %v943 = vrot.slane %v935, %v942
        %v945 = vunpack.c.l.s4 1983009808
        %v946 = vunpack.c.0.s8 %v945
        %v947 = vlaneseq
        %v948 = vshrl.u32 %v947, 7
        %v949 = vsub.s32 %v946, %v948
        %v950 = vrot.slane %v936, %v949
        %v951 = vcombine.low %v926, %v930
        %v952 = vcombine.high %v926, %v930
        %v954 = vunpack.c.l.s4 1983009808
        %v955 = vunpack.c.0.s8 %v954
        %v956 = vlaneseq
        %v957 = vshrl.u32 %v956, 7
        %v958 = vsub.s32 %v955, %v957
        %v959 = vrot.slane %v951, %v958
        %v961 = vunpack.c.l.s4 1983009808
        %v962 = vunpack.c.0.s8 %v961
        %v963 = vlaneseq
        %v964 = vshrl.u32 %v963, 7
        %v965 = vsub.s32 %v962, %v964
        %v966 = vrot.slane %v952, %v965
        %v967 = vcombine.low %v943, %v959
        %v968 = vcombine.high %v943, %v959
        %v970 = vunpack.c.l.s4 1934713408
        %v971 = vunpack.c.0.s8 %v970
        %v972 = vlaneseq
        %v973 = vshrl.u32 %v972, 7
        %v974 = vsub.s32 %v971, %v973
        %v975 = vrot.slane %v967, %v974
        %v977 = vunpack.c.l.s4 1934713408
        %v978 = vunpack.c.0.s8 %v977
        %v979 = vlaneseq
        %v980 = vshrl.u32 %v979, 7
        %v981 = vsub.s32 %v978, %v980
        %v982 = vrot.slane %v968, %v981
        %v983 = vcombine.low %v950, %v966
        %v984 = vcombine.high %v950, %v966
        %v986 = vunpack.c.l.s4 1934713408
        %v987 = vunpack.c.0.s8 %v986
        %v988 = vlaneseq
        %v989 = vshrl.u32 %v988, 7
        %v990 = vsub.s32 %v987, %v989
        %v991 = vrot.slane %v983, %v990
        %v993 = vunpack.c.l.s4 1934713408
        %v994 = vunpack.c.0.s8 %v993
        %v995 = vlaneseq
        %v996 = vshrl.u32 %v995, 7
        %v997 = vsub.s32 %v994, %v996
        %v998 = vrot.slane %v984, %v997
        %v999 = vcombine.high %v975, 0.0
        %v1000 = vcombine.high %v982, 0.0
        %v1001 = vcombine.high %v991, 0.0
        %v1002 = vcombine.high %v998, 0.0
        %1004 = vrot.lane.b32.xlu0 %v999, 16
        %v1005 = vpop.permute.xlu0 %1004
        %1008 = vrot.lane.b32.xlu0 %v982, 32
        %v1009 = vpop.permute.xlu0 %1008
        %1012 = vrot.lane.b32.xlu0 %v1000, 48
        %v1013 = vpop.permute.xlu0 %1012
        %1016 = vrot.lane.b32.xlu0 %v991, 64
        %v1017 = vpop.permute.xlu0 %1016
        %1020 = vrot.lane.b32.xlu0 %v1001, 80
        %v1021 = vpop.permute.xlu0 %1020
        %1024 = vrot.lane.b32.xlu0 %v998, 96
        %v1025 = vpop.permute.xlu0 %1024
        %1028 = vrot.lane.b32.xlu0 %v1002, 112
        %v1029 = vpop.permute.xlu0 %1028
        %v1031 = vsel %vm564, %v975, %v1005
        %v1032 = vsel %vm566, %v1031, %v1009
        %v1033 = vsel %vm568, %v1032, %v1013
        %v1034 = vsel %vm570, %v1033, %v1017
        %v1035 = vsel %vm572, %v1034, %v1021
        %v1036 = vsel %vm574, %v1035, %v1025
        %v1037 = vsel %vm576, %v1036, %v1029
        %1038 = vrot.lane.b32.xlu0 %v812, 126
        %v1039 = vpop.permute.xlu0 %1038
        %1040 = vrot.lane.b32.xlu0 %v813, 126
        %v1041 = vpop.permute.xlu0 %1040
        %1042 = vrot.lane.b32.xlu0 %v814, 126
        %v1043 = vpop.permute.xlu0 %1042
        %1044 = vrot.lane.b32.xlu0 %v815, 126
        %v1045 = vpop.permute.xlu0 %1044
        %v1050 = vcombine.low %v1039, %v1043
        %v1051 = vcombine.high %v1039, %v1043
        %v1053 = vunpack.c.l.s4 1983009808
        %v1054 = vunpack.c.0.s8 %v1053
        %v1055 = vlaneseq
        %v1056 = vshrl.u32 %v1055, 7
        %v1057 = vsub.s32 %v1054, %v1056
        %v1058 = vrot.slane %v1050, %v1057
        %v1060 = vunpack.c.l.s4 1983009808
        %v1061 = vunpack.c.0.s8 %v1060
        %v1062 = vlaneseq
        %v1063 = vshrl.u32 %v1062, 7
        %v1064 = vsub.s32 %v1061, %v1063
        %v1065 = vrot.slane %v1051, %v1064
        %v1066 = vcombine.low %v1041, %v1045
        %v1067 = vcombine.high %v1041, %v1045
        %v1069 = vunpack.c.l.s4 1983009808
        %v1070 = vunpack.c.0.s8 %v1069
        %v1071 = vlaneseq
        %v1072 = vshrl.u32 %v1071, 7
        %v1073 = vsub.s32 %v1070, %v1072
        %v1074 = vrot.slane %v1066, %v1073
        %v1076 = vunpack.c.l.s4 1983009808
        %v1077 = vunpack.c.0.s8 %v1076
        %v1078 = vlaneseq
        %v1079 = vshrl.u32 %v1078, 7
        %v1080 = vsub.s32 %v1077, %v1079
        %v1081 = vrot.slane %v1067, %v1080
        %v1082 = vcombine.low %v1058, %v1074
        %v1083 = vcombine.high %v1058, %v1074
        %v1085 = vunpack.c.l.s4 1934713408
        %v1086 = vunpack.c.0.s8 %v1085
        %v1087 = vlaneseq
        %v1088 = vshrl.u32 %v1087, 7
        %v1089 = vsub.s32 %v1086, %v1088
        %v1090 = vrot.slane %v1082, %v1089
        %v1092 = vunpack.c.l.s4 1934713408
        %v1093 = vunpack.c.0.s8 %v1092
        %v1094 = vlaneseq
        %v1095 = vshrl.u32 %v1094, 7
        %v1096 = vsub.s32 %v1093, %v1095
        %v1097 = vrot.slane %v1083, %v1096
        %v1098 = vcombine.low %v1065, %v1081
        %v1099 = vcombine.high %v1065, %v1081
        %v1101 = vunpack.c.l.s4 1934713408
        %v1102 = vunpack.c.0.s8 %v1101
        %v1103 = vlaneseq
        %v1104 = vshrl.u32 %v1103, 7
        %v1105 = vsub.s32 %v1102, %v1104
        %v1106 = vrot.slane %v1098, %v1105
        %v1108 = vunpack.c.l.s4 1934713408
        %v1109 = vunpack.c.0.s8 %v1108
        %v1110 = vlaneseq
        %v1111 = vshrl.u32 %v1110, 7
        %v1112 = vsub.s32 %v1109, %v1111
        %v1113 = vrot.slane %v1099, %v1112
        %v1114 = vcombine.high %v1090, 0.0
        %v1115 = vcombine.high %v1097, 0.0
        %v1116 = vcombine.high %v1106, 0.0
        %v1117 = vcombine.high %v1113, 0.0
        %1119 = vrot.lane.b32.xlu0 %v1114, 16
        %v1120 = vpop.permute.xlu0 %1119
        %1123 = vrot.lane.b32.xlu0 %v1097, 32
        %v1124 = vpop.permute.xlu0 %1123
        %1127 = vrot.lane.b32.xlu0 %v1115, 48
        %v1128 = vpop.permute.xlu0 %1127
        %1131 = vrot.lane.b32.xlu0 %v1106, 64
        %v1132 = vpop.permute.xlu0 %1131
        %1135 = vrot.lane.b32.xlu0 %v1116, 80
        %v1136 = vpop.permute.xlu0 %1135
        %1139 = vrot.lane.b32.xlu0 %v1113, 96
        %v1140 = vpop.permute.xlu0 %1139
        %1143 = vrot.lane.b32.xlu0 %v1117, 112
        %v1144 = vpop.permute.xlu0 %1143
        %v1146 = vsel %vm564, %v1090, %v1120
        %v1147 = vsel %vm566, %v1146, %v1124
        %v1148 = vsel %vm568, %v1147, %v1128
        %v1149 = vsel %vm570, %v1148, %v1132
        %v1150 = vsel %vm572, %v1149, %v1136
        %v1151 = vsel %vm574, %v1150, %v1140
        %v1152 = vsel %vm576, %v1151, %v1144
        %v1153 = vld [vmem:[%s454 + $0x2] sm:$0xff]
        %v1154 = vld [vmem:[%s454 + $0x12] sm:$0xff]
        %v1155 = vld [vmem:[%s454 + $0x22] sm:$0xff]
        %v1156 = vld [vmem:[%s454 + $0x32] sm:$0xff]
        %v1157 = vcombine.low %v1153, %v1155
        %v1158 = vcombine.high %v1153, %v1155
        %v1160 = vunpack.c.l.s4 1983009808
        %v1161 = vunpack.c.0.s8 %v1160
        %v1162 = vlaneseq
        %v1163 = vshrl.u32 %v1162, 7
        %v1164 = vsub.s32 %v1161, %v1163
        %v1165 = vrot.slane %v1157, %v1164
        %v1167 = vunpack.c.l.s4 1983009808
        %v1168 = vunpack.c.0.s8 %v1167
        %v1169 = vlaneseq
        %v1170 = vshrl.u32 %v1169, 7
        %v1171 = vsub.s32 %v1168, %v1170
        %v1172 = vrot.slane %v1158, %v1171
        %v1173 = vcombine.low %v1154, %v1156
        %v1174 = vcombine.high %v1154, %v1156
        %v1176 = vunpack.c.l.s4 1983009808
        %v1177 = vunpack.c.0.s8 %v1176
        %v1178 = vlaneseq
        %v1179 = vshrl.u32 %v1178, 7
        %v1180 = vsub.s32 %v1177, %v1179
        %v1181 = vrot.slane %v1173, %v1180
        %v1183 = vunpack.c.l.s4 1983009808
        %v1184 = vunpack.c.0.s8 %v1183
        %v1185 = vlaneseq
        %v1186 = vshrl.u32 %v1185, 7
        %v1187 = vsub.s32 %v1184, %v1186
        %v1188 = vrot.slane %v1174, %v1187
        %v1189 = vcombine.low %v1165, %v1181
        %v1190 = vcombine.high %v1165, %v1181
        %v1192 = vunpack.c.l.s4 1934713408
        %v1193 = vunpack.c.0.s8 %v1192
        %v1194 = vlaneseq
        %v1195 = vshrl.u32 %v1194, 7
        %v1196 = vsub.s32 %v1193, %v1195
        %v1197 = vrot.slane %v1189, %v1196
        %v1199 = vunpack.c.l.s4 1934713408
        %v1200 = vunpack.c.0.s8 %v1199
        %v1201 = vlaneseq
        %v1202 = vshrl.u32 %v1201, 7
        %v1203 = vsub.s32 %v1200, %v1202
        %v1204 = vrot.slane %v1190, %v1203
        %v1205 = vcombine.low %v1172, %v1188
        %v1206 = vcombine.high %v1172, %v1188
        %v1208 = vunpack.c.l.s4 1934713408
        %v1209 = vunpack.c.0.s8 %v1208
        %v1210 = vlaneseq
        %v1211 = vshrl.u32 %v1210, 7
        %v1212 = vsub.s32 %v1209, %v1211
        %v1213 = vrot.slane %v1205, %v1212
        %v1215 = vunpack.c.l.s4 1934713408
        %v1216 = vunpack.c.0.s8 %v1215
        %v1217 = vlaneseq
        %v1218 = vshrl.u32 %v1217, 7
        %v1219 = vsub.s32 %v1216, %v1218
        %v1220 = vrot.slane %v1206, %v1219
        %v1221 = vcombine.high %v1197, 0.0
        %v1222 = vcombine.high %v1204, 0.0
        %v1223 = vcombine.high %v1213, 0.0
        %v1224 = vcombine.high %v1220, 0.0
        %1226 = vrot.lane.b32.xlu0 %v1221, 16
        %v1227 = vpop.permute.xlu0 %1226
        %1230 = vrot.lane.b32.xlu0 %v1204, 32
        %v1231 = vpop.permute.xlu0 %1230
        %1234 = vrot.lane.b32.xlu0 %v1222, 48
        %v1235 = vpop.permute.xlu0 %1234
        %1238 = vrot.lane.b32.xlu0 %v1213, 64
        %v1239 = vpop.permute.xlu0 %1238
        %1242 = vrot.lane.b32.xlu0 %v1223, 80
        %v1243 = vpop.permute.xlu0 %1242
        %1246 = vrot.lane.b32.xlu0 %v1220, 96
        %v1247 = vpop.permute.xlu0 %1246
        %1250 = vrot.lane.b32.xlu0 %v1224, 112
        %v1251 = vpop.permute.xlu0 %1250
        %v1253 = vsel %vm564, %v1197, %v1227
        %v1254 = vsel %vm566, %v1253, %v1231
        %v1255 = vsel %vm568, %v1254, %v1235
        %v1256 = vsel %vm570, %v1255, %v1239
        %v1257 = vsel %vm572, %v1256, %v1243
        %v1258 = vsel %vm574, %v1257, %v1247
        %v1259 = vsel %vm576, %v1258, %v1251
        %1264 = vrot.lane.b32.xlu0 %v1153, 127
        %v1265 = vpop.permute.xlu0 %1264
        %1266 = vrot.lane.b32.xlu0 %v1154, 127
        %v1267 = vpop.permute.xlu0 %1266
        %1268 = vrot.lane.b32.xlu0 %v1155, 127
        %v1269 = vpop.permute.xlu0 %1268
        %1270 = vrot.lane.b32.xlu0 %v1156, 127
        %v1271 = vpop.permute.xlu0 %1270
        %v1276 = vcombine.low %v1265, %v1269
        %v1277 = vcombine.high %v1265, %v1269
        %v1279 = vunpack.c.l.s4 1983009808
        %v1280 = vunpack.c.0.s8 %v1279
        %v1281 = vlaneseq
        %v1282 = vshrl.u32 %v1281, 7
        %v1283 = vsub.s32 %v1280, %v1282
        %v1284 = vrot.slane %v1276, %v1283
        %v1286 = vunpack.c.l.s4 1983009808
        %v1287 = vunpack.c.0.s8 %v1286
        %v1288 = vlaneseq
        %v1289 = vshrl.u32 %v1288, 7
        %v1290 = vsub.s32 %v1287, %v1289
        %v1291 = vrot.slane %v1277, %v1290
        %v1292 = vcombine.low %v1267, %v1271
        %v1293 = vcombine.high %v1267, %v1271
        %v1295 = vunpack.c.l.s4 1983009808
        %v1296 = vunpack.c.0.s8 %v1295
        %v1297 = vlaneseq
        %v1298 = vshrl.u32 %v1297, 7
        %v1299 = vsub.s32 %v1296, %v1298
        %v1300 = vrot.slane %v1292, %v1299
        %v1302 = vunpack.c.l.s4 1983009808
        %v1303 = vunpack.c.0.s8 %v1302
        %v1304 = vlaneseq
        %v1305 = vshrl.u32 %v1304, 7
        %v1306 = vsub.s32 %v1303, %v1305
        %v1307 = vrot.slane %v1293, %v1306
        %v1308 = vcombine.low %v1284, %v1300
        %v1309 = vcombine.high %v1284, %v1300
        %v1311 = vunpack.c.l.s4 1934713408
        %v1312 = vunpack.c.0.s8 %v1311
        %v1313 = vlaneseq
        %v1314 = vshrl.u32 %v1313, 7
        %v1315 = vsub.s32 %v1312, %v1314
        %v1316 = vrot.slane %v1308, %v1315
        %v1318 = vunpack.c.l.s4 1934713408
        %v1319 = vunpack.c.0.s8 %v1318
        %v1320 = vlaneseq
        %v1321 = vshrl.u32 %v1320, 7
        %v1322 = vsub.s32 %v1319, %v1321
        %v1323 = vrot.slane %v1309, %v1322
        %v1324 = vcombine.low %v1291, %v1307
        %v1325 = vcombine.high %v1291, %v1307
        %v1327 = vunpack.c.l.s4 1934713408
        %v1328 = vunpack.c.0.s8 %v1327
        %v1329 = vlaneseq
        %v1330 = vshrl.u32 %v1329, 7
        %v1331 = vsub.s32 %v1328, %v1330
        %v1332 = vrot.slane %v1324, %v1331
        %v1334 = vunpack.c.l.s4 1934713408
        %v1335 = vunpack.c.0.s8 %v1334
        %v1336 = vlaneseq
        %v1337 = vshrl.u32 %v1336, 7
        %v1338 = vsub.s32 %v1335, %v1337
        %v1339 = vrot.slane %v1325, %v1338
        %v1340 = vcombine.high %v1316, 0.0
        %v1341 = vcombine.high %v1323, 0.0
        %v1342 = vcombine.high %v1332, 0.0
        %v1343 = vcombine.high %v1339, 0.0
        %1345 = vrot.lane.b32.xlu0 %v1340, 16
        %v1346 = vpop.permute.xlu0 %1345
        %1349 = vrot.lane.b32.xlu0 %v1323, 32
        %v1350 = vpop.permute.xlu0 %1349
        %1353 = vrot.lane.b32.xlu0 %v1341, 48
        %v1354 = vpop.permute.xlu0 %1353
        %1357 = vrot.lane.b32.xlu0 %v1332, 64
        %v1358 = vpop.permute.xlu0 %1357
        %1361 = vrot.lane.b32.xlu0 %v1342, 80
        %v1362 = vpop.permute.xlu0 %1361
        %1365 = vrot.lane.b32.xlu0 %v1339, 96
        %v1366 = vpop.permute.xlu0 %1365
        %1369 = vrot.lane.b32.xlu0 %v1343, 112
        %v1370 = vpop.permute.xlu0 %1369
        %v1372 = vsel %vm564, %v1316, %v1346
        %v1373 = vsel %vm566, %v1372, %v1350
        %v1374 = vsel %vm568, %v1373, %v1354
        %v1375 = vsel %vm570, %v1374, %v1358
        %v1376 = vsel %vm572, %v1375, %v1362
        %v1377 = vsel %vm574, %v1376, %v1366
        %v1378 = vsel %vm576, %v1377, %v1370
        %1379 = vrot.lane.b32.xlu0 %v1153, 126
        %v1380 = vpop.permute.xlu0 %1379
        %1381 = vrot.lane.b32.xlu0 %v1154, 126
        %v1382 = vpop.permute.xlu0 %1381
        %1383 = vrot.lane.b32.xlu0 %v1155, 126
        %v1384 = vpop.permute.xlu0 %1383
        %1385 = vrot.lane.b32.xlu0 %v1156, 126
        %v1386 = vpop.permute.xlu0 %1385
        %v1391 = vcombine.low %v1380, %v1384
        %v1392 = vcombine.high %v1380, %v1384
        %v1394 = vunpack.c.l.s4 1983009808
        %v1395 = vunpack.c.0.s8 %v1394
        %v1396 = vlaneseq
        %v1397 = vshrl.u32 %v1396, 7
        %v1398 = vsub.s32 %v1395, %v1397
        %v1399 = vrot.slane %v1391, %v1398
        %v1401 = vunpack.c.l.s4 1983009808
        %v1402 = vunpack.c.0.s8 %v1401
        %v1403 = vlaneseq
        %v1404 = vshrl.u32 %v1403, 7
        %v1405 = vsub.s32 %v1402, %v1404
        %v1406 = vrot.slane %v1392, %v1405
        %v1407 = vcombine.low %v1382, %v1386
        %v1408 = vcombine.high %v1382, %v1386
        %v1410 = vunpack.c.l.s4 1983009808
        %v1411 = vunpack.c.0.s8 %v1410
        %v1412 = vlaneseq
        %v1413 = vshrl.u32 %v1412, 7
        %v1414 = vsub.s32 %v1411, %v1413
        %v1415 = vrot.slane %v1407, %v1414
        %v1417 = vunpack.c.l.s4 1983009808
        %v1418 = vunpack.c.0.s8 %v1417
        %v1419 = vlaneseq
        %v1420 = vshrl.u32 %v1419, 7
        %v1421 = vsub.s32 %v1418, %v1420
        %v1422 = vrot.slane %v1408, %v1421
        %v1423 = vcombine.low %v1399, %v1415
        %v1424 = vcombine.high %v1399, %v1415
        %v1426 = vunpack.c.l.s4 1934713408
        %v1427 = vunpack.c.0.s8 %v1426
        %v1428 = vlaneseq
        %v1429 = vshrl.u32 %v1428, 7
        %v1430 = vsub.s32 %v1427, %v1429
        %v1431 = vrot.slane %v1423, %v1430
        %v1433 = vunpack.c.l.s4 1934713408
        %v1434 = vunpack.c.0.s8 %v1433
        %v1435 = vlaneseq
        %v1436 = vshrl.u32 %v1435, 7
        %v1437 = vsub.s32 %v1434, %v1436
        %v1438 = vrot.slane %v1424, %v1437
        %v1439 = vcombine.low %v1406, %v1422
        %v1440 = vcombine.high %v1406, %v1422
        %v1442 = vunpack.c.l.s4 1934713408
        %v1443 = vunpack.c.0.s8 %v1442
        %v1444 = vlaneseq
        %v1445 = vshrl.u32 %v1444, 7
        %v1446 = vsub.s32 %v1443, %v1445
        %v1447 = vrot.slane %v1439, %v1446
        %v1449 = vunpack.c.l.s4 1934713408
        %v1450 = vunpack.c.0.s8 %v1449
        %v1451 = vlaneseq
        %v1452 = vshrl.u32 %v1451, 7
        %v1453 = vsub.s32 %v1450, %v1452
        %v1454 = vrot.slane %v1440, %v1453
        %v1455 = vcombine.high %v1431, 0.0
        %v1456 = vcombine.high %v1438, 0.0
        %v1457 = vcombine.high %v1447, 0.0
        %v1458 = vcombine.high %v1454, 0.0
        %1460 = vrot.lane.b32.xlu0 %v1455, 16
        %v1461 = vpop.permute.xlu0 %1460
        %1464 = vrot.lane.b32.xlu0 %v1438, 32
        %v1465 = vpop.permute.xlu0 %1464
        %1468 = vrot.lane.b32.xlu0 %v1456, 48
        %v1469 = vpop.permute.xlu0 %1468
        %1472 = vrot.lane.b32.xlu0 %v1447, 64
        %v1473 = vpop.permute.xlu0 %1472
        %1476 = vrot.lane.b32.xlu0 %v1457, 80
        %v1477 = vpop.permute.xlu0 %1476
        %1480 = vrot.lane.b32.xlu0 %v1454, 96
        %v1481 = vpop.permute.xlu0 %1480
        %1484 = vrot.lane.b32.xlu0 %v1458, 112
        %v1485 = vpop.permute.xlu0 %1484
        %v1487 = vsel %vm564, %v1431, %v1461
        %v1488 = vsel %vm566, %v1487, %v1465
        %v1489 = vsel %vm568, %v1488, %v1469
        %v1490 = vsel %vm570, %v1489, %v1473
        %v1491 = vsel %vm572, %v1490, %v1477
        %v1492 = vsel %vm574, %v1491, %v1481
        %v1493 = vsel %vm576, %v1492, %v1485
        %v1495 = vrot.slane %v696, 4
        %v1498 = vrot.slane %v918, 4
        %v1501 = vrot.slane %v1152, 4
        %v1504 = vrot.slane %v1378, 4
        %vm1506 = vcmask 1043456
        %v1507 = vsel %vm1506, %v577, %v1495
        %v1508 = vsel %vm1506, %v811, %v1498
        %v1509 = vsel %vm1506, %v1037, %v1501
        %v1510 = vsel %vm1506, %v1259, %v1504
        %v1511 = vld [vmem:[%s3] sm:$0xf]
        %v1512 = vld [vmem:[%s7] sm:$0xf]
        %1514 = vset.pattern.permute.xlu0 0
        %1515 = vperm.xlu0 %1514, %v1512
        %v1516 = vpop.permute.xlu0 %1515
        %vm1518 = vcmask 293888
        %v1520 = vsel %vm1518, %v1511, 0
        %v1523 = vsel %vm1506, %v1493, 0
        %1525 = vmatprep.subr.mxu0 0.0
        %v1526 = vand.u32 %v1507, 4294901760
        %1527 = vmatpush1.msra.mxu0 %v1526
        %1528 = vmatprep.subr.mxu0 0.0
        %v1529 = vand.u32 %v1508, 4294901760
        %1530 = vmatpush1.msra.mxu0 %v1529
        %1531 = vmatprep.subr.mxu0 0.0
        %v1532 = vand.u32 %v1509, 4294901760
        %1533 = vmatpush1.msra.mxu0 %v1532
        %1534 = vmatprep.subr.mxu0 0.0
        %v1535 = vand.u32 %v1510, 4294901760
        %1536 = vmatpush1.msra.mxu0 %v1535
        %1537 = vmatprep.subr.mxu0 0.0
        %v1538 = vand.u32 %v1523, 4294901760
        %1539 = vmatpush1.msra.mxu0 %v1538
        %1540 = vmatprep.subr.mxu0 0.0
        %1541 = vmatpush1.msra.mxu0 0.0
        %1542 = vmatprep.subr.mxu0 0.0
        %1543 = vmatpush1.msra.mxu0 0.0
        %1544 = vmatprep.subr.mxu0 0.0
        %1545 = vmatpush1.msra.mxu0 0.0
        %1546 = vmatprep.subr.mxu0 0.0
        %1547 = vmatpush1.msra.mxu0 0.0
        %1548 = vmatprep.subr.mxu0 0.0
        %1549 = vmatpush1.msra.mxu0 0.0
        %1550 = vmatprep.subr.mxu0 0.0
        %1551 = vmatpush1.msra.mxu0 0.0
        %1552 = vmatprep.subr.mxu0 0.0
        %1553 = vmatpush1.msra.mxu0 0.0
        %1554 = vmatprep.subr.mxu0 0.0
        %1555 = vmatpush1.msra.mxu0 0.0
        %1556 = vmatprep.subr.mxu0 0.0
        %1557 = vmatpush1.msra.mxu0 0.0
        %1558 = vmatprep.subr.mxu0 0.0
        %1559 = vmatpush1.msra.mxu0 0.0
        %1560 = vmatprep.subr.mxu0 0.0
        %1561 = vmatpush1.msra.mxu0 0.0
        %1562 = vmatprep.subr.mxu0 0.0
        %1563 = vmatpush1.msra.mxu0 0.0
        %1564 = vmatprep.subr.mxu0 0.0
        %1565 = vmatpush1.msra.mxu0 0.0
        %1566 = vmatprep.subr.mxu0 0.0
        %1567 = vmatpush1.msra.mxu0 0.0
        %1568 = vmatprep.subr.mxu0 0.0
        %1569 = vmatpush1.msra.mxu0 0.0
        %1570 = vmatprep.subr.mxu0 0.0
        %1571 = vmatpush1.msra.mxu0 0.0
        %1572 = vmatprep.subr.mxu0 0.0
        %1573 = vmatpush1.msra.mxu0 0.0
        %1574 = vmatprep.subr.mxu0 0.0
        %1575 = vmatpush1.msra.mxu0 0.0
        %1576 = vmatprep.subr.mxu0 0.0
        %1577 = vmatpush1.msra.mxu0 0.0
        %1578 = vmatprep.subr.mxu0 0.0
        %1579 = vmatpush1.msra.mxu0 0.0
        %1580 = vmatprep.subr.mxu0 0.0
        %1581 = vmatpush1.msra.mxu0 0.0
        %1582 = vmatprep.subr.mxu0 0.0
        %1583 = vmatpush1.msra.mxu0 0.0
        %1584 = vmatprep.subr.mxu0 0.0
        %1585 = vmatpush1.msra.mxu0 0.0
        %1586 = vmatprep.subr.mxu0 0.0
        %1587 = vmatpush1.msra.mxu0 0.0
        %1588 = vmatprep.subr.mxu0 0.0
        %1589 = vmatpush1.msra.mxu0 0.0
        %1590 = vmatprep.subr.mxu0 0.0
        %1591 = vmatpush1.msra.mxu0 0.0
        %1592 = vmatprep.subr.mxu0 0.0
        %1593 = vmatpush1.msra.mxu0 0.0
        %1594 = vmatprep.mubr.f32.mxu0 0.0
        %v1595 = vand.u32 %v1520, 4294901760
        %v1596 = vsub.f32 %v1520, %v1595
        %v1597 = vand.u32 %v1596, 4294901760
        %v1598 = vsub.f32 %v1596, %v1597
        %v1599 = vand.u32 %v1598, 4294901760
        %1600 = vmatmul.mubr.f32.gmra.mrb[0].mxu0 %v1599
        %v1601 = vpop.f32.mrb[0].mxu0
        %v1602 = vadd.f32 %v1516, %v1601
        %v1603 = vpop.f32.mrb[0].mxu0
        %1604 = vdwg.mxu0
        %1605 = vmatprep.subr.mxu0 0.0
        %v1606 = vand.u32 %v1507, 4294901760
        %v1607 = vsub.f32 %v1507, %v1606
        %v1608 = vand.u32 %v1607, 4294901760
        %v1609 = vsub.f32 %v1607, %v1608
        %v1610 = vand.u32 %v1609, 4294901760
        %1611 = vmatpush1.msra.mxu0 %v1610
        %1612 = vmatprep.subr.mxu0 0.0
        %v1613 = vand.u32 %v1508, 4294901760
        %v1614 = vsub.f32 %v1508, %v1613
        %v1615 = vand.u32 %v1614, 4294901760
        %v1616 = vsub.f32 %v1614, %v1615
        %v1617 = vand.u32 %v1616, 4294901760
        %1618 = vmatpush1.msra.mxu0 %v1617
        %1619 = vmatprep.subr.mxu0 0.0
        %v1620 = vand.u32 %v1509, 4294901760
        %v1621 = vsub.f32 %v1509, %v1620
        %v1622 = vand.u32 %v1621, 4294901760
        %v1623 = vsub.f32 %v1621, %v1622
        %v1624 = vand.u32 %v1623, 4294901760
        %1625 = vmatpush1.msra.mxu0 %v1624
        %1626 = vmatprep.subr.mxu0 0.0
        %v1627 = vand.u32 %v1510, 4294901760
        %v1628 = vsub.f32 %v1510, %v1627
        %v1629 = vand.u32 %v1628, 4294901760
        %v1630 = vsub.f32 %v1628, %v1629
        %v1631 = vand.u32 %v1630, 4294901760
        %1632 = vmatpush1.msra.mxu0 %v1631
        %1633 = vmatprep.subr.mxu0 0.0
        %v1634 = vand.u32 %v1523, 4294901760
        %v1635 = vsub.f32 %v1523, %v1634
        %v1636 = vand.u32 %v1635, 4294901760
        %v1637 = vsub.f32 %v1635, %v1636
        %v1638 = vand.u32 %v1637, 4294901760
        %1639 = vmatpush1.msra.mxu0 %v1638
        %1640 = vmatprep.subr.mxu0 0.0
        %1641 = vmatpush1.msra.mxu0 0.0
        %1642 = vmatprep.subr.mxu0 0.0
        %1643 = vmatpush1.msra.mxu0 0.0
        %1644 = vmatprep.subr.mxu0 0.0
        %1645 = vmatpush1.msra.mxu0 0.0
        %1646 = vmatprep.subr.mxu0 0.0
        %1647 = vmatpush1.msra.mxu0 0.0
        %1648 = vmatprep.subr.mxu0 0.0
        %1649 = vmatpush1.msra.mxu0 0.0
        %1650 = vmatprep.subr.mxu0 0.0
        %1651 = vmatpush1.msra.mxu0 0.0
        %1652 = vmatprep.subr.mxu0 0.0
        %1653 = vmatpush1.msra.mxu0 0.0
        %1654 = vmatprep.subr.mxu0 0.0
        %1655 = vmatpush1.msra.mxu0 0.0
        %1656 = vmatprep.subr.mxu0 0.0
        %1657 = vmatpush1.msra.mxu0 0.0
        %1658 = vmatprep.subr.mxu0 0.0
        %1659 = vmatpush1.msra.mxu0 0.0
        %1660 = vmatprep.subr.mxu0 0.0
        %1661 = vmatpush1.msra.mxu0 0.0
        %1662 = vmatprep.subr.mxu0 0.0
        %1663 = vmatpush1.msra.mxu0 0.0
        %1664 = vmatprep.subr.mxu0 0.0
        %1665 = vmatpush1.msra.mxu0 0.0
        %1666 = vmatprep.subr.mxu0 0.0
        %1667 = vmatpush1.msra.mxu0 0.0
        %1668 = vmatprep.subr.mxu0 0.0
        %1669 = vmatpush1.msra.mxu0 0.0
        %1670 = vmatprep.subr.mxu0 0.0
        %1671 = vmatpush1.msra.mxu0 0.0
        %1672 = vmatprep.subr.mxu0 0.0
        %1673 = vmatpush1.msra.mxu0 0.0
        %1674 = vmatprep.subr.mxu0 0.0
        %1675 = vmatpush1.msra.mxu0 0.0
        %1676 = vmatprep.subr.mxu0 0.0
        %1677 = vmatpush1.msra.mxu0 0.0
        %1678 = vmatprep.subr.mxu0 0.0
        %1679 = vmatpush1.msra.mxu0 0.0
        %1680 = vmatprep.subr.mxu0 0.0
        %1681 = vmatpush1.msra.mxu0 0.0
        %1682 = vmatprep.subr.mxu0 0.0
        %1683 = vmatpush1.msra.mxu0 0.0
        %1684 = vmatprep.subr.mxu0 0.0
        %1685 = vmatpush1.msra.mxu0 0.0
        %1686 = vmatprep.subr.mxu0 0.0
        %1687 = vmatpush1.msra.mxu0 0.0
        %1688 = vmatprep.subr.mxu0 0.0
        %1689 = vmatpush1.msra.mxu0 0.0
        %1690 = vmatprep.subr.mxu0 0.0
        %1691 = vmatpush1.msra.mxu0 0.0
        %1692 = vmatprep.subr.mxu0 0.0
        %1693 = vmatpush1.msra.mxu0 0.0
        %1694 = vmatprep.mubr.f32.mxu0 0.0
        %v1695 = vand.u32 %v1520, 4294901760
        %1696 = vmatmul.mubr.f32.gmra.mrb[0].mxu0 %v1695
        %v1697 = vpop.f32.mrb[0].mxu0
        %v1698 = vadd.f32 %v1602, %v1697
        %v1699 = vpop.f32.mrb[0].mxu0
        %1700 = vdwg.mxu0
        %1701 = vmatprep.subr.mxu0 0.0
        %v1702 = vand.u32 %v1507, 4294901760
        %v1703 = vsub.f32 %v1507, %v1702
        %1704 = vmatpush1.msra.mxu0 %v1703
        %1705 = vmatprep.subr.mxu0 0.0
        %v1706 = vand.u32 %v1508, 4294901760
        %v1707 = vsub.f32 %v1508, %v1706
        %1708 = vmatpush1.msra.mxu0 %v1707
        %1709 = vmatprep.subr.mxu0 0.0
        %v1710 = vand.u32 %v1509, 4294901760
        %v1711 = vsub.f32 %v1509, %v1710
        %1712 = vmatpush1.msra.mxu0 %v1711
        %1713 = vmatprep.subr.mxu0 0.0
        %v1714 = vand.u32 %v1510, 4294901760
        %v1715 = vsub.f32 %v1510, %v1714
        %1716 = vmatpush1.msra.mxu0 %v1715
        %1717 = vmatprep.subr.mxu0 0.0
        %v1718 = vand.u32 %v1523, 4294901760
        %v1719 = vsub.f32 %v1523, %v1718
        %1720 = vmatpush1.msra.mxu0 %v1719
        %1721 = vmatprep.subr.mxu0 0.0
        %1722 = vmatpush1.msra.mxu0 0.0
        %1723 = vmatprep.subr.mxu0 0.0
        %1724 = vmatpush1.msra.mxu0 0.0
        %1725 = vmatprep.subr.mxu0 0.0
        %1726 = vmatpush1.msra.mxu0 0.0
        %1727 = vmatprep.subr.mxu0 0.0
        %1728 = vmatpush1.msra.mxu0 0.0
        %1729 = vmatprep.subr.mxu0 0.0
        %1730 = vmatpush1.msra.mxu0 0.0
        %1731 = vmatprep.subr.mxu0 0.0
        %1732 = vmatpush1.msra.mxu0 0.0
        %1733 = vmatprep.subr.mxu0 0.0
        %1734 = vmatpush1.msra.mxu0 0.0
        %1735 = vmatprep.subr.mxu0 0.0
        %1736 = vmatpush1.msra.mxu0 0.0
        %1737 = vmatprep.subr.mxu0 0.0
        %1738 = vmatpush1.msra.mxu0 0.0
        %1739 = vmatprep.subr.mxu0 0.0
        %1740 = vmatpush1.msra.mxu0 0.0
        %1741 = vmatprep.subr.mxu0 0.0
        %1742 = vmatpush1.msra.mxu0 0.0
        %1743 = vmatprep.subr.mxu0 0.0
        %1744 = vmatpush1.msra.mxu0 0.0
        %1745 = vmatprep.subr.mxu0 0.0
        %1746 = vmatpush1.msra.mxu0 0.0
        %1747 = vmatprep.subr.mxu0 0.0
        %1748 = vmatpush1.msra.mxu0 0.0
        %1749 = vmatprep.subr.mxu0 0.0
        %1750 = vmatpush1.msra.mxu0 0.0
        %1751 = vmatprep.subr.mxu0 0.0
        %1752 = vmatpush1.msra.mxu0 0.0
        %1753 = vmatprep.subr.mxu0 0.0
        %1754 = vmatpush1.msra.mxu0 0.0
        %1755 = vmatprep.subr.mxu0 0.0
        %1756 = vmatpush1.msra.mxu0 0.0
        %1757 = vmatprep.subr.mxu0 0.0
        %1758 = vmatpush1.msra.mxu0 0.0
        %1759 = vmatprep.subr.mxu0 0.0
        %1760 = vmatpush1.msra.mxu0 0.0
        %1761 = vmatprep.subr.mxu0 0.0
        %1762 = vmatpush1.msra.mxu0 0.0
        %1763 = vmatprep.subr.mxu0 0.0
        %1764 = vmatpush1.msra.mxu0 0.0
        %1765 = vmatprep.subr.mxu0 0.0
        %1766 = vmatpush1.msra.mxu0 0.0
        %1767 = vmatprep.subr.mxu0 0.0
        %1768 = vmatpush1.msra.mxu0 0.0
        %1769 = vmatprep.subr.mxu0 0.0
        %1770 = vmatpush1.msra.mxu0 0.0
        %1771 = vmatprep.subr.mxu0 0.0
        %1772 = vmatpush1.msra.mxu0 0.0
        %1773 = vmatprep.subr.mxu0 0.0
        %1774 = vmatpush1.msra.mxu0 0.0
        %1775 = vmatprep.mubr.f32.mxu0 0.0
        %v1776 = vand.u32 %v1520, 4294901760
        %v1777 = vsub.f32 %v1520, %v1776
        %1778 = vmatmul.mubr.f32.gmra.mrb[0].mxu0 %v1777
        %v1779 = vpop.f32.mrb[0].mxu0
        %v1780 = vadd.f32 %v1698, %v1779
        %v1781 = vpop.f32.mrb[0].mxu0
        %1782 = vdwg.mxu0
        %1783 = vmatprep.subr.mxu0 0.0
        %v1784 = vand.u32 %v1507, 4294901760
        %1785 = vmatpush1.msra.mxu0 %v1784
        %1786 = vmatprep.subr.mxu0 0.0
        %v1787 = vand.u32 %v1508, 4294901760
        %1788 = vmatpush1.msra.mxu0 %v1787
        %1789 = vmatprep.subr.mxu0 0.0
        %v1790 = vand.u32 %v1509, 4294901760
        %1791 = vmatpush1.msra.mxu0 %v1790
        %1792 = vmatprep.subr.mxu0 0.0
        %v1793 = vand.u32 %v1510, 4294901760
        %1794 = vmatpush1.msra.mxu0 %v1793
        %1795 = vmatprep.subr.mxu0 0.0
        %v1796 = vand.u32 %v1523, 4294901760
        %1797 = vmatpush1.msra.mxu0 %v1796
        %1798 = vmatprep.subr.mxu0 0.0
        %1799 = vmatpush1.msra.mxu0 0.0
        %1800 = vmatprep.subr.mxu0 0.0
        %1801 = vmatpush1.msra.mxu0 0.0
        %1802 = vmatprep.subr.mxu0 0.0
        %1803 = vmatpush1.msra.mxu0 0.0
        %1804 = vmatprep.subr.mxu0 0.0
        %1805 = vmatpush1.msra.mxu0 0.0
        %1806 = vmatprep.subr.mxu0 0.0
        %1807 = vmatpush1.msra.mxu0 0.0
        %1808 = vmatprep.subr.mxu0 0.0
        %1809 = vmatpush1.msra.mxu0 0.0
        %1810 = vmatprep.subr.mxu0 0.0
        %1811 = vmatpush1.msra.mxu0 0.0
        %1812 = vmatprep.subr.mxu0 0.0
        %1813 = vmatpush1.msra.mxu0 0.0
        %1814 = vmatprep.subr.mxu0 0.0
        %1815 = vmatpush1.msra.mxu0 0.0
        %1816 = vmatprep.subr.mxu0 0.0
        %1817 = vmatpush1.msra.mxu0 0.0
        %1818 = vmatprep.subr.mxu0 0.0
        %1819 = vmatpush1.msra.mxu0 0.0
        %1820 = vmatprep.subr.mxu0 0.0
        %1821 = vmatpush1.msra.mxu0 0.0
        %1822 = vmatprep.subr.mxu0 0.0
        %1823 = vmatpush1.msra.mxu0 0.0
        %1824 = vmatprep.subr.mxu0 0.0
        %1825 = vmatpush1.msra.mxu0 0.0
        %1826 = vmatprep.subr.mxu0 0.0
        %1827 = vmatpush1.msra.mxu0 0.0
        %1828 = vmatprep.subr.mxu0 0.0
        %1829 = vmatpush1.msra.mxu0 0.0
        %1830 = vmatprep.subr.mxu0 0.0
        %1831 = vmatpush1.msra.mxu0 0.0
        %1832 = vmatprep.subr.mxu0 0.0
        %1833 = vmatpush1.msra.mxu0 0.0
        %1834 = vmatprep.subr.mxu0 0.0
        %1835 = vmatpush1.msra.mxu0 0.0
        %1836 = vmatprep.subr.mxu0 0.0
        %1837 = vmatpush1.msra.mxu0 0.0
        %1838 = vmatprep.subr.mxu0 0.0
        %1839 = vmatpush1.msra.mxu0 0.0
        %1840 = vmatprep.subr.mxu0 0.0
        %1841 = vmatpush1.msra.mxu0 0.0
        %1842 = vmatprep.subr.mxu0 0.0
        %1843 = vmatpush1.msra.mxu0 0.0
        %1844 = vmatprep.subr.mxu0 0.0
        %1845 = vmatpush1.msra.mxu0 0.0
        %1846 = vmatprep.subr.mxu0 0.0
        %1847 = vmatpush1.msra.mxu0 0.0
        %1848 = vmatprep.subr.mxu0 0.0
        %1849 = vmatpush1.msra.mxu0 0.0
        %1850 = vmatprep.subr.mxu0 0.0
        %1851 = vmatpush1.msra.mxu0 0.0
        %1852 = vmatprep.mubr.f32.mxu0 0.0
        %v1853 = vand.u32 %v1520, 4294901760
        %v1854 = vsub.f32 %v1520, %v1853
        %v1855 = vand.u32 %v1854, 4294901760
        %1856 = vmatmul.mubr.f32.gmra.mrb[0].mxu0 %v1855
        %v1857 = vpop.f32.mrb[0].mxu0
        %v1858 = vadd.f32 %v1780, %v1857
        %v1859 = vpop.f32.mrb[0].mxu0
        %1860 = vdwg.mxu0
        %1861 = vmatprep.subr.mxu0 0.0
        %v1862 = vand.u32 %v1507, 4294901760
        %v1863 = vsub.f32 %v1507, %v1862
        %v1864 = vand.u32 %v1863, 4294901760
        %1865 = vmatpush1.msra.mxu0 %v1864
        %1866 = vmatprep.subr.mxu0 0.0
        %v1867 = vand.u32 %v1508, 4294901760
        %v1868 = vsub.f32 %v1508, %v1867
        %v1869 = vand.u32 %v1868, 4294901760
        %1870 = vmatpush1.msra.mxu0 %v1869
        %1871 = vmatprep.subr.mxu0 0.0
        %v1872 = vand.u32 %v1509, 4294901760
        %v1873 = vsub.f32 %v1509, %v1872
        %v1874 = vand.u32 %v1873, 4294901760
        %1875 = vmatpush1.msra.mxu0 %v1874
        %1876 = vmatprep.subr.mxu0 0.0
        %v1877 = vand.u32 %v1510, 4294901760
        %v1878 = vsub.f32 %v1510, %v1877
        %v1879 = vand.u32 %v1878, 4294901760
        %1880 = vmatpush1.msra.mxu0 %v1879
        %1881 = vmatprep.subr.mxu0 0.0
        %v1882 = vand.u32 %v1523, 4294901760
        %v1883 = vsub.f32 %v1523, %v1882
        %v1884 = vand.u32 %v1883, 4294901760
        %1885 = vmatpush1.msra.mxu0 %v1884
        %1886 = vmatprep.subr.mxu0 0.0
        %1887 = vmatpush1.msra.mxu0 0.0
        %1888 = vmatprep.subr.mxu0 0.0
        %1889 = vmatpush1.msra.mxu0 0.0
        %1890 = vmatprep.subr.mxu0 0.0
        %1891 = vmatpush1.msra.mxu0 0.0
        %1892 = vmatprep.subr.mxu0 0.0
        %1893 = vmatpush1.msra.mxu0 0.0
        %1894 = vmatprep.subr.mxu0 0.0
        %1895 = vmatpush1.msra.mxu0 0.0
        %1896 = vmatprep.subr.mxu0 0.0
        %1897 = vmatpush1.msra.mxu0 0.0
        %1898 = vmatprep.subr.mxu0 0.0
        %1899 = vmatpush1.msra.mxu0 0.0
        %1900 = vmatprep.subr.mxu0 0.0
        %1901 = vmatpush1.msra.mxu0 0.0
        %1902 = vmatprep.subr.mxu0 0.0
        %1903 = vmatpush1.msra.mxu0 0.0
        %1904 = vmatprep.subr.mxu0 0.0
        %1905 = vmatpush1.msra.mxu0 0.0
        %1906 = vmatprep.subr.mxu0 0.0
        %1907 = vmatpush1.msra.mxu0 0.0
        %1908 = vmatprep.subr.mxu0 0.0
        %1909 = vmatpush1.msra.mxu0 0.0
        %1910 = vmatprep.subr.mxu0 0.0
        %1911 = vmatpush1.msra.mxu0 0.0
        %1912 = vmatprep.subr.mxu0 0.0
        %1913 = vmatpush1.msra.mxu0 0.0
        %1914 = vmatprep.subr.mxu0 0.0
        %1915 = vmatpush1.msra.mxu0 0.0
        %1916 = vmatprep.subr.mxu0 0.0
        %1917 = vmatpush1.msra.mxu0 0.0
        %1918 = vmatprep.subr.mxu0 0.0
        %1919 = vmatpush1.msra.mxu0 0.0
        %1920 = vmatprep.subr.mxu0 0.0
        %1921 = vmatpush1.msra.mxu0 0.0
        %1922 = vmatprep.subr.mxu0 0.0
        %1923 = vmatpush1.msra.mxu0 0.0
        %1924 = vmatprep.subr.mxu0 0.0
        %1925 = vmatpush1.msra.mxu0 0.0
        %1926 = vmatprep.subr.mxu0 0.0
        %1927 = vmatpush1.msra.mxu0 0.0
        %1928 = vmatprep.subr.mxu0 0.0
        %1929 = vmatpush1.msra.mxu0 0.0
        %1930 = vmatprep.subr.mxu0 0.0
        %1931 = vmatpush1.msra.mxu0 0.0
        %1932 = vmatprep.subr.mxu0 0.0
        %1933 = vmatpush1.msra.mxu0 0.0
        %1934 = vmatprep.subr.mxu0 0.0
        %1935 = vmatpush1.msra.mxu0 0.0
        %1936 = vmatprep.subr.mxu0 0.0
        %1937 = vmatpush1.msra.mxu0 0.0
        %1938 = vmatprep.subr.mxu0 0.0
        %1939 = vmatpush1.msra.mxu0 0.0
        %1940 = vmatprep.mubr.f32.mxu0 0.0
        %v1941 = vand.u32 %v1520, 4294901760
        %1942 = vmatmul.mubr.f32.gmra.mrb[0].mxu0 %v1941
        %v1943 = vpop.f32.mrb[0].mxu0
        %v1944 = vadd.f32 %v1858, %v1943
        %v1945 = vpop.f32.mrb[0].mxu0
        %1946 = vdwg.mxu0
        %1947 = vmatprep.subr.mxu0 0.0
        %v1948 = vand.u32 %v1507, 4294901760
        %1949 = vmatpush1.msra.mxu0 %v1948
        %1950 = vmatprep.subr.mxu0 0.0
        %v1951 = vand.u32 %v1508, 4294901760
        %1952 = vmatpush1.msra.mxu0 %v1951
        %1953 = vmatprep.subr.mxu0 0.0
        %v1954 = vand.u32 %v1509, 4294901760
        %1955 = vmatpush1.msra.mxu0 %v1954
        %1956 = vmatprep.subr.mxu0 0.0
        %v1957 = vand.u32 %v1510, 4294901760
        %1958 = vmatpush1.msra.mxu0 %v1957
        %1959 = vmatprep.subr.mxu0 0.0
        %v1960 = vand.u32 %v1523, 4294901760
        %1961 = vmatpush1.msra.mxu0 %v1960
        %1962 = vmatprep.subr.mxu0 0.0
        %1963 = vmatpush1.msra.mxu0 0.0
        %1964 = vmatprep.subr.mxu0 0.0
        %1965 = vmatpush1.msra.mxu0 0.0
        %1966 = vmatprep.subr.mxu0 0.0
        %1967 = vmatpush1.msra.mxu0 0.0
        %1968 = vmatprep.subr.mxu0 0.0
        %1969 = vmatpush1.msra.mxu0 0.0
        %1970 = vmatprep.subr.mxu0 0.0
        %1971 = vmatpush1.msra.mxu0 0.0
        %1972 = vmatprep.subr.mxu0 0.0
        %1973 = vmatpush1.msra.mxu0 0.0
        %1974 = vmatprep.subr.mxu0 0.0
        %1975 = vmatpush1.msra.mxu0 0.0
        %1976 = vmatprep.subr.mxu0 0.0
        %1977 = vmatpush1.msra.mxu0 0.0
        %1978 = vmatprep.subr.mxu0 0.0
        %1979 = vmatpush1.msra.mxu0 0.0
        %1980 = vmatprep.subr.mxu0 0.0
        %1981 = vmatpush1.msra.mxu0 0.0
        %1982 = vmatprep.subr.mxu0 0.0
        %1983 = vmatpush1.msra.mxu0 0.0
        %1984 = vmatprep.subr.mxu0 0.0
        %1985 = vmatpush1.msra.mxu0 0.0
        %1986 = vmatprep.subr.mxu0 0.0
        %1987 = vmatpush1.msra.mxu0 0.0
        %1988 = vmatprep.subr.mxu0 0.0
        %1989 = vmatpush1.msra.mxu0 0.0
        %1990 = vmatprep.subr.mxu0 0.0
        %1991 = vmatpush1.msra.mxu0 0.0
        %1992 = vmatprep.subr.mxu0 0.0
        %1993 = vmatpush1.msra.mxu0 0.0
        %1994 = vmatprep.subr.mxu0 0.0
        %1995 = vmatpush1.msra.mxu0 0.0
        %1996 = vmatprep.subr.mxu0 0.0
        %1997 = vmatpush1.msra.mxu0 0.0
        %1998 = vmatprep.subr.mxu0 0.0
        %1999 = vmatpush1.msra.mxu0 0.0
        %2000 = vmatprep.subr.mxu0 0.0
        %2001 = vmatpush1.msra.mxu0 0.0
        %2002 = vmatprep.subr.mxu0 0.0
        %2003 = vmatpush1.msra.mxu0 0.0
        %2004 = vmatprep.subr.mxu0 0.0
        %2005 = vmatpush1.msra.mxu0 0.0
        %2006 = vmatprep.subr.mxu0 0.0
        %2007 = vmatpush1.msra.mxu0 0.0
        %2008 = vmatprep.subr.mxu0 0.0
        %2009 = vmatpush1.msra.mxu0 0.0
        %2010 = vmatprep.subr.mxu0 0.0
        %2011 = vmatpush1.msra.mxu0 0.0
        %2012 = vmatprep.subr.mxu0 0.0
        %2013 = vmatpush1.msra.mxu0 0.0
        %2014 = vmatprep.subr.mxu0 0.0
        %2015 = vmatpush1.msra.mxu0 0.0
        %2016 = vmatprep.mubr.f32.mxu0 0.0
        %v2017 = vand.u32 %v1520, 4294901760
        %2018 = vmatmul.mubr.f32.gmra.mrb[0].mxu0 %v2017
        %v2019 = vpop.f32.mrb[0].mxu0
        %v2020 = vadd.f32 %v1944, %v2019
        %v2021 = vpop.f32.mrb[0].mxu0
        %2022 = vdwg.mxu0
        %v2023 = vmax.f32 %v2020, 0.0
        %v2024 = vld [vmem:[%s463] sm:$0x3f]
        %v2025 = vld [vmem:[%s463 + $0x8] sm:$0x3f]
        %v2026 = vld [vmem:[%s463 + $0x10] sm:$0x3f]
        %v2027 = vld [vmem:[%s463 + $0x18] sm:$0x3f]
        %v2028 = vcombine.low %v2024, %v2026
        %v2029 = vcombine.high %v2024, %v2026
        %v2031 = vunpack.c.l.s4 1983009808
        %v2032 = vunpack.c.0.s8 %v2031
        %v2033 = vlaneseq
        %v2034 = vshrl.u32 %v2033, 7
        %v2035 = vsub.s32 %v2032, %v2034
        %v2036 = vrot.slane %v2028, %v2035
        %v2038 = vunpack.c.l.s4 1983009808
        %v2039 = vunpack.c.0.s8 %v2038
        %v2040 = vlaneseq
        %v2041 = vshrl.u32 %v2040, 7
        %v2042 = vsub.s32 %v2039, %v2041
        %v2043 = vrot.slane %v2029, %v2042
        %v2044 = vcombine.low %v2025, %v2027
        %v2045 = vcombine.high %v2025, %v2027
        %v2047 = vunpack.c.l.s4 1983009808
        %v2048 = vunpack.c.0.s8 %v2047
        %v2049 = vlaneseq
        %v2050 = vshrl.u32 %v2049, 7
        %v2051 = vsub.s32 %v2048, %v2050
        %v2052 = vrot.slane %v2044, %v2051
        %v2054 = vunpack.c.l.s4 1983009808
        %v2055 = vunpack.c.0.s8 %v2054
        %v2056 = vlaneseq
        %v2057 = vshrl.u32 %v2056, 7
        %v2058 = vsub.s32 %v2055, %v2057
        %v2059 = vrot.slane %v2045, %v2058
        %v2060 = vcombine.low %v2036, %v2052
        %v2061 = vcombine.high %v2036, %v2052
        %v2063 = vunpack.c.l.s4 1934713408
        %v2064 = vunpack.c.0.s8 %v2063
        %v2065 = vlaneseq
        %v2066 = vshrl.u32 %v2065, 7
        %v2067 = vsub.s32 %v2064, %v2066
        %v2068 = vrot.slane %v2060, %v2067
        %v2070 = vunpack.c.l.s4 1934713408
        %v2071 = vunpack.c.0.s8 %v2070
        %v2072 = vlaneseq
        %v2073 = vshrl.u32 %v2072, 7
        %v2074 = vsub.s32 %v2071, %v2073
        %v2075 = vrot.slane %v2061, %v2074
        %v2076 = vcombine.low %v2043, %v2059
        %v2078 = vunpack.c.l.s4 1934713408
        %v2079 = vunpack.c.0.s8 %v2078
        %v2080 = vlaneseq
        %v2081 = vshrl.u32 %v2080, 7
        %v2082 = vsub.s32 %v2079, %v2081
        %v2083 = vrot.slane %v2076, %v2082
        %v2084 = vcombine.high %v2068, 0.0
        %v2085 = vcombine.high %v2075, 0.0
        %v2086 = vcombine.high %v2083, 0.0
        %2088 = vrot.lane.b32.xlu0 %v2084, 8
        %v2089 = vpop.permute.xlu0 %2088
        %2092 = vrot.lane.b32.xlu0 %v2075, 16
        %v2093 = vpop.permute.xlu0 %2092
        %2096 = vrot.lane.b32.xlu0 %v2085, 24
        %v2097 = vpop.permute.xlu0 %2096
        %2100 = vrot.lane.b32.xlu0 %v2083, 32
        %v2101 = vpop.permute.xlu0 %2100
        %2104 = vrot.lane.b32.xlu0 %v2086, 40
        %v2105 = vpop.permute.xlu0 %2104
        %vm2107 = vcmask 64512
        %v2108 = vsel %vm2107, %v2068, %v2089
        %v2109 = vsel %vm564, %v2108, %v2093
        %vm2110 = vcmask 195584
        %v2111 = vsel %vm2110, %v2109, %v2097
        %v2112 = vsel %vm566, %v2111, %v2101
        %vm2113 = vcmask 326656
        %v2114 = vsel %vm2113, %v2112, %v2105
        %s2115 = scalar_lea.vmem %s463, 32
        %v2116 = vld [vmem:[%s2115] sm:$0x3f]
        %v2117 = vld [vmem:[%s2115 + $0x8] sm:$0x3f]
        %v2118 = vld [vmem:[%s2115 + $0x10] sm:$0x3f]
        %v2119 = vld [vmem:[%s2115 + $0x18] sm:$0x3f]
        %v2120 = vcombine.low %v2116, %v2118
        %v2121 = vcombine.high %v2116, %v2118
        %v2123 = vunpack.c.l.s4 1983009808
        %v2124 = vunpack.c.0.s8 %v2123
        %v2125 = vlaneseq
        %v2126 = vshrl.u32 %v2125, 7
        %v2127 = vsub.s32 %v2124, %v2126
        %v2128 = vrot.slane %v2120, %v2127
        %v2130 = vunpack.c.l.s4 1983009808
        %v2131 = vunpack.c.0.s8 %v2130
        %v2132 = vlaneseq
        %v2133 = vshrl.u32 %v2132, 7
        %v2134 = vsub.s32 %v2131, %v2133
        %v2135 = vrot.slane %v2121, %v2134
        %v2136 = vcombine.low %v2117, %v2119
        %v2137 = vcombine.high %v2117, %v2119
        %v2139 = vunpack.c.l.s4 1983009808
        %v2140 = vunpack.c.0.s8 %v2139
        %v2141 = vlaneseq
        %v2142 = vshrl.u32 %v2141, 7
        %v2143 = vsub.s32 %v2140, %v2142
        %v2144 = vrot.slane %v2136, %v2143
        %v2146 = vunpack.c.l.s4 1983009808
        %v2147 = vunpack.c.0.s8 %v2146
        %v2148 = vlaneseq
        %v2149 = vshrl.u32 %v2148, 7
        %v2150 = vsub.s32 %v2147, %v2149
        %v2151 = vrot.slane %v2137, %v2150
        %v2152 = vcombine.low %v2128, %v2144
        %v2153 = vcombine.high %v2128, %v2144
        %v2155 = vunpack.c.l.s4 1934713408
        %v2156 = vunpack.c.0.s8 %v2155
        %v2157 = vlaneseq
        %v2158 = vshrl.u32 %v2157, 7
        %v2159 = vsub.s32 %v2156, %v2158
        %v2160 = vrot.slane %v2152, %v2159
        %v2162 = vunpack.c.l.s4 1934713408
        %v2163 = vunpack.c.0.s8 %v2162
        %v2164 = vlaneseq
        %v2165 = vshrl.u32 %v2164, 7
        %v2166 = vsub.s32 %v2163, %v2165
        %v2167 = vrot.slane %v2153, %v2166
        %v2168 = vcombine.low %v2135, %v2151
        %v2170 = vunpack.c.l.s4 1934713408
        %v2171 = vunpack.c.0.s8 %v2170
        %v2172 = vlaneseq
        %v2173 = vshrl.u32 %v2172, 7
        %v2174 = vsub.s32 %v2171, %v2173
        %v2175 = vrot.slane %v2168, %v2174
        %v2176 = vcombine.high %v2160, 0.0
        %v2177 = vcombine.high %v2167, 0.0
        %v2178 = vcombine.high %v2175, 0.0
        %2180 = vrot.lane.b32.xlu0 %v2176, 8
        %v2181 = vpop.permute.xlu0 %2180
        %2184 = vrot.lane.b32.xlu0 %v2167, 16
        %v2185 = vpop.permute.xlu0 %2184
        %2188 = vrot.lane.b32.xlu0 %v2177, 24
        %v2189 = vpop.permute.xlu0 %2188
        %2192 = vrot.lane.b32.xlu0 %v2175, 32
        %v2193 = vpop.permute.xlu0 %2192
        %2196 = vrot.lane.b32.xlu0 %v2178, 40
        %v2197 = vpop.permute.xlu0 %2196
        %v2199 = vsel %vm2107, %v2160, %v2181
        %v2200 = vsel %vm564, %v2199, %v2185
        %v2201 = vsel %vm2110, %v2200, %v2189
        %v2202 = vsel %vm566, %v2201, %v2193
        %v2203 = vsel %vm2113, %v2202, %v2197
        %2208 = vrot.lane.b32.xlu0 %v2024, 127
        %v2209 = vpop.permute.xlu0 %2208
        %2210 = vrot.lane.b32.xlu0 %v2025, 127
        %v2211 = vpop.permute.xlu0 %2210
        %2212 = vrot.lane.b32.xlu0 %v2026, 127
        %v2213 = vpop.permute.xlu0 %2212
        %2214 = vrot.lane.b32.xlu0 %v2027, 127
        %v2215 = vpop.permute.xlu0 %2214
        %v2220 = vcombine.low %v2209, %v2213
        %v2221 = vcombine.high %v2209, %v2213
        %v2223 = vunpack.c.l.s4 1983009808
        %v2224 = vunpack.c.0.s8 %v2223
        %v2225 = vlaneseq
        %v2226 = vshrl.u32 %v2225, 7
        %v2227 = vsub.s32 %v2224, %v2226
        %v2228 = vrot.slane %v2220, %v2227
        %v2230 = vunpack.c.l.s4 1983009808
        %v2231 = vunpack.c.0.s8 %v2230
        %v2232 = vlaneseq
        %v2233 = vshrl.u32 %v2232, 7
        %v2234 = vsub.s32 %v2231, %v2233
        %v2235 = vrot.slane %v2221, %v2234
        %v2236 = vcombine.low %v2211, %v2215
        %v2237 = vcombine.high %v2211, %v2215
        %v2239 = vunpack.c.l.s4 1983009808
        %v2240 = vunpack.c.0.s8 %v2239
        %v2241 = vlaneseq
        %v2242 = vshrl.u32 %v2241, 7
        %v2243 = vsub.s32 %v2240, %v2242
        %v2244 = vrot.slane %v2236, %v2243
        %v2246 = vunpack.c.l.s4 1983009808
        %v2247 = vunpack.c.0.s8 %v2246
        %v2248 = vlaneseq
        %v2249 = vshrl.u32 %v2248, 7
        %v2250 = vsub.s32 %v2247, %v2249
        %v2251 = vrot.slane %v2237, %v2250
        %v2252 = vcombine.low %v2228, %v2244
        %v2253 = vcombine.high %v2228, %v2244
        %v2255 = vunpack.c.l.s4 1934713408
        %v2256 = vunpack.c.0.s8 %v2255
        %v2257 = vlaneseq
        %v2258 = vshrl.u32 %v2257, 7
        %v2259 = vsub.s32 %v2256, %v2258
        %v2260 = vrot.slane %v2252, %v2259
        %v2262 = vunpack.c.l.s4 1934713408
        %v2263 = vunpack.c.0.s8 %v2262
        %v2264 = vlaneseq
        %v2265 = vshrl.u32 %v2264, 7
        %v2266 = vsub.s32 %v2263, %v2265
        %v2267 = vrot.slane %v2253, %v2266
        %v2268 = vcombine.low %v2235, %v2251
        %v2270 = vunpack.c.l.s4 1934713408
        %v2271 = vunpack.c.0.s8 %v2270
        %v2272 = vlaneseq
        %v2273 = vshrl.u32 %v2272, 7
        %v2274 = vsub.s32 %v2271, %v2273
        %v2275 = vrot.slane %v2268, %v2274
        %v2276 = vcombine.high %v2260, 0.0
        %v2277 = vcombine.high %v2267, 0.0
        %v2278 = vcombine.high %v2275, 0.0
        %2280 = vrot.lane.b32.xlu0 %v2276, 8
        %v2281 = vpop.permute.xlu0 %2280
        %2284 = vrot.lane.b32.xlu0 %v2267, 16
        %v2285 = vpop.permute.xlu0 %2284
        %2288 = vrot.lane.b32.xlu0 %v2277, 24
        %v2289 = vpop.permute.xlu0 %2288
        %2292 = vrot.lane.b32.xlu0 %v2275, 32
        %v2293 = vpop.permute.xlu0 %2292
        %2296 = vrot.lane.b32.xlu0 %v2278, 40
        %v2297 = vpop.permute.xlu0 %2296
        %v2299 = vsel %vm2107, %v2260, %v2281
        %v2300 = vsel %vm564, %v2299, %v2285
        %v2301 = vsel %vm2110, %v2300, %v2289
        %v2302 = vsel %vm566, %v2301, %v2293
        %v2303 = vsel %vm2113, %v2302, %v2297
        %s2304 = scalar_lea.vmem %s463, 64
        %v2305 = vld [vmem:[%s2304] sm:$0x3f]
        %v2306 = vld [vmem:[%s2304 + $0x8] sm:$0x3f]
        %v2307 = vld [vmem:[%s2304 + $0x10] sm:$0x3f]
        %v2308 = vld [vmem:[%s2304 + $0x18] sm:$0x3f]
        %v2309 = vcombine.low %v2305, %v2307
        %v2310 = vcombine.high %v2305, %v2307
        %v2312 = vunpack.c.l.s4 1983009808
        %v2313 = vunpack.c.0.s8 %v2312
        %v2314 = vlaneseq
        %v2315 = vshrl.u32 %v2314, 7
        %v2316 = vsub.s32 %v2313, %v2315
        %v2317 = vrot.slane %v2309, %v2316
        %v2319 = vunpack.c.l.s4 1983009808
        %v2320 = vunpack.c.0.s8 %v2319
        %v2321 = vlaneseq
        %v2322 = vshrl.u32 %v2321, 7
        %v2323 = vsub.s32 %v2320, %v2322
        %v2324 = vrot.slane %v2310, %v2323
        %v2325 = vcombine.low %v2306, %v2308
        %v2326 = vcombine.high %v2306, %v2308
        %v2328 = vunpack.c.l.s4 1983009808
        %v2329 = vunpack.c.0.s8 %v2328
        %v2330 = vlaneseq
        %v2331 = vshrl.u32 %v2330, 7
        %v2332 = vsub.s32 %v2329, %v2331
        %v2333 = vrot.slane %v2325, %v2332
        %v2335 = vunpack.c.l.s4 1983009808
        %v2336 = vunpack.c.0.s8 %v2335
        %v2337 = vlaneseq
        %v2338 = vshrl.u32 %v2337, 7
        %v2339 = vsub.s32 %v2336, %v2338
        %v2340 = vrot.slane %v2326, %v2339
        %v2341 = vcombine.low %v2317, %v2333
        %v2342 = vcombine.high %v2317, %v2333
        %v2344 = vunpack.c.l.s4 1934713408
        %v2345 = vunpack.c.0.s8 %v2344
        %v2346 = vlaneseq
        %v2347 = vshrl.u32 %v2346, 7
        %v2348 = vsub.s32 %v2345, %v2347
        %v2349 = vrot.slane %v2341, %v2348
        %v2351 = vunpack.c.l.s4 1934713408
        %v2352 = vunpack.c.0.s8 %v2351
        %v2353 = vlaneseq
        %v2354 = vshrl.u32 %v2353, 7
        %v2355 = vsub.s32 %v2352, %v2354
        %v2356 = vrot.slane %v2342, %v2355
        %v2357 = vcombine.low %v2324, %v2340
        %v2359 = vunpack.c.l.s4 1934713408
        %v2360 = vunpack.c.0.s8 %v2359
        %v2361 = vlaneseq
        %v2362 = vshrl.u32 %v2361, 7
        %v2363 = vsub.s32 %v2360, %v2362
        %v2364 = vrot.slane %v2357, %v2363
        %v2365 = vcombine.high %v2349, 0.0
        %v2366 = vcombine.high %v2356, 0.0
        %v2367 = vcombine.high %v2364, 0.0
        %2369 = vrot.lane.b32.xlu0 %v2365, 8
        %v2370 = vpop.permute.xlu0 %2369
        %2373 = vrot.lane.b32.xlu0 %v2356, 16
        %v2374 = vpop.permute.xlu0 %2373
        %2377 = vrot.lane.b32.xlu0 %v2366, 24
        %v2378 = vpop.permute.xlu0 %2377
        %2381 = vrot.lane.b32.xlu0 %v2364, 32
        %v2382 = vpop.permute.xlu0 %2381
        %2385 = vrot.lane.b32.xlu0 %v2367, 40
        %v2386 = vpop.permute.xlu0 %2385
        %v2388 = vsel %vm2107, %v2349, %v2370
        %v2389 = vsel %vm564, %v2388, %v2374
        %v2390 = vsel %vm2110, %v2389, %v2378
        %v2391 = vsel %vm566, %v2390, %v2382
        %v2392 = vsel %vm2113, %v2391, %v2386
        %s2393 = scalar_lea.vmem %s463, 96
        %v2394 = vld [vmem:[%s2393] sm:$0x3f]
        %v2395 = vld [vmem:[%s2393 + $0x8] sm:$0x3f]
        %v2396 = vld [vmem:[%s2393 + $0x10] sm:$0x3f]
        %v2397 = vld [vmem:[%s2393 + $0x18] sm:$0x3f]
        %v2398 = vcombine.low %v2394, %v2396
        %v2399 = vcombine.high %v2394, %v2396
        %v2401 = vunpack.c.l.s4 1983009808
        %v2402 = vunpack.c.0.s8 %v2401
        %v2403 = vlaneseq
        %v2404 = vshrl.u32 %v2403, 7
        %v2405 = vsub.s32 %v2402, %v2404
        %v2406 = vrot.slane %v2398, %v2405
        %v2408 = vunpack.c.l.s4 1983009808
        %v2409 = vunpack.c.0.s8 %v2408
        %v2410 = vlaneseq
        %v2411 = vshrl.u32 %v2410, 7
        %v2412 = vsub.s32 %v2409, %v2411
        %v2413 = vrot.slane %v2399, %v2412
        %v2414 = vcombine.low %v2395, %v2397
        %v2415 = vcombine.high %v2395, %v2397
        %v2417 = vunpack.c.l.s4 1983009808
        %v2418 = vunpack.c.0.s8 %v2417
        %v2419 = vlaneseq
        %v2420 = vshrl.u32 %v2419, 7
        %v2421 = vsub.s32 %v2418, %v2420
        %v2422 = vrot.slane %v2414, %v2421
        %v2424 = vunpack.c.l.s4 1983009808
        %v2425 = vunpack.c.0.s8 %v2424
        %v2426 = vlaneseq
        %v2427 = vshrl.u32 %v2426, 7
        %v2428 = vsub.s32 %v2425, %v2427
        %v2429 = vrot.slane %v2415, %v2428
        %v2430 = vcombine.low %v2406, %v2422
        %v2431 = vcombine.high %v2406, %v2422
        %v2433 = vunpack.c.l.s4 1934713408
        %v2434 = vunpack.c.0.s8 %v2433
        %v2435 = vlaneseq
        %v2436 = vshrl.u32 %v2435, 7
        %v2437 = vsub.s32 %v2434, %v2436
        %v2438 = vrot.slane %v2430, %v2437
        %v2440 = vunpack.c.l.s4 1934713408
        %v2441 = vunpack.c.0.s8 %v2440
        %v2442 = vlaneseq
        %v2443 = vshrl.u32 %v2442, 7
        %v2444 = vsub.s32 %v2441, %v2443
        %v2445 = vrot.slane %v2431, %v2444
        %v2446 = vcombine.low %v2413, %v2429
        %v2448 = vunpack.c.l.s4 1934713408
        %v2449 = vunpack.c.0.s8 %v2448
        %v2450 = vlaneseq
        %v2451 = vshrl.u32 %v2450, 7
        %v2452 = vsub.s32 %v2449, %v2451
        %v2453 = vrot.slane %v2446, %v2452
        %v2454 = vcombine.high %v2438, 0.0
        %v2455 = vcombine.high %v2445, 0.0
        %v2456 = vcombine.high %v2453, 0.0
        %2458 = vrot.lane.b32.xlu0 %v2454, 8
        %v2459 = vpop.permute.xlu0 %2458
        %2462 = vrot.lane.b32.xlu0 %v2445, 16
        %v2463 = vpop.permute.xlu0 %2462
        %2466 = vrot.lane.b32.xlu0 %v2455, 24
        %v2467 = vpop.permute.xlu0 %2466
        %2470 = vrot.lane.b32.xlu0 %v2453, 32
        %v2471 = vpop.permute.xlu0 %2470
        %2474 = vrot.lane.b32.xlu0 %v2456, 40
        %v2475 = vpop.permute.xlu0 %2474
        %v2477 = vsel %vm2107, %v2438, %v2459
        %v2478 = vsel %vm564, %v2477, %v2463
        %v2479 = vsel %vm2110, %v2478, %v2467
        %v2480 = vsel %vm566, %v2479, %v2471
        %v2481 = vsel %vm2113, %v2480, %v2475
        %2486 = vrot.lane.b32.xlu0 %v2305, 127
        %v2487 = vpop.permute.xlu0 %2486
        %2488 = vrot.lane.b32.xlu0 %v2306, 127
        %v2489 = vpop.permute.xlu0 %2488
        %2490 = vrot.lane.b32.xlu0 %v2307, 127
        %v2491 = vpop.permute.xlu0 %2490
        %2492 = vrot.lane.b32.xlu0 %v2308, 127
        %v2493 = vpop.permute.xlu0 %2492
        %v2498 = vcombine.low %v2487, %v2491
        %v2499 = vcombine.high %v2487, %v2491
        %v2501 = vunpack.c.l.s4 1983009808
        %v2502 = vunpack.c.0.s8 %v2501
        %v2503 = vlaneseq
        %v2504 = vshrl.u32 %v2503, 7
        %v2505 = vsub.s32 %v2502, %v2504
        %v2506 = vrot.slane %v2498, %v2505
        %v2508 = vunpack.c.l.s4 1983009808
        %v2509 = vunpack.c.0.s8 %v2508
        %v2510 = vlaneseq
        %v2511 = vshrl.u32 %v2510, 7
        %v2512 = vsub.s32 %v2509, %v2511
        %v2513 = vrot.slane %v2499, %v2512
        %v2514 = vcombine.low %v2489, %v2493
        %v2515 = vcombine.high %v2489, %v2493
        %v2517 = vunpack.c.l.s4 1983009808
        %v2518 = vunpack.c.0.s8 %v2517
        %v2519 = vlaneseq
        %v2520 = vshrl.u32 %v2519, 7
        %v2521 = vsub.s32 %v2518, %v2520
        %v2522 = vrot.slane %v2514, %v2521
        %v2524 = vunpack.c.l.s4 1983009808
        %v2525 = vunpack.c.0.s8 %v2524
        %v2526 = vlaneseq
        %v2527 = vshrl.u32 %v2526, 7
        %v2528 = vsub.s32 %v2525, %v2527
        %v2529 = vrot.slane %v2515, %v2528
        %v2530 = vcombine.low %v2506, %v2522
        %v2531 = vcombine.high %v2506, %v2522
        %v2533 = vunpack.c.l.s4 1934713408
        %v2534 = vunpack.c.0.s8 %v2533
        %v2535 = vlaneseq
        %v2536 = vshrl.u32 %v2535, 7
        %v2537 = vsub.s32 %v2534, %v2536
        %v2538 = vrot.slane %v2530, %v2537
        %v2540 = vunpack.c.l.s4 1934713408
        %v2541 = vunpack.c.0.s8 %v2540
        %v2542 = vlaneseq
        %v2543 = vshrl.u32 %v2542, 7
        %v2544 = vsub.s32 %v2541, %v2543
        %v2545 = vrot.slane %v2531, %v2544
        %v2546 = vcombine.low %v2513, %v2529
        %v2548 = vunpack.c.l.s4 1934713408
        %v2549 = vunpack.c.0.s8 %v2548
        %v2550 = vlaneseq
        %v2551 = vshrl.u32 %v2550, 7
        %v2552 = vsub.s32 %v2549, %v2551
        %v2553 = vrot.slane %v2546, %v2552
        %v2554 = vcombine.high %v2538, 0.0
        %v2555 = vcombine.high %v2545, 0.0
        %v2556 = vcombine.high %v2553, 0.0
        %2558 = vrot.lane.b32.xlu0 %v2554, 8
        %v2559 = vpop.permute.xlu0 %2558
        %2562 = vrot.lane.b32.xlu0 %v2545, 16
        %v2563 = vpop.permute.xlu0 %2562
        %2566 = vrot.lane.b32.xlu0 %v2555, 24
        %v2567 = vpop.permute.xlu0 %2566
        %2570 = vrot.lane.b32.xlu0 %v2553, 32
        %v2571 = vpop.permute.xlu0 %2570
        %2574 = vrot.lane.b32.xlu0 %v2556, 40
        %v2575 = vpop.permute.xlu0 %2574
        %v2577 = vsel %vm2107, %v2538, %v2559
        %v2578 = vsel %vm564, %v2577, %v2563
        %v2579 = vsel %vm2110, %v2578, %v2567
        %v2580 = vsel %vm566, %v2579, %v2571
        %v2581 = vsel %vm2113, %v2580, %v2575
        %v2582 = vld [vmem:[%s463 + $0x1] sm:$0x3f]
        %v2583 = vld [vmem:[%s463 + $0x9] sm:$0x3f]
        %v2584 = vld [vmem:[%s463 + $0x11] sm:$0x3f]
        %v2585 = vld [vmem:[%s463 + $0x19] sm:$0x3f]
        %v2586 = vcombine.low %v2582, %v2584
        %v2587 = vcombine.high %v2582, %v2584
        %v2589 = vunpack.c.l.s4 1983009808
        %v2590 = vunpack.c.0.s8 %v2589
        %v2591 = vlaneseq
        %v2592 = vshrl.u32 %v2591, 7
        %v2593 = vsub.s32 %v2590, %v2592
        %v2594 = vrot.slane %v2586, %v2593
        %v2596 = vunpack.c.l.s4 1983009808
        %v2597 = vunpack.c.0.s8 %v2596
        %v2598 = vlaneseq
        %v2599 = vshrl.u32 %v2598, 7
        %v2600 = vsub.s32 %v2597, %v2599
        %v2601 = vrot.slane %v2587, %v2600
        %v2602 = vcombine.low %v2583, %v2585
        %v2603 = vcombine.high %v2583, %v2585
        %v2605 = vunpack.c.l.s4 1983009808
        %v2606 = vunpack.c.0.s8 %v2605
        %v2607 = vlaneseq
        %v2608 = vshrl.u32 %v2607, 7
        %v2609 = vsub.s32 %v2606, %v2608
        %v2610 = vrot.slane %v2602, %v2609
        %v2612 = vunpack.c.l.s4 1983009808
        %v2613 = vunpack.c.0.s8 %v2612
        %v2614 = vlaneseq
        %v2615 = vshrl.u32 %v2614, 7
        %v2616 = vsub.s32 %v2613, %v2615
        %v2617 = vrot.slane %v2603, %v2616
        %v2618 = vcombine.low %v2594, %v2610
        %v2619 = vcombine.high %v2594, %v2610
        %v2621 = vunpack.c.l.s4 1934713408
        %v2622 = vunpack.c.0.s8 %v2621
        %v2623 = vlaneseq
        %v2624 = vshrl.u32 %v2623, 7
        %v2625 = vsub.s32 %v2622, %v2624
        %v2626 = vrot.slane %v2618, %v2625
        %v2628 = vunpack.c.l.s4 1934713408
        %v2629 = vunpack.c.0.s8 %v2628
        %v2630 = vlaneseq
        %v2631 = vshrl.u32 %v2630, 7
        %v2632 = vsub.s32 %v2629, %v2631
        %v2633 = vrot.slane %v2619, %v2632
        %v2634 = vcombine.low %v2601, %v2617
        %v2636 = vunpack.c.l.s4 1934713408
        %v2637 = vunpack.c.0.s8 %v2636
        %v2638 = vlaneseq
        %v2639 = vshrl.u32 %v2638, 7
        %v2640 = vsub.s32 %v2637, %v2639
        %v2641 = vrot.slane %v2634, %v2640
        %v2642 = vcombine.high %v2626, 0.0
        %v2643 = vcombine.high %v2633, 0.0
        %v2644 = vcombine.high %v2641, 0.0
        %2646 = vrot.lane.b32.xlu0 %v2642, 8
        %v2647 = vpop.permute.xlu0 %2646
        %2650 = vrot.lane.b32.xlu0 %v2633, 16
        %v2651 = vpop.permute.xlu0 %2650
        %2654 = vrot.lane.b32.xlu0 %v2643, 24
        %v2655 = vpop.permute.xlu0 %2654
        %2658 = vrot.lane.b32.xlu0 %v2641, 32
        %v2659 = vpop.permute.xlu0 %2658
        %2662 = vrot.lane.b32.xlu0 %v2644, 40
        %v2663 = vpop.permute.xlu0 %2662
        %v2665 = vsel %vm2107, %v2626, %v2647
        %v2666 = vsel %vm564, %v2665, %v2651
        %v2667 = vsel %vm2110, %v2666, %v2655
        %v2668 = vsel %vm566, %v2667, %v2659
        %v2669 = vsel %vm2113, %v2668, %v2663
        %v2670 = vld [vmem:[%s2115 + $0x1] sm:$0x3f]
        %v2671 = vld [vmem:[%s2115 + $0x9] sm:$0x3f]
        %v2672 = vld [vmem:[%s2115 + $0x11] sm:$0x3f]
        %v2673 = vld [vmem:[%s2115 + $0x19] sm:$0x3f]
        %v2674 = vcombine.low %v2670, %v2672
        %v2675 = vcombine.high %v2670, %v2672
        %v2677 = vunpack.c.l.s4 1983009808
        %v2678 = vunpack.c.0.s8 %v2677
        %v2679 = vlaneseq
        %v2680 = vshrl.u32 %v2679, 7
        %v2681 = vsub.s32 %v2678, %v2680
        %v2682 = vrot.slane %v2674, %v2681
        %v2684 = vunpack.c.l.s4 1983009808
        %v2685 = vunpack.c.0.s8 %v2684
        %v2686 = vlaneseq
        %v2687 = vshrl.u32 %v2686, 7
        %v2688 = vsub.s32 %v2685, %v2687
        %v2689 = vrot.slane %v2675, %v2688
        %v2690 = vcombine.low %v2671, %v2673
        %v2691 = vcombine.high %v2671, %v2673
        %v2693 = vunpack.c.l.s4 1983009808
        %v2694 = vunpack.c.0.s8 %v2693
        %v2695 = vlaneseq
        %v2696 = vshrl.u32 %v2695, 7
        %v2697 = vsub.s32 %v2694, %v2696
        %v2698 = vrot.slane %v2690, %v2697
        %v2700 = vunpack.c.l.s4 1983009808
        %v2701 = vunpack.c.0.s8 %v2700
        %v2702 = vlaneseq
        %v2703 = vshrl.u32 %v2702, 7
        %v2704 = vsub.s32 %v2701, %v2703
        %v2705 = vrot.slane %v2691, %v2704
        %v2706 = vcombine.low %v2682, %v2698
        %v2707 = vcombine.high %v2682, %v2698
        %v2709 = vunpack.c.l.s4 1934713408
        %v2710 = vunpack.c.0.s8 %v2709
        %v2711 = vlaneseq
        %v2712 = vshrl.u32 %v2711, 7
        %v2713 = vsub.s32 %v2710, %v2712
        %v2714 = vrot.slane %v2706, %v2713
        %v2716 = vunpack.c.l.s4 1934713408
        %v2717 = vunpack.c.0.s8 %v2716
        %v2718 = vlaneseq
        %v2719 = vshrl.u32 %v2718, 7
        %v2720 = vsub.s32 %v2717, %v2719
        %v2721 = vrot.slane %v2707, %v2720
        %v2722 = vcombine.low %v2689, %v2705
        %v2724 = vunpack.c.l.s4 1934713408
        %v2725 = vunpack.c.0.s8 %v2724
        %v2726 = vlaneseq
        %v2727 = vshrl.u32 %v2726, 7
        %v2728 = vsub.s32 %v2725, %v2727
        %v2729 = vrot.slane %v2722, %v2728
        %v2730 = vcombine.high %v2714, 0.0
        %v2731 = vcombine.high %v2721, 0.0
        %v2732 = vcombine.high %v2729, 0.0
        %2734 = vrot.lane.b32.xlu0 %v2730, 8
        %v2735 = vpop.permute.xlu0 %2734
        %2738 = vrot.lane.b32.xlu0 %v2721, 16
        %v2739 = vpop.permute.xlu0 %2738
        %2742 = vrot.lane.b32.xlu0 %v2731, 24
        %v2743 = vpop.permute.xlu0 %2742
        %2746 = vrot.lane.b32.xlu0 %v2729, 32
        %v2747 = vpop.permute.xlu0 %2746
        %2750 = vrot.lane.b32.xlu0 %v2732, 40
        %v2751 = vpop.permute.xlu0 %2750
        %v2753 = vsel %vm2107, %v2714, %v2735
        %v2754 = vsel %vm564, %v2753, %v2739
        %v2755 = vsel %vm2110, %v2754, %v2743
        %v2756 = vsel %vm566, %v2755, %v2747
        %v2757 = vsel %vm2113, %v2756, %v2751
        %2762 = vrot.lane.b32.xlu0 %v2582, 127
        %v2763 = vpop.permute.xlu0 %2762
        %2764 = vrot.lane.b32.xlu0 %v2583, 127
        %v2765 = vpop.permute.xlu0 %2764
        %2766 = vrot.lane.b32.xlu0 %v2584, 127
        %v2767 = vpop.permute.xlu0 %2766
        %2768 = vrot.lane.b32.xlu0 %v2585, 127
        %v2769 = vpop.permute.xlu0 %2768
        %v2774 = vcombine.low %v2763, %v2767
        %v2775 = vcombine.high %v2763, %v2767
        %v2777 = vunpack.c.l.s4 1983009808
        %v2778 = vunpack.c.0.s8 %v2777
        %v2779 = vlaneseq
        %v2780 = vshrl.u32 %v2779, 7
        %v2781 = vsub.s32 %v2778, %v2780
        %v2782 = vrot.slane %v2774, %v2781
        %v2784 = vunpack.c.l.s4 1983009808
        %v2785 = vunpack.c.0.s8 %v2784
        %v2786 = vlaneseq
        %v2787 = vshrl.u32 %v2786, 7
        %v2788 = vsub.s32 %v2785, %v2787
        %v2789 = vrot.slane %v2775, %v2788
        %v2790 = vcombine.low %v2765, %v2769
        %v2791 = vcombine.high %v2765, %v2769
        %v2793 = vunpack.c.l.s4 1983009808
        %v2794 = vunpack.c.0.s8 %v2793
        %v2795 = vlaneseq
        %v2796 = vshrl.u32 %v2795, 7
        %v2797 = vsub.s32 %v2794, %v2796
        %v2798 = vrot.slane %v2790, %v2797
        %v2800 = vunpack.c.l.s4 1983009808
        %v2801 = vunpack.c.0.s8 %v2800
        %v2802 = vlaneseq
        %v2803 = vshrl.u32 %v2802, 7
        %v2804 = vsub.s32 %v2801, %v2803
        %v2805 = vrot.slane %v2791, %v2804
        %v2806 = vcombine.low %v2782, %v2798
        %v2807 = vcombine.high %v2782, %v2798
        %v2809 = vunpack.c.l.s4 1934713408
        %v2810 = vunpack.c.0.s8 %v2809
        %v2811 = vlaneseq
        %v2812 = vshrl.u32 %v2811, 7
        %v2813 = vsub.s32 %v2810, %v2812
        %v2814 = vrot.slane %v2806, %v2813
        %v2816 = vunpack.c.l.s4 1934713408
        %v2817 = vunpack.c.0.s8 %v2816
        %v2818 = vlaneseq
        %v2819 = vshrl.u32 %v2818, 7
        %v2820 = vsub.s32 %v2817, %v2819
        %v2821 = vrot.slane %v2807, %v2820
        %v2822 = vcombine.low %v2789, %v2805
        %v2824 = vunpack.c.l.s4 1934713408
        %v2825 = vunpack.c.0.s8 %v2824
        %v2826 = vlaneseq
        %v2827 = vshrl.u32 %v2826, 7
        %v2828 = vsub.s32 %v2825, %v2827
        %v2829 = vrot.slane %v2822, %v2828
        %v2830 = vcombine.high %v2814, 0.0
        %v2831 = vcombine.high %v2821, 0.0
        %v2832 = vcombine.high %v2829, 0.0
        %2834 = vrot.lane.b32.xlu0 %v2830, 8
        %v2835 = vpop.permute.xlu0 %2834
        %2838 = vrot.lane.b32.xlu0 %v2821, 16
        %v2839 = vpop.permute.xlu0 %2838
        %2842 = vrot.lane.b32.xlu0 %v2831, 24
        %v2843 = vpop.permute.xlu0 %2842
        %2846 = vrot.lane.b32.xlu0 %v2829, 32
        %v2847 = vpop.permute.xlu0 %2846
        %2850 = vrot.lane.b32.xlu0 %v2832, 40
        %v2851 = vpop.permute.xlu0 %2850
        %v2853 = vsel %vm2107, %v2814, %v2835
        %v2854 = vsel %vm564, %v2853, %v2839
        %v2855 = vsel %vm2110, %v2854, %v2843
        %v2856 = vsel %vm566, %v2855, %v2847
        %v2857 = vsel %vm2113, %v2856, %v2851
        %v2859 = vrot.slane %v2203, 4
        %v2862 = vrot.slane %v2392, 4
        %v2865 = vrot.slane %v2581, 4
        %v2868 = vrot.slane %v2757, 4
        %v2870 = vsel %vm1506, %v2114, %v2859
        %v2871 = vsel %vm1506, %v2303, %v2862
        %v2872 = vsel %vm1506, %v2481, %v2865
        %v2873 = vsel %vm1506, %v2669, %v2868
        %v2874 = vld [vmem:[%s4] sm:$0xf]
        %v2875 = vld [vmem:[%s8] sm:$0xf]
        %2877 = vset.pattern.permute.xlu0 0
        %2878 = vperm.xlu0 %2877, %v2875
        %v2879 = vpop.permute.xlu0 %2878
        %v2882 = vsel %vm1518, %v2874, 0
        %v2885 = vsel %vm1506, %v2857, 0
        %2887 = vmatprep.subr.mxu0 0.0
        %v2888 = vand.u32 %v2870, 4294901760
        %2889 = vmatpush1.msra.mxu0 %v2888
        %2890 = vmatprep.subr.mxu0 0.0
        %v2891 = vand.u32 %v2871, 4294901760
        %2892 = vmatpush1.msra.mxu0 %v2891
        %2893 = vmatprep.subr.mxu0 0.0
        %v2894 = vand.u32 %v2872, 4294901760
        %2895 = vmatpush1.msra.mxu0 %v2894
        %2896 = vmatprep.subr.mxu0 0.0
        %v2897 = vand.u32 %v2873, 4294901760
        %2898 = vmatpush1.msra.mxu0 %v2897
        %2899 = vmatprep.subr.mxu0 0.0
        %v2900 = vand.u32 %v2885, 4294901760
        %2901 = vmatpush1.msra.mxu0 %v2900
        %2902 = vmatprep.subr.mxu0 0.0
        %2903 = vmatpush1.msra.mxu0 0.0
        %2904 = vmatprep.subr.mxu0 0.0
        %2905 = vmatpush1.msra.mxu0 0.0
        %2906 = vmatprep.subr.mxu0 0.0
        %2907 = vmatpush1.msra.mxu0 0.0
        %2908 = vmatprep.subr.mxu0 0.0
        %2909 = vmatpush1.msra.mxu0 0.0
        %2910 = vmatprep.subr.mxu0 0.0
        %2911 = vmatpush1.msra.mxu0 0.0
        %2912 = vmatprep.subr.mxu0 0.0
        %2913 = vmatpush1.msra.mxu0 0.0
        %2914 = vmatprep.subr.mxu0 0.0
        %2915 = vmatpush1.msra.mxu0 0.0
        %2916 = vmatprep.subr.mxu0 0.0
        %2917 = vmatpush1.msra.mxu0 0.0
        %2918 = vmatprep.subr.mxu0 0.0
        %2919 = vmatpush1.msra.mxu0 0.0
        %2920 = vmatprep.subr.mxu0 0.0
        %2921 = vmatpush1.msra.mxu0 0.0
        %2922 = vmatprep.subr.mxu0 0.0
        %2923 = vmatpush1.msra.mxu0 0.0
        %2924 = vmatprep.subr.mxu0 0.0
        %2925 = vmatpush1.msra.mxu0 0.0
        %2926 = vmatprep.subr.mxu0 0.0
        %2927 = vmatpush1.msra.mxu0 0.0
        %2928 = vmatprep.subr.mxu0 0.0
        %2929 = vmatpush1.msra.mxu0 0.0
        %2930 = vmatprep.subr.mxu0 0.0
        %2931 = vmatpush1.msra.mxu0 0.0
        %2932 = vmatprep.subr.mxu0 0.0
        %2933 = vmatpush1.msra.mxu0 0.0
        %2934 = vmatprep.subr.mxu0 0.0
        %2935 = vmatpush1.msra.mxu0 0.0
        %2936 = vmatprep.subr.mxu0 0.0
        %2937 = vmatpush1.msra.mxu0 0.0
        %2938 = vmatprep.subr.mxu0 0.0
        %2939 = vmatpush1.msra.mxu0 0.0
        %2940 = vmatprep.subr.mxu0 0.0
        %2941 = vmatpush1.msra.mxu0 0.0
        %2942 = vmatprep.subr.mxu0 0.0
        %2943 = vmatpush1.msra.mxu0 0.0
        %2944 = vmatprep.subr.mxu0 0.0
        %2945 = vmatpush1.msra.mxu0 0.0
        %2946 = vmatprep.subr.mxu0 0.0
        %2947 = vmatpush1.msra.mxu0 0.0
        %2948 = vmatprep.subr.mxu0 0.0
        %2949 = vmatpush1.msra.mxu0 0.0
        %2950 = vmatprep.subr.mxu0 0.0
        %2951 = vmatpush1.msra.mxu0 0.0
        %2952 = vmatprep.subr.mxu0 0.0
        %2953 = vmatpush1.msra.mxu0 0.0
        %2954 = vmatprep.subr.mxu0 0.0
        %2955 = vmatpush1.msra.mxu0 0.0
        %2956 = vmatprep.mubr.f32.mxu0 0.0
        %v2957 = vand.u32 %v2882, 4294901760
        %v2958 = vsub.f32 %v2882, %v2957
        %v2959 = vand.u32 %v2958, 4294901760
        %v2960 = vsub.f32 %v2958, %v2959
        %v2961 = vand.u32 %v2960, 4294901760
        %2962 = vmatmul.mubr.f32.gmra.mrb[0].mxu0 %v2961
        %v2963 = vpop.f32.mrb[0].mxu0
        %v2964 = vadd.f32 %v2879, %v2963
        %v2965 = vpop.f32.mrb[0].mxu0
        %2966 = vdwg.mxu0
        %2967 = vmatprep.subr.mxu0 0.0
        %v2968 = vand.u32 %v2870, 4294901760
        %v2969 = vsub.f32 %v2870, %v2968
        %v2970 = vand.u32 %v2969, 4294901760
        %v2971 = vsub.f32 %v2969, %v2970
        %v2972 = vand.u32 %v2971, 4294901760
        %2973 = vmatpush1.msra.mxu0 %v2972
        %2974 = vmatprep.subr.mxu0 0.0
        %v2975 = vand.u32 %v2871, 4294901760
        %v2976 = vsub.f32 %v2871, %v2975
        %v2977 = vand.u32 %v2976, 4294901760
        %v2978 = vsub.f32 %v2976, %v2977
        %v2979 = vand.u32 %v2978, 4294901760
        %2980 = vmatpush1.msra.mxu0 %v2979
        %2981 = vmatprep.subr.mxu0 0.0
        %v2982 = vand.u32 %v2872, 4294901760
        %v2983 = vsub.f32 %v2872, %v2982
        %v2984 = vand.u32 %v2983, 4294901760
        %v2985 = vsub.f32 %v2983, %v2984
        %v2986 = vand.u32 %v2985, 4294901760
        %2987 = vmatpush1.msra.mxu0 %v2986
        %2988 = vmatprep.subr.mxu0 0.0
        %v2989 = vand.u32 %v2873, 4294901760
        %v2990 = vsub.f32 %v2873, %v2989
        %v2991 = vand.u32 %v2990, 4294901760
        %v2992 = vsub.f32 %v2990, %v2991
        %v2993 = vand.u32 %v2992, 4294901760
        %2994 = vmatpush1.msra.mxu0 %v2993
        %2995 = vmatprep.subr.mxu0 0.0
        %v2996 = vand.u32 %v2885, 4294901760
        %v2997 = vsub.f32 %v2885, %v2996
        %v2998 = vand.u32 %v2997, 4294901760
        %v2999 = vsub.f32 %v2997, %v2998
        %v3000 = vand.u32 %v2999, 4294901760
        %3001 = vmatpush1.msra.mxu0 %v3000
        %3002 = vmatprep.subr.mxu0 0.0
        %3003 = vmatpush1.msra.mxu0 0.0
        %3004 = vmatprep.subr.mxu0 0.0
        %3005 = vmatpush1.msra.mxu0 0.0
        %3006 = vmatprep.subr.mxu0 0.0
        %3007 = vmatpush1.msra.mxu0 0.0
        %3008 = vmatprep.subr.mxu0 0.0
        %3009 = vmatpush1.msra.mxu0 0.0
        %3010 = vmatprep.subr.mxu0 0.0
        %3011 = vmatpush1.msra.mxu0 0.0
        %3012 = vmatprep.subr.mxu0 0.0
        %3013 = vmatpush1.msra.mxu0 0.0
        %3014 = vmatprep.subr.mxu0 0.0
        %3015 = vmatpush1.msra.mxu0 0.0
        %3016 = vmatprep.subr.mxu0 0.0
        %3017 = vmatpush1.msra.mxu0 0.0
        %3018 = vmatprep.subr.mxu0 0.0
        %3019 = vmatpush1.msra.mxu0 0.0
        %3020 = vmatprep.subr.mxu0 0.0
        %3021 = vmatpush1.msra.mxu0 0.0
        %3022 = vmatprep.subr.mxu0 0.0
        %3023 = vmatpush1.msra.mxu0 0.0
        %3024 = vmatprep.subr.mxu0 0.0
        %3025 = vmatpush1.msra.mxu0 0.0
        %3026 = vmatprep.subr.mxu0 0.0
        %3027 = vmatpush1.msra.mxu0 0.0
        %3028 = vmatprep.subr.mxu0 0.0
        %3029 = vmatpush1.msra.mxu0 0.0
        %3030 = vmatprep.subr.mxu0 0.0
        %3031 = vmatpush1.msra.mxu0 0.0
        %3032 = vmatprep.subr.mxu0 0.0
        %3033 = vmatpush1.msra.mxu0 0.0
        %3034 = vmatprep.subr.mxu0 0.0
        %3035 = vmatpush1.msra.mxu0 0.0
        %3036 = vmatprep.subr.mxu0 0.0
        %3037 = vmatpush1.msra.mxu0 0.0
        %3038 = vmatprep.subr.mxu0 0.0
        %3039 = vmatpush1.msra.mxu0 0.0
        %3040 = vmatprep.subr.mxu0 0.0
        %3041 = vmatpush1.msra.mxu0 0.0
        %3042 = vmatprep.subr.mxu0 0.0
        %3043 = vmatpush1.msra.mxu0 0.0
        %3044 = vmatprep.subr.mxu0 0.0
        %3045 = vmatpush1.msra.mxu0 0.0
        %3046 = vmatprep.subr.mxu0 0.0
        %3047 = vmatpush1.msra.mxu0 0.0
        %3048 = vmatprep.subr.mxu0 0.0
        %3049 = vmatpush1.msra.mxu0 0.0
        %3050 = vmatprep.subr.mxu0 0.0
        %3051 = vmatpush1.msra.mxu0 0.0
        %3052 = vmatprep.subr.mxu0 0.0
        %3053 = vmatpush1.msra.mxu0 0.0
        %3054 = vmatprep.subr.mxu0 0.0
        %3055 = vmatpush1.msra.mxu0 0.0
        %3056 = vmatprep.mubr.f32.mxu0 0.0
        %v3057 = vand.u32 %v2882, 4294901760
        %3058 = vmatmul.mubr.f32.gmra.mrb[0].mxu0 %v3057
        %v3059 = vpop.f32.mrb[0].mxu0
        %v3060 = vadd.f32 %v2964, %v3059
        %v3061 = vpop.f32.mrb[0].mxu0
        %3062 = vdwg.mxu0
        %3063 = vmatprep.subr.mxu0 0.0
        %v3064 = vand.u32 %v2870, 4294901760
        %v3065 = vsub.f32 %v2870, %v3064
        %3066 = vmatpush1.msra.mxu0 %v3065
        %3067 = vmatprep.subr.mxu0 0.0
        %v3068 = vand.u32 %v2871, 4294901760
        %v3069 = vsub.f32 %v2871, %v3068
        %3070 = vmatpush1.msra.mxu0 %v3069
        %3071 = vmatprep.subr.mxu0 0.0
        %v3072 = vand.u32 %v2872, 4294901760
        %v3073 = vsub.f32 %v2872, %v3072
        %3074 = vmatpush1.msra.mxu0 %v3073
        %3075 = vmatprep.subr.mxu0 0.0
        %v3076 = vand.u32 %v2873, 4294901760
        %v3077 = vsub.f32 %v2873, %v3076
        %3078 = vmatpush1.msra.mxu0 %v3077
        %3079 = vmatprep.subr.mxu0 0.0
        %v3080 = vand.u32 %v2885, 4294901760
        %v3081 = vsub.f32 %v2885, %v3080
        %3082 = vmatpush1.msra.mxu0 %v3081
        %3083 = vmatprep.subr.mxu0 0.0
        %3084 = vmatpush1.msra.mxu0 0.0
        %3085 = vmatprep.subr.mxu0 0.0
        %3086 = vmatpush1.msra.mxu0 0.0
        %3087 = vmatprep.subr.mxu0 0.0
        %3088 = vmatpush1.msra.mxu0 0.0
        %3089 = vmatprep.subr.mxu0 0.0
        %3090 = vmatpush1.msra.mxu0 0.0
        %3091 = vmatprep.subr.mxu0 0.0
        %3092 = vmatpush1.msra.mxu0 0.0
        %3093 = vmatprep.subr.mxu0 0.0
        %3094 = vmatpush1.msra.mxu0 0.0
        %3095 = vmatprep.subr.mxu0 0.0
        %3096 = vmatpush1.msra.mxu0 0.0
        %3097 = vmatprep.subr.mxu0 0.0
        %3098 = vmatpush1.msra.mxu0 0.0
        %3099 = vmatprep.subr.mxu0 0.0
        %3100 = vmatpush1.msra.mxu0 0.0
        %3101 = vmatprep.subr.mxu0 0.0
        %3102 = vmatpush1.msra.mxu0 0.0
        %3103 = vmatprep.subr.mxu0 0.0
        %3104 = vmatpush1.msra.mxu0 0.0
        %3105 = vmatprep.subr.mxu0 0.0
        %3106 = vmatpush1.msra.mxu0 0.0
        %3107 = vmatprep.subr.mxu0 0.0
        %3108 = vmatpush1.msra.mxu0 0.0
        %3109 = vmatprep.subr.mxu0 0.0
        %3110 = vmatpush1.msra.mxu0 0.0
        %3111 = vmatprep.subr.mxu0 0.0
        %3112 = vmatpush1.msra.mxu0 0.0
        %3113 = vmatprep.subr.mxu0 0.0
        %3114 = vmatpush1.msra.mxu0 0.0
        %3115 = vmatprep.subr.mxu0 0.0
        %3116 = vmatpush1.msra.mxu0 0.0
        %3117 = vmatprep.subr.mxu0 0.0
        %3118 = vmatpush1.msra.mxu0 0.0
        %3119 = vmatprep.subr.mxu0 0.0
        %3120 = vmatpush1.msra.mxu0 0.0
        %3121 = vmatprep.subr.mxu0 0.0
        %3122 = vmatpush1.msra.mxu0 0.0
        %3123 = vmatprep.subr.mxu0 0.0
        %3124 = vmatpush1.msra.mxu0 0.0
        %3125 = vmatprep.subr.mxu0 0.0
        %3126 = vmatpush1.msra.mxu0 0.0
        %3127 = vmatprep.subr.mxu0 0.0
        %3128 = vmatpush1.msra.mxu0 0.0
        %3129 = vmatprep.subr.mxu0 0.0
        %3130 = vmatpush1.msra.mxu0 0.0
        %3131 = vmatprep.subr.mxu0 0.0
        %3132 = vmatpush1.msra.mxu0 0.0
        %3133 = vmatprep.subr.mxu0 0.0
        %3134 = vmatpush1.msra.mxu0 0.0
        %3135 = vmatprep.subr.mxu0 0.0
        %3136 = vmatpush1.msra.mxu0 0.0
        %3137 = vmatprep.mubr.f32.mxu0 0.0
        %v3138 = vand.u32 %v2882, 4294901760
        %v3139 = vsub.f32 %v2882, %v3138
        %3140 = vmatmul.mubr.f32.gmra.mrb[0].mxu0 %v3139
        %v3141 = vpop.f32.mrb[0].mxu0
        %v3142 = vadd.f32 %v3060, %v3141
        %v3143 = vpop.f32.mrb[0].mxu0
        %3144 = vdwg.mxu0
        %3145 = vmatprep.subr.mxu0 0.0
        %v3146 = vand.u32 %v2870, 4294901760
        %3147 = vmatpush1.msra.mxu0 %v3146
        %3148 = vmatprep.subr.mxu0 0.0
        %v3149 = vand.u32 %v2871, 4294901760
        %3150 = vmatpush1.msra.mxu0 %v3149
        %3151 = vmatprep.subr.mxu0 0.0
        %v3152 = vand.u32 %v2872, 4294901760
        %3153 = vmatpush1.msra.mxu0 %v3152
        %3154 = vmatprep.subr.mxu0 0.0
        %v3155 = vand.u32 %v2873, 4294901760
        %3156 = vmatpush1.msra.mxu0 %v3155
        %3157 = vmatprep.subr.mxu0 0.0
        %v3158 = vand.u32 %v2885, 4294901760
        %3159 = vmatpush1.msra.mxu0 %v3158
        %3160 = vmatprep.subr.mxu0 0.0
        %3161 = vmatpush1.msra.mxu0 0.0
        %3162 = vmatprep.subr.mxu0 0.0
        %3163 = vmatpush1.msra.mxu0 0.0
        %3164 = vmatprep.subr.mxu0 0.0
        %3165 = vmatpush1.msra.mxu0 0.0
        %3166 = vmatprep.subr.mxu0 0.0
        %3167 = vmatpush1.msra.mxu0 0.0
        %3168 = vmatprep.subr.mxu0 0.0
        %3169 = vmatpush1.msra.mxu0 0.0
        %3170 = vmatprep.subr.mxu0 0.0
        %3171 = vmatpush1.msra.mxu0 0.0
        %3172 = vmatprep.subr.mxu0 0.0
        %3173 = vmatpush1.msra.mxu0 0.0
        %3174 = vmatprep.subr.mxu0 0.0
        %3175 = vmatpush1.msra.mxu0 0.0
        %3176 = vmatprep.subr.mxu0 0.0
        %3177 = vmatpush1.msra.mxu0 0.0
        %3178 = vmatprep.subr.mxu0 0.0
        %3179 = vmatpush1.msra.mxu0 0.0
        %3180 = vmatprep.subr.mxu0 0.0
        %3181 = vmatpush1.msra.mxu0 0.0
        %3182 = vmatprep.subr.mxu0 0.0
        %3183 = vmatpush1.msra.mxu0 0.0
        %3184 = vmatprep.subr.mxu0 0.0
        %3185 = vmatpush1.msra.mxu0 0.0
        %3186 = vmatprep.subr.mxu0 0.0
        %3187 = vmatpush1.msra.mxu0 0.0
        %3188 = vmatprep.subr.mxu0 0.0
        %3189 = vmatpush1.msra.mxu0 0.0
        %3190 = vmatprep.subr.mxu0 0.0
        %3191 = vmatpush1.msra.mxu0 0.0
        %3192 = vmatprep.subr.mxu0 0.0
        %3193 = vmatpush1.msra.mxu0 0.0
        %3194 = vmatprep.subr.mxu0 0.0
        %3195 = vmatpush1.msra.mxu0 0.0
        %3196 = vmatprep.subr.mxu0 0.0
        %3197 = vmatpush1.msra.mxu0 0.0
        %3198 = vmatprep.subr.mxu0 0.0
        %3199 = vmatpush1.msra.mxu0 0.0
        %3200 = vmatprep.subr.mxu0 0.0
        %3201 = vmatpush1.msra.mxu0 0.0
        %3202 = vmatprep.subr.mxu0 0.0
        %3203 = vmatpush1.msra.mxu0 0.0
        %3204 = vmatprep.subr.mxu0 0.0
        %3205 = vmatpush1.msra.mxu0 0.0
        %3206 = vmatprep.subr.mxu0 0.0
        %3207 = vmatpush1.msra.mxu0 0.0
        %3208 = vmatprep.subr.mxu0 0.0
        %3209 = vmatpush1.msra.mxu0 0.0
        %3210 = vmatprep.subr.mxu0 0.0
        %3211 = vmatpush1.msra.mxu0 0.0
        %3212 = vmatprep.subr.mxu0 0.0
        %3213 = vmatpush1.msra.mxu0 0.0
        %3214 = vmatprep.mubr.f32.mxu0 0.0
        %v3215 = vand.u32 %v2882, 4294901760
        %v3216 = vsub.f32 %v2882, %v3215
        %v3217 = vand.u32 %v3216, 4294901760
        %3218 = vmatmul.mubr.f32.gmra.mrb[0].mxu0 %v3217
        %v3219 = vpop.f32.mrb[0].mxu0
        %v3220 = vadd.f32 %v3142, %v3219
        %v3221 = vpop.f32.mrb[0].mxu0
        %3222 = vdwg.mxu0
        %3223 = vmatprep.subr.mxu0 0.0
        %v3224 = vand.u32 %v2870, 4294901760
        %v3225 = vsub.f32 %v2870, %v3224
        %v3226 = vand.u32 %v3225, 4294901760
        %3227 = vmatpush1.msra.mxu0 %v3226
        %3228 = vmatprep.subr.mxu0 0.0
        %v3229 = vand.u32 %v2871, 4294901760
        %v3230 = vsub.f32 %v2871, %v3229
        %v3231 = vand.u32 %v3230, 4294901760
        %3232 = vmatpush1.msra.mxu0 %v3231
        %3233 = vmatprep.subr.mxu0 0.0
        %v3234 = vand.u32 %v2872, 4294901760
        %v3235 = vsub.f32 %v2872, %v3234
        %v3236 = vand.u32 %v3235, 4294901760
        %3237 = vmatpush1.msra.mxu0 %v3236
        %3238 = vmatprep.subr.mxu0 0.0
        %v3239 = vand.u32 %v2873, 4294901760
        %v3240 = vsub.f32 %v2873, %v3239
        %v3241 = vand.u32 %v3240, 4294901760
        %3242 = vmatpush1.msra.mxu0 %v3241
        %3243 = vmatprep.subr.mxu0 0.0
        %v3244 = vand.u32 %v2885, 4294901760
        %v3245 = vsub.f32 %v2885, %v3244
        %v3246 = vand.u32 %v3245, 4294901760
        %3247 = vmatpush1.msra.mxu0 %v3246
        %3248 = vmatprep.subr.mxu0 0.0
        %3249 = vmatpush1.msra.mxu0 0.0
        %3250 = vmatprep.subr.mxu0 0.0
        %3251 = vmatpush1.msra.mxu0 0.0
        %3252 = vmatprep.subr.mxu0 0.0
        %3253 = vmatpush1.msra.mxu0 0.0
        %3254 = vmatprep.subr.mxu0 0.0
        %3255 = vmatpush1.msra.mxu0 0.0
        %3256 = vmatprep.subr.mxu0 0.0
        %3257 = vmatpush1.msra.mxu0 0.0
        %3258 = vmatprep.subr.mxu0 0.0
        %3259 = vmatpush1.msra.mxu0 0.0
        %3260 = vmatprep.subr.mxu0 0.0
        %3261 = vmatpush1.msra.mxu0 0.0
        %3262 = vmatprep.subr.mxu0 0.0
        %3263 = vmatpush1.msra.mxu0 0.0
        %3264 = vmatprep.subr.mxu0 0.0
        %3265 = vmatpush1.msra.mxu0 0.0
        %3266 = vmatprep.subr.mxu0 0.0
        %3267 = vmatpush1.msra.mxu0 0.0
        %3268 = vmatprep.subr.mxu0 0.0
        %3269 = vmatpush1.msra.mxu0 0.0
        %3270 = vmatprep.subr.mxu0 0.0
        %3271 = vmatpush1.msra.mxu0 0.0
        %3272 = vmatprep.subr.mxu0 0.0
        %3273 = vmatpush1.msra.mxu0 0.0
        %3274 = vmatprep.subr.mxu0 0.0
        %3275 = vmatpush1.msra.mxu0 0.0
        %3276 = vmatprep.subr.mxu0 0.0
        %3277 = vmatpush1.msra.mxu0 0.0
        %3278 = vmatprep.subr.mxu0 0.0
        %3279 = vmatpush1.msra.mxu0 0.0
        %3280 = vmatprep.subr.mxu0 0.0
        %3281 = vmatpush1.msra.mxu0 0.0
        %3282 = vmatprep.subr.mxu0 0.0
        %3283 = vmatpush1.msra.mxu0 0.0
        %3284 = vmatprep.subr.mxu0 0.0
        %3285 = vmatpush1.msra.mxu0 0.0
        %3286 = vmatprep.subr.mxu0 0.0
        %3287 = vmatpush1.msra.mxu0 0.0
        %3288 = vmatprep.subr.mxu0 0.0
        %3289 = vmatpush1.msra.mxu0 0.0
        %3290 = vmatprep.subr.mxu0 0.0
        %3291 = vmatpush1.msra.mxu0 0.0
        %3292 = vmatprep.subr.mxu0 0.0
        %3293 = vmatpush1.msra.mxu0 0.0
        %3294 = vmatprep.subr.mxu0 0.0
        %3295 = vmatpush1.msra.mxu0 0.0
        %3296 = vmatprep.subr.mxu0 0.0
        %3297 = vmatpush1.msra.mxu0 0.0
        %3298 = vmatprep.subr.mxu0 0.0
        %3299 = vmatpush1.msra.mxu0 0.0
        %3300 = vmatprep.subr.mxu0 0.0
        %3301 = vmatpush1.msra.mxu0 0.0
        %3302 = vmatprep.mubr.f32.mxu0 0.0
        %v3303 = vand.u32 %v2882, 4294901760
        %3304 = vmatmul.mubr.f32.gmra.mrb[0].mxu0 %v3303
        %v3305 = vpop.f32.mrb[0].mxu0
        %v3306 = vadd.f32 %v3220, %v3305
        %v3307 = vpop.f32.mrb[0].mxu0
        %3308 = vdwg.mxu0
        %3309 = vmatprep.subr.mxu0 0.0
        %v3310 = vand.u32 %v2870, 4294901760
        %3311 = vmatpush1.msra.mxu0 %v3310
        %3312 = vmatprep.subr.mxu0 0.0
        %v3313 = vand.u32 %v2871, 4294901760
        %3314 = vmatpush1.msra.mxu0 %v3313
        %3315 = vmatprep.subr.mxu0 0.0
        %v3316 = vand.u32 %v2872, 4294901760
        %3317 = vmatpush1.msra.mxu0 %v3316
        %3318 = vmatprep.subr.mxu0 0.0
        %v3319 = vand.u32 %v2873, 4294901760
        %3320 = vmatpush1.msra.mxu0 %v3319
        %3321 = vmatprep.subr.mxu0 0.0
        %v3322 = vand.u32 %v2885, 4294901760
        %3323 = vmatpush1.msra.mxu0 %v3322
        %3324 = vmatprep.subr.mxu0 0.0
        %3325 = vmatpush1.msra.mxu0 0.0
        %3326 = vmatprep.subr.mxu0 0.0
        %3327 = vmatpush1.msra.mxu0 0.0
        %3328 = vmatprep.subr.mxu0 0.0
        %3329 = vmatpush1.msra.mxu0 0.0
        %3330 = vmatprep.subr.mxu0 0.0
        %3331 = vmatpush1.msra.mxu0 0.0
        %3332 = vmatprep.subr.mxu0 0.0
        %3333 = vmatpush1.msra.mxu0 0.0
        %3334 = vmatprep.subr.mxu0 0.0
        %3335 = vmatpush1.msra.mxu0 0.0
        %3336 = vmatprep.subr.mxu0 0.0
        %3337 = vmatpush1.msra.mxu0 0.0
        %3338 = vmatprep.subr.mxu0 0.0
        %3339 = vmatpush1.msra.mxu0 0.0
        %3340 = vmatprep.subr.mxu0 0.0
        %3341 = vmatpush1.msra.mxu0 0.0
        %3342 = vmatprep.subr.mxu0 0.0
        %3343 = vmatpush1.msra.mxu0 0.0
        %3344 = vmatprep.subr.mxu0 0.0
        %3345 = vmatpush1.msra.mxu0 0.0
        %3346 = vmatprep.subr.mxu0 0.0
        %3347 = vmatpush1.msra.mxu0 0.0
        %3348 = vmatprep.subr.mxu0 0.0
        %3349 = vmatpush1.msra.mxu0 0.0
        %3350 = vmatprep.subr.mxu0 0.0
        %3351 = vmatpush1.msra.mxu0 0.0
        %3352 = vmatprep.subr.mxu0 0.0
        %3353 = vmatpush1.msra.mxu0 0.0
        %3354 = vmatprep.subr.mxu0 0.0
        %3355 = vmatpush1.msra.mxu0 0.0
        %3356 = vmatprep.subr.mxu0 0.0
        %3357 = vmatpush1.msra.mxu0 0.0
        %3358 = vmatprep.subr.mxu0 0.0
        %3359 = vmatpush1.msra.mxu0 0.0
        %3360 = vmatprep.subr.mxu0 0.0
        %3361 = vmatpush1.msra.mxu0 0.0
        %3362 = vmatprep.subr.mxu0 0.0
        %3363 = vmatpush1.msra.mxu0 0.0
        %3364 = vmatprep.subr.mxu0 0.0
        %3365 = vmatpush1.msra.mxu0 0.0
        %3366 = vmatprep.subr.mxu0 0.0
        %3367 = vmatpush1.msra.mxu0 0.0
        %3368 = vmatprep.subr.mxu0 0.0
        %3369 = vmatpush1.msra.mxu0 0.0
        %3370 = vmatprep.subr.mxu0 0.0
        %3371 = vmatpush1.msra.mxu0 0.0
        %3372 = vmatprep.subr.mxu0 0.0
        %3373 = vmatpush1.msra.mxu0 0.0
        %3374 = vmatprep.subr.mxu0 0.0
        %3375 = vmatpush1.msra.mxu0 0.0
        %3376 = vmatprep.subr.mxu0 0.0
        %3377 = vmatpush1.msra.mxu0 0.0
        %3378 = vmatprep.mubr.f32.mxu0 0.0
        %v3379 = vand.u32 %v2882, 4294901760
        %3380 = vmatmul.mubr.f32.gmra.mrb[0].mxu0 %v3379
        %v3381 = vpop.f32.mrb[0].mxu0
        %v3382 = vadd.f32 %v3306, %v3381
        %v3383 = vpop.f32.mrb[0].mxu0
        %3384 = vdwg.mxu0
        %v3385 = vmax.f32 %v3382, 0.0
        %v3386 = vld [vmem:[%s10] sm:$0xff]
        %v3387 = vld [vmem:[%s445] sm:$0x3f]
        %v3389 = vsel %vm2107, %v3385, 0
        %3391 = vmatprep.subr.mxu0 0.0
        %v3392 = vand.u32 %v3386, 4294901760
        %3393 = vmatpush1.msra.mxu0 %v3392
        %3394 = vmatprep.subr.mxu0 0.0
        %3395 = vmatpush1.msra.mxu0 0.0
        %3396 = vmatprep.subr.mxu0 0.0
        %3397 = vmatpush1.msra.mxu0 0.0
        %3398 = vmatprep.subr.mxu0 0.0
        %3399 = vmatpush1.msra.mxu0 0.0
        %3400 = vmatprep.subr.mxu0 0.0
        %3401 = vmatpush1.msra.mxu0 0.0
        %3402 = vmatprep.subr.mxu0 0.0
        %3403 = vmatpush1.msra.mxu0 0.0
        %3404 = vmatprep.subr.mxu0 0.0
        %3405 = vmatpush1.msra.mxu0 0.0
        %3406 = vmatprep.subr.mxu0 0.0
        %3407 = vmatpush1.msra.mxu0 0.0
        %3408 = vmatprep.subr.mxu0 0.0
        %3409 = vmatpush1.msra.mxu0 0.0
        %3410 = vmatprep.subr.mxu0 0.0
        %3411 = vmatpush1.msra.mxu0 0.0
        %3412 = vmatprep.subr.mxu0 0.0
        %3413 = vmatpush1.msra.mxu0 0.0
        %3414 = vmatprep.subr.mxu0 0.0
        %3415 = vmatpush1.msra.mxu0 0.0
        %3416 = vmatprep.subr.mxu0 0.0
        %3417 = vmatpush1.msra.mxu0 0.0
        %3418 = vmatprep.subr.mxu0 0.0
        %3419 = vmatpush1.msra.mxu0 0.0
        %3420 = vmatprep.subr.mxu0 0.0
        %3421 = vmatpush1.msra.mxu0 0.0
        %3422 = vmatprep.subr.mxu0 0.0
        %3423 = vmatpush1.msra.mxu0 0.0
        %3424 = vmatprep.subr.mxu0 0.0
        %3425 = vmatpush1.msra.mxu0 0.0
        %3426 = vmatprep.subr.mxu0 0.0
        %3427 = vmatpush1.msra.mxu0 0.0
        %3428 = vmatprep.subr.mxu0 0.0
        %3429 = vmatpush1.msra.mxu0 0.0
        %3430 = vmatprep.subr.mxu0 0.0
        %3431 = vmatpush1.msra.mxu0 0.0
        %3432 = vmatprep.subr.mxu0 0.0
        %3433 = vmatpush1.msra.mxu0 0.0
        %3434 = vmatprep.subr.mxu0 0.0
        %3435 = vmatpush1.msra.mxu0 0.0
        %3436 = vmatprep.subr.mxu0 0.0
        %3437 = vmatpush1.msra.mxu0 0.0
        %3438 = vmatprep.subr.mxu0 0.0
        %3439 = vmatpush1.msra.mxu0 0.0
        %3440 = vmatprep.subr.mxu0 0.0
        %3441 = vmatpush1.msra.mxu0 0.0
        %3442 = vmatprep.subr.mxu0 0.0
        %3443 = vmatpush1.msra.mxu0 0.0
        %3444 = vmatprep.subr.mxu0 0.0
        %3445 = vmatpush1.msra.mxu0 0.0
        %3446 = vmatprep.subr.mxu0 0.0
        %3447 = vmatpush1.msra.mxu0 0.0
        %3448 = vmatprep.subr.mxu0 0.0
        %3449 = vmatpush1.msra.mxu0 0.0
        %3450 = vmatprep.subr.mxu0 0.0
        %3451 = vmatpush1.msra.mxu0 0.0
        %3452 = vmatprep.subr.mxu0 0.0
        %3453 = vmatpush1.msra.mxu0 0.0
        %3454 = vmatprep.subr.mxu0 0.0
        %3455 = vmatpush1.msra.mxu0 0.0
        %3456 = vmatprep.mubr.f32.mxu0 0.0
        %v3457 = vand.u32 %v3389, 4294901760
        %v3458 = vsub.f32 %v3389, %v3457
        %v3459 = vand.u32 %v3458, 4294901760
        %v3460 = vsub.f32 %v3458, %v3459
        %v3461 = vand.u32 %v3460, 4294901760
        %3462 = vmatmul.mubr.f32.gmra.mrb[0].mxu0 %v3461
        %v3463 = vpop.f32.mrb[0].mxu0
        %v3464 = vadd.f32 0.0, %v3463
        %v3465 = vpop.f32.mrb[0].mxu0
        %3466 = vdwg.mxu0
        %3467 = vmatprep.subr.mxu0 0.0
        %v3468 = vand.u32 %v3386, 4294901760
        %v3469 = vsub.f32 %v3386, %v3468
        %v3470 = vand.u32 %v3469, 4294901760
        %v3471 = vsub.f32 %v3469, %v3470
        %v3472 = vand.u32 %v3471, 4294901760
        %3473 = vmatpush1.msra.mxu0 %v3472
        %3474 = vmatprep.subr.mxu0 0.0
        %3475 = vmatpush1.msra.mxu0 0.0
        %3476 = vmatprep.subr.mxu0 0.0
        %3477 = vmatpush1.msra.mxu0 0.0
        %3478 = vmatprep.subr.mxu0 0.0
        %3479 = vmatpush1.msra.mxu0 0.0
        %3480 = vmatprep.subr.mxu0 0.0
        %3481 = vmatpush1.msra.mxu0 0.0
        %3482 = vmatprep.subr.mxu0 0.0
        %3483 = vmatpush1.msra.mxu0 0.0
        %3484 = vmatprep.subr.mxu0 0.0
        %3485 = vmatpush1.msra.mxu0 0.0
        %3486 = vmatprep.subr.mxu0 0.0
        %3487 = vmatpush1.msra.mxu0 0.0
        %3488 = vmatprep.subr.mxu0 0.0
        %3489 = vmatpush1.msra.mxu0 0.0
        %3490 = vmatprep.subr.mxu0 0.0
        %3491 = vmatpush1.msra.mxu0 0.0
        %3492 = vmatprep.subr.mxu0 0.0
        %3493 = vmatpush1.msra.mxu0 0.0
        %3494 = vmatprep.subr.mxu0 0.0
        %3495 = vmatpush1.msra.mxu0 0.0
        %3496 = vmatprep.subr.mxu0 0.0
        %3497 = vmatpush1.msra.mxu0 0.0
        %3498 = vmatprep.subr.mxu0 0.0
        %3499 = vmatpush1.msra.mxu0 0.0
        %3500 = vmatprep.subr.mxu0 0.0
        %3501 = vmatpush1.msra.mxu0 0.0
        %3502 = vmatprep.subr.mxu0 0.0
        %3503 = vmatpush1.msra.mxu0 0.0
        %3504 = vmatprep.subr.mxu0 0.0
        %3505 = vmatpush1.msra.mxu0 0.0
        %3506 = vmatprep.subr.mxu0 0.0
        %3507 = vmatpush1.msra.mxu0 0.0
        %3508 = vmatprep.subr.mxu0 0.0
        %3509 = vmatpush1.msra.mxu0 0.0
        %3510 = vmatprep.subr.mxu0 0.0
        %3511 = vmatpush1.msra.mxu0 0.0
        %3512 = vmatprep.subr.mxu0 0.0
        %3513 = vmatpush1.msra.mxu0 0.0
        %3514 = vmatprep.subr.mxu0 0.0
        %3515 = vmatpush1.msra.mxu0 0.0
        %3516 = vmatprep.subr.mxu0 0.0
        %3517 = vmatpush1.msra.mxu0 0.0
        %3518 = vmatprep.subr.mxu0 0.0
        %3519 = vmatpush1.msra.mxu0 0.0
        %3520 = vmatprep.subr.mxu0 0.0
        %3521 = vmatpush1.msra.mxu0 0.0
        %3522 = vmatprep.subr.mxu0 0.0
        %3523 = vmatpush1.msra.mxu0 0.0
        %3524 = vmatprep.subr.mxu0 0.0
        %3525 = vmatpush1.msra.mxu0 0.0
        %3526 = vmatprep.subr.mxu0 0.0
        %3527 = vmatpush1.msra.mxu0 0.0
        %3528 = vmatprep.subr.mxu0 0.0
        %3529 = vmatpush1.msra.mxu0 0.0
        %3530 = vmatprep.subr.mxu0 0.0
        %3531 = vmatpush1.msra.mxu0 0.0
        %3532 = vmatprep.subr.mxu0 0.0
        %3533 = vmatpush1.msra.mxu0 0.0
        %3534 = vmatprep.subr.mxu0 0.0
        %3535 = vmatpush1.msra.mxu0 0.0
        %3536 = vmatprep.mubr.f32.mxu0 0.0
        %v3537 = vand.u32 %v3389, 4294901760
        %3538 = vmatmul.mubr.f32.gmra.mrb[0].mxu0 %v3537
        %v3539 = vpop.f32.mrb[0].mxu0
        %v3540 = vadd.f32 %v3464, %v3539
        %v3541 = vpop.f32.mrb[0].mxu0
        %3542 = vdwg.mxu0
        %3543 = vmatprep.subr.mxu0 0.0
        %v3544 = vand.u32 %v3386, 4294901760
        %v3545 = vsub.f32 %v3386, %v3544
        %3546 = vmatpush1.msra.mxu0 %v3545
        %3547 = vmatprep.subr.mxu0 0.0
        %3548 = vmatpush1.msra.mxu0 0.0
        %3549 = vmatprep.subr.mxu0 0.0
        %3550 = vmatpush1.msra.mxu0 0.0
        %3551 = vmatprep.subr.mxu0 0.0
        %3552 = vmatpush1.msra.mxu0 0.0
        %3553 = vmatprep.subr.mxu0 0.0
        %3554 = vmatpush1.msra.mxu0 0.0
        %3555 = vmatprep.subr.mxu0 0.0
        %3556 = vmatpush1.msra.mxu0 0.0
        %3557 = vmatprep.subr.mxu0 0.0
        %3558 = vmatpush1.msra.mxu0 0.0
        %3559 = vmatprep.subr.mxu0 0.0
        %3560 = vmatpush1.msra.mxu0 0.0
        %3561 = vmatprep.subr.mxu0 0.0
        %3562 = vmatpush1.msra.mxu0 0.0
        %3563 = vmatprep.subr.mxu0 0.0
        %3564 = vmatpush1.msra.mxu0 0.0
        %3565 = vmatprep.subr.mxu0 0.0
        %3566 = vmatpush1.msra.mxu0 0.0
        %3567 = vmatprep.subr.mxu0 0.0
        %3568 = vmatpush1.msra.mxu0 0.0
        %3569 = vmatprep.subr.mxu0 0.0
        %3570 = vmatpush1.msra.mxu0 0.0
        %3571 = vmatprep.subr.mxu0 0.0
        %3572 = vmatpush1.msra.mxu0 0.0
        %3573 = vmatprep.subr.mxu0 0.0
        %3574 = vmatpush1.msra.mxu0 0.0
        %3575 = vmatprep.subr.mxu0 0.0
        %3576 = vmatpush1.msra.mxu0 0.0
        %3577 = vmatprep.subr.mxu0 0.0
        %3578 = vmatpush1.msra.mxu0 0.0
        %3579 = vmatprep.subr.mxu0 0.0
        %3580 = vmatpush1.msra.mxu0 0.0
        %3581 = vmatprep.subr.mxu0 0.0
        %3582 = vmatpush1.msra.mxu0 0.0
        %3583 = vmatprep.subr.mxu0 0.0
        %3584 = vmatpush1.msra.mxu0 0.0
        %3585 = vmatprep.subr.mxu0 0.0
        %3586 = vmatpush1.msra.mxu0 0.0
        %3587 = vmatprep.subr.mxu0 0.0
        %3588 = vmatpush1.msra.mxu0 0.0
        %3589 = vmatprep.subr.mxu0 0.0
        %3590 = vmatpush1.msra.mxu0 0.0
        %3591 = vmatprep.subr.mxu0 0.0
        %3592 = vmatpush1.msra.mxu0 0.0
        %3593 = vmatprep.subr.mxu0 0.0
        %3594 = vmatpush1.msra.mxu0 0.0
        %3595 = vmatprep.subr.mxu0 0.0
        %3596 = vmatpush1.msra.mxu0 0.0
        %3597 = vmatprep.subr.mxu0 0.0
        %3598 = vmatpush1.msra.mxu0 0.0
        %3599 = vmatprep.subr.mxu0 0.0
        %3600 = vmatpush1.msra.mxu0 0.0
        %3601 = vmatprep.subr.mxu0 0.0
        %3602 = vmatpush1.msra.mxu0 0.0
        %3603 = vmatprep.subr.mxu0 0.0
        %3604 = vmatpush1.msra.mxu0 0.0
        %3605 = vmatprep.subr.mxu0 0.0
        %3606 = vmatpush1.msra.mxu0 0.0
        %3607 = vmatprep.subr.mxu0 0.0
        %3608 = vmatpush1.msra.mxu0 0.0
        %3609 = vmatprep.mubr.f32.mxu0 0.0
        %v3610 = vand.u32 %v3389, 4294901760
        %v3611 = vsub.f32 %v3389, %v3610
        %3612 = vmatmul.mubr.f32.gmra.mrb[0].mxu0 %v3611
        %v3613 = vpop.f32.mrb[0].mxu0
        %v3614 = vadd.f32 %v3540, %v3613
        %v3615 = vpop.f32.mrb[0].mxu0
        %3616 = vdwg.mxu0
        %3617 = vmatprep.subr.mxu0 0.0
        %v3618 = vand.u32 %v3386, 4294901760
        %3619 = vmatpush1.msra.mxu0 %v3618
        %3620 = vmatprep.subr.mxu0 0.0
        %3621 = vmatpush1.msra.mxu0 0.0
        %3622 = vmatprep.subr.mxu0 0.0
        %3623 = vmatpush1.msra.mxu0 0.0
        %3624 = vmatprep.subr.mxu0 0.0
        %3625 = vmatpush1.msra.mxu0 0.0
        %3626 = vmatprep.subr.mxu0 0.0
        %3627 = vmatpush1.msra.mxu0 0.0
        %3628 = vmatprep.subr.mxu0 0.0
        %3629 = vmatpush1.msra.mxu0 0.0
        %3630 = vmatprep.subr.mxu0 0.0
        %3631 = vmatpush1.msra.mxu0 0.0
        %3632 = vmatprep.subr.mxu0 0.0
        %3633 = vmatpush1.msra.mxu0 0.0
        %3634 = vmatprep.subr.mxu0 0.0
        %3635 = vmatpush1.msra.mxu0 0.0
        %3636 = vmatprep.subr.mxu0 0.0
        %3637 = vmatpush1.msra.mxu0 0.0
        %3638 = vmatprep.subr.mxu0 0.0
        %3639 = vmatpush1.msra.mxu0 0.0
        %3640 = vmatprep.subr.mxu0 0.0
        %3641 = vmatpush1.msra.mxu0 0.0
        %3642 = vmatprep.subr.mxu0 0.0
        %3643 = vmatpush1.msra.mxu0 0.0
        %3644 = vmatprep.subr.mxu0 0.0
        %3645 = vmatpush1.msra.mxu0 0.0
        %3646 = vmatprep.subr.mxu0 0.0
        %3647 = vmatpush1.msra.mxu0 0.0
        %3648 = vmatprep.subr.mxu0 0.0
        %3649 = vmatpush1.msra.mxu0 0.0
        %3650 = vmatprep.subr.mxu0 0.0
        %3651 = vmatpush1.msra.mxu0 0.0
        %3652 = vmatprep.subr.mxu0 0.0
        %3653 = vmatpush1.msra.mxu0 0.0
        %3654 = vmatprep.subr.mxu0 0.0
        %3655 = vmatpush1.msra.mxu0 0.0
        %3656 = vmatprep.subr.mxu0 0.0
        %3657 = vmatpush1.msra.mxu0 0.0
        %3658 = vmatprep.subr.mxu0 0.0
        %3659 = vmatpush1.msra.mxu0 0.0
        %3660 = vmatprep.subr.mxu0 0.0
        %3661 = vmatpush1.msra.mxu0 0.0
        %3662 = vmatprep.subr.mxu0 0.0
        %3663 = vmatpush1.msra.mxu0 0.0
        %3664 = vmatprep.subr.mxu0 0.0
        %3665 = vmatpush1.msra.mxu0 0.0
        %3666 = vmatprep.subr.mxu0 0.0
        %3667 = vmatpush1.msra.mxu0 0.0
        %3668 = vmatprep.subr.mxu0 0.0
        %3669 = vmatpush1.msra.mxu0 0.0
        %3670 = vmatprep.subr.mxu0 0.0
        %3671 = vmatpush1.msra.mxu0 0.0
        %3672 = vmatprep.subr.mxu0 0.0
        %3673 = vmatpush1.msra.mxu0 0.0
        %3674 = vmatprep.subr.mxu0 0.0
        %3675 = vmatpush1.msra.mxu0 0.0
        %3676 = vmatprep.subr.mxu0 0.0
        %3677 = vmatpush1.msra.mxu0 0.0
        %3678 = vmatprep.subr.mxu0 0.0
        %3679 = vmatpush1.msra.mxu0 0.0
        %3680 = vmatprep.subr.mxu0 0.0
        %3681 = vmatpush1.msra.mxu0 0.0
        %3682 = vmatprep.mubr.f32.mxu0 0.0
        %v3683 = vand.u32 %v3389, 4294901760
        %v3684 = vsub.f32 %v3389, %v3683
        %v3685 = vand.u32 %v3684, 4294901760
        %3686 = vmatmul.mubr.f32.gmra.mrb[0].mxu0 %v3685
        %v3687 = vpop.f32.mrb[0].mxu0
        %v3688 = vadd.f32 %v3614, %v3687
        %v3689 = vpop.f32.mrb[0].mxu0
        %3690 = vdwg.mxu0
        %3691 = vmatprep.subr.mxu0 0.0
        %v3692 = vand.u32 %v3386, 4294901760
        %v3693 = vsub.f32 %v3386, %v3692
        %v3694 = vand.u32 %v3693, 4294901760
        %3695 = vmatpush1.msra.mxu0 %v3694
        %3696 = vmatprep.subr.mxu0 0.0
        %3697 = vmatpush1.msra.mxu0 0.0
        %3698 = vmatprep.subr.mxu0 0.0
        %3699 = vmatpush1.msra.mxu0 0.0
        %3700 = vmatprep.subr.mxu0 0.0
        %3701 = vmatpush1.msra.mxu0 0.0
        %3702 = vmatprep.subr.mxu0 0.0
        %3703 = vmatpush1.msra.mxu0 0.0
        %3704 = vmatprep.subr.mxu0 0.0
        %3705 = vmatpush1.msra.mxu0 0.0
        %3706 = vmatprep.subr.mxu0 0.0
        %3707 = vmatpush1.msra.mxu0 0.0
        %3708 = vmatprep.subr.mxu0 0.0
        %3709 = vmatpush1.msra.mxu0 0.0
        %3710 = vmatprep.subr.mxu0 0.0
        %3711 = vmatpush1.msra.mxu0 0.0
        %3712 = vmatprep.subr.mxu0 0.0
        %3713 = vmatpush1.msra.mxu0 0.0
        %3714 = vmatprep.subr.mxu0 0.0
        %3715 = vmatpush1.msra.mxu0 0.0
        %3716 = vmatprep.subr.mxu0 0.0
        %3717 = vmatpush1.msra.mxu0 0.0
        %3718 = vmatprep.subr.mxu0 0.0
        %3719 = vmatpush1.msra.mxu0 0.0
        %3720 = vmatprep.subr.mxu0 0.0
        %3721 = vmatpush1.msra.mxu0 0.0
        %3722 = vmatprep.subr.mxu0 0.0
        %3723 = vmatpush1.msra.mxu0 0.0
        %3724 = vmatprep.subr.mxu0 0.0
        %3725 = vmatpush1.msra.mxu0 0.0
        %3726 = vmatprep.subr.mxu0 0.0
        %3727 = vmatpush1.msra.mxu0 0.0
        %3728 = vmatprep.subr.mxu0 0.0
        %3729 = vmatpush1.msra.mxu0 0.0
        %3730 = vmatprep.subr.mxu0 0.0
        %3731 = vmatpush1.msra.mxu0 0.0
        %3732 = vmatprep.subr.mxu0 0.0
        %3733 = vmatpush1.msra.mxu0 0.0
        %3734 = vmatprep.subr.mxu0 0.0
        %3735 = vmatpush1.msra.mxu0 0.0
        %3736 = vmatprep.subr.mxu0 0.0
        %3737 = vmatpush1.msra.mxu0 0.0
        %3738 = vmatprep.subr.mxu0 0.0
        %3739 = vmatpush1.msra.mxu0 0.0
        %3740 = vmatprep.subr.mxu0 0.0
        %3741 = vmatpush1.msra.mxu0 0.0
        %3742 = vmatprep.subr.mxu0 0.0
        %3743 = vmatpush1.msra.mxu0 0.0
        %3744 = vmatprep.subr.mxu0 0.0
        %3745 = vmatpush1.msra.mxu0 0.0
        %3746 = vmatprep.subr.mxu0 0.0
        %3747 = vmatpush1.msra.mxu0 0.0
        %3748 = vmatprep.subr.mxu0 0.0
        %3749 = vmatpush1.msra.mxu0 0.0
        %3750 = vmatprep.subr.mxu0 0.0
        %3751 = vmatpush1.msra.mxu0 0.0
        %3752 = vmatprep.subr.mxu0 0.0
        %3753 = vmatpush1.msra.mxu0 0.0
        %3754 = vmatprep.subr.mxu0 0.0
        %3755 = vmatpush1.msra.mxu0 0.0
        %3756 = vmatprep.subr.mxu0 0.0
        %3757 = vmatpush1.msra.mxu0 0.0
        %3758 = vmatprep.mubr.f32.mxu0 0.0
        %v3759 = vand.u32 %v3389, 4294901760
        %3760 = vmatmul.mubr.f32.gmra.mrb[0].mxu0 %v3759
        %v3761 = vpop.f32.mrb[0].mxu0
        %v3762 = vadd.f32 %v3688, %v3761
        %v3763 = vpop.f32.mrb[0].mxu0
        %3764 = vdwg.mxu0
        %3765 = vmatprep.subr.mxu0 0.0
        %v3766 = vand.u32 %v3386, 4294901760
        %3767 = vmatpush1.msra.mxu0 %v3766
        %3768 = vmatprep.subr.mxu0 0.0
        %3769 = vmatpush1.msra.mxu0 0.0
        %3770 = vmatprep.subr.mxu0 0.0
        %3771 = vmatpush1.msra.mxu0 0.0
        %3772 = vmatprep.subr.mxu0 0.0
        %3773 = vmatpush1.msra.mxu0 0.0
        %3774 = vmatprep.subr.mxu0 0.0
        %3775 = vmatpush1.msra.mxu0 0.0
        %3776 = vmatprep.subr.mxu0 0.0
        %3777 = vmatpush1.msra.mxu0 0.0
        %3778 = vmatprep.subr.mxu0 0.0
        %3779 = vmatpush1.msra.mxu0 0.0
        %3780 = vmatprep.subr.mxu0 0.0
        %3781 = vmatpush1.msra.mxu0 0.0
        %3782 = vmatprep.subr.mxu0 0.0
        %3783 = vmatpush1.msra.mxu0 0.0
        %3784 = vmatprep.subr.mxu0 0.0
        %3785 = vmatpush1.msra.mxu0 0.0
        %3786 = vmatprep.subr.mxu0 0.0
        %3787 = vmatpush1.msra.mxu0 0.0
        %3788 = vmatprep.subr.mxu0 0.0
        %3789 = vmatpush1.msra.mxu0 0.0
        %3790 = vmatprep.subr.mxu0 0.0
        %3791 = vmatpush1.msra.mxu0 0.0
        %3792 = vmatprep.subr.mxu0 0.0
        %3793 = vmatpush1.msra.mxu0 0.0
        %3794 = vmatprep.subr.mxu0 0.0
        %3795 = vmatpush1.msra.mxu0 0.0
        %3796 = vmatprep.subr.mxu0 0.0
        %3797 = vmatpush1.msra.mxu0 0.0
        %3798 = vmatprep.subr.mxu0 0.0
        %3799 = vmatpush1.msra.mxu0 0.0
        %3800 = vmatprep.subr.mxu0 0.0
        %3801 = vmatpush1.msra.mxu0 0.0
        %3802 = vmatprep.subr.mxu0 0.0
        %3803 = vmatpush1.msra.mxu0 0.0
        %3804 = vmatprep.subr.mxu0 0.0
        %3805 = vmatpush1.msra.mxu0 0.0
        %3806 = vmatprep.subr.mxu0 0.0
        %3807 = vmatpush1.msra.mxu0 0.0
        %3808 = vmatprep.subr.mxu0 0.0
        %3809 = vmatpush1.msra.mxu0 0.0
        %3810 = vmatprep.subr.mxu0 0.0
        %3811 = vmatpush1.msra.mxu0 0.0
        %3812 = vmatprep.subr.mxu0 0.0
        %3813 = vmatpush1.msra.mxu0 0.0
        %3814 = vmatprep.subr.mxu0 0.0
        %3815 = vmatpush1.msra.mxu0 0.0
        %3816 = vmatprep.subr.mxu0 0.0
        %3817 = vmatpush1.msra.mxu0 0.0
        %3818 = vmatprep.subr.mxu0 0.0
        %3819 = vmatpush1.msra.mxu0 0.0
        %3820 = vmatprep.subr.mxu0 0.0
        %3821 = vmatpush1.msra.mxu0 0.0
        %3822 = vmatprep.subr.mxu0 0.0
        %3823 = vmatpush1.msra.mxu0 0.0
        %3824 = vmatprep.subr.mxu0 0.0
        %3825 = vmatpush1.msra.mxu0 0.0
        %3826 = vmatprep.subr.mxu0 0.0
        %3827 = vmatpush1.msra.mxu0 0.0
        %3828 = vmatprep.subr.mxu0 0.0
        %3829 = vmatpush1.msra.mxu0 0.0
        %3830 = vmatprep.mubr.f32.mxu0 0.0
        %v3831 = vand.u32 %v3389, 4294901760
        %3832 = vmatmul.mubr.f32.gmra.mrb[0].mxu0 %v3831
        %v3833 = vpop.f32.mrb[0].mxu0
        %v3834 = vadd.f32 %v3762, %v3833
        %v3835 = vpop.f32.mrb[0].mxu0
        %3836 = vdwg.mxu0
        %v3837 = vlaneseq
        %v3838 = vshrl.u32 %v3837, 7
        %v3839 = vsub.s32 0, %v3838
        %v3840 = vrot.slane %v3387, %v3839
        %v3841 = vmul.f32 %v3840, %v3834
        %3842 = vrot.lane.b32.xlu0 %v3385, 120
        %v3843 = vpop.permute.xlu0 %3842
        %v3844 = vsel %vm2107, %v3843, 0
        %3846 = vmatprep.subr.mxu0 0.0
        %v3847 = vand.u32 %v3386, 4294901760
        %3848 = vmatpush1.msra.mxu0 %v3847
        %3849 = vmatprep.subr.mxu0 0.0
        %3850 = vmatpush1.msra.mxu0 0.0
        %3851 = vmatprep.subr.mxu0 0.0
        %3852 = vmatpush1.msra.mxu0 0.0
        %3853 = vmatprep.subr.mxu0 0.0
        %3854 = vmatpush1.msra.mxu0 0.0
        %3855 = vmatprep.subr.mxu0 0.0
        %3856 = vmatpush1.msra.mxu0 0.0
        %3857 = vmatprep.subr.mxu0 0.0
        %3858 = vmatpush1.msra.mxu0 0.0
        %3859 = vmatprep.subr.mxu0 0.0
        %3860 = vmatpush1.msra.mxu0 0.0
        %3861 = vmatprep.subr.mxu0 0.0
        %3862 = vmatpush1.msra.mxu0 0.0
        %3863 = vmatprep.subr.mxu0 0.0
        %3864 = vmatpush1.msra.mxu0 0.0
        %3865 = vmatprep.subr.mxu0 0.0
        %3866 = vmatpush1.msra.mxu0 0.0
        %3867 = vmatprep.subr.mxu0 0.0
        %3868 = vmatpush1.msra.mxu0 0.0
        %3869 = vmatprep.subr.mxu0 0.0
        %3870 = vmatpush1.msra.mxu0 0.0
        %3871 = vmatprep.subr.mxu0 0.0
        %3872 = vmatpush1.msra.mxu0 0.0
        %3873 = vmatprep.subr.mxu0 0.0
        %3874 = vmatpush1.msra.mxu0 0.0
        %3875 = vmatprep.subr.mxu0 0.0
        %3876 = vmatpush1.msra.mxu0 0.0
        %3877 = vmatprep.subr.mxu0 0.0
        %3878 = vmatpush1.msra.mxu0 0.0
        %3879 = vmatprep.subr.mxu0 0.0
        %3880 = vmatpush1.msra.mxu0 0.0
        %3881 = vmatprep.subr.mxu0 0.0
        %3882 = vmatpush1.msra.mxu0 0.0
        %3883 = vmatprep.subr.mxu0 0.0
        %3884 = vmatpush1.msra.mxu0 0.0
        %3885 = vmatprep.subr.mxu0 0.0
        %3886 = vmatpush1.msra.mxu0 0.0
        %3887 = vmatprep.subr.mxu0 0.0
        %3888 = vmatpush1.msra.mxu0 0.0
        %3889 = vmatprep.subr.mxu0 0.0
        %3890 = vmatpush1.msra.mxu0 0.0
        %3891 = vmatprep.subr.mxu0 0.0
        %3892 = vmatpush1.msra.mxu0 0.0
        %3893 = vmatprep.subr.mxu0 0.0
        %3894 = vmatpush1.msra.mxu0 0.0
        %3895 = vmatprep.subr.mxu0 0.0
        %3896 = vmatpush1.msra.mxu0 0.0
        %3897 = vmatprep.subr.mxu0 0.0
        %3898 = vmatpush1.msra.mxu0 0.0
        %3899 = vmatprep.subr.mxu0 0.0
        %3900 = vmatpush1.msra.mxu0 0.0
        %3901 = vmatprep.subr.mxu0 0.0
        %3902 = vmatpush1.msra.mxu0 0.0
        %3903 = vmatprep.subr.mxu0 0.0
        %3904 = vmatpush1.msra.mxu0 0.0
        %3905 = vmatprep.subr.mxu0 0.0
        %3906 = vmatpush1.msra.mxu0 0.0
        %3907 = vmatprep.subr.mxu0 0.0
        %3908 = vmatpush1.msra.mxu0 0.0
        %3909 = vmatprep.subr.mxu0 0.0
        %3910 = vmatpush1.msra.mxu0 0.0
        %3911 = vmatprep.mubr.f32.mxu0 0.0
        %v3912 = vand.u32 %v3844, 4294901760
        %v3913 = vsub.f32 %v3844, %v3912
        %v3914 = vand.u32 %v3913, 4294901760
        %v3915 = vsub.f32 %v3913, %v3914
        %v3916 = vand.u32 %v3915, 4294901760
        %3917 = vmatmul.mubr.f32.gmra.mrb[0].mxu0 %v3916
        %v3918 = vpop.f32.mrb[0].mxu0
        %v3919 = vadd.f32 0.0, %v3918
        %v3920 = vpop.f32.mrb[0].mxu0
        %3921 = vdwg.mxu0
        %3922 = vmatprep.subr.mxu0 0.0
        %v3923 = vand.u32 %v3386, 4294901760
        %v3924 = vsub.f32 %v3386, %v3923
        %v3925 = vand.u32 %v3924, 4294901760
        %v3926 = vsub.f32 %v3924, %v3925
        %v3927 = vand.u32 %v3926, 4294901760
        %3928 = vmatpush1.msra.mxu0 %v3927
        %3929 = vmatprep.subr.mxu0 0.0
        %3930 = vmatpush1.msra.mxu0 0.0
        %3931 = vmatprep.subr.mxu0 0.0
        %3932 = vmatpush1.msra.mxu0 0.0
        %3933 = vmatprep.subr.mxu0 0.0
        %3934 = vmatpush1.msra.mxu0 0.0
        %3935 = vmatprep.subr.mxu0 0.0
        %3936 = vmatpush1.msra.mxu0 0.0
        %3937 = vmatprep.subr.mxu0 0.0
        %3938 = vmatpush1.msra.mxu0 0.0
        %3939 = vmatprep.subr.mxu0 0.0
        %3940 = vmatpush1.msra.mxu0 0.0
        %3941 = vmatprep.subr.mxu0 0.0
        %3942 = vmatpush1.msra.mxu0 0.0
        %3943 = vmatprep.subr.mxu0 0.0
        %3944 = vmatpush1.msra.mxu0 0.0
        %3945 = vmatprep.subr.mxu0 0.0
        %3946 = vmatpush1.msra.mxu0 0.0
        %3947 = vmatprep.subr.mxu0 0.0
        %3948 = vmatpush1.msra.mxu0 0.0
        %3949 = vmatprep.subr.mxu0 0.0
        %3950 = vmatpush1.msra.mxu0 0.0
        %3951 = vmatprep.subr.mxu0 0.0
        %3952 = vmatpush1.msra.mxu0 0.0
        %3953 = vmatprep.subr.mxu0 0.0
        %3954 = vmatpush1.msra.mxu0 0.0
        %3955 = vmatprep.subr.mxu0 0.0
        %3956 = vmatpush1.msra.mxu0 0.0
        %3957 = vmatprep.subr.mxu0 0.0
        %3958 = vmatpush1.msra.mxu0 0.0
        %3959 = vmatprep.subr.mxu0 0.0
        %3960 = vmatpush1.msra.mxu0 0.0
        %3961 = vmatprep.subr.mxu0 0.0
        %3962 = vmatpush1.msra.mxu0 0.0
        %3963 = vmatprep.subr.mxu0 0.0
        %3964 = vmatpush1.msra.mxu0 0.0
        %3965 = vmatprep.subr.mxu0 0.0
        %3966 = vmatpush1.msra.mxu0 0.0
        %3967 = vmatprep.subr.mxu0 0.0
        %3968 = vmatpush1.msra.mxu0 0.0
        %3969 = vmatprep.subr.mxu0 0.0
        %3970 = vmatpush1.msra.mxu0 0.0
        %3971 = vmatprep.subr.mxu0 0.0
        %3972 = vmatpush1.msra.mxu0 0.0
        %3973 = vmatprep.subr.mxu0 0.0
        %3974 = vmatpush1.msra.mxu0 0.0
        %3975 = vmatprep.subr.mxu0 0.0
        %3976 = vmatpush1.msra.mxu0 0.0
        %3977 = vmatprep.subr.mxu0 0.0
        %3978 = vmatpush1.msra.mxu0 0.0
        %3979 = vmatprep.subr.mxu0 0.0
        %3980 = vmatpush1.msra.mxu0 0.0
        %3981 = vmatprep.subr.mxu0 0.0
        %3982 = vmatpush1.msra.mxu0 0.0
        %3983 = vmatprep.subr.mxu0 0.0
        %3984 = vmatpush1.msra.mxu0 0.0
        %3985 = vmatprep.subr.mxu0 0.0
        %3986 = vmatpush1.msra.mxu0 0.0
        %3987 = vmatprep.subr.mxu0 0.0
        %3988 = vmatpush1.msra.mxu0 0.0
        %3989 = vmatprep.subr.mxu0 0.0
        %3990 = vmatpush1.msra.mxu0 0.0
        %3991 = vmatprep.mubr.f32.mxu0 0.0
        %v3992 = vand.u32 %v3844, 4294901760
        %3993 = vmatmul.mubr.f32.gmra.mrb[0].mxu0 %v3992
        %v3994 = vpop.f32.mrb[0].mxu0
        %v3995 = vadd.f32 %v3919, %v3994
        %v3996 = vpop.f32.mrb[0].mxu0
        %3997 = vdwg.mxu0
        %3998 = vmatprep.subr.mxu0 0.0
        %v3999 = vand.u32 %v3386, 4294901760
        %v4000 = vsub.f32 %v3386, %v3999
        %4001 = vmatpush1.msra.mxu0 %v4000
        %4002 = vmatprep.subr.mxu0 0.0
        %4003 = vmatpush1.msra.mxu0 0.0
        %4004 = vmatprep.subr.mxu0 0.0
        %4005 = vmatpush1.msra.mxu0 0.0
        %4006 = vmatprep.subr.mxu0 0.0
        %4007 = vmatpush1.msra.mxu0 0.0
        %4008 = vmatprep.subr.mxu0 0.0
        %4009 = vmatpush1.msra.mxu0 0.0
        %4010 = vmatprep.subr.mxu0 0.0
        %4011 = vmatpush1.msra.mxu0 0.0
        %4012 = vmatprep.subr.mxu0 0.0
        %4013 = vmatpush1.msra.mxu0 0.0
        %4014 = vmatprep.subr.mxu0 0.0
        %4015 = vmatpush1.msra.mxu0 0.0
        %4016 = vmatprep.subr.mxu0 0.0
        %4017 = vmatpush1.msra.mxu0 0.0
        %4018 = vmatprep.subr.mxu0 0.0
        %4019 = vmatpush1.msra.mxu0 0.0
        %4020 = vmatprep.subr.mxu0 0.0
        %4021 = vmatpush1.msra.mxu0 0.0
        %4022 = vmatprep.subr.mxu0 0.0
        %4023 = vmatpush1.msra.mxu0 0.0
        %4024 = vmatprep.subr.mxu0 0.0
        %4025 = vmatpush1.msra.mxu0 0.0
        %4026 = vmatprep.subr.mxu0 0.0
        %4027 = vmatpush1.msra.mxu0 0.0
        %4028 = vmatprep.subr.mxu0 0.0
        %4029 = vmatpush1.msra.mxu0 0.0
        %4030 = vmatprep.subr.mxu0 0.0
        %4031 = vmatpush1.msra.mxu0 0.0
        %4032 = vmatprep.subr.mxu0 0.0
        %4033 = vmatpush1.msra.mxu0 0.0
        %4034 = vmatprep.subr.mxu0 0.0
        %4035 = vmatpush1.msra.mxu0 0.0
        %4036 = vmatprep.subr.mxu0 0.0
        %4037 = vmatpush1.msra.mxu0 0.0
        %4038 = vmatprep.subr.mxu0 0.0
        %4039 = vmatpush1.msra.mxu0 0.0
        %4040 = vmatprep.subr.mxu0 0.0
        %4041 = vmatpush1.msra.mxu0 0.0
        %4042 = vmatprep.subr.mxu0 0.0
        %4043 = vmatpush1.msra.mxu0 0.0
        %4044 = vmatprep.subr.mxu0 0.0
        %4045 = vmatpush1.msra.mxu0 0.0
        %4046 = vmatprep.subr.mxu0 0.0
        %4047 = vmatpush1.msra.mxu0 0.0
        %4048 = vmatprep.subr.mxu0 0.0
        %4049 = vmatpush1.msra.mxu0 0.0
        %4050 = vmatprep.subr.mxu0 0.0
        %4051 = vmatpush1.msra.mxu0 0.0
        %4052 = vmatprep.subr.mxu0 0.0
        %4053 = vmatpush1.msra.mxu0 0.0
        %4054 = vmatprep.subr.mxu0 0.0
        %4055 = vmatpush1.msra.mxu0 0.0
        %4056 = vmatprep.subr.mxu0 0.0
        %4057 = vmatpush1.msra.mxu0 0.0
        %4058 = vmatprep.subr.mxu0 0.0
        %4059 = vmatpush1.msra.mxu0 0.0
        %4060 = vmatprep.subr.mxu0 0.0
        %4061 = vmatpush1.msra.mxu0 0.0
        %4062 = vmatprep.subr.mxu0 0.0
        %4063 = vmatpush1.msra.mxu0 0.0
        %4064 = vmatprep.mubr.f32.mxu0 0.0
        %v4065 = vand.u32 %v3844, 4294901760
        %v4066 = vsub.f32 %v3844, %v4065
        %4067 = vmatmul.mubr.f32.gmra.mrb[0].mxu0 %v4066
        %v4068 = vpop.f32.mrb[0].mxu0
        %v4069 = vadd.f32 %v3995, %v4068
        %v4070 = vpop.f32.mrb[0].mxu0
        %4071 = vdwg.mxu0
        %4072 = vmatprep.subr.mxu0 0.0
        %v4073 = vand.u32 %v3386, 4294901760
        %4074 = vmatpush1.msra.mxu0 %v4073
        %4075 = vmatprep.subr.mxu0 0.0
        %4076 = vmatpush1.msra.mxu0 0.0
        %4077 = vmatprep.subr.mxu0 0.0
        %4078 = vmatpush1.msra.mxu0 0.0
        %4079 = vmatprep.subr.mxu0 0.0
        %4080 = vmatpush1.msra.mxu0 0.0
        %4081 = vmatprep.subr.mxu0 0.0
        %4082 = vmatpush1.msra.mxu0 0.0
        %4083 = vmatprep.subr.mxu0 0.0
        %4084 = vmatpush1.msra.mxu0 0.0
        %4085 = vmatprep.subr.mxu0 0.0
        %4086 = vmatpush1.msra.mxu0 0.0
        %4087 = vmatprep.subr.mxu0 0.0
        %4088 = vmatpush1.msra.mxu0 0.0
        %4089 = vmatprep.subr.mxu0 0.0
        %4090 = vmatpush1.msra.mxu0 0.0
        %4091 = vmatprep.subr.mxu0 0.0
        %4092 = vmatpush1.msra.mxu0 0.0
        %4093 = vmatprep.subr.mxu0 0.0
        %4094 = vmatpush1.msra.mxu0 0.0
        %4095 = vmatprep.subr.mxu0 0.0
        %4096 = vmatpush1.msra.mxu0 0.0
        %4097 = vmatprep.subr.mxu0 0.0
        %4098 = vmatpush1.msra.mxu0 0.0
        %4099 = vmatprep.subr.mxu0 0.0
        %4100 = vmatpush1.msra.mxu0 0.0
        %4101 = vmatprep.subr.mxu0 0.0
        %4102 = vmatpush1.msra.mxu0 0.0
        %4103 = vmatprep.subr.mxu0 0.0
        %4104 = vmatpush1.msra.mxu0 0.0
        %4105 = vmatprep.subr.mxu0 0.0
        %4106 = vmatpush1.msra.mxu0 0.0
        %4107 = vmatprep.subr.mxu0 0.0
        %4108 = vmatpush1.msra.mxu0 0.0
        %4109 = vmatprep.subr.mxu0 0.0
        %4110 = vmatpush1.msra.mxu0 0.0
        %4111 = vmatprep.subr.mxu0 0.0
        %4112 = vmatpush1.msra.mxu0 0.0
        %4113 = vmatprep.subr.mxu0 0.0
        %4114 = vmatpush1.msra.mxu0 0.0
        %4115 = vmatprep.subr.mxu0 0.0
        %4116 = vmatpush1.msra.mxu0 0.0
        %4117 = vmatprep.subr.mxu0 0.0
        %4118 = vmatpush1.msra.mxu0 0.0
        %4119 = vmatprep.subr.mxu0 0.0
        %4120 = vmatpush1.msra.mxu0 0.0
        %4121 = vmatprep.subr.mxu0 0.0
        %4122 = vmatpush1.msra.mxu0 0.0
        %4123 = vmatprep.subr.mxu0 0.0
        %4124 = vmatpush1.msra.mxu0 0.0
        %4125 = vmatprep.subr.mxu0 0.0
        %4126 = vmatpush1.msra.mxu0 0.0
        %4127 = vmatprep.subr.mxu0 0.0
        %4128 = vmatpush1.msra.mxu0 0.0
        %4129 = vmatprep.subr.mxu0 0.0
        %4130 = vmatpush1.msra.mxu0 0.0
        %4131 = vmatprep.subr.mxu0 0.0
        %4132 = vmatpush1.msra.mxu0 0.0
        %4133 = vmatprep.subr.mxu0 0.0
        %4134 = vmatpush1.msra.mxu0 0.0
        %4135 = vmatprep.subr.mxu0 0.0
        %4136 = vmatpush1.msra.mxu0 0.0
        %4137 = vmatprep.mubr.f32.mxu0 0.0
        %v4138 = vand.u32 %v3844, 4294901760
        %v4139 = vsub.f32 %v3844, %v4138
        %v4140 = vand.u32 %v4139, 4294901760
        %4141 = vmatmul.mubr.f32.gmra.mrb[0].mxu0 %v4140
        %v4142 = vpop.f32.mrb[0].mxu0
        %v4143 = vadd.f32 %v4069, %v4142
        %v4144 = vpop.f32.mrb[0].mxu0
        %4145 = vdwg.mxu0
        %4146 = vmatprep.subr.mxu0 0.0
        %v4147 = vand.u32 %v3386, 4294901760
        %v4148 = vsub.f32 %v3386, %v4147
        %v4149 = vand.u32 %v4148, 4294901760
        %4150 = vmatpush1.msra.mxu0 %v4149
        %4151 = vmatprep.subr.mxu0 0.0
        %4152 = vmatpush1.msra.mxu0 0.0
        %4153 = vmatprep.subr.mxu0 0.0
        %4154 = vmatpush1.msra.mxu0 0.0
        %4155 = vmatprep.subr.mxu0 0.0
        %4156 = vmatpush1.msra.mxu0 0.0
        %4157 = vmatprep.subr.mxu0 0.0
        %4158 = vmatpush1.msra.mxu0 0.0
        %4159 = vmatprep.subr.mxu0 0.0
        %4160 = vmatpush1.msra.mxu0 0.0
        %4161 = vmatprep.subr.mxu0 0.0
        %4162 = vmatpush1.msra.mxu0 0.0
        %4163 = vmatprep.subr.mxu0 0.0
        %4164 = vmatpush1.msra.mxu0 0.0
        %4165 = vmatprep.subr.mxu0 0.0
        %4166 = vmatpush1.msra.mxu0 0.0
        %4167 = vmatprep.subr.mxu0 0.0
        %4168 = vmatpush1.msra.mxu0 0.0
        %4169 = vmatprep.subr.mxu0 0.0
        %4170 = vmatpush1.msra.mxu0 0.0
        %4171 = vmatprep.subr.mxu0 0.0
        %4172 = vmatpush1.msra.mxu0 0.0
        %4173 = vmatprep.subr.mxu0 0.0
        %4174 = vmatpush1.msra.mxu0 0.0
        %4175 = vmatprep.subr.mxu0 0.0
        %4176 = vmatpush1.msra.mxu0 0.0
        %4177 = vmatprep.subr.mxu0 0.0
        %4178 = vmatpush1.msra.mxu0 0.0
        %4179 = vmatprep.subr.mxu0 0.0
        %4180 = vmatpush1.msra.mxu0 0.0
        %4181 = vmatprep.subr.mxu0 0.0
        %4182 = vmatpush1.msra.mxu0 0.0
        %4183 = vmatprep.subr.mxu0 0.0
        %4184 = vmatpush1.msra.mxu0 0.0
        %4185 = vmatprep.subr.mxu0 0.0
        %4186 = vmatpush1.msra.mxu0 0.0
        %4187 = vmatprep.subr.mxu0 0.0
        %4188 = vmatpush1.msra.mxu0 0.0
        %4189 = vmatprep.subr.mxu0 0.0
        %4190 = vmatpush1.msra.mxu0 0.0
        %4191 = vmatprep.subr.mxu0 0.0
        %4192 = vmatpush1.msra.mxu0 0.0
        %4193 = vmatprep.subr.mxu0 0.0
        %4194 = vmatpush1.msra.mxu0 0.0
        %4195 = vmatprep.subr.mxu0 0.0
        %4196 = vmatpush1.msra.mxu0 0.0
        %4197 = vmatprep.subr.mxu0 0.0
        %4198 = vmatpush1.msra.mxu0 0.0
        %4199 = vmatprep.subr.mxu0 0.0
        %4200 = vmatpush1.msra.mxu0 0.0
        %4201 = vmatprep.subr.mxu0 0.0
        %4202 = vmatpush1.msra.mxu0 0.0
        %4203 = vmatprep.subr.mxu0 0.0
        %4204 = vmatpush1.msra.mxu0 0.0
        %4205 = vmatprep.subr.mxu0 0.0
        %4206 = vmatpush1.msra.mxu0 0.0
        %4207 = vmatprep.subr.mxu0 0.0
        %4208 = vmatpush1.msra.mxu0 0.0
        %4209 = vmatprep.subr.mxu0 0.0
        %4210 = vmatpush1.msra.mxu0 0.0
        %4211 = vmatprep.subr.mxu0 0.0
        %4212 = vmatpush1.msra.mxu0 0.0
        %4213 = vmatprep.mubr.f32.mxu0 0.0
        %v4214 = vand.u32 %v3844, 4294901760
        %4215 = vmatmul.mubr.f32.gmra.mrb[0].mxu0 %v4214
        %v4216 = vpop.f32.mrb[0].mxu0
        %v4217 = vadd.f32 %v4143, %v4216
        %v4218 = vpop.f32.mrb[0].mxu0
        %4219 = vdwg.mxu0
        %4220 = vmatprep.subr.mxu0 0.0
        %v4221 = vand.u32 %v3386, 4294901760
        %4222 = vmatpush1.msra.mxu0 %v4221
        %4223 = vmatprep.subr.mxu0 0.0
        %4224 = vmatpush1.msra.mxu0 0.0
        %4225 = vmatprep.subr.mxu0 0.0
        %4226 = vmatpush1.msra.mxu0 0.0
        %4227 = vmatprep.subr.mxu0 0.0
        %4228 = vmatpush1.msra.mxu0 0.0
        %4229 = vmatprep.subr.mxu0 0.0
        %4230 = vmatpush1.msra.mxu0 0.0
        %4231 = vmatprep.subr.mxu0 0.0
        %4232 = vmatpush1.msra.mxu0 0.0
        %4233 = vmatprep.subr.mxu0 0.0
        %4234 = vmatpush1.msra.mxu0 0.0
        %4235 = vmatprep.subr.mxu0 0.0
        %4236 = vmatpush1.msra.mxu0 0.0
        %4237 = vmatprep.subr.mxu0 0.0
        %4238 = vmatpush1.msra.mxu0 0.0
        %4239 = vmatprep.subr.mxu0 0.0
        %4240 = vmatpush1.msra.mxu0 0.0
        %4241 = vmatprep.subr.mxu0 0.0
        %4242 = vmatpush1.msra.mxu0 0.0
        %4243 = vmatprep.subr.mxu0 0.0
        %4244 = vmatpush1.msra.mxu0 0.0
        %4245 = vmatprep.subr.mxu0 0.0
        %4246 = vmatpush1.msra.mxu0 0.0
        %4247 = vmatprep.subr.mxu0 0.0
        %4248 = vmatpush1.msra.mxu0 0.0
        %4249 = vmatprep.subr.mxu0 0.0
        %4250 = vmatpush1.msra.mxu0 0.0
        %4251 = vmatprep.subr.mxu0 0.0
        %4252 = vmatpush1.msra.mxu0 0.0
        %4253 = vmatprep.subr.mxu0 0.0
        %4254 = vmatpush1.msra.mxu0 0.0
        %4255 = vmatprep.subr.mxu0 0.0
        %4256 = vmatpush1.msra.mxu0 0.0
        %4257 = vmatprep.subr.mxu0 0.0
        %4258 = vmatpush1.msra.mxu0 0.0
        %4259 = vmatprep.subr.mxu0 0.0
        %4260 = vmatpush1.msra.mxu0 0.0
        %4261 = vmatprep.subr.mxu0 0.0
        %4262 = vmatpush1.msra.mxu0 0.0
        %4263 = vmatprep.subr.mxu0 0.0
        %4264 = vmatpush1.msra.mxu0 0.0
        %4265 = vmatprep.subr.mxu0 0.0
        %4266 = vmatpush1.msra.mxu0 0.0
        %4267 = vmatprep.subr.mxu0 0.0
        %4268 = vmatpush1.msra.mxu0 0.0
        %4269 = vmatprep.subr.mxu0 0.0
        %4270 = vmatpush1.msra.mxu0 0.0
        %4271 = vmatprep.subr.mxu0 0.0
        %4272 = vmatpush1.msra.mxu0 0.0
        %4273 = vmatprep.subr.mxu0 0.0
        %4274 = vmatpush1.msra.mxu0 0.0
        %4275 = vmatprep.subr.mxu0 0.0
        %4276 = vmatpush1.msra.mxu0 0.0
        %4277 = vmatprep.subr.mxu0 0.0
        %4278 = vmatpush1.msra.mxu0 0.0
        %4279 = vmatprep.subr.mxu0 0.0
        %4280 = vmatpush1.msra.mxu0 0.0
        %4281 = vmatprep.subr.mxu0 0.0
        %4282 = vmatpush1.msra.mxu0 0.0
        %4283 = vmatprep.subr.mxu0 0.0
        %4284 = vmatpush1.msra.mxu0 0.0
        %4285 = vmatprep.mubr.f32.mxu0 0.0
        %v4286 = vand.u32 %v3844, 4294901760
        %4287 = vmatmul.mubr.f32.gmra.mrb[0].mxu0 %v4286
        %v4288 = vpop.f32.mrb[0].mxu0
        %v4289 = vadd.f32 %v4217, %v4288
        %v4290 = vpop.f32.mrb[0].mxu0
        %4291 = vdwg.mxu0
        %v4292 = vlaneseq
        %v4293 = vshrl.u32 %v4292, 7
        %v4294 = vsub.s32 1, %v4293
        %v4295 = vrot.slane %v3387, %v4294
        %v4296 = vmul.f32 %v4295, %v4289
        %v4297 = vadd.f32 %v3841, %v4296
        %4298 = vrot.lane.b32.xlu0 %v3385, 112
        %v4299 = vpop.permute.xlu0 %4298
        %v4300 = vsel %vm2107, %v4299, 0
        %4302 = vmatprep.subr.mxu0 0.0
        %v4303 = vand.u32 %v3386, 4294901760
        %4304 = vmatpush1.msra.mxu0 %v4303
        %4305 = vmatprep.subr.mxu0 0.0
        %4306 = vmatpush1.msra.mxu0 0.0
        %4307 = vmatprep.subr.mxu0 0.0
        %4308 = vmatpush1.msra.mxu0 0.0
        %4309 = vmatprep.subr.mxu0 0.0
        %4310 = vmatpush1.msra.mxu0 0.0
        %4311 = vmatprep.subr.mxu0 0.0
        %4312 = vmatpush1.msra.mxu0 0.0
        %4313 = vmatprep.subr.mxu0 0.0
        %4314 = vmatpush1.msra.mxu0 0.0
        %4315 = vmatprep.subr.mxu0 0.0
        %4316 = vmatpush1.msra.mxu0 0.0
        %4317 = vmatprep.subr.mxu0 0.0
        %4318 = vmatpush1.msra.mxu0 0.0
        %4319 = vmatprep.subr.mxu0 0.0
        %4320 = vmatpush1.msra.mxu0 0.0
        %4321 = vmatprep.subr.mxu0 0.0
        %4322 = vmatpush1.msra.mxu0 0.0
        %4323 = vmatprep.subr.mxu0 0.0
        %4324 = vmatpush1.msra.mxu0 0.0
        %4325 = vmatprep.subr.mxu0 0.0
        %4326 = vmatpush1.msra.mxu0 0.0
        %4327 = vmatprep.subr.mxu0 0.0
        %4328 = vmatpush1.msra.mxu0 0.0
        %4329 = vmatprep.subr.mxu0 0.0
        %4330 = vmatpush1.msra.mxu0 0.0
        %4331 = vmatprep.subr.mxu0 0.0
        %4332 = vmatpush1.msra.mxu0 0.0
        %4333 = vmatprep.subr.mxu0 0.0
        %4334 = vmatpush1.msra.mxu0 0.0
        %4335 = vmatprep.subr.mxu0 0.0
        %4336 = vmatpush1.msra.mxu0 0.0
        %4337 = vmatprep.subr.mxu0 0.0
        %4338 = vmatpush1.msra.mxu0 0.0
        %4339 = vmatprep.subr.mxu0 0.0
        %4340 = vmatpush1.msra.mxu0 0.0
        %4341 = vmatprep.subr.mxu0 0.0
        %4342 = vmatpush1.msra.mxu0 0.0
        %4343 = vmatprep.subr.mxu0 0.0
        %4344 = vmatpush1.msra.mxu0 0.0
        %4345 = vmatprep.subr.mxu0 0.0
        %4346 = vmatpush1.msra.mxu0 0.0
        %4347 = vmatprep.subr.mxu0 0.0
        %4348 = vmatpush1.msra.mxu0 0.0
        %4349 = vmatprep.subr.mxu0 0.0
        %4350 = vmatpush1.msra.mxu0 0.0
        %4351 = vmatprep.subr.mxu0 0.0
        %4352 = vmatpush1.msra.mxu0 0.0
        %4353 = vmatprep.subr.mxu0 0.0
        %4354 = vmatpush1.msra.mxu0 0.0
        %4355 = vmatprep.subr.mxu0 0.0
        %4356 = vmatpush1.msra.mxu0 0.0
        %4357 = vmatprep.subr.mxu0 0.0
        %4358 = vmatpush1.msra.mxu0 0.0
        %4359 = vmatprep.subr.mxu0 0.0
        %4360 = vmatpush1.msra.mxu0 0.0
        %4361 = vmatprep.subr.mxu0 0.0
        %4362 = vmatpush1.msra.mxu0 0.0
        %4363 = vmatprep.subr.mxu0 0.0
        %4364 = vmatpush1.msra.mxu0 0.0
        %4365 = vmatprep.subr.mxu0 0.0
        %4366 = vmatpush1.msra.mxu0 0.0
        %4367 = vmatprep.mubr.f32.mxu0 0.0
        %v4368 = vand.u32 %v4300, 4294901760
        %v4369 = vsub.f32 %v4300, %v4368
        %v4370 = vand.u32 %v4369, 4294901760
        %v4371 = vsub.f32 %v4369, %v4370
        %v4372 = vand.u32 %v4371, 4294901760
        %4373 = vmatmul.mubr.f32.gmra.mrb[0].mxu0 %v4372
        %v4374 = vpop.f32.mrb[0].mxu0
        %v4375 = vadd.f32 0.0, %v4374
        %v4376 = vpop.f32.mrb[0].mxu0
        %4377 = vdwg.mxu0
        %4378 = vmatprep.subr.mxu0 0.0
        %v4379 = vand.u32 %v3386, 4294901760
        %v4380 = vsub.f32 %v3386, %v4379
        %v4381 = vand.u32 %v4380, 4294901760
        %v4382 = vsub.f32 %v4380, %v4381
        %v4383 = vand.u32 %v4382, 4294901760
        %4384 = vmatpush1.msra.mxu0 %v4383
        %4385 = vmatprep.subr.mxu0 0.0
        %4386 = vmatpush1.msra.mxu0 0.0
        %4387 = vmatprep.subr.mxu0 0.0
        %4388 = vmatpush1.msra.mxu0 0.0
        %4389 = vmatprep.subr.mxu0 0.0
        %4390 = vmatpush1.msra.mxu0 0.0
        %4391 = vmatprep.subr.mxu0 0.0
        %4392 = vmatpush1.msra.mxu0 0.0
        %4393 = vmatprep.subr.mxu0 0.0
        %4394 = vmatpush1.msra.mxu0 0.0
        %4395 = vmatprep.subr.mxu0 0.0
        %4396 = vmatpush1.msra.mxu0 0.0
        %4397 = vmatprep.subr.mxu0 0.0
        %4398 = vmatpush1.msra.mxu0 0.0
        %4399 = vmatprep.subr.mxu0 0.0
        %4400 = vmatpush1.msra.mxu0 0.0
        %4401 = vmatprep.subr.mxu0 0.0
        %4402 = vmatpush1.msra.mxu0 0.0
        %4403 = vmatprep.subr.mxu0 0.0
        %4404 = vmatpush1.msra.mxu0 0.0
        %4405 = vmatprep.subr.mxu0 0.0
        %4406 = vmatpush1.msra.mxu0 0.0
        %4407 = vmatprep.subr.mxu0 0.0
        %4408 = vmatpush1.msra.mxu0 0.0
        %4409 = vmatprep.subr.mxu0 0.0
        %4410 = vmatpush1.msra.mxu0 0.0
        %4411 = vmatprep.subr.mxu0 0.0
        %4412 = vmatpush1.msra.mxu0 0.0
        %4413 = vmatprep.subr.mxu0 0.0
        %4414 = vmatpush1.msra.mxu0 0.0
        %4415 = vmatprep.subr.mxu0 0.0
        %4416 = vmatpush1.msra.mxu0 0.0
        %4417 = vmatprep.subr.mxu0 0.0
        %4418 = vmatpush1.msra.mxu0 0.0
        %4419 = vmatprep.subr.mxu0 0.0
        %4420 = vmatpush1.msra.mxu0 0.0
        %4421 = vmatprep.subr.mxu0 0.0
        %4422 = vmatpush1.msra.mxu0 0.0
        %4423 = vmatprep.subr.mxu0 0.0
        %4424 = vmatpush1.msra.mxu0 0.0
        %4425 = vmatprep.subr.mxu0 0.0
        %4426 = vmatpush1.msra.mxu0 0.0
        %4427 = vmatprep.subr.mxu0 0.0
        %4428 = vmatpush1.msra.mxu0 0.0
        %4429 = vmatprep.subr.mxu0 0.0
        %4430 = vmatpush1.msra.mxu0 0.0
        %4431 = vmatprep.subr.mxu0 0.0
        %4432 = vmatpush1.msra.mxu0 0.0
        %4433 = vmatprep.subr.mxu0 0.0
        %4434 = vmatpush1.msra.mxu0 0.0
        %4435 = vmatprep.subr.mxu0 0.0
        %4436 = vmatpush1.msra.mxu0 0.0
        %4437 = vmatprep.subr.mxu0 0.0
        %4438 = vmatpush1.msra.mxu0 0.0
        %4439 = vmatprep.subr.mxu0 0.0
        %4440 = vmatpush1.msra.mxu0 0.0
        %4441 = vmatprep.subr.mxu0 0.0
        %4442 = vmatpush1.msra.mxu0 0.0
        %4443 = vmatprep.subr.mxu0 0.0
        %4444 = vmatpush1.msra.mxu0 0.0
        %4445 = vmatprep.subr.mxu0 0.0
        %4446 = vmatpush1.msra.mxu0 0.0
        %4447 = vmatprep.mubr.f32.mxu0 0.0
        %v4448 = vand.u32 %v4300, 4294901760
        %4449 = vmatmul.mubr.f32.gmra.mrb[0].mxu0 %v4448
        %v4450 = vpop.f32.mrb[0].mxu0
        %v4451 = vadd.f32 %v4375, %v4450
        %v4452 = vpop.f32.mrb[0].mxu0
        %4453 = vdwg.mxu0
        %4454 = vmatprep.subr.mxu0 0.0
        %v4455 = vand.u32 %v3386, 4294901760
        %v4456 = vsub.f32 %v3386, %v4455
        %4457 = vmatpush1.msra.mxu0 %v4456
        %4458 = vmatprep.subr.mxu0 0.0
        %4459 = vmatpush1.msra.mxu0 0.0
        %4460 = vmatprep.subr.mxu0 0.0
        %4461 = vmatpush1.msra.mxu0 0.0
        %4462 = vmatprep.subr.mxu0 0.0
        %4463 = vmatpush1.msra.mxu0 0.0
        %4464 = vmatprep.subr.mxu0 0.0
        %4465 = vmatpush1.msra.mxu0 0.0
        %4466 = vmatprep.subr.mxu0 0.0
        %4467 = vmatpush1.msra.mxu0 0.0
        %4468 = vmatprep.subr.mxu0 0.0
        %4469 = vmatpush1.msra.mxu0 0.0
        %4470 = vmatprep.subr.mxu0 0.0
        %4471 = vmatpush1.msra.mxu0 0.0
        %4472 = vmatprep.subr.mxu0 0.0
        %4473 = vmatpush1.msra.mxu0 0.0
        %4474 = vmatprep.subr.mxu0 0.0
        %4475 = vmatpush1.msra.mxu0 0.0
        %4476 = vmatprep.subr.mxu0 0.0
        %4477 = vmatpush1.msra.mxu0 0.0
        %4478 = vmatprep.subr.mxu0 0.0
        %4479 = vmatpush1.msra.mxu0 0.0
        %4480 = vmatprep.subr.mxu0 0.0
        %4481 = vmatpush1.msra.mxu0 0.0
        %4482 = vmatprep.subr.mxu0 0.0
        %4483 = vmatpush1.msra.mxu0 0.0
        %4484 = vmatprep.subr.mxu0 0.0
        %4485 = vmatpush1.msra.mxu0 0.0
        %4486 = vmatprep.subr.mxu0 0.0
        %4487 = vmatpush1.msra.mxu0 0.0
        %4488 = vmatprep.subr.mxu0 0.0
        %4489 = vmatpush1.msra.mxu0 0.0
        %4490 = vmatprep.subr.mxu0 0.0
        %4491 = vmatpush1.msra.mxu0 0.0
        %4492 = vmatprep.subr.mxu0 0.0
        %4493 = vmatpush1.msra.mxu0 0.0
        %4494 = vmatprep.subr.mxu0 0.0
        %4495 = vmatpush1.msra.mxu0 0.0
        %4496 = vmatprep.subr.mxu0 0.0
        %4497 = vmatpush1.msra.mxu0 0.0
        %4498 = vmatprep.subr.mxu0 0.0
        %4499 = vmatpush1.msra.mxu0 0.0
        %4500 = vmatprep.subr.mxu0 0.0
        %4501 = vmatpush1.msra.mxu0 0.0
        %4502 = vmatprep.subr.mxu0 0.0
        %4503 = vmatpush1.msra.mxu0 0.0
        %4504 = vmatprep.subr.mxu0 0.0
        %4505 = vmatpush1.msra.mxu0 0.0
        %4506 = vmatprep.subr.mxu0 0.0
        %4507 = vmatpush1.msra.mxu0 0.0
        %4508 = vmatprep.subr.mxu0 0.0
        %4509 = vmatpush1.msra.mxu0 0.0
        %4510 = vmatprep.subr.mxu0 0.0
        %4511 = vmatpush1.msra.mxu0 0.0
        %4512 = vmatprep.subr.mxu0 0.0
        %4513 = vmatpush1.msra.mxu0 0.0
        %4514 = vmatprep.subr.mxu0 0.0
        %4515 = vmatpush1.msra.mxu0 0.0
        %4516 = vmatprep.subr.mxu0 0.0
        %4517 = vmatpush1.msra.mxu0 0.0
        %4518 = vmatprep.subr.mxu0 0.0
        %4519 = vmatpush1.msra.mxu0 0.0
        %4520 = vmatprep.mubr.f32.mxu0 0.0
        %v4521 = vand.u32 %v4300, 4294901760
        %v4522 = vsub.f32 %v4300, %v4521
        %4523 = vmatmul.mubr.f32.gmra.mrb[0].mxu0 %v4522
        %v4524 = vpop.f32.mrb[0].mxu0
        %v4525 = vadd.f32 %v4451, %v4524
        %v4526 = vpop.f32.mrb[0].mxu0
        %4527 = vdwg.mxu0
        %4528 = vmatprep.subr.mxu0 0.0
        %v4529 = vand.u32 %v3386, 4294901760
        %4530 = vmatpush1.msra.mxu0 %v4529
        %4531 = vmatprep.subr.mxu0 0.0
        %4532 = vmatpush1.msra.mxu0 0.0
        %4533 = vmatprep.subr.mxu0 0.0
        %4534 = vmatpush1.msra.mxu0 0.0
        %4535 = vmatprep.subr.mxu0 0.0
        %4536 = vmatpush1.msra.mxu0 0.0
        %4537 = vmatprep.subr.mxu0 0.0
        %4538 = vmatpush1.msra.mxu0 0.0
        %4539 = vmatprep.subr.mxu0 0.0
        %4540 = vmatpush1.msra.mxu0 0.0
        %4541 = vmatprep.subr.mxu0 0.0
        %4542 = vmatpush1.msra.mxu0 0.0
        %4543 = vmatprep.subr.mxu0 0.0
        %4544 = vmatpush1.msra.mxu0 0.0
        %4545 = vmatprep.subr.mxu0 0.0
        %4546 = vmatpush1.msra.mxu0 0.0
        %4547 = vmatprep.subr.mxu0 0.0
        %4548 = vmatpush1.msra.mxu0 0.0
        %4549 = vmatprep.subr.mxu0 0.0
        %4550 = vmatpush1.msra.mxu0 0.0
        %4551 = vmatprep.subr.mxu0 0.0
        %4552 = vmatpush1.msra.mxu0 0.0
        %4553 = vmatprep.subr.mxu0 0.0
        %4554 = vmatpush1.msra.mxu0 0.0
        %4555 = vmatprep.subr.mxu0 0.0
        %4556 = vmatpush1.msra.mxu0 0.0
        %4557 = vmatprep.subr.mxu0 0.0
        %4558 = vmatpush1.msra.mxu0 0.0
        %4559 = vmatprep.subr.mxu0 0.0
        %4560 = vmatpush1.msra.mxu0 0.0
        %4561 = vmatprep.subr.mxu0 0.0
        %4562 = vmatpush1.msra.mxu0 0.0
        %4563 = vmatprep.subr.mxu0 0.0
        %4564 = vmatpush1.msra.mxu0 0.0
        %4565 = vmatprep.subr.mxu0 0.0
        %4566 = vmatpush1.msra.mxu0 0.0
        %4567 = vmatprep.subr.mxu0 0.0
        %4568 = vmatpush1.msra.mxu0 0.0
        %4569 = vmatprep.subr.mxu0 0.0
        %4570 = vmatpush1.msra.mxu0 0.0
        %4571 = vmatprep.subr.mxu0 0.0
        %4572 = vmatpush1.msra.mxu0 0.0
        %4573 = vmatprep.subr.mxu0 0.0
        %4574 = vmatpush1.msra.mxu0 0.0
        %4575 = vmatprep.subr.mxu0 0.0
        %4576 = vmatpush1.msra.mxu0 0.0
        %4577 = vmatprep.subr.mxu0 0.0
        %4578 = vmatpush1.msra.mxu0 0.0
        %4579 = vmatprep.subr.mxu0 0.0
        %4580 = vmatpush1.msra.mxu0 0.0
        %4581 = vmatprep.subr.mxu0 0.0
        %4582 = vmatpush1.msra.mxu0 0.0
        %4583 = vmatprep.subr.mxu0 0.0
        %4584 = vmatpush1.msra.mxu0 0.0
        %4585 = vmatprep.subr.mxu0 0.0
        %4586 = vmatpush1.msra.mxu0 0.0
        %4587 = vmatprep.subr.mxu0 0.0
        %4588 = vmatpush1.msra.mxu0 0.0
        %4589 = vmatprep.subr.mxu0 0.0
        %4590 = vmatpush1.msra.mxu0 0.0
        %4591 = vmatprep.subr.mxu0 0.0
        %4592 = vmatpush1.msra.mxu0 0.0
        %4593 = vmatprep.mubr.f32.mxu0 0.0
        %v4594 = vand.u32 %v4300, 4294901760
        %v4595 = vsub.f32 %v4300, %v4594
        %v4596 = vand.u32 %v4595, 4294901760
        %4597 = vmatmul.mubr.f32.gmra.mrb[0].mxu0 %v4596
        %v4598 = vpop.f32.mrb[0].mxu0
        %v4599 = vadd.f32 %v4525, %v4598
        %v4600 = vpop.f32.mrb[0].mxu0
        %4601 = vdwg.mxu0
        %4602 = vmatprep.subr.mxu0 0.0
        %v4603 = vand.u32 %v3386, 4294901760
        %v4604 = vsub.f32 %v3386, %v4603
        %v4605 = vand.u32 %v4604, 4294901760
        %4606 = vmatpush1.msra.mxu0 %v4605
        %4607 = vmatprep.subr.mxu0 0.0
        %4608 = vmatpush1.msra.mxu0 0.0
        %4609 = vmatprep.subr.mxu0 0.0
        %4610 = vmatpush1.msra.mxu0 0.0
        %4611 = vmatprep.subr.mxu0 0.0
        %4612 = vmatpush1.msra.mxu0 0.0
        %4613 = vmatprep.subr.mxu0 0.0
        %4614 = vmatpush1.msra.mxu0 0.0
        %4615 = vmatprep.subr.mxu0 0.0
        %4616 = vmatpush1.msra.mxu0 0.0
        %4617 = vmatprep.subr.mxu0 0.0
        %4618 = vmatpush1.msra.mxu0 0.0
        %4619 = vmatprep.subr.mxu0 0.0
        %4620 = vmatpush1.msra.mxu0 0.0
        %4621 = vmatprep.subr.mxu0 0.0
        %4622 = vmatpush1.msra.mxu0 0.0
        %4623 = vmatprep.subr.mxu0 0.0
        %4624 = vmatpush1.msra.mxu0 0.0
        %4625 = vmatprep.subr.mxu0 0.0
        %4626 = vmatpush1.msra.mxu0 0.0
        %4627 = vmatprep.subr.mxu0 0.0
        %4628 = vmatpush1.msra.mxu0 0.0
        %4629 = vmatprep.subr.mxu0 0.0
        %4630 = vmatpush1.msra.mxu0 0.0
        %4631 = vmatprep.subr.mxu0 0.0
        %4632 = vmatpush1.msra.mxu0 0.0
        %4633 = vmatprep.subr.mxu0 0.0
        %4634 = vmatpush1.msra.mxu0 0.0
        %4635 = vmatprep.subr.mxu0 0.0
        %4636 = vmatpush1.msra.mxu0 0.0
        %4637 = vmatprep.subr.mxu0 0.0
        %4638 = vmatpush1.msra.mxu0 0.0
        %4639 = vmatprep.subr.mxu0 0.0
        %4640 = vmatpush1.msra.mxu0 0.0
        %4641 = vmatprep.subr.mxu0 0.0
        %4642 = vmatpush1.msra.mxu0 0.0
        %4643 = vmatprep.subr.mxu0 0.0
        %4644 = vmatpush1.msra.mxu0 0.0
        %4645 = vmatprep.subr.mxu0 0.0
        %4646 = vmatpush1.msra.mxu0 0.0
        %4647 = vmatprep.subr.mxu0 0.0
        %4648 = vmatpush1.msra.mxu0 0.0
        %4649 = vmatprep.subr.mxu0 0.0
        %4650 = vmatpush1.msra.mxu0 0.0
        %4651 = vmatprep.subr.mxu0 0.0
        %4652 = vmatpush1.msra.mxu0 0.0
        %4653 = vmatprep.subr.mxu0 0.0
        %4654 = vmatpush1.msra.mxu0 0.0
        %4655 = vmatprep.subr.mxu0 0.0
        %4656 = vmatpush1.msra.mxu0 0.0
        %4657 = vmatprep.subr.mxu0 0.0
        %4658 = vmatpush1.msra.mxu0 0.0
        %4659 = vmatprep.subr.mxu0 0.0
        %4660 = vmatpush1.msra.mxu0 0.0
        %4661 = vmatprep.subr.mxu0 0.0
        %4662 = vmatpush1.msra.mxu0 0.0
        %4663 = vmatprep.subr.mxu0 0.0
        %4664 = vmatpush1.msra.mxu0 0.0
        %4665 = vmatprep.subr.mxu0 0.0
        %4666 = vmatpush1.msra.mxu0 0.0
        %4667 = vmatprep.subr.mxu0 0.0
        %4668 = vmatpush1.msra.mxu0 0.0
        %4669 = vmatprep.mubr.f32.mxu0 0.0
        %v4670 = vand.u32 %v4300, 4294901760
        %4671 = vmatmul.mubr.f32.gmra.mrb[0].mxu0 %v4670
        %v4672 = vpop.f32.mrb[0].mxu0
        %v4673 = vadd.f32 %v4599, %v4672
        %v4674 = vpop.f32.mrb[0].mxu0
        %4675 = vdwg.mxu0
        %4676 = vmatprep.subr.mxu0 0.0
        %v4677 = vand.u32 %v3386, 4294901760
        %4678 = vmatpush1.msra.mxu0 %v4677
        %4679 = vmatprep.subr.mxu0 0.0
        %4680 = vmatpush1.msra.mxu0 0.0
        %4681 = vmatprep.subr.mxu0 0.0
        %4682 = vmatpush1.msra.mxu0 0.0
        %4683 = vmatprep.subr.mxu0 0.0
        %4684 = vmatpush1.msra.mxu0 0.0
        %4685 = vmatprep.subr.mxu0 0.0
        %4686 = vmatpush1.msra.mxu0 0.0
        %4687 = vmatprep.subr.mxu0 0.0
        %4688 = vmatpush1.msra.mxu0 0.0
        %4689 = vmatprep.subr.mxu0 0.0
        %4690 = vmatpush1.msra.mxu0 0.0
        %4691 = vmatprep.subr.mxu0 0.0
        %4692 = vmatpush1.msra.mxu0 0.0
        %4693 = vmatprep.subr.mxu0 0.0
        %4694 = vmatpush1.msra.mxu0 0.0
        %4695 = vmatprep.subr.mxu0 0.0
        %4696 = vmatpush1.msra.mxu0 0.0
        %4697 = vmatprep.subr.mxu0 0.0
        %4698 = vmatpush1.msra.mxu0 0.0
        %4699 = vmatprep.subr.mxu0 0.0
        %4700 = vmatpush1.msra.mxu0 0.0
        %4701 = vmatprep.subr.mxu0 0.0
        %4702 = vmatpush1.msra.mxu0 0.0
        %4703 = vmatprep.subr.mxu0 0.0
        %4704 = vmatpush1.msra.mxu0 0.0
        %4705 = vmatprep.subr.mxu0 0.0
        %4706 = vmatpush1.msra.mxu0 0.0
        %4707 = vmatprep.subr.mxu0 0.0
        %4708 = vmatpush1.msra.mxu0 0.0
        %4709 = vmatprep.subr.mxu0 0.0
        %4710 = vmatpush1.msra.mxu0 0.0
        %4711 = vmatprep.subr.mxu0 0.0
        %4712 = vmatpush1.msra.mxu0 0.0
        %4713 = vmatprep.subr.mxu0 0.0
        %4714 = vmatpush1.msra.mxu0 0.0
        %4715 = vmatprep.subr.mxu0 0.0
        %4716 = vmatpush1.msra.mxu0 0.0
        %4717 = vmatprep.subr.mxu0 0.0
        %4718 = vmatpush1.msra.mxu0 0.0
        %4719 = vmatprep.subr.mxu0 0.0
        %4720 = vmatpush1.msra.mxu0 0.0
        %4721 = vmatprep.subr.mxu0 0.0
        %4722 = vmatpush1.msra.mxu0 0.0
        %4723 = vmatprep.subr.mxu0 0.0
        %4724 = vmatpush1.msra.mxu0 0.0
        %4725 = vmatprep.subr.mxu0 0.0
        %4726 = vmatpush1.msra.mxu0 0.0
        %4727 = vmatprep.subr.mxu0 0.0
        %4728 = vmatpush1.msra.mxu0 0.0
        %4729 = vmatprep.subr.mxu0 0.0
        %4730 = vmatpush1.msra.mxu0 0.0
        %4731 = vmatprep.subr.mxu0 0.0
        %4732 = vmatpush1.msra.mxu0 0.0
        %4733 = vmatprep.subr.mxu0 0.0
        %4734 = vmatpush1.msra.mxu0 0.0
        %4735 = vmatprep.subr.mxu0 0.0
        %4736 = vmatpush1.msra.mxu0 0.0
        %4737 = vmatprep.subr.mxu0 0.0
        %4738 = vmatpush1.msra.mxu0 0.0
        %4739 = vmatprep.subr.mxu0 0.0
        %4740 = vmatpush1.msra.mxu0 0.0
        %4741 = vmatprep.mubr.f32.mxu0 0.0
        %v4742 = vand.u32 %v4300, 4294901760
        %4743 = vmatmul.mubr.f32.gmra.mrb[0].mxu0 %v4742
        %v4744 = vpop.f32.mrb[0].mxu0
        %v4745 = vadd.f32 %v4673, %v4744
        %v4746 = vpop.f32.mrb[0].mxu0
        %4747 = vdwg.mxu0
        %v4748 = vlaneseq
        %v4749 = vshrl.u32 %v4748, 7
        %v4750 = vsub.s32 2, %v4749
        %v4751 = vrot.slane %v3387, %v4750
        %v4752 = vmul.f32 %v4751, %v4745
        %v4753 = vadd.f32 %v4297, %v4752
        %4754 = vrot.lane.b32.xlu0 %v3385, 104
        %v4755 = vpop.permute.xlu0 %4754
        %v4756 = vsel %vm2107, %v4755, 0
        %4758 = vmatprep.subr.mxu0 0.0
        %v4759 = vand.u32 %v3386, 4294901760
        %4760 = vmatpush1.msra.mxu0 %v4759
        %4761 = vmatprep.subr.mxu0 0.0
        %4762 = vmatpush1.msra.mxu0 0.0
        %4763 = vmatprep.subr.mxu0 0.0
        %4764 = vmatpush1.msra.mxu0 0.0
        %4765 = vmatprep.subr.mxu0 0.0
        %4766 = vmatpush1.msra.mxu0 0.0
        %4767 = vmatprep.subr.mxu0 0.0
        %4768 = vmatpush1.msra.mxu0 0.0
        %4769 = vmatprep.subr.mxu0 0.0
        %4770 = vmatpush1.msra.mxu0 0.0
        %4771 = vmatprep.subr.mxu0 0.0
        %4772 = vmatpush1.msra.mxu0 0.0
        %4773 = vmatprep.subr.mxu0 0.0
        %4774 = vmatpush1.msra.mxu0 0.0
        %4775 = vmatprep.subr.mxu0 0.0
        %4776 = vmatpush1.msra.mxu0 0.0
        %4777 = vmatprep.subr.mxu0 0.0
        %4778 = vmatpush1.msra.mxu0 0.0
        %4779 = vmatprep.subr.mxu0 0.0
        %4780 = vmatpush1.msra.mxu0 0.0
        %4781 = vmatprep.subr.mxu0 0.0
        %4782 = vmatpush1.msra.mxu0 0.0
        %4783 = vmatprep.subr.mxu0 0.0
        %4784 = vmatpush1.msra.mxu0 0.0
        %4785 = vmatprep.subr.mxu0 0.0
        %4786 = vmatpush1.msra.mxu0 0.0
        %4787 = vmatprep.subr.mxu0 0.0
        %4788 = vmatpush1.msra.mxu0 0.0
        %4789 = vmatprep.subr.mxu0 0.0
        %4790 = vmatpush1.msra.mxu0 0.0
        %4791 = vmatprep.subr.mxu0 0.0
        %4792 = vmatpush1.msra.mxu0 0.0
        %4793 = vmatprep.subr.mxu0 0.0
        %4794 = vmatpush1.msra.mxu0 0.0
        %4795 = vmatprep.subr.mxu0 0.0
        %4796 = vmatpush1.msra.mxu0 0.0
        %4797 = vmatprep.subr.mxu0 0.0
        %4798 = vmatpush1.msra.mxu0 0.0
        %4799 = vmatprep.subr.mxu0 0.0
        %4800 = vmatpush1.msra.mxu0 0.0
        %4801 = vmatprep.subr.mxu0 0.0
        %4802 = vmatpush1.msra.mxu0 0.0
        %4803 = vmatprep.subr.mxu0 0.0
        %4804 = vmatpush1.msra.mxu0 0.0
        %4805 = vmatprep.subr.mxu0 0.0
        %4806 = vmatpush1.msra.mxu0 0.0
        %4807 = vmatprep.subr.mxu0 0.0
        %4808 = vmatpush1.msra.mxu0 0.0
        %4809 = vmatprep.subr.mxu0 0.0
        %4810 = vmatpush1.msra.mxu0 0.0
        %4811 = vmatprep.subr.mxu0 0.0
        %4812 = vmatpush1.msra.mxu0 0.0
        %4813 = vmatprep.subr.mxu0 0.0
        %4814 = vmatpush1.msra.mxu0 0.0
        %4815 = vmatprep.subr.mxu0 0.0
        %4816 = vmatpush1.msra.mxu0 0.0
        %4817 = vmatprep.subr.mxu0 0.0
        %4818 = vmatpush1.msra.mxu0 0.0
        %4819 = vmatprep.subr.mxu0 0.0
        %4820 = vmatpush1.msra.mxu0 0.0
        %4821 = vmatprep.subr.mxu0 0.0
        %4822 = vmatpush1.msra.mxu0 0.0
        %4823 = vmatprep.mubr.f32.mxu0 0.0
        %v4824 = vand.u32 %v4756, 4294901760
        %v4825 = vsub.f32 %v4756, %v4824
        %v4826 = vand.u32 %v4825, 4294901760
        %v4827 = vsub.f32 %v4825, %v4826
        %v4828 = vand.u32 %v4827, 4294901760
        %4829 = vmatmul.mubr.f32.gmra.mrb[0].mxu0 %v4828
        %v4830 = vpop.f32.mrb[0].mxu0
        %v4831 = vadd.f32 0.0, %v4830
        %v4832 = vpop.f32.mrb[0].mxu0
        %4833 = vdwg.mxu0
        %4834 = vmatprep.subr.mxu0 0.0
        %v4835 = vand.u32 %v3386, 4294901760
        %v4836 = vsub.f32 %v3386, %v4835
        %v4837 = vand.u32 %v4836, 4294901760
        %v4838 = vsub.f32 %v4836, %v4837
        %v4839 = vand.u32 %v4838, 4294901760
        %4840 = vmatpush1.msra.mxu0 %v4839
        %4841 = vmatprep.subr.mxu0 0.0
        %4842 = vmatpush1.msra.mxu0 0.0
        %4843 = vmatprep.subr.mxu0 0.0
        %4844 = vmatpush1.msra.mxu0 0.0
        %4845 = vmatprep.subr.mxu0 0.0
        %4846 = vmatpush1.msra.mxu0 0.0
        %4847 = vmatprep.subr.mxu0 0.0
        %4848 = vmatpush1.msra.mxu0 0.0
        %4849 = vmatprep.subr.mxu0 0.0
        %4850 = vmatpush1.msra.mxu0 0.0
        %4851 = vmatprep.subr.mxu0 0.0
        %4852 = vmatpush1.msra.mxu0 0.0
        %4853 = vmatprep.subr.mxu0 0.0
        %4854 = vmatpush1.msra.mxu0 0.0
        %4855 = vmatprep.subr.mxu0 0.0
        %4856 = vmatpush1.msra.mxu0 0.0
        %4857 = vmatprep.subr.mxu0 0.0
        %4858 = vmatpush1.msra.mxu0 0.0
        %4859 = vmatprep.subr.mxu0 0.0
        %4860 = vmatpush1.msra.mxu0 0.0
        %4861 = vmatprep.subr.mxu0 0.0
        %4862 = vmatpush1.msra.mxu0 0.0
        %4863 = vmatprep.subr.mxu0 0.0
        %4864 = vmatpush1.msra.mxu0 0.0
        %4865 = vmatprep.subr.mxu0 0.0
        %4866 = vmatpush1.msra.mxu0 0.0
        %4867 = vmatprep.subr.mxu0 0.0
        %4868 = vmatpush1.msra.mxu0 0.0
        %4869 = vmatprep.subr.mxu0 0.0
        %4870 = vmatpush1.msra.mxu0 0.0
        %4871 = vmatprep.subr.mxu0 0.0
        %4872 = vmatpush1.msra.mxu0 0.0
        %4873 = vmatprep.subr.mxu0 0.0
        %4874 = vmatpush1.msra.mxu0 0.0
        %4875 = vmatprep.subr.mxu0 0.0
        %4876 = vmatpush1.msra.mxu0 0.0
        %4877 = vmatprep.subr.mxu0 0.0
        %4878 = vmatpush1.msra.mxu0 0.0
        %4879 = vmatprep.subr.mxu0 0.0
        %4880 = vmatpush1.msra.mxu0 0.0
        %4881 = vmatprep.subr.mxu0 0.0
        %4882 = vmatpush1.msra.mxu0 0.0
        %4883 = vmatprep.subr.mxu0 0.0
        %4884 = vmatpush1.msra.mxu0 0.0
        %4885 = vmatprep.subr.mxu0 0.0
        %4886 = vmatpush1.msra.mxu0 0.0
        %4887 = vmatprep.subr.mxu0 0.0
        %4888 = vmatpush1.msra.mxu0 0.0
        %4889 = vmatprep.subr.mxu0 0.0
        %4890 = vmatpush1.msra.mxu0 0.0
        %4891 = vmatprep.subr.mxu0 0.0
        %4892 = vmatpush1.msra.mxu0 0.0
        %4893 = vmatprep.subr.mxu0 0.0
        %4894 = vmatpush1.msra.mxu0 0.0
        %4895 = vmatprep.subr.mxu0 0.0
        %4896 = vmatpush1.msra.mxu0 0.0
        %4897 = vmatprep.subr.mxu0 0.0
        %4898 = vmatpush1.msra.mxu0 0.0
        %4899 = vmatprep.subr.mxu0 0.0
        %4900 = vmatpush1.msra.mxu0 0.0
        %4901 = vmatprep.subr.mxu0 0.0
        %4902 = vmatpush1.msra.mxu0 0.0
        %4903 = vmatprep.mubr.f32.mxu0 0.0
        %v4904 = vand.u32 %v4756, 4294901760
        %4905 = vmatmul.mubr.f32.gmra.mrb[0].mxu0 %v4904
        %v4906 = vpop.f32.mrb[0].mxu0
        %v4907 = vadd.f32 %v4831, %v4906
        %v4908 = vpop.f32.mrb[0].mxu0
        %4909 = vdwg.mxu0
        %4910 = vmatprep.subr.mxu0 0.0
        %v4911 = vand.u32 %v3386, 4294901760
        %v4912 = vsub.f32 %v3386, %v4911
        %4913 = vmatpush1.msra.mxu0 %v4912
        %4914 = vmatprep.subr.mxu0 0.0
        %4915 = vmatpush1.msra.mxu0 0.0
        %4916 = vmatprep.subr.mxu0 0.0
        %4917 = vmatpush1.msra.mxu0 0.0
        %4918 = vmatprep.subr.mxu0 0.0
        %4919 = vmatpush1.msra.mxu0 0.0
        %4920 = vmatprep.subr.mxu0 0.0
        %4921 = vmatpush1.msra.mxu0 0.0
        %4922 = vmatprep.subr.mxu0 0.0
        %4923 = vmatpush1.msra.mxu0 0.0
        %4924 = vmatprep.subr.mxu0 0.0
        %4925 = vmatpush1.msra.mxu0 0.0
        %4926 = vmatprep.subr.mxu0 0.0
        %4927 = vmatpush1.msra.mxu0 0.0
        %4928 = vmatprep.subr.mxu0 0.0
        %4929 = vmatpush1.msra.mxu0 0.0
        %4930 = vmatprep.subr.mxu0 0.0
        %4931 = vmatpush1.msra.mxu0 0.0
        %4932 = vmatprep.subr.mxu0 0.0
        %4933 = vmatpush1.msra.mxu0 0.0
        %4934 = vmatprep.subr.mxu0 0.0
        %4935 = vmatpush1.msra.mxu0 0.0
        %4936 = vmatprep.subr.mxu0 0.0
        %4937 = vmatpush1.msra.mxu0 0.0
        %4938 = vmatprep.subr.mxu0 0.0
        %4939 = vmatpush1.msra.mxu0 0.0
        %4940 = vmatprep.subr.mxu0 0.0
        %4941 = vmatpush1.msra.mxu0 0.0
        %4942 = vmatprep.subr.mxu0 0.0
        %4943 = vmatpush1.msra.mxu0 0.0
        %4944 = vmatprep.subr.mxu0 0.0
        %4945 = vmatpush1.msra.mxu0 0.0
        %4946 = vmatprep.subr.mxu0 0.0
        %4947 = vmatpush1.msra.mxu0 0.0
        %4948 = vmatprep.subr.mxu0 0.0
        %4949 = vmatpush1.msra.mxu0 0.0
        %4950 = vmatprep.subr.mxu0 0.0
        %4951 = vmatpush1.msra.mxu0 0.0
        %4952 = vmatprep.subr.mxu0 0.0
        %4953 = vmatpush1.msra.mxu0 0.0
        %4954 = vmatprep.subr.mxu0 0.0
        %4955 = vmatpush1.msra.mxu0 0.0
        %4956 = vmatprep.subr.mxu0 0.0
        %4957 = vmatpush1.msra.mxu0 0.0
        %4958 = vmatprep.subr.mxu0 0.0
        %4959 = vmatpush1.msra.mxu0 0.0
        %4960 = vmatprep.subr.mxu0 0.0
        %4961 = vmatpush1.msra.mxu0 0.0
        %4962 = vmatprep.subr.mxu0 0.0
        %4963 = vmatpush1.msra.mxu0 0.0
        %4964 = vmatprep.subr.mxu0 0.0
        %4965 = vmatpush1.msra.mxu0 0.0
        %4966 = vmatprep.subr.mxu0 0.0
        %4967 = vmatpush1.msra.mxu0 0.0
        %4968 = vmatprep.subr.mxu0 0.0
        %4969 = vmatpush1.msra.mxu0 0.0
        %4970 = vmatprep.subr.mxu0 0.0
        %4971 = vmatpush1.msra.mxu0 0.0
        %4972 = vmatprep.subr.mxu0 0.0
        %4973 = vmatpush1.msra.mxu0 0.0
        %4974 = vmatprep.subr.mxu0 0.0
        %4975 = vmatpush1.msra.mxu0 0.0
        %4976 = vmatprep.mubr.f32.mxu0 0.0
        %v4977 = vand.u32 %v4756, 4294901760
        %v4978 = vsub.f32 %v4756, %v4977
        %4979 = vmatmul.mubr.f32.gmra.mrb[0].mxu0 %v4978
        %v4980 = vpop.f32.mrb[0].mxu0
        %v4981 = vadd.f32 %v4907, %v4980
        %v4982 = vpop.f32.mrb[0].mxu0
        %4983 = vdwg.mxu0
        %4984 = vmatprep.subr.mxu0 0.0
        %v4985 = vand.u32 %v3386, 4294901760
        %4986 = vmatpush1.msra.mxu0 %v4985
        %4987 = vmatprep.subr.mxu0 0.0
        %4988 = vmatpush1.msra.mxu0 0.0
        %4989 = vmatprep.subr.mxu0 0.0
        %4990 = vmatpush1.msra.mxu0 0.0
        %4991 = vmatprep.subr.mxu0 0.0
        %4992 = vmatpush1.msra.mxu0 0.0
        %4993 = vmatprep.subr.mxu0 0.0
        %4994 = vmatpush1.msra.mxu0 0.0
        %4995 = vmatprep.subr.mxu0 0.0
        %4996 = vmatpush1.msra.mxu0 0.0
        %4997 = vmatprep.subr.mxu0 0.0
        %4998 = vmatpush1.msra.mxu0 0.0
        %4999 = vmatprep.subr.mxu0 0.0
        %5000 = vmatpush1.msra.mxu0 0.0
        %5001 = vmatprep.subr.mxu0 0.0
        %5002 = vmatpush1.msra.mxu0 0.0
        %5003 = vmatprep.subr.mxu0 0.0
        %5004 = vmatpush1.msra.mxu0 0.0
        %5005 = vmatprep.subr.mxu0 0.0
        %5006 = vmatpush1.msra.mxu0 0.0
        %5007 = vmatprep.subr.mxu0 0.0
        %5008 = vmatpush1.msra.mxu0 0.0
        %5009 = vmatprep.subr.mxu0 0.0
        %5010 = vmatpush1.msra.mxu0 0.0
        %5011 = vmatprep.subr.mxu0 0.0
        %5012 = vmatpush1.msra.mxu0 0.0
        %5013 = vmatprep.subr.mxu0 0.0
        %5014 = vmatpush1.msra.mxu0 0.0
        %5015 = vmatprep.subr.mxu0 0.0
        %5016 = vmatpush1.msra.mxu0 0.0
        %5017 = vmatprep.subr.mxu0 0.0
        %5018 = vmatpush1.msra.mxu0 0.0
        %5019 = vmatprep.subr.mxu0 0.0
        %5020 = vmatpush1.msra.mxu0 0.0
        %5021 = vmatprep.subr.mxu0 0.0
        %5022 = vmatpush1.msra.mxu0 0.0
        %5023 = vmatprep.subr.mxu0 0.0
        %5024 = vmatpush1.msra.mxu0 0.0
        %5025 = vmatprep.subr.mxu0 0.0
        %5026 = vmatpush1.msra.mxu0 0.0
        %5027 = vmatprep.subr.mxu0 0.0
        %5028 = vmatpush1.msra.mxu0 0.0
        %5029 = vmatprep.subr.mxu0 0.0
        %5030 = vmatpush1.msra.mxu0 0.0
        %5031 = vmatprep.subr.mxu0 0.0
        %5032 = vmatpush1.msra.mxu0 0.0
        %5033 = vmatprep.subr.mxu0 0.0
        %5034 = vmatpush1.msra.mxu0 0.0
        %5035 = vmatprep.subr.mxu0 0.0
        %5036 = vmatpush1.msra.mxu0 0.0
        %5037 = vmatprep.subr.mxu0 0.0
        %5038 = vmatpush1.msra.mxu0 0.0
        %5039 = vmatprep.subr.mxu0 0.0
        %5040 = vmatpush1.msra.mxu0 0.0
        %5041 = vmatprep.subr.mxu0 0.0
        %5042 = vmatpush1.msra.mxu0 0.0
        %5043 = vmatprep.subr.mxu0 0.0
        %5044 = vmatpush1.msra.mxu0 0.0
        %5045 = vmatprep.subr.mxu0 0.0
        %5046 = vmatpush1.msra.mxu0 0.0
        %5047 = vmatprep.subr.mxu0 0.0
        %5048 = vmatpush1.msra.mxu0 0.0
        %5049 = vmatprep.mubr.f32.mxu0 0.0
        %v5050 = vand.u32 %v4756, 4294901760
        %v5051 = vsub.f32 %v4756, %v5050
        %v5052 = vand.u32 %v5051, 4294901760
        %5053 = vmatmul.mubr.f32.gmra.mrb[0].mxu0 %v5052
        %v5054 = vpop.f32.mrb[0].mxu0
        %v5055 = vadd.f32 %v4981, %v5054
        %v5056 = vpop.f32.mrb[0].mxu0
        %5057 = vdwg.mxu0
        %5058 = vmatprep.subr.mxu0 0.0
        %v5059 = vand.u32 %v3386, 4294901760
        %v5060 = vsub.f32 %v3386, %v5059
        %v5061 = vand.u32 %v5060, 4294901760
        %5062 = vmatpush1.msra.mxu0 %v5061
        %5063 = vmatprep.subr.mxu0 0.0
        %5064 = vmatpush1.msra.mxu0 0.0
        %5065 = vmatprep.subr.mxu0 0.0
        %5066 = vmatpush1.msra.mxu0 0.0
        %5067 = vmatprep.subr.mxu0 0.0
        %5068 = vmatpush1.msra.mxu0 0.0
        %5069 = vmatprep.subr.mxu0 0.0
        %5070 = vmatpush1.msra.mxu0 0.0
        %5071 = vmatprep.subr.mxu0 0.0
        %5072 = vmatpush1.msra.mxu0 0.0
        %5073 = vmatprep.subr.mxu0 0.0
        %5074 = vmatpush1.msra.mxu0 0.0
        %5075 = vmatprep.subr.mxu0 0.0
        %5076 = vmatpush1.msra.mxu0 0.0
        %5077 = vmatprep.subr.mxu0 0.0
        %5078 = vmatpush1.msra.mxu0 0.0
        %5079 = vmatprep.subr.mxu0 0.0
        %5080 = vmatpush1.msra.mxu0 0.0
        %5081 = vmatprep.subr.mxu0 0.0
        %5082 = vmatpush1.msra.mxu0 0.0
        %5083 = vmatprep.subr.mxu0 0.0
        %5084 = vmatpush1.msra.mxu0 0.0
        %5085 = vmatprep.subr.mxu0 0.0
        %5086 = vmatpush1.msra.mxu0 0.0
        %5087 = vmatprep.subr.mxu0 0.0
        %5088 = vmatpush1.msra.mxu0 0.0
        %5089 = vmatprep.subr.mxu0 0.0
        %5090 = vmatpush1.msra.mxu0 0.0
        %5091 = vmatprep.subr.mxu0 0.0
        %5092 = vmatpush1.msra.mxu0 0.0
        %5093 = vmatprep.subr.mxu0 0.0
        %5094 = vmatpush1.msra.mxu0 0.0
        %5095 = vmatprep.subr.mxu0 0.0
        %5096 = vmatpush1.msra.mxu0 0.0
        %5097 = vmatprep.subr.mxu0 0.0
        %5098 = vmatpush1.msra.mxu0 0.0
        %5099 = vmatprep.subr.mxu0 0.0
        %5100 = vmatpush1.msra.mxu0 0.0
        %5101 = vmatprep.subr.mxu0 0.0
        %5102 = vmatpush1.msra.mxu0 0.0
        %5103 = vmatprep.subr.mxu0 0.0
        %5104 = vmatpush1.msra.mxu0 0.0
        %5105 = vmatprep.subr.mxu0 0.0
        %5106 = vmatpush1.msra.mxu0 0.0
        %5107 = vmatprep.subr.mxu0 0.0
        %5108 = vmatpush1.msra.mxu0 0.0
        %5109 = vmatprep.subr.mxu0 0.0
        %5110 = vmatpush1.msra.mxu0 0.0
        %5111 = vmatprep.subr.mxu0 0.0
        %5112 = vmatpush1.msra.mxu0 0.0
        %5113 = vmatprep.subr.mxu0 0.0
        %5114 = vmatpush1.msra.mxu0 0.0
        %5115 = vmatprep.subr.mxu0 0.0
        %5116 = vmatpush1.msra.mxu0 0.0
        %5117 = vmatprep.subr.mxu0 0.0
        %5118 = vmatpush1.msra.mxu0 0.0
        %5119 = vmatprep.subr.mxu0 0.0
        %5120 = vmatpush1.msra.mxu0 0.0
        %5121 = vmatprep.subr.mxu0 0.0
        %5122 = vmatpush1.msra.mxu0 0.0
        %5123 = vmatprep.subr.mxu0 0.0
        %5124 = vmatpush1.msra.mxu0 0.0
        %5125 = vmatprep.mubr.f32.mxu0 0.0
        %v5126 = vand.u32 %v4756, 4294901760
        %5127 = vmatmul.mubr.f32.gmra.mrb[0].mxu0 %v5126
        %v5128 = vpop.f32.mrb[0].mxu0
        %v5129 = vadd.f32 %v5055, %v5128
        %v5130 = vpop.f32.mrb[0].mxu0
        %5131 = vdwg.mxu0
        %5132 = vmatprep.subr.mxu0 0.0
        %v5133 = vand.u32 %v3386, 4294901760
        %5134 = vmatpush1.msra.mxu0 %v5133
        %5135 = vmatprep.subr.mxu0 0.0
        %5136 = vmatpush1.msra.mxu0 0.0
        %5137 = vmatprep.subr.mxu0 0.0
        %5138 = vmatpush1.msra.mxu0 0.0
        %5139 = vmatprep.subr.mxu0 0.0
        %5140 = vmatpush1.msra.mxu0 0.0
        %5141 = vmatprep.subr.mxu0 0.0
        %5142 = vmatpush1.msra.mxu0 0.0
        %5143 = vmatprep.subr.mxu0 0.0
        %5144 = vmatpush1.msra.mxu0 0.0
        %5145 = vmatprep.subr.mxu0 0.0
        %5146 = vmatpush1.msra.mxu0 0.0
        %5147 = vmatprep.subr.mxu0 0.0
        %5148 = vmatpush1.msra.mxu0 0.0
        %5149 = vmatprep.subr.mxu0 0.0
        %5150 = vmatpush1.msra.mxu0 0.0
        %5151 = vmatprep.subr.mxu0 0.0
        %5152 = vmatpush1.msra.mxu0 0.0
        %5153 = vmatprep.subr.mxu0 0.0
        %5154 = vmatpush1.msra.mxu0 0.0
        %5155 = vmatprep.subr.mxu0 0.0
        %5156 = vmatpush1.msra.mxu0 0.0
        %5157 = vmatprep.subr.mxu0 0.0
        %5158 = vmatpush1.msra.mxu0 0.0
        %5159 = vmatprep.subr.mxu0 0.0
        %5160 = vmatpush1.msra.mxu0 0.0
        %5161 = vmatprep.subr.mxu0 0.0
        %5162 = vmatpush1.msra.mxu0 0.0
        %5163 = vmatprep.subr.mxu0 0.0
        %5164 = vmatpush1.msra.mxu0 0.0
        %5165 = vmatprep.subr.mxu0 0.0
        %5166 = vmatpush1.msra.mxu0 0.0
        %5167 = vmatprep.subr.mxu0 0.0
        %5168 = vmatpush1.msra.mxu0 0.0
        %5169 = vmatprep.subr.mxu0 0.0
        %5170 = vmatpush1.msra.mxu0 0.0
        %5171 = vmatprep.subr.mxu0 0.0
        %5172 = vmatpush1.msra.mxu0 0.0
        %5173 = vmatprep.subr.mxu0 0.0
        %5174 = vmatpush1.msra.mxu0 0.0
        %5175 = vmatprep.subr.mxu0 0.0
        %5176 = vmatpush1.msra.mxu0 0.0
        %5177 = vmatprep.subr.mxu0 0.0
        %5178 = vmatpush1.msra.mxu0 0.0
        %5179 = vmatprep.subr.mxu0 0.0
        %5180 = vmatpush1.msra.mxu0 0.0
        %5181 = vmatprep.subr.mxu0 0.0
        %5182 = vmatpush1.msra.mxu0 0.0
        %5183 = vmatprep.subr.mxu0 0.0
        %5184 = vmatpush1.msra.mxu0 0.0
        %5185 = vmatprep.subr.mxu0 0.0
        %5186 = vmatpush1.msra.mxu0 0.0
        %5187 = vmatprep.subr.mxu0 0.0
        %5188 = vmatpush1.msra.mxu0 0.0
        %5189 = vmatprep.subr.mxu0 0.0
        %5190 = vmatpush1.msra.mxu0 0.0
        %5191 = vmatprep.subr.mxu0 0.0
        %5192 = vmatpush1.msra.mxu0 0.0
        %5193 = vmatprep.subr.mxu0 0.0
        %5194 = vmatpush1.msra.mxu0 0.0
        %5195 = vmatprep.subr.mxu0 0.0
        %5196 = vmatpush1.msra.mxu0 0.0
        %5197 = vmatprep.mubr.f32.mxu0 0.0
        %v5198 = vand.u32 %v4756, 4294901760
        %5199 = vmatmul.mubr.f32.gmra.mrb[0].mxu0 %v5198
        %v5200 = vpop.f32.mrb[0].mxu0
        %v5201 = vadd.f32 %v5129, %v5200
        %v5202 = vpop.f32.mrb[0].mxu0
        %5203 = vdwg.mxu0
        %v5204 = vlaneseq
        %v5205 = vshrl.u32 %v5204, 7
        %v5206 = vsub.s32 3, %v5205
        %v5207 = vrot.slane %v3387, %v5206
        %v5208 = vmul.f32 %v5207, %v5201
        %v5209 = vadd.f32 %v4753, %v5208
        %5210 = vrot.lane.b32.xlu0 %v3385, 96
        %v5211 = vpop.permute.xlu0 %5210
        %v5212 = vsel %vm2107, %v5211, 0
        %5214 = vmatprep.subr.mxu0 0.0
        %v5215 = vand.u32 %v3386, 4294901760
        %5216 = vmatpush1.msra.mxu0 %v5215
        %5217 = vmatprep.subr.mxu0 0.0
        %5218 = vmatpush1.msra.mxu0 0.0
        %5219 = vmatprep.subr.mxu0 0.0
        %5220 = vmatpush1.msra.mxu0 0.0
        %5221 = vmatprep.subr.mxu0 0.0
        %5222 = vmatpush1.msra.mxu0 0.0
        %5223 = vmatprep.subr.mxu0 0.0
        %5224 = vmatpush1.msra.mxu0 0.0
        %5225 = vmatprep.subr.mxu0 0.0
        %5226 = vmatpush1.msra.mxu0 0.0
        %5227 = vmatprep.subr.mxu0 0.0
        %5228 = vmatpush1.msra.mxu0 0.0
        %5229 = vmatprep.subr.mxu0 0.0
        %5230 = vmatpush1.msra.mxu0 0.0
        %5231 = vmatprep.subr.mxu0 0.0
        %5232 = vmatpush1.msra.mxu0 0.0
        %5233 = vmatprep.subr.mxu0 0.0
        %5234 = vmatpush1.msra.mxu0 0.0
        %5235 = vmatprep.subr.mxu0 0.0
        %5236 = vmatpush1.msra.mxu0 0.0
        %5237 = vmatprep.subr.mxu0 0.0
        %5238 = vmatpush1.msra.mxu0 0.0
        %5239 = vmatprep.subr.mxu0 0.0
        %5240 = vmatpush1.msra.mxu0 0.0
        %5241 = vmatprep.subr.mxu0 0.0
        %5242 = vmatpush1.msra.mxu0 0.0
        %5243 = vmatprep.subr.mxu0 0.0
        %5244 = vmatpush1.msra.mxu0 0.0
        %5245 = vmatprep.subr.mxu0 0.0
        %5246 = vmatpush1.msra.mxu0 0.0
        %5247 = vmatprep.subr.mxu0 0.0
        %5248 = vmatpush1.msra.mxu0 0.0
        %5249 = vmatprep.subr.mxu0 0.0
        %5250 = vmatpush1.msra.mxu0 0.0
        %5251 = vmatprep.subr.mxu0 0.0
        %5252 = vmatpush1.msra.mxu0 0.0
        %5253 = vmatprep.subr.mxu0 0.0
        %5254 = vmatpush1.msra.mxu0 0.0
        %5255 = vmatprep.subr.mxu0 0.0
        %5256 = vmatpush1.msra.mxu0 0.0
        %5257 = vmatprep.subr.mxu0 0.0
        %5258 = vmatpush1.msra.mxu0 0.0
        %5259 = vmatprep.subr.mxu0 0.0
        %5260 = vmatpush1.msra.mxu0 0.0
        %5261 = vmatprep.subr.mxu0 0.0
        %5262 = vmatpush1.msra.mxu0 0.0
        %5263 = vmatprep.subr.mxu0 0.0
        %5264 = vmatpush1.msra.mxu0 0.0
        %5265 = vmatprep.subr.mxu0 0.0
        %5266 = vmatpush1.msra.mxu0 0.0
        %5267 = vmatprep.subr.mxu0 0.0
        %5268 = vmatpush1.msra.mxu0 0.0
        %5269 = vmatprep.subr.mxu0 0.0
        %5270 = vmatpush1.msra.mxu0 0.0
        %5271 = vmatprep.subr.mxu0 0.0
        %5272 = vmatpush1.msra.mxu0 0.0
        %5273 = vmatprep.subr.mxu0 0.0
        %5274 = vmatpush1.msra.mxu0 0.0
        %5275 = vmatprep.subr.mxu0 0.0
        %5276 = vmatpush1.msra.mxu0 0.0
        %5277 = vmatprep.subr.mxu0 0.0
        %5278 = vmatpush1.msra.mxu0 0.0
        %5279 = vmatprep.mubr.f32.mxu0 0.0
        %v5280 = vand.u32 %v5212, 4294901760
        %v5281 = vsub.f32 %v5212, %v5280
        %v5282 = vand.u32 %v5281, 4294901760
        %v5283 = vsub.f32 %v5281, %v5282
        %v5284 = vand.u32 %v5283, 4294901760
        %5285 = vmatmul.mubr.f32.gmra.mrb[0].mxu0 %v5284
        %v5286 = vpop.f32.mrb[0].mxu0
        %v5287 = vadd.f32 0.0, %v5286
        %v5288 = vpop.f32.mrb[0].mxu0
        %5289 = vdwg.mxu0
        %5290 = vmatprep.subr.mxu0 0.0
        %v5291 = vand.u32 %v3386, 4294901760
        %v5292 = vsub.f32 %v3386, %v5291
        %v5293 = vand.u32 %v5292, 4294901760
        %v5294 = vsub.f32 %v5292, %v5293
        %v5295 = vand.u32 %v5294, 4294901760
        %5296 = vmatpush1.msra.mxu0 %v5295
        %5297 = vmatprep.subr.mxu0 0.0
        %5298 = vmatpush1.msra.mxu0 0.0
        %5299 = vmatprep.subr.mxu0 0.0
        %5300 = vmatpush1.msra.mxu0 0.0
        %5301 = vmatprep.subr.mxu0 0.0
        %5302 = vmatpush1.msra.mxu0 0.0
        %5303 = vmatprep.subr.mxu0 0.0
        %5304 = vmatpush1.msra.mxu0 0.0
        %5305 = vmatprep.subr.mxu0 0.0
        %5306 = vmatpush1.msra.mxu0 0.0
        %5307 = vmatprep.subr.mxu0 0.0
        %5308 = vmatpush1.msra.mxu0 0.0
        %5309 = vmatprep.subr.mxu0 0.0
        %5310 = vmatpush1.msra.mxu0 0.0
        %5311 = vmatprep.subr.mxu0 0.0
        %5312 = vmatpush1.msra.mxu0 0.0
        %5313 = vmatprep.subr.mxu0 0.0
        %5314 = vmatpush1.msra.mxu0 0.0
        %5315 = vmatprep.subr.mxu0 0.0
        %5316 = vmatpush1.msra.mxu0 0.0
        %5317 = vmatprep.subr.mxu0 0.0
        %5318 = vmatpush1.msra.mxu0 0.0
        %5319 = vmatprep.subr.mxu0 0.0
        %5320 = vmatpush1.msra.mxu0 0.0
        %5321 = vmatprep.subr.mxu0 0.0
        %5322 = vmatpush1.msra.mxu0 0.0
        %5323 = vmatprep.subr.mxu0 0.0
        %5324 = vmatpush1.msra.mxu0 0.0
        %5325 = vmatprep.subr.mxu0 0.0
        %5326 = vmatpush1.msra.mxu0 0.0
        %5327 = vmatprep.subr.mxu0 0.0
        %5328 = vmatpush1.msra.mxu0 0.0
        %5329 = vmatprep.subr.mxu0 0.0
        %5330 = vmatpush1.msra.mxu0 0.0
        %5331 = vmatprep.subr.mxu0 0.0
        %5332 = vmatpush1.msra.mxu0 0.0
        %5333 = vmatprep.subr.mxu0 0.0
        %5334 = vmatpush1.msra.mxu0 0.0
        %5335 = vmatprep.subr.mxu0 0.0
        %5336 = vmatpush1.msra.mxu0 0.0
        %5337 = vmatprep.subr.mxu0 0.0
        %5338 = vmatpush1.msra.mxu0 0.0
        %5339 = vmatprep.subr.mxu0 0.0
        %5340 = vmatpush1.msra.mxu0 0.0
        %5341 = vmatprep.subr.mxu0 0.0
        %5342 = vmatpush1.msra.mxu0 0.0
        %5343 = vmatprep.subr.mxu0 0.0
        %5344 = vmatpush1.msra.mxu0 0.0
        %5345 = vmatprep.subr.mxu0 0.0
        %5346 = vmatpush1.msra.mxu0 0.0
        %5347 = vmatprep.subr.mxu0 0.0
        %5348 = vmatpush1.msra.mxu0 0.0
        %5349 = vmatprep.subr.mxu0 0.0
        %5350 = vmatpush1.msra.mxu0 0.0
        %5351 = vmatprep.subr.mxu0 0.0
        %5352 = vmatpush1.msra.mxu0 0.0
        %5353 = vmatprep.subr.mxu0 0.0
        %5354 = vmatpush1.msra.mxu0 0.0
        %5355 = vmatprep.subr.mxu0 0.0
        %5356 = vmatpush1.msra.mxu0 0.0
        %5357 = vmatprep.subr.mxu0 0.0
        %5358 = vmatpush1.msra.mxu0 0.0
        %5359 = vmatprep.mubr.f32.mxu0 0.0
        %v5360 = vand.u32 %v5212, 4294901760
        %5361 = vmatmul.mubr.f32.gmra.mrb[0].mxu0 %v5360
        %v5362 = vpop.f32.mrb[0].mxu0
        %v5363 = vadd.f32 %v5287, %v5362
        %v5364 = vpop.f32.mrb[0].mxu0
        %5365 = vdwg.mxu0
        %5366 = vmatprep.subr.mxu0 0.0
        %v5367 = vand.u32 %v3386, 4294901760
        %v5368 = vsub.f32 %v3386, %v5367
        %5369 = vmatpush1.msra.mxu0 %v5368
        %5370 = vmatprep.subr.mxu0 0.0
        %5371 = vmatpush1.msra.mxu0 0.0
        %5372 = vmatprep.subr.mxu0 0.0
        %5373 = vmatpush1.msra.mxu0 0.0
        %5374 = vmatprep.subr.mxu0 0.0
        %5375 = vmatpush1.msra.mxu0 0.0
        %5376 = vmatprep.subr.mxu0 0.0
        %5377 = vmatpush1.msra.mxu0 0.0
        %5378 = vmatprep.subr.mxu0 0.0
        %5379 = vmatpush1.msra.mxu0 0.0
        %5380 = vmatprep.subr.mxu0 0.0
        %5381 = vmatpush1.msra.mxu0 0.0
        %5382 = vmatprep.subr.mxu0 0.0
        %5383 = vmatpush1.msra.mxu0 0.0
        %5384 = vmatprep.subr.mxu0 0.0
        %5385 = vmatpush1.msra.mxu0 0.0
        %5386 = vmatprep.subr.mxu0 0.0
        %5387 = vmatpush1.msra.mxu0 0.0
        %5388 = vmatprep.subr.mxu0 0.0
        %5389 = vmatpush1.msra.mxu0 0.0
        %5390 = vmatprep.subr.mxu0 0.0
        %5391 = vmatpush1.msra.mxu0 0.0
        %5392 = vmatprep.subr.mxu0 0.0
        %5393 = vmatpush1.msra.mxu0 0.0
        %5394 = vmatprep.subr.mxu0 0.0
        %5395 = vmatpush1.msra.mxu0 0.0
        %5396 = vmatprep.subr.mxu0 0.0
        %5397 = vmatpush1.msra.mxu0 0.0
        %5398 = vmatprep.subr.mxu0 0.0
        %5399 = vmatpush1.msra.mxu0 0.0
        %5400 = vmatprep.subr.mxu0 0.0
        %5401 = vmatpush1.msra.mxu0 0.0
        %5402 = vmatprep.subr.mxu0 0.0
        %5403 = vmatpush1.msra.mxu0 0.0
        %5404 = vmatprep.subr.mxu0 0.0
        %5405 = vmatpush1.msra.mxu0 0.0
        %5406 = vmatprep.subr.mxu0 0.0
        %5407 = vmatpush1.msra.mxu0 0.0
        %5408 = vmatprep.subr.mxu0 0.0
        %5409 = vmatpush1.msra.mxu0 0.0
        %5410 = vmatprep.subr.mxu0 0.0
        %5411 = vmatpush1.msra.mxu0 0.0
        %5412 = vmatprep.subr.mxu0 0.0
        %5413 = vmatpush1.msra.mxu0 0.0
        %5414 = vmatprep.subr.mxu0 0.0
        %5415 = vmatpush1.msra.mxu0 0.0
        %5416 = vmatprep.subr.mxu0 0.0
        %5417 = vmatpush1.msra.mxu0 0.0
        %5418 = vmatprep.subr.mxu0 0.0
        %5419 = vmatpush1.msra.mxu0 0.0
        %5420 = vmatprep.subr.mxu0 0.0
        %5421 = vmatpush1.msra.mxu0 0.0
        %5422 = vmatprep.subr.mxu0 0.0
        %5423 = vmatpush1.msra.mxu0 0.0
        %5424 = vmatprep.subr.mxu0 0.0
        %5425 = vmatpush1.msra.mxu0 0.0
        %5426 = vmatprep.subr.mxu0 0.0
        %5427 = vmatpush1.msra.mxu0 0.0
        %5428 = vmatprep.subr.mxu0 0.0
        %5429 = vmatpush1.msra.mxu0 0.0
        %5430 = vmatprep.subr.mxu0 0.0
        %5431 = vmatpush1.msra.mxu0 0.0
        %5432 = vmatprep.mubr.f32.mxu0 0.0
        %v5433 = vand.u32 %v5212, 4294901760
        %v5434 = vsub.f32 %v5212, %v5433
        %5435 = vmatmul.mubr.f32.gmra.mrb[0].mxu0 %v5434
        %v5436 = vpop.f32.mrb[0].mxu0
        %v5437 = vadd.f32 %v5363, %v5436
        %v5438 = vpop.f32.mrb[0].mxu0
        %5439 = vdwg.mxu0
        %5440 = vmatprep.subr.mxu0 0.0
        %v5441 = vand.u32 %v3386, 4294901760
        %5442 = vmatpush1.msra.mxu0 %v5441
        %5443 = vmatprep.subr.mxu0 0.0
        %5444 = vmatpush1.msra.mxu0 0.0
        %5445 = vmatprep.subr.mxu0 0.0
        %5446 = vmatpush1.msra.mxu0 0.0
        %5447 = vmatprep.subr.mxu0 0.0
        %5448 = vmatpush1.msra.mxu0 0.0
        %5449 = vmatprep.subr.mxu0 0.0
        %5450 = vmatpush1.msra.mxu0 0.0
        %5451 = vmatprep.subr.mxu0 0.0
        %5452 = vmatpush1.msra.mxu0 0.0
        %5453 = vmatprep.subr.mxu0 0.0
        %5454 = vmatpush1.msra.mxu0 0.0
        %5455 = vmatprep.subr.mxu0 0.0
        %5456 = vmatpush1.msra.mxu0 0.0
        %5457 = vmatprep.subr.mxu0 0.0
        %5458 = vmatpush1.msra.mxu0 0.0
        %5459 = vmatprep.subr.mxu0 0.0
        %5460 = vmatpush1.msra.mxu0 0.0
        %5461 = vmatprep.subr.mxu0 0.0
        %5462 = vmatpush1.msra.mxu0 0.0
        %5463 = vmatprep.subr.mxu0 0.0
        %5464 = vmatpush1.msra.mxu0 0.0
        %5465 = vmatprep.subr.mxu0 0.0
        %5466 = vmatpush1.msra.mxu0 0.0
        %5467 = vmatprep.subr.mxu0 0.0
        %5468 = vmatpush1.msra.mxu0 0.0
        %5469 = vmatprep.subr.mxu0 0.0
        %5470 = vmatpush1.msra.mxu0 0.0
        %5471 = vmatprep.subr.mxu0 0.0
        %5472 = vmatpush1.msra.mxu0 0.0
        %5473 = vmatprep.subr.mxu0 0.0
        %5474 = vmatpush1.msra.mxu0 0.0
        %5475 = vmatprep.subr.mxu0 0.0
        %5476 = vmatpush1.msra.mxu0 0.0
        %5477 = vmatprep.subr.mxu0 0.0
        %5478 = vmatpush1.msra.mxu0 0.0
        %5479 = vmatprep.subr.mxu0 0.0
        %5480 = vmatpush1.msra.mxu0 0.0
        %5481 = vmatprep.subr.mxu0 0.0
        %5482 = vmatpush1.msra.mxu0 0.0
        %5483 = vmatprep.subr.mxu0 0.0
        %5484 = vmatpush1.msra.mxu0 0.0
        %5485 = vmatprep.subr.mxu0 0.0
        %5486 = vmatpush1.msra.mxu0 0.0
        %5487 = vmatprep.subr.mxu0 0.0
        %5488 = vmatpush1.msra.mxu0 0.0
        %5489 = vmatprep.subr.mxu0 0.0
        %5490 = vmatpush1.msra.mxu0 0.0
        %5491 = vmatprep.subr.mxu0 0.0
        %5492 = vmatpush1.msra.mxu0 0.0
        %5493 = vmatprep.subr.mxu0 0.0
        %5494 = vmatpush1.msra.mxu0 0.0
        %5495 = vmatprep.subr.mxu0 0.0
        %5496 = vmatpush1.msra.mxu0 0.0
        %5497 = vmatprep.subr.mxu0 0.0
        %5498 = vmatpush1.msra.mxu0 0.0
        %5499 = vmatprep.subr.mxu0 0.0
        %5500 = vmatpush1.msra.mxu0 0.0
        %5501 = vmatprep.subr.mxu0 0.0
        %5502 = vmatpush1.msra.mxu0 0.0
        %5503 = vmatprep.subr.mxu0 0.0
        %5504 = vmatpush1.msra.mxu0 0.0
        %5505 = vmatprep.mubr.f32.mxu0 0.0
        %v5506 = vand.u32 %v5212, 4294901760
        %v5507 = vsub.f32 %v5212, %v5506
        %v5508 = vand.u32 %v5507, 4294901760
        %5509 = vmatmul.mubr.f32.gmra.mrb[0].mxu0 %v5508
        %v5510 = vpop.f32.mrb[0].mxu0
        %v5511 = vadd.f32 %v5437, %v5510
        %v5512 = vpop.f32.mrb[0].mxu0
        %5513 = vdwg.mxu0
        %5514 = vmatprep.subr.mxu0 0.0
        %v5515 = vand.u32 %v3386, 4294901760
        %v5516 = vsub.f32 %v3386, %v5515
        %v5517 = vand.u32 %v5516, 4294901760
        %5518 = vmatpush1.msra.mxu0 %v5517
        %5519 = vmatprep.subr.mxu0 0.0
        %5520 = vmatpush1.msra.mxu0 0.0
        %5521 = vmatprep.subr.mxu0 0.0
        %5522 = vmatpush1.msra.mxu0 0.0
        %5523 = vmatprep.subr.mxu0 0.0
        %5524 = vmatpush1.msra.mxu0 0.0
        %5525 = vmatprep.subr.mxu0 0.0
        %5526 = vmatpush1.msra.mxu0 0.0
        %5527 = vmatprep.subr.mxu0 0.0
        %5528 = vmatpush1.msra.mxu0 0.0
        %5529 = vmatprep.subr.mxu0 0.0
        %5530 = vmatpush1.msra.mxu0 0.0
        %5531 = vmatprep.subr.mxu0 0.0
        %5532 = vmatpush1.msra.mxu0 0.0
        %5533 = vmatprep.subr.mxu0 0.0
        %5534 = vmatpush1.msra.mxu0 0.0
        %5535 = vmatprep.subr.mxu0 0.0
        %5536 = vmatpush1.msra.mxu0 0.0
        %5537 = vmatprep.subr.mxu0 0.0
        %5538 = vmatpush1.msra.mxu0 0.0
        %5539 = vmatprep.subr.mxu0 0.0
        %5540 = vmatpush1.msra.mxu0 0.0
        %5541 = vmatprep.subr.mxu0 0.0
        %5542 = vmatpush1.msra.mxu0 0.0
        %5543 = vmatprep.subr.mxu0 0.0
        %5544 = vmatpush1.msra.mxu0 0.0
        %5545 = vmatprep.subr.mxu0 0.0
        %5546 = vmatpush1.msra.mxu0 0.0
        %5547 = vmatprep.subr.mxu0 0.0
        %5548 = vmatpush1.msra.mxu0 0.0
        %5549 = vmatprep.subr.mxu0 0.0
        %5550 = vmatpush1.msra.mxu0 0.0
        %5551 = vmatprep.subr.mxu0 0.0
        %5552 = vmatpush1.msra.mxu0 0.0
        %5553 = vmatprep.subr.mxu0 0.0
        %5554 = vmatpush1.msra.mxu0 0.0
        %5555 = vmatprep.subr.mxu0 0.0
        %5556 = vmatpush1.msra.mxu0 0.0
        %5557 = vmatprep.subr.mxu0 0.0
        %5558 = vmatpush1.msra.mxu0 0.0
        %5559 = vmatprep.subr.mxu0 0.0
        %5560 = vmatpush1.msra.mxu0 0.0
        %5561 = vmatprep.subr.mxu0 0.0
        %5562 = vmatpush1.msra.mxu0 0.0
        %5563 = vmatprep.subr.mxu0 0.0
        %5564 = vmatpush1.msra.mxu0 0.0
        %5565 = vmatprep.subr.mxu0 0.0
        %5566 = vmatpush1.msra.mxu0 0.0
        %5567 = vmatprep.subr.mxu0 0.0
        %5568 = vmatpush1.msra.mxu0 0.0
        %5569 = vmatprep.subr.mxu0 0.0
        %5570 = vmatpush1.msra.mxu0 0.0
        %5571 = vmatprep.subr.mxu0 0.0
        %5572 = vmatpush1.msra.mxu0 0.0
        %5573 = vmatprep.subr.mxu0 0.0
        %5574 = vmatpush1.msra.mxu0 0.0
        %5575 = vmatprep.subr.mxu0 0.0
        %5576 = vmatpush1.msra.mxu0 0.0
        %5577 = vmatprep.subr.mxu0 0.0
        %5578 = vmatpush1.msra.mxu0 0.0
        %5579 = vmatprep.subr.mxu0 0.0
        %5580 = vmatpush1.msra.mxu0 0.0
        %5581 = vmatprep.mubr.f32.mxu0 0.0
        %v5582 = vand.u32 %v5212, 4294901760
        %5583 = vmatmul.mubr.f32.gmra.mrb[0].mxu0 %v5582
        %v5584 = vpop.f32.mrb[0].mxu0
        %v5585 = vadd.f32 %v5511, %v5584
        %v5586 = vpop.f32.mrb[0].mxu0
        %5587 = vdwg.mxu0
        %5588 = vmatprep.subr.mxu0 0.0
        %v5589 = vand.u32 %v3386, 4294901760
        %5590 = vmatpush1.msra.mxu0 %v5589
        %5591 = vmatprep.subr.mxu0 0.0
        %5592 = vmatpush1.msra.mxu0 0.0
        %5593 = vmatprep.subr.mxu0 0.0
        %5594 = vmatpush1.msra.mxu0 0.0
        %5595 = vmatprep.subr.mxu0 0.0
        %5596 = vmatpush1.msra.mxu0 0.0
        %5597 = vmatprep.subr.mxu0 0.0
        %5598 = vmatpush1.msra.mxu0 0.0
        %5599 = vmatprep.subr.mxu0 0.0
        %5600 = vmatpush1.msra.mxu0 0.0
        %5601 = vmatprep.subr.mxu0 0.0
        %5602 = vmatpush1.msra.mxu0 0.0
        %5603 = vmatprep.subr.mxu0 0.0
        %5604 = vmatpush1.msra.mxu0 0.0
        %5605 = vmatprep.subr.mxu0 0.0
        %5606 = vmatpush1.msra.mxu0 0.0
        %5607 = vmatprep.subr.mxu0 0.0
        %5608 = vmatpush1.msra.mxu0 0.0
        %5609 = vmatprep.subr.mxu0 0.0
        %5610 = vmatpush1.msra.mxu0 0.0
        %5611 = vmatprep.subr.mxu0 0.0
        %5612 = vmatpush1.msra.mxu0 0.0
        %5613 = vmatprep.subr.mxu0 0.0
        %5614 = vmatpush1.msra.mxu0 0.0
        %5615 = vmatprep.subr.mxu0 0.0
        %5616 = vmatpush1.msra.mxu0 0.0
        %5617 = vmatprep.subr.mxu0 0.0
        %5618 = vmatpush1.msra.mxu0 0.0
        %5619 = vmatprep.subr.mxu0 0.0
        %5620 = vmatpush1.msra.mxu0 0.0
        %5621 = vmatprep.subr.mxu0 0.0
        %5622 = vmatpush1.msra.mxu0 0.0
        %5623 = vmatprep.subr.mxu0 0.0
        %5624 = vmatpush1.msra.mxu0 0.0
        %5625 = vmatprep.subr.mxu0 0.0
        %5626 = vmatpush1.msra.mxu0 0.0
        %5627 = vmatprep.subr.mxu0 0.0
        %5628 = vmatpush1.msra.mxu0 0.0
        %5629 = vmatprep.subr.mxu0 0.0
        %5630 = vmatpush1.msra.mxu0 0.0
        %5631 = vmatprep.subr.mxu0 0.0
        %5632 = vmatpush1.msra.mxu0 0.0
        %5633 = vmatprep.subr.mxu0 0.0
        %5634 = vmatpush1.msra.mxu0 0.0
        %5635 = vmatprep.subr.mxu0 0.0
        %5636 = vmatpush1.msra.mxu0 0.0
        %5637 = vmatprep.subr.mxu0 0.0
        %5638 = vmatpush1.msra.mxu0 0.0
        %5639 = vmatprep.subr.mxu0 0.0
        %5640 = vmatpush1.msra.mxu0 0.0
        %5641 = vmatprep.subr.mxu0 0.0
        %5642 = vmatpush1.msra.mxu0 0.0
        %5643 = vmatprep.subr.mxu0 0.0
        %5644 = vmatpush1.msra.mxu0 0.0
        %5645 = vmatprep.subr.mxu0 0.0
        %5646 = vmatpush1.msra.mxu0 0.0
        %5647 = vmatprep.subr.mxu0 0.0
        %5648 = vmatpush1.msra.mxu0 0.0
        %5649 = vmatprep.subr.mxu0 0.0
        %5650 = vmatpush1.msra.mxu0 0.0
        %5651 = vmatprep.subr.mxu0 0.0
        %5652 = vmatpush1.msra.mxu0 0.0
        %5653 = vmatprep.mubr.f32.mxu0 0.0
        %v5654 = vand.u32 %v5212, 4294901760
        %5655 = vmatmul.mubr.f32.gmra.mrb[0].mxu0 %v5654
        %v5656 = vpop.f32.mrb[0].mxu0
        %v5657 = vadd.f32 %v5585, %v5656
        %v5658 = vpop.f32.mrb[0].mxu0
        %5659 = vdwg.mxu0
        %v5660 = vlaneseq
        %v5661 = vshrl.u32 %v5660, 7
        %v5662 = vsub.s32 4, %v5661
        %v5663 = vrot.slane %v3387, %v5662
        %v5664 = vmul.f32 %v5663, %v5657
        %v5665 = vadd.f32 %v5209, %v5664
        %5666 = vrot.lane.b32.xlu0 %v3385, 88
        %v5667 = vpop.permute.xlu0 %5666
        %v5668 = vsel %vm2107, %v5667, 0
        %5670 = vmatprep.subr.mxu0 0.0
        %v5671 = vand.u32 %v3386, 4294901760
        %5672 = vmatpush1.msra.mxu0 %v5671
        %5673 = vmatprep.subr.mxu0 0.0
        %5674 = vmatpush1.msra.mxu0 0.0
        %5675 = vmatprep.subr.mxu0 0.0
        %5676 = vmatpush1.msra.mxu0 0.0
        %5677 = vmatprep.subr.mxu0 0.0
        %5678 = vmatpush1.msra.mxu0 0.0
        %5679 = vmatprep.subr.mxu0 0.0
        %5680 = vmatpush1.msra.mxu0 0.0
        %5681 = vmatprep.subr.mxu0 0.0
        %5682 = vmatpush1.msra.mxu0 0.0
        %5683 = vmatprep.subr.mxu0 0.0
        %5684 = vmatpush1.msra.mxu0 0.0
        %5685 = vmatprep.subr.mxu0 0.0
        %5686 = vmatpush1.msra.mxu0 0.0
        %5687 = vmatprep.subr.mxu0 0.0
        %5688 = vmatpush1.msra.mxu0 0.0
        %5689 = vmatprep.subr.mxu0 0.0
        %5690 = vmatpush1.msra.mxu0 0.0
        %5691 = vmatprep.subr.mxu0 0.0
        %5692 = vmatpush1.msra.mxu0 0.0
        %5693 = vmatprep.subr.mxu0 0.0
        %5694 = vmatpush1.msra.mxu0 0.0
        %5695 = vmatprep.subr.mxu0 0.0
        %5696 = vmatpush1.msra.mxu0 0.0
        %5697 = vmatprep.subr.mxu0 0.0
        %5698 = vmatpush1.msra.mxu0 0.0
        %5699 = vmatprep.subr.mxu0 0.0
        %5700 = vmatpush1.msra.mxu0 0.0
        %5701 = vmatprep.subr.mxu0 0.0
        %5702 = vmatpush1.msra.mxu0 0.0
        %5703 = vmatprep.subr.mxu0 0.0
        %5704 = vmatpush1.msra.mxu0 0.0
        %5705 = vmatprep.subr.mxu0 0.0
        %5706 = vmatpush1.msra.mxu0 0.0
        %5707 = vmatprep.subr.mxu0 0.0
        %5708 = vmatpush1.msra.mxu0 0.0
        %5709 = vmatprep.subr.mxu0 0.0
        %5710 = vmatpush1.msra.mxu0 0.0
        %5711 = vmatprep.subr.mxu0 0.0
        %5712 = vmatpush1.msra.mxu0 0.0
        %5713 = vmatprep.subr.mxu0 0.0
        %5714 = vmatpush1.msra.mxu0 0.0
        %5715 = vmatprep.subr.mxu0 0.0
        %5716 = vmatpush1.msra.mxu0 0.0
        %5717 = vmatprep.subr.mxu0 0.0
        %5718 = vmatpush1.msra.mxu0 0.0
        %5719 = vmatprep.subr.mxu0 0.0
        %5720 = vmatpush1.msra.mxu0 0.0
        %5721 = vmatprep.subr.mxu0 0.0
        %5722 = vmatpush1.msra.mxu0 0.0
        %5723 = vmatprep.subr.mxu0 0.0
        %5724 = vmatpush1.msra.mxu0 0.0
        %5725 = vmatprep.subr.mxu0 0.0
        %5726 = vmatpush1.msra.mxu0 0.0
        %5727 = vmatprep.subr.mxu0 0.0
        %5728 = vmatpush1.msra.mxu0 0.0
        %5729 = vmatprep.subr.mxu0 0.0
        %5730 = vmatpush1.msra.mxu0 0.0
        %5731 = vmatprep.subr.mxu0 0.0
        %5732 = vmatpush1.msra.mxu0 0.0
        %5733 = vmatprep.subr.mxu0 0.0
        %5734 = vmatpush1.msra.mxu0 0.0
        %5735 = vmatprep.mubr.f32.mxu0 0.0
        %v5736 = vand.u32 %v5668, 4294901760
        %v5737 = vsub.f32 %v5668, %v5736
        %v5738 = vand.u32 %v5737, 4294901760
        %v5739 = vsub.f32 %v5737, %v5738
        %v5740 = vand.u32 %v5739, 4294901760
        %5741 = vmatmul.mubr.f32.gmra.mrb[0].mxu0 %v5740
        %v5742 = vpop.f32.mrb[0].mxu0
        %v5743 = vadd.f32 0.0, %v5742
        %v5744 = vpop.f32.mrb[0].mxu0
        %5745 = vdwg.mxu0
        %5746 = vmatprep.subr.mxu0 0.0
        %v5747 = vand.u32 %v3386, 4294901760
        %v5748 = vsub.f32 %v3386, %v5747
        %v5749 = vand.u32 %v5748, 4294901760
        %v5750 = vsub.f32 %v5748, %v5749
        %v5751 = vand.u32 %v5750, 4294901760
        %5752 = vmatpush1.msra.mxu0 %v5751
        %5753 = vmatprep.subr.mxu0 0.0
        %5754 = vmatpush1.msra.mxu0 0.0
        %5755 = vmatprep.subr.mxu0 0.0
        %5756 = vmatpush1.msra.mxu0 0.0
        %5757 = vmatprep.subr.mxu0 0.0
        %5758 = vmatpush1.msra.mxu0 0.0
        %5759 = vmatprep.subr.mxu0 0.0
        %5760 = vmatpush1.msra.mxu0 0.0
        %5761 = vmatprep.subr.mxu0 0.0
        %5762 = vmatpush1.msra.mxu0 0.0
        %5763 = vmatprep.subr.mxu0 0.0
        %5764 = vmatpush1.msra.mxu0 0.0
        %5765 = vmatprep.subr.mxu0 0.0
        %5766 = vmatpush1.msra.mxu0 0.0
        %5767 = vmatprep.subr.mxu0 0.0
        %5768 = vmatpush1.msra.mxu0 0.0
        %5769 = vmatprep.subr.mxu0 0.0
        %5770 = vmatpush1.msra.mxu0 0.0
        %5771 = vmatprep.subr.mxu0 0.0
        %5772 = vmatpush1.msra.mxu0 0.0
        %5773 = vmatprep.subr.mxu0 0.0
        %5774 = vmatpush1.msra.mxu0 0.0
        %5775 = vmatprep.subr.mxu0 0.0
        %5776 = vmatpush1.msra.mxu0 0.0
        %5777 = vmatprep.subr.mxu0 0.0
        %5778 = vmatpush1.msra.mxu0 0.0
        %5779 = vmatprep.subr.mxu0 0.0
        %5780 = vmatpush1.msra.mxu0 0.0
        %5781 = vmatprep.subr.mxu0 0.0
        %5782 = vmatpush1.msra.mxu0 0.0
        %5783 = vmatprep.subr.mxu0 0.0
        %5784 = vmatpush1.msra.mxu0 0.0
        %5785 = vmatprep.subr.mxu0 0.0
        %5786 = vmatpush1.msra.mxu0 0.0
        %5787 = vmatprep.subr.mxu0 0.0
        %5788 = vmatpush1.msra.mxu0 0.0
        %5789 = vmatprep.subr.mxu0 0.0
        %5790 = vmatpush1.msra.mxu0 0.0
        %5791 = vmatprep.subr.mxu0 0.0
        %5792 = vmatpush1.msra.mxu0 0.0
        %5793 = vmatprep.subr.mxu0 0.0
        %5794 = vmatpush1.msra.mxu0 0.0
        %5795 = vmatprep.subr.mxu0 0.0
        %5796 = vmatpush1.msra.mxu0 0.0
        %5797 = vmatprep.subr.mxu0 0.0
        %5798 = vmatpush1.msra.mxu0 0.0
        %5799 = vmatprep.subr.mxu0 0.0
        %5800 = vmatpush1.msra.mxu0 0.0
        %5801 = vmatprep.subr.mxu0 0.0
        %5802 = vmatpush1.msra.mxu0 0.0
        %5803 = vmatprep.subr.mxu0 0.0
        %5804 = vmatpush1.msra.mxu0 0.0
        %5805 = vmatprep.subr.mxu0 0.0
        %5806 = vmatpush1.msra.mxu0 0.0
        %5807 = vmatprep.subr.mxu0 0.0
        %5808 = vmatpush1.msra.mxu0 0.0
        %5809 = vmatprep.subr.mxu0 0.0
        %5810 = vmatpush1.msra.mxu0 0.0
        %5811 = vmatprep.subr.mxu0 0.0
        %5812 = vmatpush1.msra.mxu0 0.0
        %5813 = vmatprep.subr.mxu0 0.0
        %5814 = vmatpush1.msra.mxu0 0.0
        %5815 = vmatprep.mubr.f32.mxu0 0.0
        %v5816 = vand.u32 %v5668, 4294901760
        %5817 = vmatmul.mubr.f32.gmra.mrb[0].mxu0 %v5816
        %v5818 = vpop.f32.mrb[0].mxu0
        %v5819 = vadd.f32 %v5743, %v5818
        %v5820 = vpop.f32.mrb[0].mxu0
        %5821 = vdwg.mxu0
        %5822 = vmatprep.subr.mxu0 0.0
        %v5823 = vand.u32 %v3386, 4294901760
        %v5824 = vsub.f32 %v3386, %v5823
        %5825 = vmatpush1.msra.mxu0 %v5824
        %5826 = vmatprep.subr.mxu0 0.0
        %5827 = vmatpush1.msra.mxu0 0.0
        %5828 = vmatprep.subr.mxu0 0.0
        %5829 = vmatpush1.msra.mxu0 0.0
        %5830 = vmatprep.subr.mxu0 0.0
        %5831 = vmatpush1.msra.mxu0 0.0
        %5832 = vmatprep.subr.mxu0 0.0
        %5833 = vmatpush1.msra.mxu0 0.0
        %5834 = vmatprep.subr.mxu0 0.0
        %5835 = vmatpush1.msra.mxu0 0.0
        %5836 = vmatprep.subr.mxu0 0.0
        %5837 = vmatpush1.msra.mxu0 0.0
        %5838 = vmatprep.subr.mxu0 0.0
        %5839 = vmatpush1.msra.mxu0 0.0
        %5840 = vmatprep.subr.mxu0 0.0
        %5841 = vmatpush1.msra.mxu0 0.0
        %5842 = vmatprep.subr.mxu0 0.0
        %5843 = vmatpush1.msra.mxu0 0.0
        %5844 = vmatprep.subr.mxu0 0.0
        %5845 = vmatpush1.msra.mxu0 0.0
        %5846 = vmatprep.subr.mxu0 0.0
        %5847 = vmatpush1.msra.mxu0 0.0
        %5848 = vmatprep.subr.mxu0 0.0
        %5849 = vmatpush1.msra.mxu0 0.0
        %5850 = vmatprep.subr.mxu0 0.0
        %5851 = vmatpush1.msra.mxu0 0.0
        %5852 = vmatprep.subr.mxu0 0.0
        %5853 = vmatpush1.msra.mxu0 0.0
        %5854 = vmatprep.subr.mxu0 0.0
        %5855 = vmatpush1.msra.mxu0 0.0
        %5856 = vmatprep.subr.mxu0 0.0
        %5857 = vmatpush1.msra.mxu0 0.0
        %5858 = vmatprep.subr.mxu0 0.0
        %5859 = vmatpush1.msra.mxu0 0.0
        %5860 = vmatprep.subr.mxu0 0.0
        %5861 = vmatpush1.msra.mxu0 0.0
        %5862 = vmatprep.subr.mxu0 0.0
        %5863 = vmatpush1.msra.mxu0 0.0
        %5864 = vmatprep.subr.mxu0 0.0
        %5865 = vmatpush1.msra.mxu0 0.0
        %5866 = vmatprep.subr.mxu0 0.0
        %5867 = vmatpush1.msra.mxu0 0.0
        %5868 = vmatprep.subr.mxu0 0.0
        %5869 = vmatpush1.msra.mxu0 0.0
        %5870 = vmatprep.subr.mxu0 0.0
        %5871 = vmatpush1.msra.mxu0 0.0
        %5872 = vmatprep.subr.mxu0 0.0
        %5873 = vmatpush1.msra.mxu0 0.0
        %5874 = vmatprep.subr.mxu0 0.0
        %5875 = vmatpush1.msra.mxu0 0.0
        %5876 = vmatprep.subr.mxu0 0.0
        %5877 = vmatpush1.msra.mxu0 0.0
        %5878 = vmatprep.subr.mxu0 0.0
        %5879 = vmatpush1.msra.mxu0 0.0
        %5880 = vmatprep.subr.mxu0 0.0
        %5881 = vmatpush1.msra.mxu0 0.0
        %5882 = vmatprep.subr.mxu0 0.0
        %5883 = vmatpush1.msra.mxu0 0.0
        %5884 = vmatprep.subr.mxu0 0.0
        %5885 = vmatpush1.msra.mxu0 0.0
        %5886 = vmatprep.subr.mxu0 0.0
        %5887 = vmatpush1.msra.mxu0 0.0
        %5888 = vmatprep.mubr.f32.mxu0 0.0
        %v5889 = vand.u32 %v5668, 4294901760
        %v5890 = vsub.f32 %v5668, %v5889
        %5891 = vmatmul.mubr.f32.gmra.mrb[0].mxu0 %v5890
        %v5892 = vpop.f32.mrb[0].mxu0
        %v5893 = vadd.f32 %v5819, %v5892
        %v5894 = vpop.f32.mrb[0].mxu0
        %5895 = vdwg.mxu0
        %5896 = vmatprep.subr.mxu0 0.0
        %v5897 = vand.u32 %v3386, 4294901760
        %5898 = vmatpush1.msra.mxu0 %v5897
        %5899 = vmatprep.subr.mxu0 0.0
        %5900 = vmatpush1.msra.mxu0 0.0
        %5901 = vmatprep.subr.mxu0 0.0
        %5902 = vmatpush1.msra.mxu0 0.0
        %5903 = vmatprep.subr.mxu0 0.0
        %5904 = vmatpush1.msra.mxu0 0.0
        %5905 = vmatprep.subr.mxu0 0.0
        %5906 = vmatpush1.msra.mxu0 0.0
        %5907 = vmatprep.subr.mxu0 0.0
        %5908 = vmatpush1.msra.mxu0 0.0
        %5909 = vmatprep.subr.mxu0 0.0
        %5910 = vmatpush1.msra.mxu0 0.0
        %5911 = vmatprep.subr.mxu0 0.0
        %5912 = vmatpush1.msra.mxu0 0.0
        %5913 = vmatprep.subr.mxu0 0.0
        %5914 = vmatpush1.msra.mxu0 0.0
        %5915 = vmatprep.subr.mxu0 0.0
        %5916 = vmatpush1.msra.mxu0 0.0
        %5917 = vmatprep.subr.mxu0 0.0
        %5918 = vmatpush1.msra.mxu0 0.0
        %5919 = vmatprep.subr.mxu0 0.0
        %5920 = vmatpush1.msra.mxu0 0.0
        %5921 = vmatprep.subr.mxu0 0.0
        %5922 = vmatpush1.msra.mxu0 0.0
        %5923 = vmatprep.subr.mxu0 0.0
        %5924 = vmatpush1.msra.mxu0 0.0
        %5925 = vmatprep.subr.mxu0 0.0
        %5926 = vmatpush1.msra.mxu0 0.0
        %5927 = vmatprep.subr.mxu0 0.0
        %5928 = vmatpush1.msra.mxu0 0.0
        %5929 = vmatprep.subr.mxu0 0.0
        %5930 = vmatpush1.msra.mxu0 0.0
        %5931 = vmatprep.subr.mxu0 0.0
        %5932 = vmatpush1.msra.mxu0 0.0
        %5933 = vmatprep.subr.mxu0 0.0
        %5934 = vmatpush1.msra.mxu0 0.0
        %5935 = vmatprep.subr.mxu0 0.0
        %5936 = vmatpush1.msra.mxu0 0.0
        %5937 = vmatprep.subr.mxu0 0.0
        %5938 = vmatpush1.msra.mxu0 0.0
        %5939 = vmatprep.subr.mxu0 0.0
        %5940 = vmatpush1.msra.mxu0 0.0
        %5941 = vmatprep.subr.mxu0 0.0
        %5942 = vmatpush1.msra.mxu0 0.0
        %5943 = vmatprep.subr.mxu0 0.0
        %5944 = vmatpush1.msra.mxu0 0.0
        %5945 = vmatprep.subr.mxu0 0.0
        %5946 = vmatpush1.msra.mxu0 0.0
        %5947 = vmatprep.subr.mxu0 0.0
        %5948 = vmatpush1.msra.mxu0 0.0
        %5949 = vmatprep.subr.mxu0 0.0
        %5950 = vmatpush1.msra.mxu0 0.0
        %5951 = vmatprep.subr.mxu0 0.0
        %5952 = vmatpush1.msra.mxu0 0.0
        %5953 = vmatprep.subr.mxu0 0.0
        %5954 = vmatpush1.msra.mxu0 0.0
        %5955 = vmatprep.subr.mxu0 0.0
        %5956 = vmatpush1.msra.mxu0 0.0
        %5957 = vmatprep.subr.mxu0 0.0
        %5958 = vmatpush1.msra.mxu0 0.0
        %5959 = vmatprep.subr.mxu0 0.0
        %5960 = vmatpush1.msra.mxu0 0.0
        %5961 = vmatprep.mubr.f32.mxu0 0.0
        %v5962 = vand.u32 %v5668, 4294901760
        %v5963 = vsub.f32 %v5668, %v5962
        %v5964 = vand.u32 %v5963, 4294901760
        %5965 = vmatmul.mubr.f32.gmra.mrb[0].mxu0 %v5964
        %v5966 = vpop.f32.mrb[0].mxu0
        %v5967 = vadd.f32 %v5893, %v5966
        %v5968 = vpop.f32.mrb[0].mxu0
        %5969 = vdwg.mxu0
        %5970 = vmatprep.subr.mxu0 0.0
        %v5971 = vand.u32 %v3386, 4294901760
        %v5972 = vsub.f32 %v3386, %v5971
        %v5973 = vand.u32 %v5972, 4294901760
        %5974 = vmatpush1.msra.mxu0 %v5973
        %5975 = vmatprep.subr.mxu0 0.0
        %5976 = vmatpush1.msra.mxu0 0.0
        %5977 = vmatprep.subr.mxu0 0.0
        %5978 = vmatpush1.msra.mxu0 0.0
        %5979 = vmatprep.subr.mxu0 0.0
        %5980 = vmatpush1.msra.mxu0 0.0
        %5981 = vmatprep.subr.mxu0 0.0
        %5982 = vmatpush1.msra.mxu0 0.0
        %5983 = vmatprep.subr.mxu0 0.0
        %5984 = vmatpush1.msra.mxu0 0.0
        %5985 = vmatprep.subr.mxu0 0.0
        %5986 = vmatpush1.msra.mxu0 0.0
        %5987 = vmatprep.subr.mxu0 0.0
        %5988 = vmatpush1.msra.mxu0 0.0
        %5989 = vmatprep.subr.mxu0 0.0
        %5990 = vmatpush1.msra.mxu0 0.0
        %5991 = vmatprep.subr.mxu0 0.0
        %5992 = vmatpush1.msra.mxu0 0.0
        %5993 = vmatprep.subr.mxu0 0.0
        %5994 = vmatpush1.msra.mxu0 0.0
        %5995 = vmatprep.subr.mxu0 0.0
        %5996 = vmatpush1.msra.mxu0 0.0
        %5997 = vmatprep.subr.mxu0 0.0
        %5998 = vmatpush1.msra.mxu0 0.0
        %5999 = vmatprep.subr.mxu0 0.0
        %6000 = vmatpush1.msra.mxu0 0.0
        %6001 = vmatprep.subr.mxu0 0.0
        %6002 = vmatpush1.msra.mxu0 0.0
        %6003 = vmatprep.subr.mxu0 0.0
        %6004 = vmatpush1.msra.mxu0 0.0
        %6005 = vmatprep.subr.mxu0 0.0
        %6006 = vmatpush1.msra.mxu0 0.0
        %6007 = vmatprep.subr.mxu0 0.0
        %6008 = vmatpush1.msra.mxu0 0.0
        %6009 = vmatprep.subr.mxu0 0.0
        %6010 = vmatpush1.msra.mxu0 0.0
        %6011 = vmatprep.subr.mxu0 0.0
        %6012 = vmatpush1.msra.mxu0 0.0
        %6013 = vmatprep.subr.mxu0 0.0
        %6014 = vmatpush1.msra.mxu0 0.0
        %6015 = vmatprep.subr.mxu0 0.0
        %6016 = vmatpush1.msra.mxu0 0.0
        %6017 = vmatprep.subr.mxu0 0.0
        %6018 = vmatpush1.msra.mxu0 0.0
        %6019 = vmatprep.subr.mxu0 0.0
        %6020 = vmatpush1.msra.mxu0 0.0
        %6021 = vmatprep.subr.mxu0 0.0
        %6022 = vmatpush1.msra.mxu0 0.0
        %6023 = vmatprep.subr.mxu0 0.0
        %6024 = vmatpush1.msra.mxu0 0.0
        %6025 = vmatprep.subr.mxu0 0.0
        %6026 = vmatpush1.msra.mxu0 0.0
        %6027 = vmatprep.subr.mxu0 0.0
        %6028 = vmatpush1.msra.mxu0 0.0
        %6029 = vmatprep.subr.mxu0 0.0
        %6030 = vmatpush1.msra.mxu0 0.0
        %6031 = vmatprep.subr.mxu0 0.0
        %6032 = vmatpush1.msra.mxu0 0.0
        %6033 = vmatprep.subr.mxu0 0.0
        %6034 = vmatpush1.msra.mxu0 0.0
        %6035 = vmatprep.subr.mxu0 0.0
        %6036 = vmatpush1.msra.mxu0 0.0
        %6037 = vmatprep.mubr.f32.mxu0 0.0
        %v6038 = vand.u32 %v5668, 4294901760
        %6039 = vmatmul.mubr.f32.gmra.mrb[0].mxu0 %v6038
        %v6040 = vpop.f32.mrb[0].mxu0
        %v6041 = vadd.f32 %v5967, %v6040
        %v6042 = vpop.f32.mrb[0].mxu0
        %6043 = vdwg.mxu0
        %6044 = vmatprep.subr.mxu0 0.0
        %v6045 = vand.u32 %v3386, 4294901760
        %6046 = vmatpush1.msra.mxu0 %v6045
        %6047 = vmatprep.subr.mxu0 0.0
        %6048 = vmatpush1.msra.mxu0 0.0
        %6049 = vmatprep.subr.mxu0 0.0
        %6050 = vmatpush1.msra.mxu0 0.0
        %6051 = vmatprep.subr.mxu0 0.0
        %6052 = vmatpush1.msra.mxu0 0.0
        %6053 = vmatprep.subr.mxu0 0.0
        %6054 = vmatpush1.msra.mxu0 0.0
        %6055 = vmatprep.subr.mxu0 0.0
        %6056 = vmatpush1.msra.mxu0 0.0
        %6057 = vmatprep.subr.mxu0 0.0
        %6058 = vmatpush1.msra.mxu0 0.0
        %6059 = vmatprep.subr.mxu0 0.0
        %6060 = vmatpush1.msra.mxu0 0.0
        %6061 = vmatprep.subr.mxu0 0.0
        %6062 = vmatpush1.msra.mxu0 0.0
        %6063 = vmatprep.subr.mxu0 0.0
        %6064 = vmatpush1.msra.mxu0 0.0
        %6065 = vmatprep.subr.mxu0 0.0
        %6066 = vmatpush1.msra.mxu0 0.0
        %6067 = vmatprep.subr.mxu0 0.0
        %6068 = vmatpush1.msra.mxu0 0.0
        %6069 = vmatprep.subr.mxu0 0.0
        %6070 = vmatpush1.msra.mxu0 0.0
        %6071 = vmatprep.subr.mxu0 0.0
        %6072 = vmatpush1.msra.mxu0 0.0
        %6073 = vmatprep.subr.mxu0 0.0
        %6074 = vmatpush1.msra.mxu0 0.0
        %6075 = vmatprep.subr.mxu0 0.0
        %6076 = vmatpush1.msra.mxu0 0.0
        %6077 = vmatprep.subr.mxu0 0.0
        %6078 = vmatpush1.msra.mxu0 0.0
        %6079 = vmatprep.subr.mxu0 0.0
        %6080 = vmatpush1.msra.mxu0 0.0
        %6081 = vmatprep.subr.mxu0 0.0
        %6082 = vmatpush1.msra.mxu0 0.0
        %6083 = vmatprep.subr.mxu0 0.0
        %6084 = vmatpush1.msra.mxu0 0.0
        %6085 = vmatprep.subr.mxu0 0.0
        %6086 = vmatpush1.msra.mxu0 0.0
        %6087 = vmatprep.subr.mxu0 0.0
        %6088 = vmatpush1.msra.mxu0 0.0
        %6089 = vmatprep.subr.mxu0 0.0
        %6090 = vmatpush1.msra.mxu0 0.0
        %6091 = vmatprep.subr.mxu0 0.0
        %6092 = vmatpush1.msra.mxu0 0.0
        %6093 = vmatprep.subr.mxu0 0.0
        %6094 = vmatpush1.msra.mxu0 0.0
        %6095 = vmatprep.subr.mxu0 0.0
        %6096 = vmatpush1.msra.mxu0 0.0
        %6097 = vmatprep.subr.mxu0 0.0
        %6098 = vmatpush1.msra.mxu0 0.0
        %6099 = vmatprep.subr.mxu0 0.0
        %6100 = vmatpush1.msra.mxu0 0.0
        %6101 = vmatprep.subr.mxu0 0.0
        %6102 = vmatpush1.msra.mxu0 0.0
        %6103 = vmatprep.subr.mxu0 0.0
        %6104 = vmatpush1.msra.mxu0 0.0
        %6105 = vmatprep.subr.mxu0 0.0
        %6106 = vmatpush1.msra.mxu0 0.0
        %6107 = vmatprep.subr.mxu0 0.0
        %6108 = vmatpush1.msra.mxu0 0.0
        %6109 = vmatprep.mubr.f32.mxu0 0.0
        %v6110 = vand.u32 %v5668, 4294901760
        %6111 = vmatmul.mubr.f32.gmra.mrb[0].mxu0 %v6110
        %v6112 = vpop.f32.mrb[0].mxu0
        %v6113 = vadd.f32 %v6041, %v6112
        %v6114 = vpop.f32.mrb[0].mxu0
        %6115 = vdwg.mxu0
        %v6116 = vlaneseq
        %v6117 = vshrl.u32 %v6116, 7
        %v6118 = vsub.s32 5, %v6117
        %v6119 = vrot.slane %v3387, %v6118
        %v6120 = vmul.f32 %v6119, %v6113
        %v6121 = vadd.f32 %v5665, %v6120
        %v6122 = vld [vmem:[%s5] sm:$0xff]
        %v6123 = vld [vmem:[%s6] sm:$0xff]
        %vm6124 = vcmask 31744
        %v6126 = vsel %vm6124, %v6123, 0
        %v6129 = vsel %vm1506, %v6121, 0
        %6131 = vmatprep.subr.mxu0 0.0
        %v6132 = vand.u32 %v6129, 4294901760
        %6133 = vmatpush1.msra.mxu0 %v6132
        %6134 = vmatprep.subr.mxu0 0.0
        %6135 = vmatpush1.msra.mxu0 0.0
        %6136 = vmatprep.subr.mxu0 0.0
        %6137 = vmatpush1.msra.mxu0 0.0
        %6138 = vmatprep.subr.mxu0 0.0
        %6139 = vmatpush1.msra.mxu0 0.0
        %6140 = vmatprep.subr.mxu0 0.0
        %6141 = vmatpush1.msra.mxu0 0.0
        %6142 = vmatprep.subr.mxu0 0.0
        %6143 = vmatpush1.msra.mxu0 0.0
        %6144 = vmatprep.subr.mxu0 0.0
        %6145 = vmatpush1.msra.mxu0 0.0
        %6146 = vmatprep.subr.mxu0 0.0
        %6147 = vmatpush1.msra.mxu0 0.0
        %6148 = vmatprep.subr.mxu0 0.0
        %6149 = vmatpush1.msra.mxu0 0.0
        %6150 = vmatprep.subr.mxu0 0.0
        %6151 = vmatpush1.msra.mxu0 0.0
        %6152 = vmatprep.subr.mxu0 0.0
        %6153 = vmatpush1.msra.mxu0 0.0
        %6154 = vmatprep.subr.mxu0 0.0
        %6155 = vmatpush1.msra.mxu0 0.0
        %6156 = vmatprep.subr.mxu0 0.0
        %6157 = vmatpush1.msra.mxu0 0.0
        %6158 = vmatprep.subr.mxu0 0.0
        %6159 = vmatpush1.msra.mxu0 0.0
        %6160 = vmatprep.subr.mxu0 0.0
        %6161 = vmatpush1.msra.mxu0 0.0
        %6162 = vmatprep.subr.mxu0 0.0
        %6163 = vmatpush1.msra.mxu0 0.0
        %6164 = vmatprep.subr.mxu0 0.0
        %6165 = vmatpush1.msra.mxu0 0.0
        %6166 = vmatprep.subr.mxu0 0.0
        %6167 = vmatpush1.msra.mxu0 0.0
        %6168 = vmatprep.subr.mxu0 0.0
        %6169 = vmatpush1.msra.mxu0 0.0
        %6170 = vmatprep.subr.mxu0 0.0
        %6171 = vmatpush1.msra.mxu0 0.0
        %6172 = vmatprep.subr.mxu0 0.0
        %6173 = vmatpush1.msra.mxu0 0.0
        %6174 = vmatprep.subr.mxu0 0.0
        %6175 = vmatpush1.msra.mxu0 0.0
        %6176 = vmatprep.subr.mxu0 0.0
        %6177 = vmatpush1.msra.mxu0 0.0
        %6178 = vmatprep.subr.mxu0 0.0
        %6179 = vmatpush1.msra.mxu0 0.0
        %6180 = vmatprep.subr.mxu0 0.0
        %6181 = vmatpush1.msra.mxu0 0.0
        %6182 = vmatprep.subr.mxu0 0.0
        %6183 = vmatpush1.msra.mxu0 0.0
        %6184 = vmatprep.subr.mxu0 0.0
        %6185 = vmatpush1.msra.mxu0 0.0
        %6186 = vmatprep.subr.mxu0 0.0
        %6187 = vmatpush1.msra.mxu0 0.0
        %6188 = vmatprep.subr.mxu0 0.0
        %6189 = vmatpush1.msra.mxu0 0.0
        %6190 = vmatprep.subr.mxu0 0.0
        %6191 = vmatpush1.msra.mxu0 0.0
        %6192 = vmatprep.subr.mxu0 0.0
        %6193 = vmatpush1.msra.mxu0 0.0
        %6194 = vmatprep.subr.mxu0 0.0
        %6195 = vmatpush1.msra.mxu0 0.0
        %6196 = vmatprep.mubr.f32.mxu0 0.0
        %v6197 = vand.u32 %v6126, 4294901760
        %v6198 = vsub.f32 %v6126, %v6197
        %v6199 = vand.u32 %v6198, 4294901760
        %v6200 = vsub.f32 %v6198, %v6199
        %v6201 = vand.u32 %v6200, 4294901760
        %6202 = vmatmul.mubr.f32.gmra.mrb[0].mxu0 %v6201
        %v6203 = vpop.f32.mrb[0].mxu0
        %v6204 = vadd.f32 0.0, %v6203
        %v6205 = vpop.f32.mrb[0].mxu0
        %6206 = vdwg.mxu0
        %6207 = vmatprep.subr.mxu0 0.0
        %v6208 = vand.u32 %v6129, 4294901760
        %v6209 = vsub.f32 %v6129, %v6208
        %v6210 = vand.u32 %v6209, 4294901760
        %v6211 = vsub.f32 %v6209, %v6210
        %v6212 = vand.u32 %v6211, 4294901760
        %6213 = vmatpush1.msra.mxu0 %v6212
        %6214 = vmatprep.subr.mxu0 0.0
        %6215 = vmatpush1.msra.mxu0 0.0
        %6216 = vmatprep.subr.mxu0 0.0
        %6217 = vmatpush1.msra.mxu0 0.0
        %6218 = vmatprep.subr.mxu0 0.0
        %6219 = vmatpush1.msra.mxu0 0.0
        %6220 = vmatprep.subr.mxu0 0.0
        %6221 = vmatpush1.msra.mxu0 0.0
        %6222 = vmatprep.subr.mxu0 0.0
        %6223 = vmatpush1.msra.mxu0 0.0
        %6224 = vmatprep.subr.mxu0 0.0
        %6225 = vmatpush1.msra.mxu0 0.0
        %6226 = vmatprep.subr.mxu0 0.0
        %6227 = vmatpush1.msra.mxu0 0.0
        %6228 = vmatprep.subr.mxu0 0.0
        %6229 = vmatpush1.msra.mxu0 0.0
        %6230 = vmatprep.subr.mxu0 0.0
        %6231 = vmatpush1.msra.mxu0 0.0
        %6232 = vmatprep.subr.mxu0 0.0
        %6233 = vmatpush1.msra.mxu0 0.0
        %6234 = vmatprep.subr.mxu0 0.0
        %6235 = vmatpush1.msra.mxu0 0.0
        %6236 = vmatprep.subr.mxu0 0.0
        %6237 = vmatpush1.msra.mxu0 0.0
        %6238 = vmatprep.subr.mxu0 0.0
        %6239 = vmatpush1.msra.mxu0 0.0
        %6240 = vmatprep.subr.mxu0 0.0
        %6241 = vmatpush1.msra.mxu0 0.0
        %6242 = vmatprep.subr.mxu0 0.0
        %6243 = vmatpush1.msra.mxu0 0.0
        %6244 = vmatprep.subr.mxu0 0.0
        %6245 = vmatpush1.msra.mxu0 0.0
        %6246 = vmatprep.subr.mxu0 0.0
        %6247 = vmatpush1.msra.mxu0 0.0
        %6248 = vmatprep.subr.mxu0 0.0
        %6249 = vmatpush1.msra.mxu0 0.0
        %6250 = vmatprep.subr.mxu0 0.0
        %6251 = vmatpush1.msra.mxu0 0.0
        %6252 = vmatprep.subr.mxu0 0.0
        %6253 = vmatpush1.msra.mxu0 0.0
        %6254 = vmatprep.subr.mxu0 0.0
        %6255 = vmatpush1.msra.mxu0 0.0
        %6256 = vmatprep.subr.mxu0 0.0
        %6257 = vmatpush1.msra.mxu0 0.0
        %6258 = vmatprep.subr.mxu0 0.0
        %6259 = vmatpush1.msra.mxu0 0.0
        %6260 = vmatprep.subr.mxu0 0.0
        %6261 = vmatpush1.msra.mxu0 0.0
        %6262 = vmatprep.subr.mxu0 0.0
        %6263 = vmatpush1.msra.mxu0 0.0
        %6264 = vmatprep.subr.mxu0 0.0
        %6265 = vmatpush1.msra.mxu0 0.0
        %6266 = vmatprep.subr.mxu0 0.0
        %6267 = vmatpush1.msra.mxu0 0.0
        %6268 = vmatprep.subr.mxu0 0.0
        %6269 = vmatpush1.msra.mxu0 0.0
        %6270 = vmatprep.subr.mxu0 0.0
        %6271 = vmatpush1.msra.mxu0 0.0
        %6272 = vmatprep.subr.mxu0 0.0
        %6273 = vmatpush1.msra.mxu0 0.0
        %6274 = vmatprep.subr.mxu0 0.0
        %6275 = vmatpush1.msra.mxu0 0.0
        %6276 = vmatprep.mubr.f32.mxu0 0.0
        %v6277 = vand.u32 %v6126, 4294901760
        %6278 = vmatmul.mubr.f32.gmra.mrb[0].mxu0 %v6277
        %v6279 = vpop.f32.mrb[0].mxu0
        %v6280 = vadd.f32 %v6204, %v6279
        %v6281 = vpop.f32.mrb[0].mxu0
        %6282 = vdwg.mxu0
        %6283 = vmatprep.subr.mxu0 0.0
        %v6284 = vand.u32 %v6129, 4294901760
        %v6285 = vsub.f32 %v6129, %v6284
        %6286 = vmatpush1.msra.mxu0 %v6285
        %6287 = vmatprep.subr.mxu0 0.0
        %6288 = vmatpush1.msra.mxu0 0.0
        %6289 = vmatprep.subr.mxu0 0.0
        %6290 = vmatpush1.msra.mxu0 0.0
        %6291 = vmatprep.subr.mxu0 0.0
        %6292 = vmatpush1.msra.mxu0 0.0
        %6293 = vmatprep.subr.mxu0 0.0
        %6294 = vmatpush1.msra.mxu0 0.0
        %6295 = vmatprep.subr.mxu0 0.0
        %6296 = vmatpush1.msra.mxu0 0.0
        %6297 = vmatprep.subr.mxu0 0.0
        %6298 = vmatpush1.msra.mxu0 0.0
        %6299 = vmatprep.subr.mxu0 0.0
        %6300 = vmatpush1.msra.mxu0 0.0
        %6301 = vmatprep.subr.mxu0 0.0
        %6302 = vmatpush1.msra.mxu0 0.0
        %6303 = vmatprep.subr.mxu0 0.0
        %6304 = vmatpush1.msra.mxu0 0.0
        %6305 = vmatprep.subr.mxu0 0.0
        %6306 = vmatpush1.msra.mxu0 0.0
        %6307 = vmatprep.subr.mxu0 0.0
        %6308 = vmatpush1.msra.mxu0 0.0
        %6309 = vmatprep.subr.mxu0 0.0
        %6310 = vmatpush1.msra.mxu0 0.0
        %6311 = vmatprep.subr.mxu0 0.0
        %6312 = vmatpush1.msra.mxu0 0.0
        %6313 = vmatprep.subr.mxu0 0.0
        %6314 = vmatpush1.msra.mxu0 0.0
        %6315 = vmatprep.subr.mxu0 0.0
        %6316 = vmatpush1.msra.mxu0 0.0
        %6317 = vmatprep.subr.mxu0 0.0
        %6318 = vmatpush1.msra.mxu0 0.0
        %6319 = vmatprep.subr.mxu0 0.0
        %6320 = vmatpush1.msra.mxu0 0.0
        %6321 = vmatprep.subr.mxu0 0.0
        %6322 = vmatpush1.msra.mxu0 0.0
        %6323 = vmatprep.subr.mxu0 0.0
        %6324 = vmatpush1.msra.mxu0 0.0
        %6325 = vmatprep.subr.mxu0 0.0
        %6326 = vmatpush1.msra.mxu0 0.0
        %6327 = vmatprep.subr.mxu0 0.0
        %6328 = vmatpush1.msra.mxu0 0.0
        %6329 = vmatprep.subr.mxu0 0.0
        %6330 = vmatpush1.msra.mxu0 0.0
        %6331 = vmatprep.subr.mxu0 0.0
        %6332 = vmatpush1.msra.mxu0 0.0
        %6333 = vmatprep.subr.mxu0 0.0
        %6334 = vmatpush1.msra.mxu0 0.0
        %6335 = vmatprep.subr.mxu0 0.0
        %6336 = vmatpush1.msra.mxu0 0.0
        %6337 = vmatprep.subr.mxu0 0.0
        %6338 = vmatpush1.msra.mxu0 0.0
        %6339 = vmatprep.subr.mxu0 0.0
        %6340 = vmatpush1.msra.mxu0 0.0
        %6341 = vmatprep.subr.mxu0 0.0
        %6342 = vmatpush1.msra.mxu0 0.0
        %6343 = vmatprep.subr.mxu0 0.0
        %6344 = vmatpush1.msra.mxu0 0.0
        %6345 = vmatprep.subr.mxu0 0.0
        %6346 = vmatpush1.msra.mxu0 0.0
        %6347 = vmatprep.subr.mxu0 0.0
        %6348 = vmatpush1.msra.mxu0 0.0
        %6349 = vmatprep.mubr.f32.mxu0 0.0
        %v6350 = vand.u32 %v6126, 4294901760
        %v6351 = vsub.f32 %v6126, %v6350
        %6352 = vmatmul.mubr.f32.gmra.mrb[0].mxu0 %v6351
        %v6353 = vpop.f32.mrb[0].mxu0
        %v6354 = vadd.f32 %v6280, %v6353
        %v6355 = vpop.f32.mrb[0].mxu0
        %6356 = vdwg.mxu0
        %6357 = vmatprep.subr.mxu0 0.0
        %v6358 = vand.u32 %v6129, 4294901760
        %6359 = vmatpush1.msra.mxu0 %v6358
        %6360 = vmatprep.subr.mxu0 0.0
        %6361 = vmatpush1.msra.mxu0 0.0
        %6362 = vmatprep.subr.mxu0 0.0
        %6363 = vmatpush1.msra.mxu0 0.0
        %6364 = vmatprep.subr.mxu0 0.0
        %6365 = vmatpush1.msra.mxu0 0.0
        %6366 = vmatprep.subr.mxu0 0.0
        %6367 = vmatpush1.msra.mxu0 0.0
        %6368 = vmatprep.subr.mxu0 0.0
        %6369 = vmatpush1.msra.mxu0 0.0
        %6370 = vmatprep.subr.mxu0 0.0
        %6371 = vmatpush1.msra.mxu0 0.0
        %6372 = vmatprep.subr.mxu0 0.0
        %6373 = vmatpush1.msra.mxu0 0.0
        %6374 = vmatprep.subr.mxu0 0.0
        %6375 = vmatpush1.msra.mxu0 0.0
        %6376 = vmatprep.subr.mxu0 0.0
        %6377 = vmatpush1.msra.mxu0 0.0
        %6378 = vmatprep.subr.mxu0 0.0
        %6379 = vmatpush1.msra.mxu0 0.0
        %6380 = vmatprep.subr.mxu0 0.0
        %6381 = vmatpush1.msra.mxu0 0.0
        %6382 = vmatprep.subr.mxu0 0.0
        %6383 = vmatpush1.msra.mxu0 0.0
        %6384 = vmatprep.subr.mxu0 0.0
        %6385 = vmatpush1.msra.mxu0 0.0
        %6386 = vmatprep.subr.mxu0 0.0
        %6387 = vmatpush1.msra.mxu0 0.0
        %6388 = vmatprep.subr.mxu0 0.0
        %6389 = vmatpush1.msra.mxu0 0.0
        %6390 = vmatprep.subr.mxu0 0.0
        %6391 = vmatpush1.msra.mxu0 0.0
        %6392 = vmatprep.subr.mxu0 0.0
        %6393 = vmatpush1.msra.mxu0 0.0
        %6394 = vmatprep.subr.mxu0 0.0
        %6395 = vmatpush1.msra.mxu0 0.0
        %6396 = vmatprep.subr.mxu0 0.0
        %6397 = vmatpush1.msra.mxu0 0.0
        %6398 = vmatprep.subr.mxu0 0.0
        %6399 = vmatpush1.msra.mxu0 0.0
        %6400 = vmatprep.subr.mxu0 0.0
        %6401 = vmatpush1.msra.mxu0 0.0
        %6402 = vmatprep.subr.mxu0 0.0
        %6403 = vmatpush1.msra.mxu0 0.0
        %6404 = vmatprep.subr.mxu0 0.0
        %6405 = vmatpush1.msra.mxu0 0.0
        %6406 = vmatprep.subr.mxu0 0.0
        %6407 = vmatpush1.msra.mxu0 0.0
        %6408 = vmatprep.subr.mxu0 0.0
        %6409 = vmatpush1.msra.mxu0 0.0
        %6410 = vmatprep.subr.mxu0 0.0
        %6411 = vmatpush1.msra.mxu0 0.0
        %6412 = vmatprep.subr.mxu0 0.0
        %6413 = vmatpush1.msra.mxu0 0.0
        %6414 = vmatprep.subr.mxu0 0.0
        %6415 = vmatpush1.msra.mxu0 0.0
        %6416 = vmatprep.subr.mxu0 0.0
        %6417 = vmatpush1.msra.mxu0 0.0
        %6418 = vmatprep.subr.mxu0 0.0
        %6419 = vmatpush1.msra.mxu0 0.0
        %6420 = vmatprep.subr.mxu0 0.0
        %6421 = vmatpush1.msra.mxu0 0.0
        %6422 = vmatprep.mubr.f32.mxu0 0.0
        %v6423 = vand.u32 %v6126, 4294901760
        %v6424 = vsub.f32 %v6126, %v6423
        %v6425 = vand.u32 %v6424, 4294901760
        %6426 = vmatmul.mubr.f32.gmra.mrb[0].mxu0 %v6425
        %v6427 = vpop.f32.mrb[0].mxu0
        %v6428 = vadd.f32 %v6354, %v6427
        %v6429 = vpop.f32.mrb[0].mxu0
        %6430 = vdwg.mxu0
        %6431 = vmatprep.subr.mxu0 0.0
        %v6432 = vand.u32 %v6129, 4294901760
        %v6433 = vsub.f32 %v6129, %v6432
        %v6434 = vand.u32 %v6433, 4294901760
        %6435 = vmatpush1.msra.mxu0 %v6434
        %6436 = vmatprep.subr.mxu0 0.0
        %6437 = vmatpush1.msra.mxu0 0.0
        %6438 = vmatprep.subr.mxu0 0.0
        %6439 = vmatpush1.msra.mxu0 0.0
        %6440 = vmatprep.subr.mxu0 0.0
        %6441 = vmatpush1.msra.mxu0 0.0
        %6442 = vmatprep.subr.mxu0 0.0
        %6443 = vmatpush1.msra.mxu0 0.0
        %6444 = vmatprep.subr.mxu0 0.0
        %6445 = vmatpush1.msra.mxu0 0.0
        %6446 = vmatprep.subr.mxu0 0.0
        %6447 = vmatpush1.msra.mxu0 0.0
        %6448 = vmatprep.subr.mxu0 0.0
        %6449 = vmatpush1.msra.mxu0 0.0
        %6450 = vmatprep.subr.mxu0 0.0
        %6451 = vmatpush1.msra.mxu0 0.0
        %6452 = vmatprep.subr.mxu0 0.0
        %6453 = vmatpush1.msra.mxu0 0.0
        %6454 = vmatprep.subr.mxu0 0.0
        %6455 = vmatpush1.msra.mxu0 0.0
        %6456 = vmatprep.subr.mxu0 0.0
        %6457 = vmatpush1.msra.mxu0 0.0
        %6458 = vmatprep.subr.mxu0 0.0
        %6459 = vmatpush1.msra.mxu0 0.0
        %6460 = vmatprep.subr.mxu0 0.0
        %6461 = vmatpush1.msra.mxu0 0.0
        %6462 = vmatprep.subr.mxu0 0.0
        %6463 = vmatpush1.msra.mxu0 0.0
        %6464 = vmatprep.subr.mxu0 0.0
        %6465 = vmatpush1.msra.mxu0 0.0
        %6466 = vmatprep.subr.mxu0 0.0
        %6467 = vmatpush1.msra.mxu0 0.0
        %6468 = vmatprep.subr.mxu0 0.0
        %6469 = vmatpush1.msra.mxu0 0.0
        %6470 = vmatprep.subr.mxu0 0.0
        %6471 = vmatpush1.msra.mxu0 0.0
        %6472 = vmatprep.subr.mxu0 0.0
        %6473 = vmatpush1.msra.mxu0 0.0
        %6474 = vmatprep.subr.mxu0 0.0
        %6475 = vmatpush1.msra.mxu0 0.0
        %6476 = vmatprep.subr.mxu0 0.0
        %6477 = vmatpush1.msra.mxu0 0.0
        %6478 = vmatprep.subr.mxu0 0.0
        %6479 = vmatpush1.msra.mxu0 0.0
        %6480 = vmatprep.subr.mxu0 0.0
        %6481 = vmatpush1.msra.mxu0 0.0
        %6482 = vmatprep.subr.mxu0 0.0
        %6483 = vmatpush1.msra.mxu0 0.0
        %6484 = vmatprep.subr.mxu0 0.0
        %6485 = vmatpush1.msra.mxu0 0.0
        %6486 = vmatprep.subr.mxu0 0.0
        %6487 = vmatpush1.msra.mxu0 0.0
        %6488 = vmatprep.subr.mxu0 0.0
        %6489 = vmatpush1.msra.mxu0 0.0
        %6490 = vmatprep.subr.mxu0 0.0
        %6491 = vmatpush1.msra.mxu0 0.0
        %6492 = vmatprep.subr.mxu0 0.0
        %6493 = vmatpush1.msra.mxu0 0.0
        %6494 = vmatprep.subr.mxu0 0.0
        %6495 = vmatpush1.msra.mxu0 0.0
        %6496 = vmatprep.subr.mxu0 0.0
        %6497 = vmatpush1.msra.mxu0 0.0
        %6498 = vmatprep.mubr.f32.mxu0 0.0
        %v6499 = vand.u32 %v6126, 4294901760
        %6500 = vmatmul.mubr.f32.gmra.mrb[0].mxu0 %v6499
        %v6501 = vpop.f32.mrb[0].mxu0
        %v6502 = vadd.f32 %v6428, %v6501
        %v6503 = vpop.f32.mrb[0].mxu0
        %6504 = vdwg.mxu0
        %6505 = vmatprep.subr.mxu0 0.0
        %v6506 = vand.u32 %v6129, 4294901760
        %6507 = vmatpush1.msra.mxu0 %v6506
        %6508 = vmatprep.subr.mxu0 0.0
        %6509 = vmatpush1.msra.mxu0 0.0
        %6510 = vmatprep.subr.mxu0 0.0
        %6511 = vmatpush1.msra.mxu0 0.0
        %6512 = vmatprep.subr.mxu0 0.0
        %6513 = vmatpush1.msra.mxu0 0.0
        %6514 = vmatprep.subr.mxu0 0.0
        %6515 = vmatpush1.msra.mxu0 0.0
        %6516 = vmatprep.subr.mxu0 0.0
        %6517 = vmatpush1.msra.mxu0 0.0
        %6518 = vmatprep.subr.mxu0 0.0
        %6519 = vmatpush1.msra.mxu0 0.0
        %6520 = vmatprep.subr.mxu0 0.0
        %6521 = vmatpush1.msra.mxu0 0.0
        %6522 = vmatprep.subr.mxu0 0.0
        %6523 = vmatpush1.msra.mxu0 0.0
        %6524 = vmatprep.subr.mxu0 0.0
        %6525 = vmatpush1.msra.mxu0 0.0
        %6526 = vmatprep.subr.mxu0 0.0
        %6527 = vmatpush1.msra.mxu0 0.0
        %6528 = vmatprep.subr.mxu0 0.0
        %6529 = vmatpush1.msra.mxu0 0.0
        %6530 = vmatprep.subr.mxu0 0.0
        %6531 = vmatpush1.msra.mxu0 0.0
        %6532 = vmatprep.subr.mxu0 0.0
        %6533 = vmatpush1.msra.mxu0 0.0
        %6534 = vmatprep.subr.mxu0 0.0
        %6535 = vmatpush1.msra.mxu0 0.0
        %6536 = vmatprep.subr.mxu0 0.0
        %6537 = vmatpush1.msra.mxu0 0.0
        %6538 = vmatprep.subr.mxu0 0.0
        %6539 = vmatpush1.msra.mxu0 0.0
        %6540 = vmatprep.subr.mxu0 0.0
        %6541 = vmatpush1.msra.mxu0 0.0
        %6542 = vmatprep.subr.mxu0 0.0
        %6543 = vmatpush1.msra.mxu0 0.0
        %6544 = vmatprep.subr.mxu0 0.0
        %6545 = vmatpush1.msra.mxu0 0.0
        %6546 = vmatprep.subr.mxu0 0.0
        %6547 = vmatpush1.msra.mxu0 0.0
        %6548 = vmatprep.subr.mxu0 0.0
        %6549 = vmatpush1.msra.mxu0 0.0
        %6550 = vmatprep.subr.mxu0 0.0
        %6551 = vmatpush1.msra.mxu0 0.0
        %6552 = vmatprep.subr.mxu0 0.0
        %6553 = vmatpush1.msra.mxu0 0.0
        %6554 = vmatprep.subr.mxu0 0.0
        %6555 = vmatpush1.msra.mxu0 0.0
        %6556 = vmatprep.subr.mxu0 0.0
        %6557 = vmatpush1.msra.mxu0 0.0
        %6558 = vmatprep.subr.mxu0 0.0
        %6559 = vmatpush1.msra.mxu0 0.0
        %6560 = vmatprep.subr.mxu0 0.0
        %6561 = vmatpush1.msra.mxu0 0.0
        %6562 = vmatprep.subr.mxu0 0.0
        %6563 = vmatpush1.msra.mxu0 0.0
        %6564 = vmatprep.subr.mxu0 0.0
        %6565 = vmatpush1.msra.mxu0 0.0
        %6566 = vmatprep.subr.mxu0 0.0
        %6567 = vmatpush1.msra.mxu0 0.0
        %6568 = vmatprep.subr.mxu0 0.0
        %6569 = vmatpush1.msra.mxu0 0.0
        %6570 = vmatprep.mubr.f32.mxu0 0.0
        %v6571 = vand.u32 %v6126, 4294901760
        %6572 = vmatmul.mubr.f32.gmra.mrb[0].mxu0 %v6571
        %v6573 = vpop.f32.mrb[0].mxu0
        %v6574 = vadd.f32 %v6502, %v6573
        %v6575 = vpop.f32.mrb[0].mxu0
        %6576 = vdwg.mxu0
        %v6578 = vsel %vm6124, %v6122, 0
        %v6581 = vsel %vm1506, %v2023, 0
        %6583 = vmatprep.subr.mxu0 0.0
        %v6584 = vand.u32 %v6581, 4294901760
        %6585 = vmatpush1.msra.mxu0 %v6584
        %6586 = vmatprep.subr.mxu0 0.0
        %6587 = vmatpush1.msra.mxu0 0.0
        %6588 = vmatprep.subr.mxu0 0.0
        %6589 = vmatpush1.msra.mxu0 0.0
        %6590 = vmatprep.subr.mxu0 0.0
        %6591 = vmatpush1.msra.mxu0 0.0
        %6592 = vmatprep.subr.mxu0 0.0
        %6593 = vmatpush1.msra.mxu0 0.0
        %6594 = vmatprep.subr.mxu0 0.0
        %6595 = vmatpush1.msra.mxu0 0.0
        %6596 = vmatprep.subr.mxu0 0.0
        %6597 = vmatpush1.msra.mxu0 0.0
        %6598 = vmatprep.subr.mxu0 0.0
        %6599 = vmatpush1.msra.mxu0 0.0
        %6600 = vmatprep.subr.mxu0 0.0
        %6601 = vmatpush1.msra.mxu0 0.0
        %6602 = vmatprep.subr.mxu0 0.0
        %6603 = vmatpush1.msra.mxu0 0.0
        %6604 = vmatprep.subr.mxu0 0.0
        %6605 = vmatpush1.msra.mxu0 0.0
        %6606 = vmatprep.subr.mxu0 0.0
        %6607 = vmatpush1.msra.mxu0 0.0
        %6608 = vmatprep.subr.mxu0 0.0
        %6609 = vmatpush1.msra.mxu0 0.0
        %6610 = vmatprep.subr.mxu0 0.0
        %6611 = vmatpush1.msra.mxu0 0.0
        %6612 = vmatprep.subr.mxu0 0.0
        %6613 = vmatpush1.msra.mxu0 0.0
        %6614 = vmatprep.subr.mxu0 0.0
        %6615 = vmatpush1.msra.mxu0 0.0
        %6616 = vmatprep.subr.mxu0 0.0
        %6617 = vmatpush1.msra.mxu0 0.0
        %6618 = vmatprep.subr.mxu0 0.0
        %6619 = vmatpush1.msra.mxu0 0.0
        %6620 = vmatprep.subr.mxu0 0.0
        %6621 = vmatpush1.msra.mxu0 0.0
        %6622 = vmatprep.subr.mxu0 0.0
        %6623 = vmatpush1.msra.mxu0 0.0
        %6624 = vmatprep.subr.mxu0 0.0
        %6625 = vmatpush1.msra.mxu0 0.0
        %6626 = vmatprep.subr.mxu0 0.0
        %6627 = vmatpush1.msra.mxu0 0.0
        %6628 = vmatprep.subr.mxu0 0.0
        %6629 = vmatpush1.msra.mxu0 0.0
        %6630 = vmatprep.subr.mxu0 0.0
        %6631 = vmatpush1.msra.mxu0 0.0
        %6632 = vmatprep.subr.mxu0 0.0
        %6633 = vmatpush1.msra.mxu0 0.0
        %6634 = vmatprep.subr.mxu0 0.0
        %6635 = vmatpush1.msra.mxu0 0.0
        %6636 = vmatprep.subr.mxu0 0.0
        %6637 = vmatpush1.msra.mxu0 0.0
        %6638 = vmatprep.subr.mxu0 0.0
        %6639 = vmatpush1.msra.mxu0 0.0
        %6640 = vmatprep.subr.mxu0 0.0
        %6641 = vmatpush1.msra.mxu0 0.0
        %6642 = vmatprep.subr.mxu0 0.0
        %6643 = vmatpush1.msra.mxu0 0.0
        %6644 = vmatprep.subr.mxu0 0.0
        %6645 = vmatpush1.msra.mxu0 0.0
        %6646 = vmatprep.subr.mxu0 0.0
        %6647 = vmatpush1.msra.mxu0 0.0
        %6648 = vmatprep.mubr.f32.mxu0 0.0
        %v6649 = vand.u32 %v6578, 4294901760
        %v6650 = vsub.f32 %v6578, %v6649
        %v6651 = vand.u32 %v6650, 4294901760
        %v6652 = vsub.f32 %v6650, %v6651
        %v6653 = vand.u32 %v6652, 4294901760
        %6654 = vmatmul.mubr.f32.gmra.mrb[0].mxu0 %v6653
        %v6655 = vpop.f32.mrb[0].mxu0
        %v6656 = vadd.f32 %v6574, %v6655
        %v6657 = vpop.f32.mrb[0].mxu0
        %6658 = vdwg.mxu0
        %6659 = vmatprep.subr.mxu0 0.0
        %v6660 = vand.u32 %v6581, 4294901760
        %v6661 = vsub.f32 %v6581, %v6660
        %v6662 = vand.u32 %v6661, 4294901760
        %v6663 = vsub.f32 %v6661, %v6662
        %v6664 = vand.u32 %v6663, 4294901760
        %6665 = vmatpush1.msra.mxu0 %v6664
        %6666 = vmatprep.subr.mxu0 0.0
        %6667 = vmatpush1.msra.mxu0 0.0
        %6668 = vmatprep.subr.mxu0 0.0
        %6669 = vmatpush1.msra.mxu0 0.0
        %6670 = vmatprep.subr.mxu0 0.0
        %6671 = vmatpush1.msra.mxu0 0.0
        %6672 = vmatprep.subr.mxu0 0.0
        %6673 = vmatpush1.msra.mxu0 0.0
        %6674 = vmatprep.subr.mxu0 0.0
        %6675 = vmatpush1.msra.mxu0 0.0
        %6676 = vmatprep.subr.mxu0 0.0
        %6677 = vmatpush1.msra.mxu0 0.0
        %6678 = vmatprep.subr.mxu0 0.0
        %6679 = vmatpush1.msra.mxu0 0.0
        %6680 = vmatprep.subr.mxu0 0.0
        %6681 = vmatpush1.msra.mxu0 0.0
        %6682 = vmatprep.subr.mxu0 0.0
        %6683 = vmatpush1.msra.mxu0 0.0
        %6684 = vmatprep.subr.mxu0 0.0
        %6685 = vmatpush1.msra.mxu0 0.0
        %6686 = vmatprep.subr.mxu0 0.0
        %6687 = vmatpush1.msra.mxu0 0.0
        %6688 = vmatprep.subr.mxu0 0.0
        %6689 = vmatpush1.msra.mxu0 0.0
        %6690 = vmatprep.subr.mxu0 0.0
        %6691 = vmatpush1.msra.mxu0 0.0
        %6692 = vmatprep.subr.mxu0 0.0
        %6693 = vmatpush1.msra.mxu0 0.0
        %6694 = vmatprep.subr.mxu0 0.0
        %6695 = vmatpush1.msra.mxu0 0.0
        %6696 = vmatprep.subr.mxu0 0.0
        %6697 = vmatpush1.msra.mxu0 0.0
        %6698 = vmatprep.subr.mxu0 0.0
        %6699 = vmatpush1.msra.mxu0 0.0
        %6700 = vmatprep.subr.mxu0 0.0
        %6701 = vmatpush1.msra.mxu0 0.0
        %6702 = vmatprep.subr.mxu0 0.0
        %6703 = vmatpush1.msra.mxu0 0.0
        %6704 = vmatprep.subr.mxu0 0.0
        %6705 = vmatpush1.msra.mxu0 0.0
        %6706 = vmatprep.subr.mxu0 0.0
        %6707 = vmatpush1.msra.mxu0 0.0
        %6708 = vmatprep.subr.mxu0 0.0
        %6709 = vmatpush1.msra.mxu0 0.0
        %6710 = vmatprep.subr.mxu0 0.0
        %6711 = vmatpush1.msra.mxu0 0.0
        %6712 = vmatprep.subr.mxu0 0.0
        %6713 = vmatpush1.msra.mxu0 0.0
        %6714 = vmatprep.subr.mxu0 0.0
        %6715 = vmatpush1.msra.mxu0 0.0
        %6716 = vmatprep.subr.mxu0 0.0
        %6717 = vmatpush1.msra.mxu0 0.0
        %6718 = vmatprep.subr.mxu0 0.0
        %6719 = vmatpush1.msra.mxu0 0.0
        %6720 = vmatprep.subr.mxu0 0.0
        %6721 = vmatpush1.msra.mxu0 0.0
        %6722 = vmatprep.subr.mxu0 0.0
        %6723 = vmatpush1.msra.mxu0 0.0
        %6724 = vmatprep.subr.mxu0 0.0
        %6725 = vmatpush1.msra.mxu0 0.0
        %6726 = vmatprep.subr.mxu0 0.0
        %6727 = vmatpush1.msra.mxu0 0.0
        %6728 = vmatprep.mubr.f32.mxu0 0.0
        %v6729 = vand.u32 %v6578, 4294901760
        %6730 = vmatmul.mubr.f32.gmra.mrb[0].mxu0 %v6729
        %v6731 = vpop.f32.mrb[0].mxu0
        %v6732 = vadd.f32 %v6656, %v6731
        %v6733 = vpop.f32.mrb[0].mxu0
        %6734 = vdwg.mxu0
        %6735 = vmatprep.subr.mxu0 0.0
        %v6736 = vand.u32 %v6581, 4294901760
        %v6737 = vsub.f32 %v6581, %v6736
        %6738 = vmatpush1.msra.mxu0 %v6737
        %6739 = vmatprep.subr.mxu0 0.0
        %6740 = vmatpush1.msra.mxu0 0.0
        %6741 = vmatprep.subr.mxu0 0.0
        %6742 = vmatpush1.msra.mxu0 0.0
        %6743 = vmatprep.subr.mxu0 0.0
        %6744 = vmatpush1.msra.mxu0 0.0
        %6745 = vmatprep.subr.mxu0 0.0
        %6746 = vmatpush1.msra.mxu0 0.0
        %6747 = vmatprep.subr.mxu0 0.0
        %6748 = vmatpush1.msra.mxu0 0.0
        %6749 = vmatprep.subr.mxu0 0.0
        %6750 = vmatpush1.msra.mxu0 0.0
        %6751 = vmatprep.subr.mxu0 0.0
        %6752 = vmatpush1.msra.mxu0 0.0
        %6753 = vmatprep.subr.mxu0 0.0
        %6754 = vmatpush1.msra.mxu0 0.0
        %6755 = vmatprep.subr.mxu0 0.0
        %6756 = vmatpush1.msra.mxu0 0.0
        %6757 = vmatprep.subr.mxu0 0.0
        %6758 = vmatpush1.msra.mxu0 0.0
        %6759 = vmatprep.subr.mxu0 0.0
        %6760 = vmatpush1.msra.mxu0 0.0
        %6761 = vmatprep.subr.mxu0 0.0
        %6762 = vmatpush1.msra.mxu0 0.0
        %6763 = vmatprep.subr.mxu0 0.0
        %6764 = vmatpush1.msra.mxu0 0.0
        %6765 = vmatprep.subr.mxu0 0.0
        %6766 = vmatpush1.msra.mxu0 0.0
        %6767 = vmatprep.subr.mxu0 0.0
        %6768 = vmatpush1.msra.mxu0 0.0
        %6769 = vmatprep.subr.mxu0 0.0
        %6770 = vmatpush1.msra.mxu0 0.0
        %6771 = vmatprep.subr.mxu0 0.0
        %6772 = vmatpush1.msra.mxu0 0.0
        %6773 = vmatprep.subr.mxu0 0.0
        %6774 = vmatpush1.msra.mxu0 0.0
        %6775 = vmatprep.subr.mxu0 0.0
        %6776 = vmatpush1.msra.mxu0 0.0
        %6777 = vmatprep.subr.mxu0 0.0
        %6778 = vmatpush1.msra.mxu0 0.0
        %6779 = vmatprep.subr.mxu0 0.0
        %6780 = vmatpush1.msra.mxu0 0.0
        %6781 = vmatprep.subr.mxu0 0.0
        %6782 = vmatpush1.msra.mxu0 0.0
        %6783 = vmatprep.subr.mxu0 0.0
        %6784 = vmatpush1.msra.mxu0 0.0
        %6785 = vmatprep.subr.mxu0 0.0
        %6786 = vmatpush1.msra.mxu0 0.0
        %6787 = vmatprep.subr.mxu0 0.0
        %6788 = vmatpush1.msra.mxu0 0.0
        %6789 = vmatprep.subr.mxu0 0.0
        %6790 = vmatpush1.msra.mxu0 0.0
        %6791 = vmatprep.subr.mxu0 0.0
        %6792 = vmatpush1.msra.mxu0 0.0
        %6793 = vmatprep.subr.mxu0 0.0
        %6794 = vmatpush1.msra.mxu0 0.0
        %6795 = vmatprep.subr.mxu0 0.0
        %6796 = vmatpush1.msra.mxu0 0.0
        %6797 = vmatprep.subr.mxu0 0.0
        %6798 = vmatpush1.msra.mxu0 0.0
        %6799 = vmatprep.subr.mxu0 0.0
        %6800 = vmatpush1.msra.mxu0 0.0
        %6801 = vmatprep.mubr.f32.mxu0 0.0
        %v6802 = vand.u32 %v6578, 4294901760
        %v6803 = vsub.f32 %v6578, %v6802
        %6804 = vmatmul.mubr.f32.gmra.mrb[0].mxu0 %v6803
        %v6805 = vpop.f32.mrb[0].mxu0
        %v6806 = vadd.f32 %v6732, %v6805
        %v6807 = vpop.f32.mrb[0].mxu0
        %6808 = vdwg.mxu0
        %6809 = vmatprep.subr.mxu0 0.0
        %v6810 = vand.u32 %v6581, 4294901760
        %6811 = vmatpush1.msra.mxu0 %v6810
        %6812 = vmatprep.subr.mxu0 0.0
        %6813 = vmatpush1.msra.mxu0 0.0
        %6814 = vmatprep.subr.mxu0 0.0
        %6815 = vmatpush1.msra.mxu0 0.0
        %6816 = vmatprep.subr.mxu0 0.0
        %6817 = vmatpush1.msra.mxu0 0.0
        %6818 = vmatprep.subr.mxu0 0.0
        %6819 = vmatpush1.msra.mxu0 0.0
        %6820 = vmatprep.subr.mxu0 0.0
        %6821 = vmatpush1.msra.mxu0 0.0
        %6822 = vmatprep.subr.mxu0 0.0
        %6823 = vmatpush1.msra.mxu0 0.0
        %6824 = vmatprep.subr.mxu0 0.0
        %6825 = vmatpush1.msra.mxu0 0.0
        %6826 = vmatprep.subr.mxu0 0.0
        %6827 = vmatpush1.msra.mxu0 0.0
        %6828 = vmatprep.subr.mxu0 0.0
        %6829 = vmatpush1.msra.mxu0 0.0
        %6830 = vmatprep.subr.mxu0 0.0
        %6831 = vmatpush1.msra.mxu0 0.0
        %6832 = vmatprep.subr.mxu0 0.0
        %6833 = vmatpush1.msra.mxu0 0.0
        %6834 = vmatprep.subr.mxu0 0.0
        %6835 = vmatpush1.msra.mxu0 0.0
        %6836 = vmatprep.subr.mxu0 0.0
        %6837 = vmatpush1.msra.mxu0 0.0
        %6838 = vmatprep.subr.mxu0 0.0
        %6839 = vmatpush1.msra.mxu0 0.0
        %6840 = vmatprep.subr.mxu0 0.0
        %6841 = vmatpush1.msra.mxu0 0.0
        %6842 = vmatprep.subr.mxu0 0.0
        %6843 = vmatpush1.msra.mxu0 0.0
        %6844 = vmatprep.subr.mxu0 0.0
        %6845 = vmatpush1.msra.mxu0 0.0
        %6846 = vmatprep.subr.mxu0 0.0
        %6847 = vmatpush1.msra.mxu0 0.0
        %6848 = vmatprep.subr.mxu0 0.0
        %6849 = vmatpush1.msra.mxu0 0.0
        %6850 = vmatprep.subr.mxu0 0.0
        %6851 = vmatpush1.msra.mxu0 0.0
        %6852 = vmatprep.subr.mxu0 0.0
        %6853 = vmatpush1.msra.mxu0 0.0
        %6854 = vmatprep.subr.mxu0 0.0
        %6855 = vmatpush1.msra.mxu0 0.0
        %6856 = vmatprep.subr.mxu0 0.0
        %6857 = vmatpush1.msra.mxu0 0.0
        %6858 = vmatprep.subr.mxu0 0.0
        %6859 = vmatpush1.msra.mxu0 0.0
        %6860 = vmatprep.subr.mxu0 0.0
        %6861 = vmatpush1.msra.mxu0 0.0
        %6862 = vmatprep.subr.mxu0 0.0
        %6863 = vmatpush1.msra.mxu0 0.0
        %6864 = vmatprep.subr.mxu0 0.0
        %6865 = vmatpush1.msra.mxu0 0.0
        %6866 = vmatprep.subr.mxu0 0.0
        %6867 = vmatpush1.msra.mxu0 0.0
        %6868 = vmatprep.subr.mxu0 0.0
        %6869 = vmatpush1.msra.mxu0 0.0
        %6870 = vmatprep.subr.mxu0 0.0
        %6871 = vmatpush1.msra.mxu0 0.0
        %6872 = vmatprep.subr.mxu0 0.0
        %6873 = vmatpush1.msra.mxu0 0.0
        %6874 = vmatprep.mubr.f32.mxu0 0.0
        %v6875 = vand.u32 %v6578, 4294901760
        %v6876 = vsub.f32 %v6578, %v6875
        %v6877 = vand.u32 %v6876, 4294901760
        %6878 = vmatmul.mubr.f32.gmra.mrb[0].mxu0 %v6877
        %v6879 = vpop.f32.mrb[0].mxu0
        %v6880 = vadd.f32 %v6806, %v6879
        %v6881 = vpop.f32.mrb[0].mxu0
        %6882 = vdwg.mxu0
        %6883 = vmatprep.subr.mxu0 0.0
        %v6884 = vand.u32 %v6581, 4294901760
        %v6885 = vsub.f32 %v6581, %v6884
        %v6886 = vand.u32 %v6885, 4294901760
        %6887 = vmatpush1.msra.mxu0 %v6886
        %6888 = vmatprep.subr.mxu0 0.0
        %6889 = vmatpush1.msra.mxu0 0.0
        %6890 = vmatprep.subr.mxu0 0.0
        %6891 = vmatpush1.msra.mxu0 0.0
        %6892 = vmatprep.subr.mxu0 0.0
        %6893 = vmatpush1.msra.mxu0 0.0
        %6894 = vmatprep.subr.mxu0 0.0
        %6895 = vmatpush1.msra.mxu0 0.0
        %6896 = vmatprep.subr.mxu0 0.0
        %6897 = vmatpush1.msra.mxu0 0.0
        %6898 = vmatprep.subr.mxu0 0.0
        %6899 = vmatpush1.msra.mxu0 0.0
        %6900 = vmatprep.subr.mxu0 0.0
        %6901 = vmatpush1.msra.mxu0 0.0
        %6902 = vmatprep.subr.mxu0 0.0
        %6903 = vmatpush1.msra.mxu0 0.0
        %6904 = vmatprep.subr.mxu0 0.0
        %6905 = vmatpush1.msra.mxu0 0.0
        %6906 = vmatprep.subr.mxu0 0.0
        %6907 = vmatpush1.msra.mxu0 0.0
        %6908 = vmatprep.subr.mxu0 0.0
        %6909 = vmatpush1.msra.mxu0 0.0
        %6910 = vmatprep.subr.mxu0 0.0
        %6911 = vmatpush1.msra.mxu0 0.0
        %6912 = vmatprep.subr.mxu0 0.0
        %6913 = vmatpush1.msra.mxu0 0.0
        %6914 = vmatprep.subr.mxu0 0.0
        %6915 = vmatpush1.msra.mxu0 0.0
        %6916 = vmatprep.subr.mxu0 0.0
        %6917 = vmatpush1.msra.mxu0 0.0
        %6918 = vmatprep.subr.mxu0 0.0
        %6919 = vmatpush1.msra.mxu0 0.0
        %6920 = vmatprep.subr.mxu0 0.0
        %6921 = vmatpush1.msra.mxu0 0.0
        %6922 = vmatprep.subr.mxu0 0.0
        %6923 = vmatpush1.msra.mxu0 0.0
        %6924 = vmatprep.subr.mxu0 0.0
        %6925 = vmatpush1.msra.mxu0 0.0
        %6926 = vmatprep.subr.mxu0 0.0
        %6927 = vmatpush1.msra.mxu0 0.0
        %6928 = vmatprep.subr.mxu0 0.0
        %6929 = vmatpush1.msra.mxu0 0.0
        %6930 = vmatprep.subr.mxu0 0.0
        %6931 = vmatpush1.msra.mxu0 0.0
        %6932 = vmatprep.subr.mxu0 0.0
        %6933 = vmatpush1.msra.mxu0 0.0
        %6934 = vmatprep.subr.mxu0 0.0
        %6935 = vmatpush1.msra.mxu0 0.0
        %6936 = vmatprep.subr.mxu0 0.0
        %6937 = vmatpush1.msra.mxu0 0.0
        %6938 = vmatprep.subr.mxu0 0.0
        %6939 = vmatpush1.msra.mxu0 0.0
        %6940 = vmatprep.subr.mxu0 0.0
        %6941 = vmatpush1.msra.mxu0 0.0
        %6942 = vmatprep.subr.mxu0 0.0
        %6943 = vmatpush1.msra.mxu0 0.0
        %6944 = vmatprep.subr.mxu0 0.0
        %6945 = vmatpush1.msra.mxu0 0.0
        %6946 = vmatprep.subr.mxu0 0.0
        %6947 = vmatpush1.msra.mxu0 0.0
        %6948 = vmatprep.subr.mxu0 0.0
        %6949 = vmatpush1.msra.mxu0 0.0
        %6950 = vmatprep.mubr.f32.mxu0 0.0
        %v6951 = vand.u32 %v6578, 4294901760
        %6952 = vmatmul.mubr.f32.gmra.mrb[0].mxu0 %v6951
        %v6953 = vpop.f32.mrb[0].mxu0
        %v6954 = vadd.f32 %v6880, %v6953
        %v6955 = vpop.f32.mrb[0].mxu0
        %6956 = vdwg.mxu0
        %6957 = vmatprep.subr.mxu0 0.0
        %v6958 = vand.u32 %v6581, 4294901760
        %6959 = vmatpush1.msra.mxu0 %v6958
        %6960 = vmatprep.subr.mxu0 0.0
        %6961 = vmatpush1.msra.mxu0 0.0
        %6962 = vmatprep.subr.mxu0 0.0
        %6963 = vmatpush1.msra.mxu0 0.0
        %6964 = vmatprep.subr.mxu0 0.0
        %6965 = vmatpush1.msra.mxu0 0.0
        %6966 = vmatprep.subr.mxu0 0.0
        %6967 = vmatpush1.msra.mxu0 0.0
        %6968 = vmatprep.subr.mxu0 0.0
        %6969 = vmatpush1.msra.mxu0 0.0
        %6970 = vmatprep.subr.mxu0 0.0
        %6971 = vmatpush1.msra.mxu0 0.0
        %6972 = vmatprep.subr.mxu0 0.0
        %6973 = vmatpush1.msra.mxu0 0.0
        %6974 = vmatprep.subr.mxu0 0.0
        %6975 = vmatpush1.msra.mxu0 0.0
        %6976 = vmatprep.subr.mxu0 0.0
        %6977 = vmatpush1.msra.mxu0 0.0
        %6978 = vmatprep.subr.mxu0 0.0
        %6979 = vmatpush1.msra.mxu0 0.0
        %6980 = vmatprep.subr.mxu0 0.0
        %6981 = vmatpush1.msra.mxu0 0.0
        %6982 = vmatprep.subr.mxu0 0.0
        %6983 = vmatpush1.msra.mxu0 0.0
        %6984 = vmatprep.subr.mxu0 0.0
        %6985 = vmatpush1.msra.mxu0 0.0
        %6986 = vmatprep.subr.mxu0 0.0
        %6987 = vmatpush1.msra.mxu0 0.0
        %6988 = vmatprep.subr.mxu0 0.0
        %6989 = vmatpush1.msra.mxu0 0.0
        %6990 = vmatprep.subr.mxu0 0.0
        %6991 = vmatpush1.msra.mxu0 0.0
        %6992 = vmatprep.subr.mxu0 0.0
        %6993 = vmatpush1.msra.mxu0 0.0
        %6994 = vmatprep.subr.mxu0 0.0
        %6995 = vmatpush1.msra.mxu0 0.0
        %6996 = vmatprep.subr.mxu0 0.0
        %6997 = vmatpush1.msra.mxu0 0.0
        %6998 = vmatprep.subr.mxu0 0.0
        %6999 = vmatpush1.msra.mxu0 0.0
        %7000 = vmatprep.subr.mxu0 0.0
        %7001 = vmatpush1.msra.mxu0 0.0
        %7002 = vmatprep.subr.mxu0 0.0
        %7003 = vmatpush1.msra.mxu0 0.0
        %7004 = vmatprep.subr.mxu0 0.0
        %7005 = vmatpush1.msra.mxu0 0.0
        %7006 = vmatprep.subr.mxu0 0.0
        %7007 = vmatpush1.msra.mxu0 0.0
        %7008 = vmatprep.subr.mxu0 0.0
        %7009 = vmatpush1.msra.mxu0 0.0
        %7010 = vmatprep.subr.mxu0 0.0
        %7011 = vmatpush1.msra.mxu0 0.0
        %7012 = vmatprep.subr.mxu0 0.0
        %7013 = vmatpush1.msra.mxu0 0.0
        %7014 = vmatprep.subr.mxu0 0.0
        %7015 = vmatpush1.msra.mxu0 0.0
        %7016 = vmatprep.subr.mxu0 0.0
        %7017 = vmatpush1.msra.mxu0 0.0
        %7018 = vmatprep.subr.mxu0 0.0
        %7019 = vmatpush1.msra.mxu0 0.0
        %7020 = vmatprep.subr.mxu0 0.0
        %7021 = vmatpush1.msra.mxu0 0.0
        %7022 = vmatprep.mubr.f32.mxu0 0.0
        %v7023 = vand.u32 %v6578, 4294901760
        %7024 = vmatmul.mubr.f32.gmra.mrb[0].mxu0 %v7023
        %v7025 = vpop.f32.mrb[0].mxu0
        %v7026 = vadd.f32 %v6954, %v7025
        %v7027 = vpop.f32.mrb[0].mxu0
        %7028 = vdwg.mxu0
        %v7029 = vld [vmem:[%s9] sm:$0xff]
        %7031 = vset.pattern.permute.xlu0 0
        %7032 = vperm.xlu0 %7031, %v7029
        %v7033 = vpop.permute.xlu0 %7032
        %v7035 = vadd.f32 %v7026, %v7033
        %v7036 = vmax.f32 %v7035, 0.0
        %7038 = vrot.lane.b32.xlu0 %v7036, 112
        %v7039 = vpop.permute.xlu0 %7038
        %7041 = vrot.lane.b32.xlu0 %v7036, 96
        %v7042 = vpop.permute.xlu0 %7041
        %7044 = vrot.lane.b32.xlu0 %v7036, 80
        %v7045 = vpop.permute.xlu0 %7044
        %7047 = vrot.lane.b32.xlu0 %v7036, 64
        %v7048 = vpop.permute.xlu0 %7047
        %7050 = vrot.lane.b32.xlu0 %v7036, 48
        %v7051 = vpop.permute.xlu0 %7050
        %7053 = vrot.lane.b32.xlu0 %v7036, 32
        %v7054 = vpop.permute.xlu0 %7053
        %7056 = vrot.lane.b32.xlu0 %v7036, 16
        %v7057 = vpop.permute.xlu0 %7056
        %v7059 = vcombine.low %v7036, %v7042
        %v7060 = vcombine.high %v7036, %v7042
        %v7062 = vunpack.c.l.s4 1983009808
        %v7063 = vunpack.c.0.s8 %v7062
        %v7064 = vlaneseq
        %v7065 = vshrl.u32 %v7064, 7
        %v7066 = vsub.s32 %v7063, %v7065
        %v7067 = vrot.slane %v7059, %v7066
        %v7069 = vunpack.c.l.s4 1983009808
        %v7070 = vunpack.c.0.s8 %v7069
        %v7071 = vlaneseq
        %v7072 = vshrl.u32 %v7071, 7
        %v7073 = vsub.s32 %v7070, %v7072
        %v7074 = vrot.slane %v7060, %v7073
        %v7075 = vcombine.low %v7039, %v7045
        %v7076 = vcombine.high %v7039, %v7045
        %v7078 = vunpack.c.l.s4 1983009808
        %v7079 = vunpack.c.0.s8 %v7078
        %v7080 = vlaneseq
        %v7081 = vshrl.u32 %v7080, 7
        %v7082 = vsub.s32 %v7079, %v7081
        %v7083 = vrot.slane %v7075, %v7082
        %v7085 = vunpack.c.l.s4 1983009808
        %v7086 = vunpack.c.0.s8 %v7085
        %v7087 = vlaneseq
        %v7088 = vshrl.u32 %v7087, 7
        %v7089 = vsub.s32 %v7086, %v7088
        %v7090 = vrot.slane %v7076, %v7089
        %v7091 = vcombine.low %v7048, %v7054
        %v7092 = vcombine.high %v7048, %v7054
        %v7094 = vunpack.c.l.s4 1983009808
        %v7095 = vunpack.c.0.s8 %v7094
        %v7096 = vlaneseq
        %v7097 = vshrl.u32 %v7096, 7
        %v7098 = vsub.s32 %v7095, %v7097
        %v7099 = vrot.slane %v7091, %v7098
        %v7101 = vunpack.c.l.s4 1983009808
        %v7102 = vunpack.c.0.s8 %v7101
        %v7103 = vlaneseq
        %v7104 = vshrl.u32 %v7103, 7
        %v7105 = vsub.s32 %v7102, %v7104
        %v7106 = vrot.slane %v7092, %v7105
        %v7107 = vcombine.low %v7051, %v7057
        %v7108 = vcombine.high %v7051, %v7057
        %v7110 = vunpack.c.l.s4 1983009808
        %v7111 = vunpack.c.0.s8 %v7110
        %v7112 = vlaneseq
        %v7113 = vshrl.u32 %v7112, 7
        %v7114 = vsub.s32 %v7111, %v7113
        %v7115 = vrot.slane %v7107, %v7114
        %v7117 = vunpack.c.l.s4 1983009808
        %v7118 = vunpack.c.0.s8 %v7117
        %v7119 = vlaneseq
        %v7120 = vshrl.u32 %v7119, 7
        %v7121 = vsub.s32 %v7118, %v7120
        %v7122 = vrot.slane %v7108, %v7121
        %v7123 = vcombine.low %v7067, %v7083
        %v7124 = vcombine.high %v7067, %v7083
        %v7126 = vunpack.c.l.s4 1934713408
        %v7127 = vunpack.c.0.s8 %v7126
        %v7128 = vlaneseq
        %v7129 = vshrl.u32 %v7128, 7
        %v7130 = vsub.s32 %v7127, %v7129
        %v7131 = vrot.slane %v7123, %v7130
        %v7133 = vunpack.c.l.s4 1934713408
        %v7134 = vunpack.c.0.s8 %v7133
        %v7135 = vlaneseq
        %v7136 = vshrl.u32 %v7135, 7
        %v7137 = vsub.s32 %v7134, %v7136
        %v7138 = vrot.slane %v7124, %v7137
        %v7139 = vcombine.low %v7074, %v7090
        %v7140 = vcombine.high %v7074, %v7090
        %v7142 = vunpack.c.l.s4 1934713408
        %v7143 = vunpack.c.0.s8 %v7142
        %v7144 = vlaneseq
        %v7145 = vshrl.u32 %v7144, 7
        %v7146 = vsub.s32 %v7143, %v7145
        %v7147 = vrot.slane %v7139, %v7146
        %v7149 = vunpack.c.l.s4 1934713408
        %v7150 = vunpack.c.0.s8 %v7149
        %v7151 = vlaneseq
        %v7152 = vshrl.u32 %v7151, 7
        %v7153 = vsub.s32 %v7150, %v7152
        %v7154 = vrot.slane %v7140, %v7153
        %v7155 = vcombine.low %v7099, %v7115
        %v7156 = vcombine.high %v7099, %v7115
        %v7158 = vunpack.c.l.s4 1934713408
        %v7159 = vunpack.c.0.s8 %v7158
        %v7160 = vlaneseq
        %v7161 = vshrl.u32 %v7160, 7
        %v7162 = vsub.s32 %v7159, %v7161
        %v7163 = vrot.slane %v7155, %v7162
        %v7165 = vunpack.c.l.s4 1934713408
        %v7166 = vunpack.c.0.s8 %v7165
        %v7167 = vlaneseq
        %v7168 = vshrl.u32 %v7167, 7
        %v7169 = vsub.s32 %v7166, %v7168
        %v7170 = vrot.slane %v7156, %v7169
        %v7171 = vcombine.low %v7106, %v7122
        %v7172 = vcombine.high %v7106, %v7122
        %v7174 = vunpack.c.l.s4 1934713408
        %v7175 = vunpack.c.0.s8 %v7174
        %v7176 = vlaneseq
        %v7177 = vshrl.u32 %v7176, 7
        %v7178 = vsub.s32 %v7175, %v7177
        %v7179 = vrot.slane %v7171, %v7178
        %v7181 = vunpack.c.l.s4 1934713408
        %v7182 = vunpack.c.0.s8 %v7181
        %v7183 = vlaneseq
        %v7184 = vshrl.u32 %v7183, 7
        %v7185 = vsub.s32 %v7182, %v7184
        %v7186 = vrot.slane %v7172, %v7185
        %v7187 = vcombine.low %v7131, %v7163
        %v7188 = vcombine.high %v7131, %v7163
        %v7189 = vcombine.low %v7138, %v7170
        %v7190 = vcombine.high %v7138, %v7170
        %v7191 = vcombine.low %v7147, %v7179
        %v7192 = vcombine.high %v7147, %v7179
        %v7193 = vcombine.low %v7154, %v7186
        %v7194 = vcombine.high %v7154, %v7186
        %7195 = vst.msk [vmem:[%s441] sm:$0xff] %vm564, %v7187
        %7196 = vst.msk [vmem:[%s441 + $0x8] sm:$0xff] %vm564, %v7188
        %7197 = vst.msk [vmem:[%s441 + $0x10] sm:$0xff] %vm564, %v7189
        %7198 = vst.msk [vmem:[%s441 + $0x18] sm:$0xff] %vm564, %v7190
        %7199 = vst.msk [vmem:[%s441 + $0x20] sm:$0xff] %vm564, %v7191
        %7200 = vst.msk [vmem:[%s441 + $0x28] sm:$0xff] %vm564, %v7192
        %7201 = vst.msk [vmem:[%s441 + $0x30] sm:$0xff] %vm564, %v7193
        %7202 = vst.msk [vmem:[%s441 + $0x38] sm:$0xff] %vm564, %v7194
        %s7203 = sand.u32 %s297, 1
        %s7204 = scalar_lea.sflag [#allocation3], %s7203
        %s7205 = sand.u32 %s297, 1
        %s7206 = smul.addr %s7205, 64
        %s7207 = scalar_lea.vmem [#allocation2], %s7206
        // Predicated region
        $region65: #{tpu_custom_call.1} parent=63 // pred_check
          %p7208 = pneg %p307
        $region66: #{tpu_custom_call.1} parent=63 // pred_check_branch
          %7210 = sbr.rel (%p7208) target = $region68
        $region67: #{tpu_custom_call.1} parent=63 // pred_region
          %s7212 = ssub.s32 1024, 1024
          %7213 = vsyncadd %s7204, %s7212
          %s7214 = smul.addr %s29, 16
          %s7215 = sadd.s32 %s30, %s7214
          %s7216 = smul.addr %s7215, 128
          %s7217 = scalar_lea.hbm %s11, %s7216
          %s7218 = sshll.u32 %s7207, 4
          %s7219 = int_to_ptr.vmem [resolvable:$true] %s7218
          %7224 = dma.vmem_to_hbm [thread:$0]  %s7219, 1024, %s7217, %s7204, 128, 256, 8
        $region68: #{tpu_custom_call.1} parent=63 // pred_fallthru
          _
      $region64: #{tpu_custom_call.1} parent=5 // pred_fallthru
        _
      %p7225 = scmp.le.s32.totalorder 2, %s20
      // Predicated region
      $region69: #{tpu_custom_call.1} parent=5 // pred_check
        %p7226 = pneg %p7225
      $region70: #{tpu_custom_call.1} parent=5 // pred_check_branch
        %7228 = sbr.rel (%p7226) target = $region72
      $region71: #{tpu_custom_call.1} parent=5 // pred_region
        %s7229 = ssub.s32 %s20, 2
        // Predicated region
        $region73: #{tpu_custom_call.1} parent=71 // pred_check
          %p7230 = pneg %p313
        $region74: #{tpu_custom_call.1} parent=71 // pred_check_branch
          %7232 = sbr.rel (%p7230) target = $region76
        $region75: #{tpu_custom_call.1} parent=71 // pred_region
          %s7233 = sand.u32 %s298, 1
          %s7234 = scalar_lea.sflag [#allocation3], %s7233
          %s7235 = sand.u32 %s298, 1
          %s7236 = smul.addr %s7235, 64
          %s7237 = scalar_lea.vmem [#allocation2], %s7236
          %7238 = dma.done %s7234, 1024
        $region76: #{tpu_custom_call.1} parent=71 // pred_fallthru
          _
      $region72: #{tpu_custom_call.1} parent=5 // pred_fallthru
        _
    $region6: #{tpu_custom_call.1} parent=1 // loop_footer
      %s24 = sadd.s32 1, %s20
    $region7: #{tpu_custom_call.1} parent=1 // loop_footer_branch
      %19 = sbr.rel target = $region3
    $region8: #{tpu_custom_call.1} parent=1 // loop_exit
      _
    %7239 = vsyncpa [#allocation3], 1
    %s7240 = scalar_lea.sflag [#allocation3], 1
    %7241 = vsyncpa %s7240, 1

</llo_original>
